<compile_context>
chip_gen: v7x
topology: tpu7x:2x2x1
jax: 0.10.0
libtpu: 0.0.40
codegen_flags: <defaults>
</compile_context>

<pallas_src>
import functools

import jax
import jax.numpy as jnp
from jax import lax
from jax.experimental import pallas as pl
from jax.experimental.pallas import tpu as pltpu

LANES = 128  # TPU lane width; all channel-like dims are padded to this.


def _round_up(x, m):
    return (x + m - 1) // m * m


def _pad_axis(a, axis, target):
    if a.shape[axis] == target:
        return a
    pad = [(0, 0)] * a.ndim
    pad[axis] = (0, target - a.shape[axis])
    return jnp.pad(a, pad)


# ----------------------- fused conv + ReLU + maxpool ------------------------
# One grid step = one image. Per pooled output row the kernel:
#   * computes two conv rows via 9 shifted bf16 matmuls each (contraction is
#     only over Cin; the shifted windows are sliced straight off the VMEM ref),
#   * takes the row max, then the column 2x2 max via two 0/1 selection matmuls,
#   * adds bias, applies ReLU, casts to bf16 and stores one pooled row.
# If pad_out, the pooled rows are written into the interior of a zero-filled
# (H2+2, W2+2) buffer so the output is directly the next layer's padded input.

def _conv_relu_pool_kernel(x_ref, w_ref, b_ref, o_ref, *, pad_out):
    Hp, Wp, _ = x_ref.shape
    H, W = Hp - 2, Wp - 2
    H2, W2 = H // 2, W // 2
    cout = o_ref.shape[-1]

    # Column-pool selection matrices (loop invariant, built once).
    r_idx = lax.broadcasted_iota(jnp.int32, (W2, W), 0)
    c_idx = lax.broadcasted_iota(jnp.int32, (W2, W), 1)
    s_even = (c_idx == 2 * r_idx).astype(jnp.float32)
    s_odd = (c_idx == 2 * r_idx + 1).astype(jnp.float32)

    bias = b_ref[...]                                           # (1, cout) f32

    if pad_out:
        o_ref[...] = jnp.zeros_like(o_ref)                      # zero border

    def conv_row(row):
        acc = jnp.zeros((W, cout), jnp.float32)
        for dy in range(3):
            for dx in range(3):
                xs = x_ref[row + dy, pl.ds(dx, W), :]           # (W, cin) bf16
                acc += jnp.dot(xs, w_ref[dy * 3 + dx],
                               preferred_element_type=jnp.float32)
        return acc                                              # (W, cout) f32

    def body(r, carry):
        m = jnp.maximum(conv_row(2 * r), conv_row(2 * r + 1))   # pool rows
        pooled = jnp.maximum(                                   # pool columns
            jnp.dot(s_even, m, preferred_element_type=jnp.float32),
            jnp.dot(s_odd, m, preferred_element_type=jnp.float32))
        pooled = jnp.maximum(pooled + bias, 0.0).astype(o_ref.dtype)
        if pad_out:
            o_ref[r + 1, pl.ds(1, W2), :] = pooled
        else:
            o_ref[r] = pooled
        return carry

    lax.fori_loop(0, H2, body, 0)


def conv_relu_pool(x_pad, w9, b, *, pad_out):
    """x_pad: (N, H+2, W+2, 128) bf16 (spatial+channel padded).
    w9: (9, 128, 128) bf16. b: (1, 128) f32."""
    N, Hp, Wp, cin = x_pad.shape
    H, W = Hp - 2, Wp - 2
    H2, W2 = H // 2, W // 2
    Ho, Wo = (H2 + 2, W2 + 2) if pad_out else (H2, W2)
    cout = w9.shape[-1]
    kernel = functools.partial(_conv_relu_pool_kernel, pad_out=pad_out)
    return pl.pallas_call(
        kernel,
        out_shape=jax.ShapeDtypeStruct((N, Ho, Wo, cout), jnp.bfloat16),
        grid=(N,),
        in_specs=[
            pl.BlockSpec((None, Hp, Wp, cin), lambda n: (n, 0, 0, 0)),
            pl.BlockSpec((9, cin, cout), lambda n: (0, 0, 0)),
            pl.BlockSpec((1, cout), lambda n: (0, 0)),
        ],
        out_specs=pl.BlockSpec((None, Ho, Wo, cout), lambda n: (n, 0, 0, 0)),
        compiler_params=pltpu.CompilerParams(
            dimension_semantics=("parallel",)),
    )(x_pad, w9, b)


# -------------------------- fused dense head (fc1+fc2) ----------------------

def _dense_head_kernel(x_ref, w4_ref, b4_ref, w5_ref, b5_ref, o_ref):
    h = jnp.dot(x_ref[...], w4_ref[...], preferred_element_type=jnp.float32)
    h = jnp.maximum(h + b4_ref[...], 0.0)                       # fc1 + ReLU
    out = jnp.dot(h.astype(w5_ref.dtype), w5_ref[...],
                  preferred_element_type=jnp.float32)
    o_ref[...] = (out + b5_ref[...]).astype(o_ref.dtype)        # fc2 logits


def dense_head(flat, w4, b4, w5, b5):
    M, K = flat.shape
    hidden = w4.shape[-1]
    nout = w5.shape[-1]
    TM = min(256, _round_up(M, 8))
    Mp = _round_up(M, TM)
    if Mp != M:
        flat = jnp.pad(flat, ((0, Mp - M), (0, 0)))
    out = pl.pallas_call(
        _dense_head_kernel,
        out_shape=jax.ShapeDtypeStruct((Mp, nout), jnp.float32),
        grid=(Mp // TM,),
        in_specs=[
            pl.BlockSpec((TM, K), lambda i: (i, 0)),
            pl.BlockSpec((K, hidden), lambda i: (0, 0)),
            pl.BlockSpec((1, hidden), lambda i: (0, 0)),
            pl.BlockSpec((hidden, nout), lambda i: (0, 0)),
            pl.BlockSpec((1, nout), lambda i: (0, 0)),
        ],
        out_specs=pl.BlockSpec((TM, nout), lambda i: (i, 0)),
        compiler_params=pltpu.CompilerParams(
            dimension_semantics=("parallel",)),
    )(flat, w4, b4, w5, b5)
    return out[:M]


# ---------------------------- parameters / model ----------------------------

def init_params(key):
    ks = jax.random.split(key, 10)
    f32 = jnp.float32

    def conv_w(k, cin, cout):
        return jax.random.normal(k, (3, 3, cin, cout), f32) * 0.05

    def dense_w(k, din, dout):
        return jax.random.normal(k, (din, dout), f32) * 0.05

    return {
        "w1": conv_w(ks[0], 1, 32),   "b1": jax.random.normal(ks[1], (32,), f32) * 0.01,
        "w2": conv_w(ks[2], 32, 64),  "b2": jax.random.normal(ks[3], (64,), f32) * 0.01,
        "w3": conv_w(ks[4], 64, 64),  "b3": jax.random.normal(ks[5], (64,), f32) * 0.01,
        "w4": dense_w(ks[6], 64 * 3 * 3, 128), "b4": jax.random.normal(ks[7], (128,), f32) * 0.01,
        "w5": dense_w(ks[8], 128, 10),         "b5": jax.random.normal(ks[9], (10,), f32) * 0.01,
    }


def prepare_params(p):
    """Pad channels to 128 lanes, cast matmul operands to bf16, and permute
    fc1's rows so the padded-NHWC flatten reproduces PyTorch's NCHW view."""
    q = {}
    for i in (1, 2, 3):
        w = p[f"w{i}"]                                          # (3, 3, cin, cout)
        w = _pad_axis(_pad_axis(w, 2, LANES), 3, LANES)         # zero padding
        q[f"w{i}"] = w.reshape(9, LANES, LANES).astype(jnp.bfloat16)
        q[f"b{i}"] = _pad_axis(p[f"b{i}"], 0, LANES).reshape(1, LANES).astype(jnp.float32)
    # fc1 rows: NCHW flatten index c*9 + h*3 + w  ->  NHWC-padded (h*3+w)*128 + c
    w4 = p["w4"].reshape(64, 3, 3, -1)                          # [c, h, w, :]
    w4 = jnp.transpose(w4, (1, 2, 0, 3))                        # [h, w, c, :]
    w4 = _pad_axis(w4, 2, LANES)                                # zero rows for pad chans
    q["w4"] = w4.reshape(9 * LANES, -1).astype(jnp.bfloat16)    # (1152, 128)
    q["b4"] = p["b4"].reshape(1, -1).astype(jnp.float32)        # (1, 128)
    q["w5"] = _pad_axis(p["w5"], 1, LANES).astype(jnp.bfloat16)  # (128, 128)
    q["b5"] = _pad_axis(p["b5"], 0, LANES).reshape(1, LANES).astype(jnp.float32)
    return q


def convnet_forward(params, x_nchw):
    p = prepare_params(params)

    # NCHW (PyTorch) -> NHWC, pad channels to 128 lanes, pad spatially by 1.
    # Zero channel/weight padding is mathematically inert.
    x = jnp.transpose(x_nchw, (0, 2, 3, 1))                     # (N, 28, 28, 1)
    x = _pad_axis(x, 3, LANES)
    x = jnp.pad(x, ((0, 0), (1, 1), (1, 1), (0, 0))).astype(jnp.bfloat16)

    h = conv_relu_pool(x, p["w1"], p["b1"], pad_out=True)       # (N, 16, 16, 128)
    h = conv_relu_pool(h, p["w2"], p["b2"], pad_out=True)       # (N, 9, 9, 128)
    h = conv_relu_pool(h, p["w3"], p["b3"], pad_out=False)      # (N, 3, 3, 128)

    # Flatten; w4 was row-permuted so this equals PyTorch's NCHW .view(N, -1).
    flat = h.reshape(h.shape[0], -1)                            # (N, 1152) bf16
    out = dense_head(flat, p["w4"], p["b4"], p["w5"], p["b5"])  # (N, 128) f32
    return out[:, :10]                                          # (N, 10)


# ----------------------------------- main ------------------------------------

if __name__ == "__main__":
    key = jax.random.PRNGKey(0)
    k_param, k_x = jax.random.split(key)

    params = init_params(k_param)
    # MNIST-shaped input: batch=2, 1 channel, 28x28 (NCHW like the PyTorch module)
    x = jax.random.normal(k_x, (2, 1, 28, 28), jnp.float32)

    fwd = jax.jit(convnet_forward)
    out = fwd(params, x)
    out = jax.block_until_ready(out)

    assert out.shape == (2, 10), out.shape
    assert out.dtype == jnp.float32
    print("KERNEL_OK")
</pallas_src>

<mosaic_0001>
module attributes {stable_mosaic.version = 11 : i64} {
  func.func @_conv_relu_pool_kernel(%arg0: i32, %arg1: memref<1x30x30x128xbf16, #tpu.memory_space<vmem>>, %arg2: memref<9x128x128xbf16, #tpu.memory_space<vmem>>, %arg3: memref<1x128xf32, #tpu.memory_space<vmem>>, %arg4: memref<1x16x16x128xbf16, #tpu.memory_space<vmem>>) attributes {dimension_semantics = [#tpu.dimension_semantics<parallel>], iteration_bounds = array<i64: 2>, scalar_prefetch = 0 : i64, scratch_operands = 0 : i64, tpu.core_type = #tpu.core_type<tc>, window_params = [{transform_indices = @transform_0, window_bounds = array<i64: 1, 30, 30, 128>}, {pipeline_mode = #tpu.pipeline_mode<synchronous>, transform_indices = @transform_1, window_bounds = array<i64: 9, 128, 128>}, {pipeline_mode = #tpu.pipeline_mode<synchronous>, transform_indices = @transform_2, window_bounds = array<i64: 1, 128>}, {transform_indices = @transform_3, window_bounds = array<i64: 1, 16, 16, 128>}]} {
    %0 = tpu.iota {dimensions = array<i32: 0>} : vector<14x28xi32>
    %1 = tpu.iota {dimensions = array<i32: 1>} : vector<14x28xi32>
    %c2_i32 = arith.constant 2 : i32
    %2 = vector.broadcast %c2_i32 : i32 to vector<14x28xi32>
    %3 = arith.muli %2, %0 : vector<14x28xi32>
    %4 = arith.cmpi eq, %1, %3 : vector<14x28xi32>
    %5 = arith.extui %4 : vector<14x28xi1> to vector<14x28xi32>
    %6 = arith.sitofp %5 : vector<14x28xi32> to vector<14x28xf32>
    %c2_i32_0 = arith.constant 2 : i32
    %7 = vector.broadcast %c2_i32_0 : i32 to vector<14x28xi32>
    %8 = arith.muli %7, %0 : vector<14x28xi32>
    %c1_i32 = arith.constant 1 : i32
    %9 = vector.broadcast %c1_i32 : i32 to vector<14x28xi32>
    %10 = arith.addi %8, %9 : vector<14x28xi32>
    %11 = arith.cmpi eq, %1, %10 : vector<14x28xi32>
    %12 = arith.extui %11 : vector<14x28xi1> to vector<14x28xi32>
    %13 = arith.sitofp %12 : vector<14x28xi32> to vector<14x28xf32>
    %c0 = arith.constant 0 : index
    %c0_1 = arith.constant 0 : index
    %14 = vector.load %arg3[%c0, %c0_1] : memref<1x128xf32, #tpu.memory_space<vmem>>, vector<1x128xf32>
    %cst = arith.constant 0.000000e+00 : bf16
    %15 = vector.broadcast %cst : bf16 to vector<16x16x128xbf16>
    %c0_2 = arith.constant 0 : index
    %c0_3 = arith.constant 0 : index
    %c0_4 = arith.constant 0 : index
    %c0_5 = arith.constant 0 : index
    %16 = vector.load %arg4[%c0_2, %c0_3, %c0_4, %c0_5] : memref<1x16x16x128xbf16, #tpu.memory_space<vmem>>, vector<1x16x16x128xbf16>
    %17 = vector.shape_cast %16 : vector<1x16x16x128xbf16> to vector<16x16x128xbf16>
    %18 = vector.shape_cast %15 : vector<16x16x128xbf16> to vector<1x16x16x128xbf16>
    tpu.vector_store %arg4[%c0_2, %c0_3, %c0_4, %c0_5], %18 {strides = array<i32>} : memref<1x16x16x128xbf16, #tpu.memory_space<vmem>>, vector<1x16x16x128xbf16>,
    %c0_i32 = arith.constant 0 : i32
    %c14_i32 = arith.constant 14 : i32
    %19 = arith.addi %c0_i32, %c14_i32 : i32
    %c1_i32_6 = arith.constant 1 : i32
    scf.for %arg5 = %c0_i32 to %19 step %c1_i32_6  : i32 {
      %c2_i32_8 = arith.constant 2 : i32
      %20 = arith.muli %c2_i32_8, %arg5 : i32
      %cst_9 = arith.constant 0.000000e+00 : f32
      %21 = vector.broadcast %cst_9 : f32 to vector<28x128xf32>
      %c0_i32_10 = arith.constant 0 : i32
      %22 = arith.addi %20, %c0_i32_10 : i32
      %c0_11 = arith.constant 0 : index
      %23 = arith.index_cast %22 : i32 to index
      %c0_12 = arith.constant 0 : index
      %c0_13 = arith.constant 0 : index
      %24 = vector.load %arg1[%c0_11, %23, %c0_12, %c0_13] : memref<1x30x30x128xbf16, #tpu.memory_space<vmem>>, vector<1x1x28x128xbf16>
      %25 = vector.shape_cast %24 : vector<1x1x28x128xbf16> to vector<28x128xbf16>
      %c0_14 = arith.constant 0 : index
      %c0_15 = arith.constant 0 : index
      %c0_16 = arith.constant 0 : index
      %26 = vector.load %arg2[%c0_14, %c0_15, %c0_16] : memref<9x128x128xbf16, #tpu.memory_space<vmem>>, vector<1x128x128xbf16>
      %27 = vector.shape_cast %26 : vector<1x128x128xbf16> to vector<128x128xbf16>
      %cst_17 = arith.constant dense<0.000000e+00> : vector<28x128xf32>
      %28 = tpu.matmul %25, %27, %cst_17 {dimension_numbers = #tpu.dot_dimension_numbers<[1], [0], [0], [1], [0, 0, 1, 1], [], []>} : vector<28x128xbf16>, vector<128x128xbf16>, vector<28x128xf32> -> vector<28x128xf32>
      %29 = arith.addf %21, %28 : vector<28x128xf32>
      %c0_i32_18 = arith.constant 0 : i32
      %30 = arith.addi %20, %c0_i32_18 : i32
      %c0_19 = arith.constant 0 : index
      %31 = arith.index_cast %30 : i32 to index
      %c1 = arith.constant 1 : index
      %c0_20 = arith.constant 0 : index
      %32 = vector.load %arg1[%c0_19, %31, %c1, %c0_20] : memref<1x30x30x128xbf16, #tpu.memory_space<vmem>>, vector<1x1x28x128xbf16>
      %33 = vector.shape_cast %32 : vector<1x1x28x128xbf16> to vector<28x128xbf16>
      %c1_21 = arith.constant 1 : index
      %c0_22 = arith.constant 0 : index
      %c0_23 = arith.constant 0 : index
      %34 = vector.load %arg2[%c1_21, %c0_22, %c0_23] : memref<9x128x128xbf16, #tpu.memory_space<vmem>>, vector<1x128x128xbf16>
      %35 = vector.shape_cast %34 : vector<1x128x128xbf16> to vector<128x128xbf16>
      %cst_24 = arith.constant dense<0.000000e+00> : vector<28x128xf32>
      %36 = tpu.matmul %33, %35, %cst_24 {dimension_numbers = #tpu.dot_dimension_numbers<[1], [0], [0], [1], [0, 0, 1, 1], [], []>} : vector<28x128xbf16>, vector<128x128xbf16>, vector<28x128xf32> -> vector<28x128xf32>
      %37 = arith.addf %29, %36 : vector<28x128xf32>
      %c0_i32_25 = arith.constant 0 : i32
      %38 = arith.addi %20, %c0_i32_25 : i32
      %c0_26 = arith.constant 0 : index
      %39 = arith.index_cast %38 : i32 to index
      %c2 = arith.constant 2 : index
      %c0_27 = arith.constant 0 : index
      %40 = vector.load %arg1[%c0_26, %39, %c2, %c0_27] : memref<1x30x30x128xbf16, #tpu.memory_space<vmem>>, vector<1x1x28x128xbf16>
      %41 = vector.shape_cast %40 : vector<1x1x28x128xbf16> to vector<28x128xbf16>
      %c2_28 = arith.constant 2 : index
      %c0_29 = arith.constant 0 : index
      %c0_30 = arith.constant 0 : index
      %42 = vector.load %arg2[%c2_28, %c0_29, %c0_30] : memref<9x128x128xbf16, #tpu.memory_space<vmem>>, vector<1x128x128xbf16>
      %43 = vector.shape_cast %42 : vector<1x128x128xbf16> to vector<128x128xbf16>
      %cst_31 = arith.constant dense<0.000000e+00> : vector<28x128xf32>
      %44 = tpu.matmul %41, %43, %cst_31 {dimension_numbers = #tpu.dot_dimension_numbers<[1], [0], [0], [1], [0, 0, 1, 1], [], []>} : vector<28x128xbf16>, vector<128x128xbf16>, vector<28x128xf32> -> vector<28x128xf32>
      %45 = arith.addf %37, %44 : vector<28x128xf32>
      %c1_i32_32 = arith.constant 1 : i32
      %46 = arith.addi %20, %c1_i32_32 : i32
      %c0_33 = arith.constant 0 : index
      %47 = arith.index_cast %46 : i32 to index
      %c0_34 = arith.constant 0 : index
      %c0_35 = arith.constant 0 : index
      %48 = vector.load %arg1[%c0_33, %47, %c0_34, %c0_35] : memref<1x30x30x128xbf16, #tpu.memory_space<vmem>>, vector<1x1x28x128xbf16>
      %49 = vector.shape_cast %48 : vector<1x1x28x128xbf16> to vector<28x128xbf16>
      %c3 = arith.constant 3 : index
      %c0_36 = arith.constant 0 : index
      %c0_37 = arith.constant 0 : index
      %50 = vector.load %arg2[%c3, %c0_36, %c0_37] : memref<9x128x128xbf16, #tpu.memory_space<vmem>>, vector<1x128x128xbf16>
      %51 = vector.shape_cast %50 : vector<1x128x128xbf16> to vector<128x128xbf16>
      %cst_38 = arith.constant dense<0.000000e+00> : vector<28x128xf32>
      %52 = tpu.matmul %49, %51, %cst_38 {dimension_numbers = #tpu.dot_dimension_numbers<[1], [0], [0], [1], [0, 0, 1, 1], [], []>} : vector<28x128xbf16>, vector<128x128xbf16>, vector<28x128xf32> -> vector<28x128xf32>
      %53 = arith.addf %45, %52 : vector<28x128xf32>
      %c1_i32_39 = arith.constant 1 : i32
      %54 = arith.addi %20, %c1_i32_39 : i32
      %c0_40 = arith.constant 0 : index
      %55 = arith.index_cast %54 : i32 to index
      %c1_41 = arith.constant 1 : index
      %c0_42 = arith.constant 0 : index
      %56 = vector.load %arg1[%c0_40, %55, %c1_41, %c0_42] : memref<1x30x30x128xbf16, #tpu.memory_space<vmem>>, vector<1x1x28x128xbf16>
      %57 = vector.shape_cast %56 : vector<1x1x28x128xbf16> to vector<28x128xbf16>
      %c4 = arith.constant 4 : index
      %c0_43 = arith.constant 0 : index
      %c0_44 = arith.constant 0 : index
      %58 = vector.load %arg2[%c4, %c0_43, %c0_44] : memref<9x128x128xbf16, #tpu.memory_space<vmem>>, vector<1x128x128xbf16>
      %59 = vector.shape_cast %58 : vector<1x128x128xbf16> to vector<128x128xbf16>
      %cst_45 = arith.constant dense<0.000000e+00> : vector<28x128xf32>
      %60 = tpu.matmul %57, %59, %cst_45 {dimension_numbers = #tpu.dot_dimension_numbers<[1], [0], [0], [1], [0, 0, 1, 1], [], []>} : vector<28x128xbf16>, vector<128x128xbf16>, vector<28x128xf32> -> vector<28x128xf32>
      %61 = arith.addf %53, %60 : vector<28x128xf32>
      %c1_i32_46 = arith.constant 1 : i32
      %62 = arith.addi %20, %c1_i32_46 : i32
      %c0_47 = arith.constant 0 : index
      %63 = arith.index_cast %62 : i32 to index
      %c2_48 = arith.constant 2 : index
      %c0_49 = arith.constant 0 : index
      %64 = vector.load %arg1[%c0_47, %63, %c2_48, %c0_49] : memref<1x30x30x128xbf16, #tpu.memory_space<vmem>>, vector<1x1x28x128xbf16>
      %65 = vector.shape_cast %64 : vector<1x1x28x128xbf16> to vector<28x128xbf16>
      %c5 = arith.constant 5 : index
      %c0_50 = arith.constant 0 : index
      %c0_51 = arith.constant 0 : index
      %66 = vector.load %arg2[%c5, %c0_50, %c0_51] : memref<9x128x128xbf16, #tpu.memory_space<vmem>>, vector<1x128x128xbf16>
      %67 = vector.shape_cast %66 : vector<1x128x128xbf16> to vector<128x128xbf16>
      %cst_52 = arith.constant dense<0.000000e+00> : vector<28x128xf32>
      %68 = tpu.matmul %65, %67, %cst_52 {dimension_numbers = #tpu.dot_dimension_numbers<[1], [0], [0], [1], [0, 0, 1, 1], [], []>} : vector<28x128xbf16>, vector<128x128xbf16>, vector<28x128xf32> -> vector<28x128xf32>
      %69 = arith.addf %61, %68 : vector<28x128xf32>
      %c2_i32_53 = arith.constant 2 : i32
      %70 = arith.addi %20, %c2_i32_53 : i32
      %c0_54 = arith.constant 0 : index
      %71 = arith.index_cast %70 : i32 to index
      %c0_55 = arith.constant 0 : index
      %c0_56 = arith.constant 0 : index
      %72 = vector.load %arg1[%c0_54, %71, %c0_55, %c0_56] : memref<1x30x30x128xbf16, #tpu.memory_space<vmem>>, vector<1x1x28x128xbf16>
      %73 = vector.shape_cast %72 : vector<1x1x28x128xbf16> to vector<28x128xbf16>
      %c6 = arith.constant 6 : index
      %c0_57 = arith.constant 0 : index
      %c0_58 = arith.constant 0 : index
      %74 = vector.load %arg2[%c6, %c0_57, %c0_58] : memref<9x128x128xbf16, #tpu.memory_space<vmem>>, vector<1x128x128xbf16>
      %75 = vector.shape_cast %74 : vector<1x128x128xbf16> to vector<128x128xbf16>
      %cst_59 = arith.constant dense<0.000000e+00> : vector<28x128xf32>
      %76 = tpu.matmul %73, %75, %cst_59 {dimension_numbers = #tpu.dot_dimension_numbers<[1], [0], [0], [1], [0, 0, 1, 1], [], []>} : vector<28x128xbf16>, vector<128x128xbf16>, vector<28x128xf32> -> vector<28x128xf32>
      %77 = arith.addf %69, %76 : vector<28x128xf32>
      %c2_i32_60 = arith.constant 2 : i32
      %78 = arith.addi %20, %c2_i32_60 : i32
      %c0_61 = arith.constant 0 : index
      %79 = arith.index_cast %78 : i32 to index
      %c1_62 = arith.constant 1 : index
      %c0_63 = arith.constant 0 : index
      %80 = vector.load %arg1[%c0_61, %79, %c1_62, %c0_63] : memref<1x30x30x128xbf16, #tpu.memory_space<vmem>>, vector<1x1x28x128xbf16>
      %81 = vector.shape_cast %80 : vector<1x1x28x128xbf16> to vector<28x128xbf16>
      %c7 = arith.constant 7 : index
      %c0_64 = arith.constant 0 : index
      %c0_65 = arith.constant 0 : index
      %82 = vector.load %arg2[%c7, %c0_64, %c0_65] : memref<9x128x128xbf16, #tpu.memory_space<vmem>>, vector<1x128x128xbf16>
      %83 = vector.shape_cast %82 : vector<1x128x128xbf16> to vector<128x128xbf16>
      %cst_66 = arith.constant dense<0.000000e+00> : vector<28x128xf32>
      %84 = tpu.matmul %81, %83, %cst_66 {dimension_numbers = #tpu.dot_dimension_numbers<[1], [0], [0], [1], [0, 0, 1, 1], [], []>} : vector<28x128xbf16>, vector<128x128xbf16>, vector<28x128xf32> -> vector<28x128xf32>
      %85 = arith.addf %77, %84 : vector<28x128xf32>
      %c2_i32_67 = arith.constant 2 : i32
      %86 = arith.addi %20, %c2_i32_67 : i32
      %c0_68 = arith.constant 0 : index
      %87 = arith.index_cast %86 : i32 to index
      %c2_69 = arith.constant 2 : index
      %c0_70 = arith.constant 0 : index
      %88 = vector.load %arg1[%c0_68, %87, %c2_69, %c0_70] : memref<1x30x30x128xbf16, #tpu.memory_space<vmem>>, vector<1x1x28x128xbf16>
      %89 = vector.shape_cast %88 : vector<1x1x28x128xbf16> to vector<28x128xbf16>
      %c8 = arith.constant 8 : index
      %c0_71 = arith.constant 0 : index
      %c0_72 = arith.constant 0 : index
      %90 = vector.load %arg2[%c8, %c0_71, %c0_72] : memref<9x128x128xbf16, #tpu.memory_space<vmem>>, vector<1x128x128xbf16>
      %91 = vector.shape_cast %90 : vector<1x128x128xbf16> to vector<128x128xbf16>
      %cst_73 = arith.constant dense<0.000000e+00> : vector<28x128xf32>
      %92 = tpu.matmul %89, %91, %cst_73 {dimension_numbers = #tpu.dot_dimension_numbers<[1], [0], [0], [1], [0, 0, 1, 1], [], []>} : vector<28x128xbf16>, vector<128x128xbf16>, vector<28x128xf32> -> vector<28x128xf32>
      %93 = arith.addf %85, %92 : vector<28x128xf32>
      %c2_i32_74 = arith.constant 2 : i32
      %94 = arith.muli %c2_i32_74, %arg5 : i32
      %c1_i32_75 = arith.constant 1 : i32
      %95 = arith.addi %94, %c1_i32_75 : i32
      %cst_76 = arith.constant 0.000000e+00 : f32
      %96 = vector.broadcast %cst_76 : f32 to vector<28x128xf32>
      %c0_i32_77 = arith.constant 0 : i32
      %97 = arith.addi %95, %c0_i32_77 : i32
      %c0_78 = arith.constant 0 : index
      %98 = arith.index_cast %97 : i32 to index
      %c0_79 = arith.constant 0 : index
      %c0_80 = arith.constant 0 : index
      %99 = vector.load %arg1[%c0_78, %98, %c0_79, %c0_80] : memref<1x30x30x128xbf16, #tpu.memory_space<vmem>>, vector<1x1x28x128xbf16>
      %100 = vector.shape_cast %99 : vector<1x1x28x128xbf16> to vector<28x128xbf16>
      %c0_81 = arith.constant 0 : index
      %c0_82 = arith.constant 0 : index
      %c0_83 = arith.constant 0 : index
      %101 = vector.load %arg2[%c0_81, %c0_82, %c0_83] : memref<9x128x128xbf16, #tpu.memory_space<vmem>>, vector<1x128x128xbf16>
      %102 = vector.shape_cast %101 : vector<1x128x128xbf16> to vector<128x128xbf16>
      %cst_84 = arith.constant dense<0.000000e+00> : vector<28x128xf32>
      %103 = tpu.matmul %100, %102, %cst_84 {dimension_numbers = #tpu.dot_dimension_numbers<[1], [0], [0], [1], [0, 0, 1, 1], [], []>} : vector<28x128xbf16>, vector<128x128xbf16>, vector<28x128xf32> -> vector<28x128xf32>
      %104 = arith.addf %96, %103 : vector<28x128xf32>
      %c0_i32_85 = arith.constant 0 : i32
      %105 = arith.addi %95, %c0_i32_85 : i32
      %c0_86 = arith.constant 0 : index
      %106 = arith.index_cast %105 : i32 to index
      %c1_87 = arith.constant 1 : index
      %c0_88 = arith.constant 0 : index
      %107 = vector.load %arg1[%c0_86, %106, %c1_87, %c0_88] : memref<1x30x30x128xbf16, #tpu.memory_space<vmem>>, vector<1x1x28x128xbf16>
      %108 = vector.shape_cast %107 : vector<1x1x28x128xbf16> to vector<28x128xbf16>
      %c1_89 = arith.constant 1 : index
      %c0_90 = arith.constant 0 : index
      %c0_91 = arith.constant 0 : index
      %109 = vector.load %arg2[%c1_89, %c0_90, %c0_91] : memref<9x128x128xbf16, #tpu.memory_space<vmem>>, vector<1x128x128xbf16>
      %110 = vector.shape_cast %109 : vector<1x128x128xbf16> to vector<128x128xbf16>
      %cst_92 = arith.constant dense<0.000000e+00> : vector<28x128xf32>
      %111 = tpu.matmul %108, %110, %cst_92 {dimension_numbers = #tpu.dot_dimension_numbers<[1], [0], [0], [1], [0, 0, 1, 1], [], []>} : vector<28x128xbf16>, vector<128x128xbf16>, vector<28x128xf32> -> vector<28x128xf32>
      %112 = arith.addf %104, %111 : vector<28x128xf32>
      %c0_i32_93 = arith.constant 0 : i32
      %113 = arith.addi %95, %c0_i32_93 : i32
      %c0_94 = arith.constant 0 : index
      %114 = arith.index_cast %113 : i32 to index
      %c2_95 = arith.constant 2 : index
      %c0_96 = arith.constant 0 : index
      %115 = vector.load %arg1[%c0_94, %114, %c2_95, %c0_96] : memref<1x30x30x128xbf16, #tpu.memory_space<vmem>>, vector<1x1x28x128xbf16>
      %116 = vector.shape_cast %115 : vector<1x1x28x128xbf16> to vector<28x128xbf16>
      %c2_97 = arith.constant 2 : index
      %c0_98 = arith.constant 0 : index
      %c0_99 = arith.constant 0 : index
      %117 = vector.load %arg2[%c2_97, %c0_98, %c0_99] : memref<9x128x128xbf16, #tpu.memory_space<vmem>>, vector<1x128x128xbf16>
      %118 = vector.shape_cast %117 : vector<1x128x128xbf16> to vector<128x128xbf16>
      %cst_100 = arith.constant dense<0.000000e+00> : vector<28x128xf32>
      %119 = tpu.matmul %116, %118, %cst_100 {dimension_numbers = #tpu.dot_dimension_numbers<[1], [0], [0], [1], [0, 0, 1, 1], [], []>} : vector<28x128xbf16>, vector<128x128xbf16>, vector<28x128xf32> -> vector<28x128xf32>
      %120 = arith.addf %112, %119 : vector<28x128xf32>
      %c1_i32_101 = arith.constant 1 : i32
      %121 = arith.addi %95, %c1_i32_101 : i32
      %c0_102 = arith.constant 0 : index
      %122 = arith.index_cast %121 : i32 to index
      %c0_103 = arith.constant 0 : index
      %c0_104 = arith.constant 0 : index
      %123 = vector.load %arg1[%c0_102, %122, %c0_103, %c0_104] : memref<1x30x30x128xbf16, #tpu.memory_space<vmem>>, vector<1x1x28x128xbf16>
      %124 = vector.shape_cast %123 : vector<1x1x28x128xbf16> to vector<28x128xbf16>
      %c3_105 = arith.constant 3 : index
      %c0_106 = arith.constant 0 : index
      %c0_107 = arith.constant 0 : index
      %125 = vector.load %arg2[%c3_105, %c0_106, %c0_107] : memref<9x128x128xbf16, #tpu.memory_space<vmem>>, vector<1x128x128xbf16>
      %126 = vector.shape_cast %125 : vector<1x128x128xbf16> to vector<128x128xbf16>
      %cst_108 = arith.constant dense<0.000000e+00> : vector<28x128xf32>
      %127 = tpu.matmul %124, %126, %cst_108 {dimension_numbers = #tpu.dot_dimension_numbers<[1], [0], [0], [1], [0, 0, 1, 1], [], []>} : vector<28x128xbf16>, vector<128x128xbf16>, vector<28x128xf32> -> vector<28x128xf32>
      %128 = arith.addf %120, %127 : vector<28x128xf32>
      %c1_i32_109 = arith.constant 1 : i32
      %129 = arith.addi %95, %c1_i32_109 : i32
      %c0_110 = arith.constant 0 : index
      %130 = arith.index_cast %129 : i32 to index
      %c1_111 = arith.constant 1 : index
      %c0_112 = arith.constant 0 : index
      %131 = vector.load %arg1[%c0_110, %130, %c1_111, %c0_112] : memref<1x30x30x128xbf16, #tpu.memory_space<vmem>>, vector<1x1x28x128xbf16>
      %132 = vector.shape_cast %131 : vector<1x1x28x128xbf16> to vector<28x128xbf16>
      %c4_113 = arith.constant 4 : index
      %c0_114 = arith.constant 0 : index
      %c0_115 = arith.constant 0 : index
      %133 = vector.load %arg2[%c4_113, %c0_114, %c0_115] : memref<9x128x128xbf16, #tpu.memory_space<vmem>>, vector<1x128x128xbf16>
      %134 = vector.shape_cast %133 : vector<1x128x128xbf16> to vector<128x128xbf16>
      %cst_116 = arith.constant dense<0.000000e+00> : vector<28x128xf32>
      %135 = tpu.matmul %132, %134, %cst_116 {dimension_numbers = #tpu.dot_dimension_numbers<[1], [0], [0], [1], [0, 0, 1, 1], [], []>} : vector<28x128xbf16>, vector<128x128xbf16>, vector<28x128xf32> -> vector<28x128xf32>
      %136 = arith.addf %128, %135 : vector<28x128xf32>
      %c1_i32_117 = arith.constant 1 : i32
      %137 = arith.addi %95, %c1_i32_117 : i32
      %c0_118 = arith.constant 0 : index
      %138 = arith.index_cast %137 : i32 to index
      %c2_119 = arith.constant 2 : index
      %c0_120 = arith.constant 0 : index
      %139 = vector.load %arg1[%c0_118, %138, %c2_119, %c0_120] : memref<1x30x30x128xbf16, #tpu.memory_space<vmem>>, vector<1x1x28x128xbf16>
      %140 = vector.shape_cast %139 : vector<1x1x28x128xbf16> to vector<28x128xbf16>
      %c5_121 = arith.constant 5 : index
      %c0_122 = arith.constant 0 : index
      %c0_123 = arith.constant 0 : index
      %141 = vector.load %arg2[%c5_121, %c0_122, %c0_123] : memref<9x128x128xbf16, #tpu.memory_space<vmem>>, vector<1x128x128xbf16>
      %142 = vector.shape_cast %141 : vector<1x128x128xbf16> to vector<128x128xbf16>
      %cst_124 = arith.constant dense<0.000000e+00> : vector<28x128xf32>
      %143 = tpu.matmul %140, %142, %cst_124 {dimension_numbers = #tpu.dot_dimension_numbers<[1], [0], [0], [1], [0, 0, 1, 1], [], []>} : vector<28x128xbf16>, vector<128x128xbf16>, vector<28x128xf32> -> vector<28x128xf32>
      %144 = arith.addf %136, %143 : vector<28x128xf32>
      %c2_i32_125 = arith.constant 2 : i32
      %145 = arith.addi %95, %c2_i32_125 : i32
      %c0_126 = arith.constant 0 : index
      %146 = arith.index_cast %145 : i32 to index
      %c0_127 = arith.constant 0 : index
      %c0_128 = arith.constant 0 : index
      %147 = vector.load %arg1[%c0_126, %146, %c0_127, %c0_128] : memref<1x30x30x128xbf16, #tpu.memory_space<vmem>>, vector<1x1x28x128xbf16>
      %148 = vector.shape_cast %147 : vector<1x1x28x128xbf16> to vector<28x128xbf16>
      %c6_129 = arith.constant 6 : index
      %c0_130 = arith.constant 0 : index
      %c0_131 = arith.constant 0 : index
      %149 = vector.load %arg2[%c6_129, %c0_130, %c0_131] : memref<9x128x128xbf16, #tpu.memory_space<vmem>>, vector<1x128x128xbf16>
      %150 = vector.shape_cast %149 : vector<1x128x128xbf16> to vector<128x128xbf16>
      %cst_132 = arith.constant dense<0.000000e+00> : vector<28x128xf32>
      %151 = tpu.matmul %148, %150, %cst_132 {dimension_numbers = #tpu.dot_dimension_numbers<[1], [0], [0], [1], [0, 0, 1, 1], [], []>} : vector<28x128xbf16>, vector<128x128xbf16>, vector<28x128xf32> -> vector<28x128xf32>
      %152 = arith.addf %144, %151 : vector<28x128xf32>
      %c2_i32_133 = arith.constant 2 : i32
      %153 = arith.addi %95, %c2_i32_133 : i32
      %c0_134 = arith.constant 0 : index
      %154 = arith.index_cast %153 : i32 to index
      %c1_135 = arith.constant 1 : index
      %c0_136 = arith.constant 0 : index
      %155 = vector.load %arg1[%c0_134, %154, %c1_135, %c0_136] : memref<1x30x30x128xbf16, #tpu.memory_space<vmem>>, vector<1x1x28x128xbf16>
      %156 = vector.shape_cast %155 : vector<1x1x28x128xbf16> to vector<28x128xbf16>
      %c7_137 = arith.constant 7 : index
      %c0_138 = arith.constant 0 : index
      %c0_139 = arith.constant 0 : index
      %157 = vector.load %arg2[%c7_137, %c0_138, %c0_139] : memref<9x128x128xbf16, #tpu.memory_space<vmem>>, vector<1x128x128xbf16>
      %158 = vector.shape_cast %157 : vector<1x128x128xbf16> to vector<128x128xbf16>
      %cst_140 = arith.constant dense<0.000000e+00> : vector<28x128xf32>
      %159 = tpu.matmul %156, %158, %cst_140 {dimension_numbers = #tpu.dot_dimension_numbers<[1], [0], [0], [1], [0, 0, 1, 1], [], []>} : vector<28x128xbf16>, vector<128x128xbf16>, vector<28x128xf32> -> vector<28x128xf32>
      %160 = arith.addf %152, %159 : vector<28x128xf32>
      %c2_i32_141 = arith.constant 2 : i32
      %161 = arith.addi %95, %c2_i32_141 : i32
      %c0_142 = arith.constant 0 : index
      %162 = arith.index_cast %161 : i32 to index
      %c2_143 = arith.constant 2 : index
      %c0_144 = arith.constant 0 : index
      %163 = vector.load %arg1[%c0_142, %162, %c2_143, %c0_144] : memref<1x30x30x128xbf16, #tpu.memory_space<vmem>>, vector<1x1x28x128xbf16>
      %164 = vector.shape_cast %163 : vector<1x1x28x128xbf16> to vector<28x128xbf16>
      %c8_145 = arith.constant 8 : index
      %c0_146 = arith.constant 0 : index
      %c0_147 = arith.constant 0 : index
      %165 = vector.load %arg2[%c8_145, %c0_146, %c0_147] : memref<9x128x128xbf16, #tpu.memory_space<vmem>>, vector<1x128x128xbf16>
      %166 = vector.shape_cast %165 : vector<1x128x128xbf16> to vector<128x128xbf16>
      %cst_148 = arith.constant dense<0.000000e+00> : vector<28x128xf32>
      %167 = tpu.matmul %164, %166, %cst_148 {dimension_numbers = #tpu.dot_dimension_numbers<[1], [0], [0], [1], [0, 0, 1, 1], [], []>} : vector<28x128xbf16>, vector<128x128xbf16>, vector<28x128xf32> -> vector<28x128xf32>
      %168 = arith.addf %160, %167 : vector<28x128xf32>
      %169 = arith.maximumf %93, %168 : vector<28x128xf32>
      %cst_149 = arith.constant dense<0.000000e+00> : vector<14x128xf32>
      %170 = tpu.matmul %6, %169, %cst_149 {dimension_numbers = #tpu.dot_dimension_numbers<[1], [0], [0], [1], [0, 0, 1, 1], [], []>} : vector<14x28xf32>, vector<28x128xf32>, vector<14x128xf32> -> vector<14x128xf32>
      %cst_150 = arith.constant dense<0.000000e+00> : vector<14x128xf32>
      %171 = tpu.matmul %13, %169, %cst_150 {dimension_numbers = #tpu.dot_dimension_numbers<[1], [0], [0], [1], [0, 0, 1, 1], [], []>} : vector<14x28xf32>, vector<28x128xf32>, vector<14x128xf32> -> vector<14x128xf32>
      %172 = arith.maximumf %170, %171 : vector<14x128xf32>
      %173 = vector.broadcast %14 : vector<1x128xf32> to vector<14x128xf32>
      %174 = arith.addf %172, %173 : vector<14x128xf32>
      %cst_151 = arith.constant 0.000000e+00 : f32
      %175 = vector.broadcast %cst_151 : f32 to vector<14x128xf32>
      %176 = arith.maximumf %174, %175 : vector<14x128xf32>
      %177 = arith.truncf %176 : vector<14x128xf32> to vector<14x128xbf16>
      %c1_i32_152 = arith.constant 1 : i32
      %178 = arith.addi %arg5, %c1_i32_152 : i32
      %c0_153 = arith.constant 0 : index
      %179 = arith.index_cast %178 : i32 to index
      %c1_154 = arith.constant 1 : index
      %c0_155 = arith.constant 0 : index
      %180 = vector.load %arg4[%c0_153, %179, %c1_154, %c0_155] : memref<1x16x16x128xbf16, #tpu.memory_space<vmem>>, vector<1x1x14x128xbf16>
      %181 = vector.shape_cast %180 : vector<1x1x14x128xbf16> to vector<14x128xbf16>
      %182 = vector.shape_cast %177 : vector<14x128xbf16> to vector<1x1x14x128xbf16>
      tpu.vector_store %arg4[%c0_153, %179, %c1_154, %c0_155], %182 {strides = array<i32>} : memref<1x16x16x128xbf16, #tpu.memory_space<vmem>>, vector<1x1x14x128xbf16>,
    }
    %c14_i32_7 = arith.constant 14 : i32
    return
  }
  func.func @transform_0(%arg0: i32) -> (i32, i32, i32, i32) {
    %c0_i32 = arith.constant 0 : i32
    %c0_i32_0 = arith.constant 0 : i32
    %c0_i32_1 = arith.constant 0 : i32
    %c0_i32_2 = arith.constant 0 : i32
    return %arg0, %c0_i32, %c0_i32_0, %c0_i32_1 : i32, i32, i32, i32
  }
  func.func @transform_1(%arg0: i32) -> (i32, i32, i32) {
    %c0_i32 = arith.constant 0 : i32
    %c0_i32_0 = arith.constant 0 : i32
    %c0_i32_1 = arith.constant 0 : i32
    %c0_i32_2 = arith.constant 0 : i32
    return %c0_i32, %c0_i32_0, %c0_i32_1 : i32, i32, i32
  }
  func.func @transform_2(%arg0: i32) -> (i32, i32) {
    %c0_i32 = arith.constant 0 : i32
    %c0_i32_0 = arith.constant 0 : i32
    %c0_i32_1 = arith.constant 0 : i32
    return %c0_i32, %c0_i32_0 : i32, i32
  }
  func.func @transform_3(%arg0: i32) -> (i32, i32, i32, i32) {
    %c0_i32 = arith.constant 0 : i32
    %c0_i32_0 = arith.constant 0 : i32
    %c0_i32_1 = arith.constant 0 : i32
    %c0_i32_2 = arith.constant 0 : i32
    return %arg0, %c0_i32, %c0_i32_0, %c0_i32_1 : i32, i32, i32, i32
  }
}

module attributes {stable_mosaic.version = 11 : i64} {
  func.func @_conv_relu_pool_kernel(%arg0: i32, %arg1: memref<1x16x16x128xbf16, #tpu.memory_space<vmem>>, %arg2: memref<9x128x128xbf16, #tpu.memory_space<vmem>>, %arg3: memref<1x128xf32, #tpu.memory_space<vmem>>, %arg4: memref<1x9x9x128xbf16, #tpu.memory_space<vmem>>) attributes {dimension_semantics = [#tpu.dimension_semantics<parallel>], iteration_bounds = array<i64: 2>, scalar_prefetch = 0 : i64, scratch_operands = 0 : i64, tpu.core_type = #tpu.core_type<tc>, window_params = [{transform_indices = @transform_0, window_bounds = array<i64: 1, 16, 16, 128>}, {pipeline_mode = #tpu.pipeline_mode<synchronous>, transform_indices = @transform_1, window_bounds = array<i64: 9, 128, 128>}, {pipeline_mode = #tpu.pipeline_mode<synchronous>, transform_indices = @transform_2, window_bounds = array<i64: 1, 128>}, {transform_indices = @transform_3, window_bounds = array<i64: 1, 9, 9, 128>}]} {
    %0 = tpu.iota {dimensions = array<i32: 0>} : vector<7x14xi32>
    %1 = tpu.iota {dimensions = array<i32: 1>} : vector<7x14xi32>
    %c2_i32 = arith.constant 2 : i32
    %2 = vector.broadcast %c2_i32 : i32 to vector<7x14xi32>
    %3 = arith.muli %2, %0 : vector<7x14xi32>
    %4 = arith.cmpi eq, %1, %3 : vector<7x14xi32>
    %5 = arith.extui %4 : vector<7x14xi1> to vector<7x14xi32>
    %6 = arith.sitofp %5 : vector<7x14xi32> to vector<7x14xf32>
    %c2_i32_0 = arith.constant 2 : i32
    %7 = vector.broadcast %c2_i32_0 : i32 to vector<7x14xi32>
    %8 = arith.muli %7, %0 : vector<7x14xi32>
    %c1_i32 = arith.constant 1 : i32
    %9 = vector.broadcast %c1_i32 : i32 to vector<7x14xi32>
    %10 = arith.addi %8, %9 : vector<7x14xi32>
    %11 = arith.cmpi eq, %1, %10 : vector<7x14xi32>
    %12 = arith.extui %11 : vector<7x14xi1> to vector<7x14xi32>
    %13 = arith.sitofp %12 : vector<7x14xi32> to vector<7x14xf32>
    %c0 = arith.constant 0 : index
    %c0_1 = arith.constant 0 : index
    %14 = vector.load %arg3[%c0, %c0_1] : memref<1x128xf32, #tpu.memory_space<vmem>>, vector<1x128xf32>
    %cst = arith.constant 0.000000e+00 : bf16
    %15 = vector.broadcast %cst : bf16 to vector<9x9x128xbf16>
    %c0_2 = arith.constant 0 : index
    %c0_3 = arith.constant 0 : index
    %c0_4 = arith.constant 0 : index
    %c0_5 = arith.constant 0 : index
    %16 = vector.load %arg4[%c0_2, %c0_3, %c0_4, %c0_5] : memref<1x9x9x128xbf16, #tpu.memory_space<vmem>>, vector<1x9x9x128xbf16>
    %17 = vector.shape_cast %16 : vector<1x9x9x128xbf16> to vector<9x9x128xbf16>
    %18 = vector.shape_cast %15 : vector<9x9x128xbf16> to vector<1x9x9x128xbf16>
    tpu.vector_store %arg4[%c0_2, %c0_3, %c0_4, %c0_5], %18 {strides = array<i32>} : memref<1x9x9x128xbf16, #tpu.memory_space<vmem>>, vector<1x9x9x128xbf16>,
    %c0_i32 = arith.constant 0 : i32
    %c7_i32 = arith.constant 7 : i32
    %19 = arith.addi %c0_i32, %c7_i32 : i32
    %c1_i32_6 = arith.constant 1 : i32
    scf.for %arg5 = %c0_i32 to %19 step %c1_i32_6  : i32 {
      %c2_i32_8 = arith.constant 2 : i32
      %20 = arith.muli %c2_i32_8, %arg5 : i32
      %cst_9 = arith.constant 0.000000e+00 : f32
      %21 = vector.broadcast %cst_9 : f32 to vector<14x128xf32>
      %c0_i32_10 = arith.constant 0 : i32
      %22 = arith.addi %20, %c0_i32_10 : i32
      %c0_11 = arith.constant 0 : index
      %23 = arith.index_cast %22 : i32 to index
      %c0_12 = arith.constant 0 : index
      %c0_13 = arith.constant 0 : index
      %24 = vector.load %arg1[%c0_11, %23, %c0_12, %c0_13] : memref<1x16x16x128xbf16, #tpu.memory_space<vmem>>, vector<1x1x14x128xbf16>
      %25 = vector.shape_cast %24 : vector<1x1x14x128xbf16> to vector<14x128xbf16>
      %c0_14 = arith.constant 0 : index
      %c0_15 = arith.constant 0 : index
      %c0_16 = arith.constant 0 : index
      %26 = vector.load %arg2[%c0_14, %c0_15, %c0_16] : memref<9x128x128xbf16, #tpu.memory_space<vmem>>, vector<1x128x128xbf16>
      %27 = vector.shape_cast %26 : vector<1x128x128xbf16> to vector<128x128xbf16>
      %cst_17 = arith.constant dense<0.000000e+00> : vector<14x128xf32>
      %28 = tpu.matmul %25, %27, %cst_17 {dimension_numbers = #tpu.dot_dimension_numbers<[1], [0], [0], [1], [0, 0, 1, 1], [], []>} : vector<14x128xbf16>, vector<128x128xbf16>, vector<14x128xf32> -> vector<14x128xf32>
      %29 = arith.addf %21, %28 : vector<14x128xf32>
      %c0_i32_18 = arith.constant 0 : i32
      %30 = arith.addi %20, %c0_i32_18 : i32
      %c0_19 = arith.constant 0 : index
      %31 = arith.index_cast %30 : i32 to index
      %c1 = arith.constant 1 : index
      %c0_20 = arith.constant 0 : index
      %32 = vector.load %arg1[%c0_19, %31, %c1, %c0_20] : memref<1x16x16x128xbf16, #tpu.memory_space<vmem>>, vector<1x1x14x128xbf16>
      %33 = vector.shape_cast %32 : vector<1x1x14x128xbf16> to vector<14x128xbf16>
      %c1_21 = arith.constant 1 : index
      %c0_22 = arith.constant 0 : index
      %c0_23 = arith.constant 0 : index
      %34 = vector.load %arg2[%c1_21, %c0_22, %c0_23] : memref<9x128x128xbf16, #tpu.memory_space<vmem>>, vector<1x128x128xbf16>
      %35 = vector.shape_cast %34 : vector<1x128x128xbf16> to vector<128x128xbf16>
      %cst_24 = arith.constant dense<0.000000e+00> : vector<14x128xf32>
      %36 = tpu.matmul %33, %35, %cst_24 {dimension_numbers = #tpu.dot_dimension_numbers<[1], [0], [0], [1], [0, 0, 1, 1], [], []>} : vector<14x128xbf16>, vector<128x128xbf16>, vector<14x128xf32> -> vector<14x128xf32>
      %37 = arith.addf %29, %36 : vector<14x128xf32>
      %c0_i32_25 = arith.constant 0 : i32
      %38 = arith.addi %20, %c0_i32_25 : i32
      %c0_26 = arith.constant 0 : index
      %39 = arith.index_cast %38 : i32 to index
      %c2 = arith.constant 2 : index
      %c0_27 = arith.constant 0 : index
      %40 = vector.load %arg1[%c0_26, %39, %c2, %c0_27] : memref<1x16x16x128xbf16, #tpu.memory_space<vmem>>, vector<1x1x14x128xbf16>
      %41 = vector.shape_cast %40 : vector<1x1x14x128xbf16> to vector<14x128xbf16>
      %c2_28 = arith.constant 2 : index
      %c0_29 = arith.constant 0 : index
      %c0_30 = arith.constant 0 : index
      %42 = vector.load %arg2[%c2_28, %c0_29, %c0_30] : memref<9x128x128xbf16, #tpu.memory_space<vmem>>, vector<1x128x128xbf16>
      %43 = vector.shape_cast %42 : vector<1x128x128xbf16> to vector<128x128xbf16>
      %cst_31 = arith.constant dense<0.000000e+00> : vector<14x128xf32>
      %44 = tpu.matmul %41, %43, %cst_31 {dimension_numbers = #tpu.dot_dimension_numbers<[1], [0], [0], [1], [0, 0, 1, 1], [], []>} : vector<14x128xbf16>, vector<128x128xbf16>, vector<14x128xf32> -> vector<14x128xf32>
      %45 = arith.addf %37, %44 : vector<14x128xf32>
      %c1_i32_32 = arith.constant 1 : i32
      %46 = arith.addi %20, %c1_i32_32 : i32
      %c0_33 = arith.constant 0 : index
      %47 = arith.index_cast %46 : i32 to index
      %c0_34 = arith.constant 0 : index
      %c0_35 = arith.constant 0 : index
      %48 = vector.load %arg1[%c0_33, %47, %c0_34, %c0_35] : memref<1x16x16x128xbf16, #tpu.memory_space<vmem>>, vector<1x1x14x128xbf16>
      %49 = vector.shape_cast %48 : vector<1x1x14x128xbf16> to vector<14x128xbf16>
      %c3 = arith.constant 3 : index
      %c0_36 = arith.constant 0 : index
      %c0_37 = arith.constant 0 : index
      %50 = vector.load %arg2[%c3, %c0_36, %c0_37] : memref<9x128x128xbf16, #tpu.memory_space<vmem>>, vector<1x128x128xbf16>
      %51 = vector.shape_cast %50 : vector<1x128x128xbf16> to vector<128x128xbf16>
      %cst_38 = arith.constant dense<0.000000e+00> : vector<14x128xf32>
      %52 = tpu.matmul %49, %51, %cst_38 {dimension_numbers = #tpu.dot_dimension_numbers<[1], [0], [0], [1], [0, 0, 1, 1], [], []>} : vector<14x128xbf16>, vector<128x128xbf16>, vector<14x128xf32> -> vector<14x128xf32>
      %53 = arith.addf %45, %52 : vector<14x128xf32>
      %c1_i32_39 = arith.constant 1 : i32
      %54 = arith.addi %20, %c1_i32_39 : i32
      %c0_40 = arith.constant 0 : index
      %55 = arith.index_cast %54 : i32 to index
      %c1_41 = arith.constant 1 : index
      %c0_42 = arith.constant 0 : index
      %56 = vector.load %arg1[%c0_40, %55, %c1_41, %c0_42] : memref<1x16x16x128xbf16, #tpu.memory_space<vmem>>, vector<1x1x14x128xbf16>
      %57 = vector.shape_cast %56 : vector<1x1x14x128xbf16> to vector<14x128xbf16>
      %c4 = arith.constant 4 : index
      %c0_43 = arith.constant 0 : index
      %c0_44 = arith.constant 0 : index
      %58 = vector.load %arg2[%c4, %c0_43, %c0_44] : memref<9x128x128xbf16, #tpu.memory_space<vmem>>, vector<1x128x128xbf16>
      %59 = vector.shape_cast %58 : vector<1x128x128xbf16> to vector<128x128xbf16>
      %cst_45 = arith.constant dense<0.000000e+00> : vector<14x128xf32>
      %60 = tpu.matmul %57, %59, %cst_45 {dimension_numbers = #tpu.dot_dimension_numbers<[1], [0], [0], [1], [0, 0, 1, 1], [], []>} : vector<14x128xbf16>, vector<128x128xbf16>, vector<14x128xf32> -> vector<14x128xf32>
      %61 = arith.addf %53, %60 : vector<14x128xf32>
      %c1_i32_46 = arith.constant 1 : i32
      %62 = arith.addi %20, %c1_i32_46 : i32
      %c0_47 = arith.constant 0 : index
      %63 = arith.index_cast %62 : i32 to index
      %c2_48 = arith.constant 2 : index
      %c0_49 = arith.constant 0 : index
      %64 = vector.load %arg1[%c0_47, %63, %c2_48, %c0_49] : memref<1x16x16x128xbf16, #tpu.memory_space<vmem>>, vector<1x1x14x128xbf16>
      %65 = vector.shape_cast %64 : vector<1x1x14x128xbf16> to vector<14x128xbf16>
      %c5 = arith.constant 5 : index
      %c0_50 = arith.constant 0 : index
      %c0_51 = arith.constant 0 : index
      %66 = vector.load %arg2[%c5, %c0_50, %c0_51] : memref<9x128x128xbf16, #tpu.memory_space<vmem>>, vector<1x128x128xbf16>
      %67 = vector.shape_cast %66 : vector<1x128x128xbf16> to vector<128x128xbf16>
      %cst_52 = arith.constant dense<0.000000e+00> : vector<14x128xf32>
      %68 = tpu.matmul %65, %67, %cst_52 {dimension_numbers = #tpu.dot_dimension_numbers<[1], [0], [0], [1], [0, 0, 1, 1], [], []>} : vector<14x128xbf16>, vector<128x128xbf16>, vector<14x128xf32> -> vector<14x128xf32>
      %69 = arith.addf %61, %68 : vector<14x128xf32>
      %c2_i32_53 = arith.constant 2 : i32
      %70 = arith.addi %20, %c2_i32_53 : i32
      %c0_54 = arith.constant 0 : index
      %71 = arith.index_cast %70 : i32 to index
      %c0_55 = arith.constant 0 : index
      %c0_56 = arith.constant 0 : index
      %72 = vector.load %arg1[%c0_54, %71, %c0_55, %c0_56] : memref<1x16x16x128xbf16, #tpu.memory_space<vmem>>, vector<1x1x14x128xbf16>
      %73 = vector.shape_cast %72 : vector<1x1x14x128xbf16> to vector<14x128xbf16>
      %c6 = arith.constant 6 : index
      %c0_57 = arith.constant 0 : index
      %c0_58 = arith.constant 0 : index
      %74 = vector.load %arg2[%c6, %c0_57, %c0_58] : memref<9x128x128xbf16, #tpu.memory_space<vmem>>, vector<1x128x128xbf16>
      %75 = vector.shape_cast %74 : vector<1x128x128xbf16> to vector<128x128xbf16>
      %cst_59 = arith.constant dense<0.000000e+00> : vector<14x128xf32>
      %76 = tpu.matmul %73, %75, %cst_59 {dimension_numbers = #tpu.dot_dimension_numbers<[1], [0], [0], [1], [0, 0, 1, 1], [], []>} : vector<14x128xbf16>, vector<128x128xbf16>, vector<14x128xf32> -> vector<14x128xf32>
      %77 = arith.addf %69, %76 : vector<14x128xf32>
      %c2_i32_60 = arith.constant 2 : i32
      %78 = arith.addi %20, %c2_i32_60 : i32
      %c0_61 = arith.constant 0 : index
      %79 = arith.index_cast %78 : i32 to index
      %c1_62 = arith.constant 1 : index
      %c0_63 = arith.constant 0 : index
      %80 = vector.load %arg1[%c0_61, %79, %c1_62, %c0_63] : memref<1x16x16x128xbf16, #tpu.memory_space<vmem>>, vector<1x1x14x128xbf16>
      %81 = vector.shape_cast %80 : vector<1x1x14x128xbf16> to vector<14x128xbf16>
      %c7 = arith.constant 7 : index
      %c0_64 = arith.constant 0 : index
      %c0_65 = arith.constant 0 : index
      %82 = vector.load %arg2[%c7, %c0_64, %c0_65] : memref<9x128x128xbf16, #tpu.memory_space<vmem>>, vector<1x128x128xbf16>
      %83 = vector.shape_cast %82 : vector<1x128x128xbf16> to vector<128x128xbf16>
      %cst_66 = arith.constant dense<0.000000e+00> : vector<14x128xf32>
      %84 = tpu.matmul %81, %83, %cst_66 {dimension_numbers = #tpu.dot_dimension_numbers<[1], [0], [0], [1], [0, 0, 1, 1], [], []>} : vector<14x128xbf16>, vector<128x128xbf16>, vector<14x128xf32> -> vector<14x128xf32>
      %85 = arith.addf %77, %84 : vector<14x128xf32>
      %c2_i32_67 = arith.constant 2 : i32
      %86 = arith.addi %20, %c2_i32_67 : i32
      %c0_68 = arith.constant 0 : index
      %87 = arith.index_cast %86 : i32 to index
      %c2_69 = arith.constant 2 : index
      %c0_70 = arith.constant 0 : index
      %88 = vector.load %arg1[%c0_68, %87, %c2_69, %c0_70] : memref<1x16x16x128xbf16, #tpu.memory_space<vmem>>, vector<1x1x14x128xbf16>
      %89 = vector.shape_cast %88 : vector<1x1x14x128xbf16> to vector<14x128xbf16>
      %c8 = arith.constant 8 : index
      %c0_71 = arith.constant 0 : index
      %c0_72 = arith.constant 0 : index
      %90 = vector.load %arg2[%c8, %c0_71, %c0_72] : memref<9x128x128xbf16, #tpu.memory_space<vmem>>, vector<1x128x128xbf16>
      %91 = vector.shape_cast %90 : vector<1x128x128xbf16> to vector<128x128xbf16>
      %cst_73 = arith.constant dense<0.000000e+00> : vector<14x128xf32>
      %92 = tpu.matmul %89, %91, %cst_73 {dimension_numbers = #tpu.dot_dimension_numbers<[1], [0], [0], [1], [0, 0, 1, 1], [], []>} : vector<14x128xbf16>, vector<128x128xbf16>, vector<14x128xf32> -> vector<14x128xf32>
      %93 = arith.addf %85, %92 : vector<14x128xf32>
      %c2_i32_74 = arith.constant 2 : i32
      %94 = arith.muli %c2_i32_74, %arg5 : i32
      %c1_i32_75 = arith.constant 1 : i32
      %95 = arith.addi %94, %c1_i32_75 : i32
      %cst_76 = arith.constant 0.000000e+00 : f32
      %96 = vector.broadcast %cst_76 : f32 to vector<14x128xf32>
      %c0_i32_77 = arith.constant 0 : i32
      %97 = arith.addi %95, %c0_i32_77 : i32
      %c0_78 = arith.constant 0 : index
      %98 = arith.index_cast %97 : i32 to index
      %c0_79 = arith.constant 0 : index
      %c0_80 = arith.constant 0 : index
      %99 = vector.load %arg1[%c0_78, %98, %c0_79, %c0_80] : memref<1x16x16x128xbf16, #tpu.memory_space<vmem>>, vector<1x1x14x128xbf16>
      %100 = vector.shape_cast %99 : vector<1x1x14x128xbf16> to vector<14x128xbf16>
      %c0_81 = arith.constant 0 : index
      %c0_82 = arith.constant 0 : index
      %c0_83 = arith.constant 0 : index
      %101 = vector.load %arg2[%c0_81, %c0_82, %c0_83] : memref<9x128x128xbf16, #tpu.memory_space<vmem>>, vector<1x128x128xbf16>
      %102 = vector.shape_cast %101 : vector<1x128x128xbf16> to vector<128x128xbf16>
      %cst_84 = arith.constant dense<0.000000e+00> : vector<14x128xf32>
      %103 = tpu.matmul %100, %102, %cst_84 {dimension_numbers = #tpu.dot_dimension_numbers<[1], [0], [0], [1], [0, 0, 1, 1], [], []>} : vector<14x128xbf16>, vector<128x128xbf16>, vector<14x128xf32> -> vector<14x128xf32>
      %104 = arith.addf %96, %103 : vector<14x128xf32>
      %c0_i32_85 = arith.constant 0 : i32
      %105 = arith.addi %95, %c0_i32_85 : i32
      %c0_86 = arith.constant 0 : index
      %106 = arith.index_cast %105 : i32 to index
      %c1_87 = arith.constant 1 : index
      %c0_88 = arith.constant 0 : index
      %107 = vector.load %arg1[%c0_86, %106, %c1_87, %c0_88] : memref<1x16x16x128xbf16, #tpu.memory_space<vmem>>, vector<1x1x14x128xbf16>
      %108 = vector.shape_cast %107 : vector<1x1x14x128xbf16> to vector<14x128xbf16>
      %c1_89 = arith.constant 1 : index
      %c0_90 = arith.constant 0 : index
      %c0_91 = arith.constant 0 : index
      %109 = vector.load %arg2[%c1_89, %c0_90, %c0_91] : memref<9x128x128xbf16, #tpu.memory_space<vmem>>, vector<1x128x128xbf16>
      %110 = vector.shape_cast %109 : vector<1x128x128xbf16> to vector<128x128xbf16>
      %cst_92 = arith.constant dense<0.000000e+00> : vector<14x128xf32>
      %111 = tpu.matmul %108, %110, %cst_92 {dimension_numbers = #tpu.dot_dimension_numbers<[1], [0], [0], [1], [0, 0, 1, 1], [], []>} : vector<14x128xbf16>, vector<128x128xbf16>, vector<14x128xf32> -> vector<14x128xf32>
      %112 = arith.addf %104, %111 : vector<14x128xf32>
      %c0_i32_93 = arith.constant 0 : i32
      %113 = arith.addi %95, %c0_i32_93 : i32
      %c0_94 = arith.constant 0 : index
      %114 = arith.index_cast %113 : i32 to index
      %c2_95 = arith.constant 2 : index
      %c0_96 = arith.constant 0 : index
      %115 = vector.load %arg1[%c0_94, %114, %c2_95, %c0_96] : memref<1x16x16x128xbf16, #tpu.memory_space<vmem>>, vector<1x1x14x128xbf16>
      %116 = vector.shape_cast %115 : vector<1x1x14x128xbf16> to vector<14x128xbf16>
      %c2_97 = arith.constant 2 : index
      %c0_98 = arith.constant 0 : index
      %c0_99 = arith.constant 0 : index
      %117 = vector.load %arg2[%c2_97, %c0_98, %c0_99] : memref<9x128x128xbf16, #tpu.memory_space<vmem>>, vector<1x128x128xbf16>
      %118 = vector.shape_cast %117 : vector<1x128x128xbf16> to vector<128x128xbf16>
      %cst_100 = arith.constant dense<0.000000e+00> : vector<14x128xf32>
      %119 = tpu.matmul %116, %118, %cst_100 {dimension_numbers = #tpu.dot_dimension_numbers<[1], [0], [0], [1], [0, 0, 1, 1], [], []>} : vector<14x128xbf16>, vector<128x128xbf16>, vector<14x128xf32> -> vector<14x128xf32>
      %120 = arith.addf %112, %119 : vector<14x128xf32>
      %c1_i32_101 = arith.constant 1 : i32
      %121 = arith.addi %95, %c1_i32_101 : i32
      %c0_102 = arith.constant 0 : index
      %122 = arith.index_cast %121 : i32 to index
      %c0_103 = arith.constant 0 : index
      %c0_104 = arith.constant 0 : index
      %123 = vector.load %arg1[%c0_102, %122, %c0_103, %c0_104] : memref<1x16x16x128xbf16, #tpu.memory_space<vmem>>, vector<1x1x14x128xbf16>
      %124 = vector.shape_cast %123 : vector<1x1x14x128xbf16> to vector<14x128xbf16>
      %c3_105 = arith.constant 3 : index
      %c0_106 = arith.constant 0 : index
      %c0_107 = arith.constant 0 : index
      %125 = vector.load %arg2[%c3_105, %c0_106, %c0_107] : memref<9x128x128xbf16, #tpu.memory_space<vmem>>, vector<1x128x128xbf16>
      %126 = vector.shape_cast %125 : vector<1x128x128xbf16> to vector<128x128xbf16>
      %cst_108 = arith.constant dense<0.000000e+00> : vector<14x128xf32>
      %127 = tpu.matmul %124, %126, %cst_108 {dimension_numbers = #tpu.dot_dimension_numbers<[1], [0], [0], [1], [0, 0, 1, 1], [], []>} : vector<14x128xbf16>, vector<128x128xbf16>, vector<14x128xf32> -> vector<14x128xf32>
      %128 = arith.addf %120, %127 : vector<14x128xf32>
      %c1_i32_109 = arith.constant 1 : i32
      %129 = arith.addi %95, %c1_i32_109 : i32
      %c0_110 = arith.constant 0 : index
      %130 = arith.index_cast %129 : i32 to index
      %c1_111 = arith.constant 1 : index
      %c0_112 = arith.constant 0 : index
      %131 = vector.load %arg1[%c0_110, %130, %c1_111, %c0_112] : memref<1x16x16x128xbf16, #tpu.memory_space<vmem>>, vector<1x1x14x128xbf16>
      %132 = vector.shape_cast %131 : vector<1x1x14x128xbf16> to vector<14x128xbf16>
      %c4_113 = arith.constant 4 : index
      %c0_114 = arith.constant 0 : index
      %c0_115 = arith.constant 0 : index
      %133 = vector.load %arg2[%c4_113, %c0_114, %c0_115] : memref<9x128x128xbf16, #tpu.memory_space<vmem>>, vector<1x128x128xbf16>
      %134 = vector.shape_cast %133 : vector<1x128x128xbf16> to vector<128x128xbf16>
      %cst_116 = arith.constant dense<0.000000e+00> : vector<14x128xf32>
      %135 = tpu.matmul %132, %134, %cst_116 {dimension_numbers = #tpu.dot_dimension_numbers<[1], [0], [0], [1], [0, 0, 1, 1], [], []>} : vector<14x128xbf16>, vector<128x128xbf16>, vector<14x128xf32> -> vector<14x128xf32>
      %136 = arith.addf %128, %135 : vector<14x128xf32>
      %c1_i32_117 = arith.constant 1 : i32
      %137 = arith.addi %95, %c1_i32_117 : i32
      %c0_118 = arith.constant 0 : index
      %138 = arith.index_cast %137 : i32 to index
      %c2_119 = arith.constant 2 : index
      %c0_120 = arith.constant 0 : index
      %139 = vector.load %arg1[%c0_118, %138, %c2_119, %c0_120] : memref<1x16x16x128xbf16, #tpu.memory_space<vmem>>, vector<1x1x14x128xbf16>
      %140 = vector.shape_cast %139 : vector<1x1x14x128xbf16> to vector<14x128xbf16>
      %c5_121 = arith.constant 5 : index
      %c0_122 = arith.constant 0 : index
      %c0_123 = arith.constant 0 : index
      %141 = vector.load %arg2[%c5_121, %c0_122, %c0_123] : memref<9x128x128xbf16, #tpu.memory_space<vmem>>, vector<1x128x128xbf16>
      %142 = vector.shape_cast %141 : vector<1x128x128xbf16> to vector<128x128xbf16>
      %cst_124 = arith.constant dense<0.000000e+00> : vector<14x128xf32>
      %143 = tpu.matmul %140, %142, %cst_124 {dimension_numbers = #tpu.dot_dimension_numbers<[1], [0], [0], [1], [0, 0, 1, 1], [], []>} : vector<14x128xbf16>, vector<128x128xbf16>, vector<14x128xf32> -> vector<14x128xf32>
      %144 = arith.addf %136, %143 : vector<14x128xf32>
      %c2_i32_125 = arith.constant 2 : i32
      %145 = arith.addi %95, %c2_i32_125 : i32
      %c0_126 = arith.constant 0 : index
      %146 = arith.index_cast %145 : i32 to index
      %c0_127 = arith.constant 0 : index
      %c0_128 = arith.constant 0 : index
      %147 = vector.load %arg1[%c0_126, %146, %c0_127, %c0_128] : memref<1x16x16x128xbf16, #tpu.memory_space<vmem>>, vector<1x1x14x128xbf16>
      %148 = vector.shape_cast %147 : vector<1x1x14x128xbf16> to vector<14x128xbf16>
      %c6_129 = arith.constant 6 : index
      %c0_130 = arith.constant 0 : index
      %c0_131 = arith.constant 0 : index
      %149 = vector.load %arg2[%c6_129, %c0_130, %c0_131] : memref<9x128x128xbf16, #tpu.memory_space<vmem>>, vector<1x128x128xbf16>
      %150 = vector.shape_cast %149 : vector<1x128x128xbf16> to vector<128x128xbf16>
      %cst_132 = arith.constant dense<0.000000e+00> : vector<14x128xf32>
      %151 = tpu.matmul %148, %150, %cst_132 {dimension_numbers = #tpu.dot_dimension_numbers<[1], [0], [0], [1], [0, 0, 1, 1], [], []>} : vector<14x128xbf16>, vector<128x128xbf16>, vector<14x128xf32> -> vector<14x128xf32>
      %152 = arith.addf %144, %151 : vector<14x128xf32>
      %c2_i32_133 = arith.constant 2 : i32
      %153 = arith.addi %95, %c2_i32_133 : i32
      %c0_134 = arith.constant 0 : index
      %154 = arith.index_cast %153 : i32 to index
      %c1_135 = arith.constant 1 : index
      %c0_136 = arith.constant 0 : index
      %155 = vector.load %arg1[%c0_134, %154, %c1_135, %c0_136] : memref<1x16x16x128xbf16, #tpu.memory_space<vmem>>, vector<1x1x14x128xbf16>
      %156 = vector.shape_cast %155 : vector<1x1x14x128xbf16> to vector<14x128xbf16>
      %c7_137 = arith.constant 7 : index
      %c0_138 = arith.constant 0 : index
      %c0_139 = arith.constant 0 : index
      %157 = vector.load %arg2[%c7_137, %c0_138, %c0_139] : memref<9x128x128xbf16, #tpu.memory_space<vmem>>, vector<1x128x128xbf16>
      %158 = vector.shape_cast %157 : vector<1x128x128xbf16> to vector<128x128xbf16>
      %cst_140 = arith.constant dense<0.000000e+00> : vector<14x128xf32>
      %159 = tpu.matmul %156, %158, %cst_140 {dimension_numbers = #tpu.dot_dimension_numbers<[1], [0], [0], [1], [0, 0, 1, 1], [], []>} : vector<14x128xbf16>, vector<128x128xbf16>, vector<14x128xf32> -> vector<14x128xf32>
      %160 = arith.addf %152, %159 : vector<14x128xf32>
      %c2_i32_141 = arith.constant 2 : i32
      %161 = arith.addi %95, %c2_i32_141 : i32
      %c0_142 = arith.constant 0 : index
      %162 = arith.index_cast %161 : i32 to index
      %c2_143 = arith.constant 2 : index
      %c0_144 = arith.constant 0 : index
      %163 = vector.load %arg1[%c0_142, %162, %c2_143, %c0_144] : memref<1x16x16x128xbf16, #tpu.memory_space<vmem>>, vector<1x1x14x128xbf16>
      %164 = vector.shape_cast %163 : vector<1x1x14x128xbf16> to vector<14x128xbf16>
      %c8_145 = arith.constant 8 : index
      %c0_146 = arith.constant 0 : index
      %c0_147 = arith.constant 0 : index
      %165 = vector.load %arg2[%c8_145, %c0_146, %c0_147] : memref<9x128x128xbf16, #tpu.memory_space<vmem>>, vector<1x128x128xbf16>
      %166 = vector.shape_cast %165 : vector<1x128x128xbf16> to vector<128x128xbf16>
      %cst_148 = arith.constant dense<0.000000e+00> : vector<14x128xf32>
      %167 = tpu.matmul %164, %166, %cst_148 {dimension_numbers = #tpu.dot_dimension_numbers<[1], [0], [0], [1], [0, 0, 1, 1], [], []>} : vector<14x128xbf16>, vector<128x128xbf16>, vector<14x128xf32> -> vector<14x128xf32>
      %168 = arith.addf %160, %167 : vector<14x128xf32>
      %169 = arith.maximumf %93, %168 : vector<14x128xf32>
      %cst_149 = arith.constant dense<0.000000e+00> : vector<7x128xf32>
      %170 = tpu.matmul %6, %169, %cst_149 {dimension_numbers = #tpu.dot_dimension_numbers<[1], [0], [0], [1], [0, 0, 1, 1], [], []>} : vector<7x14xf32>, vector<14x128xf32>, vector<7x128xf32> -> vector<7x128xf32>
      %cst_150 = arith.constant dense<0.000000e+00> : vector<7x128xf32>
      %171 = tpu.matmul %13, %169, %cst_150 {dimension_numbers = #tpu.dot_dimension_numbers<[1], [0], [0], [1], [0, 0, 1, 1], [], []>} : vector<7x14xf32>, vector<14x128xf32>, vector<7x128xf32> -> vector<7x128xf32>
      %172 = arith.maximumf %170, %171 : vector<7x128xf32>
      %173 = vector.broadcast %14 : vector<1x128xf32> to vector<7x128xf32>
      %174 = arith.addf %172, %173 : vector<7x128xf32>
      %cst_151 = arith.constant 0.000000e+00 : f32
      %175 = vector.broadcast %cst_151 : f32 to vector<7x128xf32>
      %176 = arith.maximumf %174, %175 : vector<7x128xf32>
      %177 = arith.truncf %176 : vector<7x128xf32> to vector<7x128xbf16>
      %c1_i32_152 = arith.constant 1 : i32
      %178 = arith.addi %arg5, %c1_i32_152 : i32
      %c0_153 = arith.constant 0 : index
      %179 = arith.index_cast %178 : i32 to index
      %c1_154 = arith.constant 1 : index
      %c0_155 = arith.constant 0 : index
      %180 = vector.load %arg4[%c0_153, %179, %c1_154, %c0_155] : memref<1x9x9x128xbf16, #tpu.memory_space<vmem>>, vector<1x1x7x128xbf16>
      %181 = vector.shape_cast %180 : vector<1x1x7x128xbf16> to vector<7x128xbf16>
      %182 = vector.shape_cast %177 : vector<7x128xbf16> to vector<1x1x7x128xbf16>
      tpu.vector_store %arg4[%c0_153, %179, %c1_154, %c0_155], %182 {strides = array<i32>} : memref<1x9x9x128xbf16, #tpu.memory_space<vmem>>, vector<1x1x7x128xbf16>,
    }
    %c7_i32_7 = arith.constant 7 : i32
    return
  }
  func.func @transform_0(%arg0: i32) -> (i32, i32, i32, i32) {
    %c0_i32 = arith.constant 0 : i32
    %c0_i32_0 = arith.constant 0 : i32
    %c0_i32_1 = arith.constant 0 : i32
    %c0_i32_2 = arith.constant 0 : i32
    return %arg0, %c0_i32, %c0_i32_0, %c0_i32_1 : i32, i32, i32, i32
  }
  func.func @transform_1(%arg0: i32) -> (i32, i32, i32) {
    %c0_i32 = arith.constant 0 : i32
    %c0_i32_0 = arith.constant 0 : i32
    %c0_i32_1 = arith.constant 0 : i32
    %c0_i32_2 = arith.constant 0 : i32
    return %c0_i32, %c0_i32_0, %c0_i32_1 : i32, i32, i32
  }
  func.func @transform_2(%arg0: i32) -> (i32, i32) {
    %c0_i32 = arith.constant 0 : i32
    %c0_i32_0 = arith.constant 0 : i32
    %c0_i32_1 = arith.constant 0 : i32
    return %c0_i32, %c0_i32_0 : i32, i32
  }
  func.func @transform_3(%arg0: i32) -> (i32, i32, i32, i32) {
    %c0_i32 = arith.constant 0 : i32
    %c0_i32_0 = arith.constant 0 : i32
    %c0_i32_1 = arith.constant 0 : i32
    %c0_i32_2 = arith.constant 0 : i32
    return %arg0, %c0_i32, %c0_i32_0, %c0_i32_1 : i32, i32, i32, i32
  }
}

module attributes {stable_mosaic.version = 11 : i64} {
  func.func @_conv_relu_pool_kernel(%arg0: i32, %arg1: memref<1x9x9x128xbf16, #tpu.memory_space<vmem>>, %arg2: memref<9x128x128xbf16, #tpu.memory_space<vmem>>, %arg3: memref<1x128xf32, #tpu.memory_space<vmem>>, %arg4: memref<1x3x3x128xbf16, #tpu.memory_space<vmem>>) attributes {dimension_semantics = [#tpu.dimension_semantics<parallel>], iteration_bounds = array<i64: 2>, scalar_prefetch = 0 : i64, scratch_operands = 0 : i64, tpu.core_type = #tpu.core_type<tc>, window_params = [{transform_indices = @transform_0, window_bounds = array<i64: 1, 9, 9, 128>}, {pipeline_mode = #tpu.pipeline_mode<synchronous>, transform_indices = @transform_1, window_bounds = array<i64: 9, 128, 128>}, {pipeline_mode = #tpu.pipeline_mode<synchronous>, transform_indices = @transform_2, window_bounds = array<i64: 1, 128>}, {transform_indices = @transform_3, window_bounds = array<i64: 1, 3, 3, 128>}]} {
    %0 = tpu.iota {dimensions = array<i32: 0>} : vector<3x7xi32>
    %1 = tpu.iota {dimensions = array<i32: 1>} : vector<3x7xi32>
    %c2_i32 = arith.constant 2 : i32
    %2 = vector.broadcast %c2_i32 : i32 to vector<3x7xi32>
    %3 = arith.muli %2, %0 : vector<3x7xi32>
    %4 = arith.cmpi eq, %1, %3 : vector<3x7xi32>
    %5 = arith.extui %4 : vector<3x7xi1> to vector<3x7xi32>
    %6 = arith.sitofp %5 : vector<3x7xi32> to vector<3x7xf32>
    %c2_i32_0 = arith.constant 2 : i32
    %7 = vector.broadcast %c2_i32_0 : i32 to vector<3x7xi32>
    %8 = arith.muli %7, %0 : vector<3x7xi32>
    %c1_i32 = arith.constant 1 : i32
    %9 = vector.broadcast %c1_i32 : i32 to vector<3x7xi32>
    %10 = arith.addi %8, %9 : vector<3x7xi32>
    %11 = arith.cmpi eq, %1, %10 : vector<3x7xi32>
    %12 = arith.extui %11 : vector<3x7xi1> to vector<3x7xi32>
    %13 = arith.sitofp %12 : vector<3x7xi32> to vector<3x7xf32>
    %c0 = arith.constant 0 : index
    %c0_1 = arith.constant 0 : index
    %14 = vector.load %arg3[%c0, %c0_1] : memref<1x128xf32, #tpu.memory_space<vmem>>, vector<1x128xf32>
    %c0_i32 = arith.constant 0 : i32
    %c3_i32 = arith.constant 3 : i32
    %15 = arith.addi %c0_i32, %c3_i32 : i32
    %c1_i32_2 = arith.constant 1 : i32
    scf.for %arg5 = %c0_i32 to %15 step %c1_i32_2  : i32 {
      %c2_i32_4 = arith.constant 2 : i32
      %16 = arith.muli %c2_i32_4, %arg5 : i32
      %cst = arith.constant 0.000000e+00 : f32
      %17 = vector.broadcast %cst : f32 to vector<7x128xf32>
      %c0_i32_5 = arith.constant 0 : i32
      %18 = arith.addi %16, %c0_i32_5 : i32
      %c0_6 = arith.constant 0 : index
      %19 = arith.index_cast %18 : i32 to index
      %c0_7 = arith.constant 0 : index
      %c0_8 = arith.constant 0 : index
      %20 = vector.load %arg1[%c0_6, %19, %c0_7, %c0_8] : memref<1x9x9x128xbf16, #tpu.memory_space<vmem>>, vector<1x1x7x128xbf16>
      %21 = vector.shape_cast %20 : vector<1x1x7x128xbf16> to vector<7x128xbf16>
      %c0_9 = arith.constant 0 : index
      %c0_10 = arith.constant 0 : index
      %c0_11 = arith.constant 0 : index
      %22 = vector.load %arg2[%c0_9, %c0_10, %c0_11] : memref<9x128x128xbf16, #tpu.memory_space<vmem>>, vector<1x128x128xbf16>
      %23 = vector.shape_cast %22 : vector<1x128x128xbf16> to vector<128x128xbf16>
      %cst_12 = arith.constant dense<0.000000e+00> : vector<7x128xf32>
      %24 = tpu.matmul %21, %23, %cst_12 {dimension_numbers = #tpu.dot_dimension_numbers<[1], [0], [0], [1], [0, 0, 1, 1], [], []>} : vector<7x128xbf16>, vector<128x128xbf16>, vector<7x128xf32> -> vector<7x128xf32>
      %25 = arith.addf %17, %24 : vector<7x128xf32>
      %c0_i32_13 = arith.constant 0 : i32
      %26 = arith.addi %16, %c0_i32_13 : i32
      %c0_14 = arith.constant 0 : index
      %27 = arith.index_cast %26 : i32 to index
      %c1 = arith.constant 1 : index
      %c0_15 = arith.constant 0 : index
      %28 = vector.load %arg1[%c0_14, %27, %c1, %c0_15] : memref<1x9x9x128xbf16, #tpu.memory_space<vmem>>, vector<1x1x7x128xbf16>
      %29 = vector.shape_cast %28 : vector<1x1x7x128xbf16> to vector<7x128xbf16>
      %c1_16 = arith.constant 1 : index
      %c0_17 = arith.constant 0 : index
      %c0_18 = arith.constant 0 : index
      %30 = vector.load %arg2[%c1_16, %c0_17, %c0_18] : memref<9x128x128xbf16, #tpu.memory_space<vmem>>, vector<1x128x128xbf16>
      %31 = vector.shape_cast %30 : vector<1x128x128xbf16> to vector<128x128xbf16>
      %cst_19 = arith.constant dense<0.000000e+00> : vector<7x128xf32>
      %32 = tpu.matmul %29, %31, %cst_19 {dimension_numbers = #tpu.dot_dimension_numbers<[1], [0], [0], [1], [0, 0, 1, 1], [], []>} : vector<7x128xbf16>, vector<128x128xbf16>, vector<7x128xf32> -> vector<7x128xf32>
      %33 = arith.addf %25, %32 : vector<7x128xf32>
      %c0_i32_20 = arith.constant 0 : i32
      %34 = arith.addi %16, %c0_i32_20 : i32
      %c0_21 = arith.constant 0 : index
      %35 = arith.index_cast %34 : i32 to index
      %c2 = arith.constant 2 : index
      %c0_22 = arith.constant 0 : index
      %36 = vector.load %arg1[%c0_21, %35, %c2, %c0_22] : memref<1x9x9x128xbf16, #tpu.memory_space<vmem>>, vector<1x1x7x128xbf16>
      %37 = vector.shape_cast %36 : vector<1x1x7x128xbf16> to vector<7x128xbf16>
      %c2_23 = arith.constant 2 : index
      %c0_24 = arith.constant 0 : index
      %c0_25 = arith.constant 0 : index
      %38 = vector.load %arg2[%c2_23, %c0_24, %c0_25] : memref<9x128x128xbf16, #tpu.memory_space<vmem>>, vector<1x128x128xbf16>
      %39 = vector.shape_cast %38 : vector<1x128x128xbf16> to vector<128x128xbf16>
      %cst_26 = arith.constant dense<0.000000e+00> : vector<7x128xf32>
      %40 = tpu.matmul %37, %39, %cst_26 {dimension_numbers = #tpu.dot_dimension_numbers<[1], [0], [0], [1], [0, 0, 1, 1], [], []>} : vector<7x128xbf16>, vector<128x128xbf16>, vector<7x128xf32> -> vector<7x128xf32>
      %41 = arith.addf %33, %40 : vector<7x128xf32>
      %c1_i32_27 = arith.constant 1 : i32
      %42 = arith.addi %16, %c1_i32_27 : i32
      %c0_28 = arith.constant 0 : index
      %43 = arith.index_cast %42 : i32 to index
      %c0_29 = arith.constant 0 : index
      %c0_30 = arith.constant 0 : index
      %44 = vector.load %arg1[%c0_28, %43, %c0_29, %c0_30] : memref<1x9x9x128xbf16, #tpu.memory_space<vmem>>, vector<1x1x7x128xbf16>
      %45 = vector.shape_cast %44 : vector<1x1x7x128xbf16> to vector<7x128xbf16>
      %c3 = arith.constant 3 : index
      %c0_31 = arith.constant 0 : index
      %c0_32 = arith.constant 0 : index
      %46 = vector.load %arg2[%c3, %c0_31, %c0_32] : memref<9x128x128xbf16, #tpu.memory_space<vmem>>, vector<1x128x128xbf16>
      %47 = vector.shape_cast %46 : vector<1x128x128xbf16> to vector<128x128xbf16>
      %cst_33 = arith.constant dense<0.000000e+00> : vector<7x128xf32>
      %48 = tpu.matmul %45, %47, %cst_33 {dimension_numbers = #tpu.dot_dimension_numbers<[1], [0], [0], [1], [0, 0, 1, 1], [], []>} : vector<7x128xbf16>, vector<128x128xbf16>, vector<7x128xf32> -> vector<7x128xf32>
      %49 = arith.addf %41, %48 : vector<7x128xf32>
      %c1_i32_34 = arith.constant 1 : i32
      %50 = arith.addi %16, %c1_i32_34 : i32
      %c0_35 = arith.constant 0 : index
      %51 = arith.index_cast %50 : i32 to index
      %c1_36 = arith.constant 1 : index
      %c0_37 = arith.constant 0 : index
      %52 = vector.load %arg1[%c0_35, %51, %c1_36, %c0_37] : memref<1x9x9x128xbf16, #tpu.memory_space<vmem>>, vector<1x1x7x128xbf16>
      %53 = vector.shape_cast %52 : vector<1x1x7x128xbf16> to vector<7x128xbf16>
      %c4 = arith.constant 4 : index
      %c0_38 = arith.constant 0 : index
      %c0_39 = arith.constant 0 : index
      %54 = vector.load %arg2[%c4, %c0_38, %c0_39] : memref<9x128x128xbf16, #tpu.memory_space<vmem>>, vector<1x128x128xbf16>
      %55 = vector.shape_cast %54 : vector<1x128x128xbf16> to vector<128x128xbf16>
      %cst_40 = arith.constant dense<0.000000e+00> : vector<7x128xf32>
      %56 = tpu.matmul %53, %55, %cst_40 {dimension_numbers = #tpu.dot_dimension_numbers<[1], [0], [0], [1], [0, 0, 1, 1], [], []>} : vector<7x128xbf16>, vector<128x128xbf16>, vector<7x128xf32> -> vector<7x128xf32>
      %57 = arith.addf %49, %56 : vector<7x128xf32>
      %c1_i32_41 = arith.constant 1 : i32
      %58 = arith.addi %16, %c1_i32_41 : i32
      %c0_42 = arith.constant 0 : index
      %59 = arith.index_cast %58 : i32 to index
      %c2_43 = arith.constant 2 : index
      %c0_44 = arith.constant 0 : index
      %60 = vector.load %arg1[%c0_42, %59, %c2_43, %c0_44] : memref<1x9x9x128xbf16, #tpu.memory_space<vmem>>, vector<1x1x7x128xbf16>
      %61 = vector.shape_cast %60 : vector<1x1x7x128xbf16> to vector<7x128xbf16>
      %c5 = arith.constant 5 : index
      %c0_45 = arith.constant 0 : index
      %c0_46 = arith.constant 0 : index
      %62 = vector.load %arg2[%c5, %c0_45, %c0_46] : memref<9x128x128xbf16, #tpu.memory_space<vmem>>, vector<1x128x128xbf16>
      %63 = vector.shape_cast %62 : vector<1x128x128xbf16> to vector<128x128xbf16>
      %cst_47 = arith.constant dense<0.000000e+00> : vector<7x128xf32>
      %64 = tpu.matmul %61, %63, %cst_47 {dimension_numbers = #tpu.dot_dimension_numbers<[1], [0], [0], [1], [0, 0, 1, 1], [], []>} : vector<7x128xbf16>, vector<128x128xbf16>, vector<7x128xf32> -> vector<7x128xf32>
      %65 = arith.addf %57, %64 : vector<7x128xf32>
      %c2_i32_48 = arith.constant 2 : i32
      %66 = arith.addi %16, %c2_i32_48 : i32
      %c0_49 = arith.constant 0 : index
      %67 = arith.index_cast %66 : i32 to index
      %c0_50 = arith.constant 0 : index
      %c0_51 = arith.constant 0 : index
      %68 = vector.load %arg1[%c0_49, %67, %c0_50, %c0_51] : memref<1x9x9x128xbf16, #tpu.memory_space<vmem>>, vector<1x1x7x128xbf16>
      %69 = vector.shape_cast %68 : vector<1x1x7x128xbf16> to vector<7x128xbf16>
      %c6 = arith.constant 6 : index
      %c0_52 = arith.constant 0 : index
      %c0_53 = arith.constant 0 : index
      %70 = vector.load %arg2[%c6, %c0_52, %c0_53] : memref<9x128x128xbf16, #tpu.memory_space<vmem>>, vector<1x128x128xbf16>
      %71 = vector.shape_cast %70 : vector<1x128x128xbf16> to vector<128x128xbf16>
      %cst_54 = arith.constant dense<0.000000e+00> : vector<7x128xf32>
      %72 = tpu.matmul %69, %71, %cst_54 {dimension_numbers = #tpu.dot_dimension_numbers<[1], [0], [0], [1], [0, 0, 1, 1], [], []>} : vector<7x128xbf16>, vector<128x128xbf16>, vector<7x128xf32> -> vector<7x128xf32>
      %73 = arith.addf %65, %72 : vector<7x128xf32>
      %c2_i32_55 = arith.constant 2 : i32
      %74 = arith.addi %16, %c2_i32_55 : i32
      %c0_56 = arith.constant 0 : index
      %75 = arith.index_cast %74 : i32 to index
      %c1_57 = arith.constant 1 : index
      %c0_58 = arith.constant 0 : index
      %76 = vector.load %arg1[%c0_56, %75, %c1_57, %c0_58] : memref<1x9x9x128xbf16, #tpu.memory_space<vmem>>, vector<1x1x7x128xbf16>
      %77 = vector.shape_cast %76 : vector<1x1x7x128xbf16> to vector<7x128xbf16>
      %c7 = arith.constant 7 : index
      %c0_59 = arith.constant 0 : index
      %c0_60 = arith.constant 0 : index
      %78 = vector.load %arg2[%c7, %c0_59, %c0_60] : memref<9x128x128xbf16, #tpu.memory_space<vmem>>, vector<1x128x128xbf16>
      %79 = vector.shape_cast %78 : vector<1x128x128xbf16> to vector<128x128xbf16>
      %cst_61 = arith.constant dense<0.000000e+00> : vector<7x128xf32>
      %80 = tpu.matmul %77, %79, %cst_61 {dimension_numbers = #tpu.dot_dimension_numbers<[1], [0], [0], [1], [0, 0, 1, 1], [], []>} : vector<7x128xbf16>, vector<128x128xbf16>, vector<7x128xf32> -> vector<7x128xf32>
      %81 = arith.addf %73, %80 : vector<7x128xf32>
      %c2_i32_62 = arith.constant 2 : i32
      %82 = arith.addi %16, %c2_i32_62 : i32
      %c0_63 = arith.constant 0 : index
      %83 = arith.index_cast %82 : i32 to index
      %c2_64 = arith.constant 2 : index
      %c0_65 = arith.constant 0 : index
      %84 = vector.load %arg1[%c0_63, %83, %c2_64, %c0_65] : memref<1x9x9x128xbf16, #tpu.memory_space<vmem>>, vector<1x1x7x128xbf16>
      %85 = vector.shape_cast %84 : vector<1x1x7x128xbf16> to vector<7x128xbf16>
      %c8 = arith.constant 8 : index
      %c0_66 = arith.constant 0 : index
      %c0_67 = arith.constant 0 : index
      %86 = vector.load %arg2[%c8, %c0_66, %c0_67] : memref<9x128x128xbf16, #tpu.memory_space<vmem>>, vector<1x128x128xbf16>
      %87 = vector.shape_cast %86 : vector<1x128x128xbf16> to vector<128x128xbf16>
      %cst_68 = arith.constant dense<0.000000e+00> : vector<7x128xf32>
      %88 = tpu.matmul %85, %87, %cst_68 {dimension_numbers = #tpu.dot_dimension_numbers<[1], [0], [0], [1], [0, 0, 1, 1], [], []>} : vector<7x128xbf16>, vector<128x128xbf16>, vector<7x128xf32> -> vector<7x128xf32>
      %89 = arith.addf %81, %88 : vector<7x128xf32>
      %c2_i32_69 = arith.constant 2 : i32
      %90 = arith.muli %c2_i32_69, %arg5 : i32
      %c1_i32_70 = arith.constant 1 : i32
      %91 = arith.addi %90, %c1_i32_70 : i32
      %cst_71 = arith.constant 0.000000e+00 : f32
      %92 = vector.broadcast %cst_71 : f32 to vector<7x128xf32>
      %c0_i32_72 = arith.constant 0 : i32
      %93 = arith.addi %91, %c0_i32_72 : i32
      %c0_73 = arith.constant 0 : index
      %94 = arith.index_cast %93 : i32 to index
      %c0_74 = arith.constant 0 : index
      %c0_75 = arith.constant 0 : index
      %95 = vector.load %arg1[%c0_73, %94, %c0_74, %c0_75] : memref<1x9x9x128xbf16, #tpu.memory_space<vmem>>, vector<1x1x7x128xbf16>
      %96 = vector.shape_cast %95 : vector<1x1x7x128xbf16> to vector<7x128xbf16>
      %c0_76 = arith.constant 0 : index
      %c0_77 = arith.constant 0 : index
      %c0_78 = arith.constant 0 : index
      %97 = vector.load %arg2[%c0_76, %c0_77, %c0_78] : memref<9x128x128xbf16, #tpu.memory_space<vmem>>, vector<1x128x128xbf16>
      %98 = vector.shape_cast %97 : vector<1x128x128xbf16> to vector<128x128xbf16>
      %cst_79 = arith.constant dense<0.000000e+00> : vector<7x128xf32>
      %99 = tpu.matmul %96, %98, %cst_79 {dimension_numbers = #tpu.dot_dimension_numbers<[1], [0], [0], [1], [0, 0, 1, 1], [], []>} : vector<7x128xbf16>, vector<128x128xbf16>, vector<7x128xf32> -> vector<7x128xf32>
      %100 = arith.addf %92, %99 : vector<7x128xf32>
      %c0_i32_80 = arith.constant 0 : i32
      %101 = arith.addi %91, %c0_i32_80 : i32
      %c0_81 = arith.constant 0 : index
      %102 = arith.index_cast %101 : i32 to index
      %c1_82 = arith.constant 1 : index
      %c0_83 = arith.constant 0 : index
      %103 = vector.load %arg1[%c0_81, %102, %c1_82, %c0_83] : memref<1x9x9x128xbf16, #tpu.memory_space<vmem>>, vector<1x1x7x128xbf16>
      %104 = vector.shape_cast %103 : vector<1x1x7x128xbf16> to vector<7x128xbf16>
      %c1_84 = arith.constant 1 : index
      %c0_85 = arith.constant 0 : index
      %c0_86 = arith.constant 0 : index
      %105 = vector.load %arg2[%c1_84, %c0_85, %c0_86] : memref<9x128x128xbf16, #tpu.memory_space<vmem>>, vector<1x128x128xbf16>
      %106 = vector.shape_cast %105 : vector<1x128x128xbf16> to vector<128x128xbf16>
      %cst_87 = arith.constant dense<0.000000e+00> : vector<7x128xf32>
      %107 = tpu.matmul %104, %106, %cst_87 {dimension_numbers = #tpu.dot_dimension_numbers<[1], [0], [0], [1], [0, 0, 1, 1], [], []>} : vector<7x128xbf16>, vector<128x128xbf16>, vector<7x128xf32> -> vector<7x128xf32>
      %108 = arith.addf %100, %107 : vector<7x128xf32>
      %c0_i32_88 = arith.constant 0 : i32
      %109 = arith.addi %91, %c0_i32_88 : i32
      %c0_89 = arith.constant 0 : index
      %110 = arith.index_cast %109 : i32 to index
      %c2_90 = arith.constant 2 : index
      %c0_91 = arith.constant 0 : index
      %111 = vector.load %arg1[%c0_89, %110, %c2_90, %c0_91] : memref<1x9x9x128xbf16, #tpu.memory_space<vmem>>, vector<1x1x7x128xbf16>
      %112 = vector.shape_cast %111 : vector<1x1x7x128xbf16> to vector<7x128xbf16>
      %c2_92 = arith.constant 2 : index
      %c0_93 = arith.constant 0 : index
      %c0_94 = arith.constant 0 : index
      %113 = vector.load %arg2[%c2_92, %c0_93, %c0_94] : memref<9x128x128xbf16, #tpu.memory_space<vmem>>, vector<1x128x128xbf16>
      %114 = vector.shape_cast %113 : vector<1x128x128xbf16> to vector<128x128xbf16>
      %cst_95 = arith.constant dense<0.000000e+00> : vector<7x128xf32>
      %115 = tpu.matmul %112, %114, %cst_95 {dimension_numbers = #tpu.dot_dimension_numbers<[1], [0], [0], [1], [0, 0, 1, 1], [], []>} : vector<7x128xbf16>, vector<128x128xbf16>, vector<7x128xf32> -> vector<7x128xf32>
      %116 = arith.addf %108, %115 : vector<7x128xf32>
      %c1_i32_96 = arith.constant 1 : i32
      %117 = arith.addi %91, %c1_i32_96 : i32
      %c0_97 = arith.constant 0 : index
      %118 = arith.index_cast %117 : i32 to index
      %c0_98 = arith.constant 0 : index
      %c0_99 = arith.constant 0 : index
      %119 = vector.load %arg1[%c0_97, %118, %c0_98, %c0_99] : memref<1x9x9x128xbf16, #tpu.memory_space<vmem>>, vector<1x1x7x128xbf16>
      %120 = vector.shape_cast %119 : vector<1x1x7x128xbf16> to vector<7x128xbf16>
      %c3_100 = arith.constant 3 : index
      %c0_101 = arith.constant 0 : index
      %c0_102 = arith.constant 0 : index
      %121 = vector.load %arg2[%c3_100, %c0_101, %c0_102] : memref<9x128x128xbf16, #tpu.memory_space<vmem>>, vector<1x128x128xbf16>
      %122 = vector.shape_cast %121 : vector<1x128x128xbf16> to vector<128x128xbf16>
      %cst_103 = arith.constant dense<0.000000e+00> : vector<7x128xf32>
      %123 = tpu.matmul %120, %122, %cst_103 {dimension_numbers = #tpu.dot_dimension_numbers<[1], [0], [0], [1], [0, 0, 1, 1], [], []>} : vector<7x128xbf16>, vector<128x128xbf16>, vector<7x128xf32> -> vector<7x128xf32>
      %124 = arith.addf %116, %123 : vector<7x128xf32>
      %c1_i32_104 = arith.constant 1 : i32
      %125 = arith.addi %91, %c1_i32_104 : i32
      %c0_105 = arith.constant 0 : index
      %126 = arith.index_cast %125 : i32 to index
      %c1_106 = arith.constant 1 : index
      %c0_107 = arith.constant 0 : index
      %127 = vector.load %arg1[%c0_105, %126, %c1_106, %c0_107] : memref<1x9x9x128xbf16, #tpu.memory_space<vmem>>, vector<1x1x7x128xbf16>
      %128 = vector.shape_cast %127 : vector<1x1x7x128xbf16> to vector<7x128xbf16>
      %c4_108 = arith.constant 4 : index
      %c0_109 = arith.constant 0 : index
      %c0_110 = arith.constant 0 : index
      %129 = vector.load %arg2[%c4_108, %c0_109, %c0_110] : memref<9x128x128xbf16, #tpu.memory_space<vmem>>, vector<1x128x128xbf16>
      %130 = vector.shape_cast %129 : vector<1x128x128xbf16> to vector<128x128xbf16>
      %cst_111 = arith.constant dense<0.000000e+00> : vector<7x128xf32>
      %131 = tpu.matmul %128, %130, %cst_111 {dimension_numbers = #tpu.dot_dimension_numbers<[1], [0], [0], [1], [0, 0, 1, 1], [], []>} : vector<7x128xbf16>, vector<128x128xbf16>, vector<7x128xf32> -> vector<7x128xf32>
      %132 = arith.addf %124, %131 : vector<7x128xf32>
      %c1_i32_112 = arith.constant 1 : i32
      %133 = arith.addi %91, %c1_i32_112 : i32
      %c0_113 = arith.constant 0 : index
      %134 = arith.index_cast %133 : i32 to index
      %c2_114 = arith.constant 2 : index
      %c0_115 = arith.constant 0 : index
      %135 = vector.load %arg1[%c0_113, %134, %c2_114, %c0_115] : memref<1x9x9x128xbf16, #tpu.memory_space<vmem>>, vector<1x1x7x128xbf16>
      %136 = vector.shape_cast %135 : vector<1x1x7x128xbf16> to vector<7x128xbf16>
      %c5_116 = arith.constant 5 : index
      %c0_117 = arith.constant 0 : index
      %c0_118 = arith.constant 0 : index
      %137 = vector.load %arg2[%c5_116, %c0_117, %c0_118] : memref<9x128x128xbf16, #tpu.memory_space<vmem>>, vector<1x128x128xbf16>
      %138 = vector.shape_cast %137 : vector<1x128x128xbf16> to vector<128x128xbf16>
      %cst_119 = arith.constant dense<0.000000e+00> : vector<7x128xf32>
      %139 = tpu.matmul %136, %138, %cst_119 {dimension_numbers = #tpu.dot_dimension_numbers<[1], [0], [0], [1], [0, 0, 1, 1], [], []>} : vector<7x128xbf16>, vector<128x128xbf16>, vector<7x128xf32> -> vector<7x128xf32>
      %140 = arith.addf %132, %139 : vector<7x128xf32>
      %c2_i32_120 = arith.constant 2 : i32
      %141 = arith.addi %91, %c2_i32_120 : i32
      %c0_121 = arith.constant 0 : index
      %142 = arith.index_cast %141 : i32 to index
      %c0_122 = arith.constant 0 : index
      %c0_123 = arith.constant 0 : index
      %143 = vector.load %arg1[%c0_121, %142, %c0_122, %c0_123] : memref<1x9x9x128xbf16, #tpu.memory_space<vmem>>, vector<1x1x7x128xbf16>
      %144 = vector.shape_cast %143 : vector<1x1x7x128xbf16> to vector<7x128xbf16>
      %c6_124 = arith.constant 6 : index
      %c0_125 = arith.constant 0 : index
      %c0_126 = arith.constant 0 : index
      %145 = vector.load %arg2[%c6_124, %c0_125, %c0_126] : memref<9x128x128xbf16, #tpu.memory_space<vmem>>, vector<1x128x128xbf16>
      %146 = vector.shape_cast %145 : vector<1x128x128xbf16> to vector<128x128xbf16>
      %cst_127 = arith.constant dense<0.000000e+00> : vector<7x128xf32>
      %147 = tpu.matmul %144, %146, %cst_127 {dimension_numbers = #tpu.dot_dimension_numbers<[1], [0], [0], [1], [0, 0, 1, 1], [], []>} : vector<7x128xbf16>, vector<128x128xbf16>, vector<7x128xf32> -> vector<7x128xf32>
      %148 = arith.addf %140, %147 : vector<7x128xf32>
      %c2_i32_128 = arith.constant 2 : i32
      %149 = arith.addi %91, %c2_i32_128 : i32
      %c0_129 = arith.constant 0 : index
      %150 = arith.index_cast %149 : i32 to index
      %c1_130 = arith.constant 1 : index
      %c0_131 = arith.constant 0 : index
      %151 = vector.load %arg1[%c0_129, %150, %c1_130, %c0_131] : memref<1x9x9x128xbf16, #tpu.memory_space<vmem>>, vector<1x1x7x128xbf16>
      %152 = vector.shape_cast %151 : vector<1x1x7x128xbf16> to vector<7x128xbf16>
      %c7_132 = arith.constant 7 : index
      %c0_133 = arith.constant 0 : index
      %c0_134 = arith.constant 0 : index
      %153 = vector.load %arg2[%c7_132, %c0_133, %c0_134] : memref<9x128x128xbf16, #tpu.memory_space<vmem>>, vector<1x128x128xbf16>
      %154 = vector.shape_cast %153 : vector<1x128x128xbf16> to vector<128x128xbf16>
      %cst_135 = arith.constant dense<0.000000e+00> : vector<7x128xf32>
      %155 = tpu.matmul %152, %154, %cst_135 {dimension_numbers = #tpu.dot_dimension_numbers<[1], [0], [0], [1], [0, 0, 1, 1], [], []>} : vector<7x128xbf16>, vector<128x128xbf16>, vector<7x128xf32> -> vector<7x128xf32>
      %156 = arith.addf %148, %155 : vector<7x128xf32>
      %c2_i32_136 = arith.constant 2 : i32
      %157 = arith.addi %91, %c2_i32_136 : i32
      %c0_137 = arith.constant 0 : index
      %158 = arith.index_cast %157 : i32 to index
      %c2_138 = arith.constant 2 : index
      %c0_139 = arith.constant 0 : index
      %159 = vector.load %arg1[%c0_137, %158, %c2_138, %c0_139] : memref<1x9x9x128xbf16, #tpu.memory_space<vmem>>, vector<1x1x7x128xbf16>
      %160 = vector.shape_cast %159 : vector<1x1x7x128xbf16> to vector<7x128xbf16>
      %c8_140 = arith.constant 8 : index
      %c0_141 = arith.constant 0 : index
      %c0_142 = arith.constant 0 : index
      %161 = vector.load %arg2[%c8_140, %c0_141, %c0_142] : memref<9x128x128xbf16, #tpu.memory_space<vmem>>, vector<1x128x128xbf16>
      %162 = vector.shape_cast %161 : vector<1x128x128xbf16> to vector<128x128xbf16>
      %cst_143 = arith.constant dense<0.000000e+00> : vector<7x128xf32>
      %163 = tpu.matmul %160, %162, %cst_143 {dimension_numbers = #tpu.dot_dimension_numbers<[1], [0], [0], [1], [0, 0, 1, 1], [], []>} : vector<7x128xbf16>, vector<128x128xbf16>, vector<7x128xf32> -> vector<7x128xf32>
      %164 = arith.addf %156, %163 : vector<7x128xf32>
      %165 = arith.maximumf %89, %164 : vector<7x128xf32>
      %cst_144 = arith.constant dense<0.000000e+00> : vector<3x128xf32>
      %166 = tpu.matmul %6, %165, %cst_144 {dimension_numbers = #tpu.dot_dimension_numbers<[1], [0], [0], [1], [0, 0, 1, 1], [], []>} : vector<3x7xf32>, vector<7x128xf32>, vector<3x128xf32> -> vector<3x128xf32>
      %cst_145 = arith.constant dense<0.000000e+00> : vector<3x128xf32>
      %167 = tpu.matmul %13, %165, %cst_145 {dimension_numbers = #tpu.dot_dimension_numbers<[1], [0], [0], [1], [0, 0, 1, 1], [], []>} : vector<3x7xf32>, vector<7x128xf32>, vector<3x128xf32> -> vector<3x128xf32>
      %168 = arith.maximumf %166, %167 : vector<3x128xf32>
      %169 = vector.broadcast %14 : vector<1x128xf32> to vector<3x128xf32>
      %170 = arith.addf %168, %169 : vector<3x128xf32>
      %cst_146 = arith.constant 0.000000e+00 : f32
      %171 = vector.broadcast %cst_146 : f32 to vector<3x128xf32>
      %172 = arith.maximumf %170, %171 : vector<3x128xf32>
      %173 = arith.truncf %172 : vector<3x128xf32> to vector<3x128xbf16>
      %c0_147 = arith.constant 0 : index
      %174 = arith.index_cast %arg5 : i32 to index
      %c0_148 = arith.constant 0 : index
      %c0_149 = arith.constant 0 : index
      %175 = vector.load %arg4[%c0_147, %174, %c0_148, %c0_149] : memref<1x3x3x128xbf16, #tpu.memory_space<vmem>>, vector<1x1x3x128xbf16>
      %176 = vector.shape_cast %175 : vector<1x1x3x128xbf16> to vector<3x128xbf16>
      %177 = vector.shape_cast %173 : vector<3x128xbf16> to vector<1x1x3x128xbf16>
      tpu.vector_store %arg4[%c0_147, %174, %c0_148, %c0_149], %177 {strides = array<i32>} : memref<1x3x3x128xbf16, #tpu.memory_space<vmem>>, vector<1x1x3x128xbf16>,
    }
    %c3_i32_3 = arith.constant 3 : i32
    return
  }
  func.func @transform_0(%arg0: i32) -> (i32, i32, i32, i32) {
    %c0_i32 = arith.constant 0 : i32
    %c0_i32_0 = arith.constant 0 : i32
    %c0_i32_1 = arith.constant 0 : i32
    %c0_i32_2 = arith.constant 0 : i32
    return %arg0, %c0_i32, %c0_i32_0, %c0_i32_1 : i32, i32, i32, i32
  }
  func.func @transform_1(%arg0: i32) -> (i32, i32, i32) {
    %c0_i32 = arith.constant 0 : i32
    %c0_i32_0 = arith.constant 0 : i32
    %c0_i32_1 = arith.constant 0 : i32
    %c0_i32_2 = arith.constant 0 : i32
    return %c0_i32, %c0_i32_0, %c0_i32_1 : i32, i32, i32
  }
  func.func @transform_2(%arg0: i32) -> (i32, i32) {
    %c0_i32 = arith.constant 0 : i32
    %c0_i32_0 = arith.constant 0 : i32
    %c0_i32_1 = arith.constant 0 : i32
    return %c0_i32, %c0_i32_0 : i32, i32
  }
  func.func @transform_3(%arg0: i32) -> (i32, i32, i32, i32) {
    %c0_i32 = arith.constant 0 : i32
    %c0_i32_0 = arith.constant 0 : i32
    %c0_i32_1 = arith.constant 0 : i32
    %c0_i32_2 = arith.constant 0 : i32
    return %arg0, %c0_i32, %c0_i32_0, %c0_i32_1 : i32, i32, i32, i32
  }
}

module attributes {stable_mosaic.version = 11 : i64} {
  func.func @_dense_head_kernel(%arg0: i32, %arg1: memref<8x1152xbf16, #tpu.memory_space<vmem>>, %arg2: memref<1152x128xbf16, #tpu.memory_space<vmem>>, %arg3: memref<1x128xf32, #tpu.memory_space<vmem>>, %arg4: memref<128x128xbf16, #tpu.memory_space<vmem>>, %arg5: memref<1x128xf32, #tpu.memory_space<vmem>>, %arg6: memref<8x128xf32, #tpu.memory_space<vmem>>) attributes {dimension_semantics = [#tpu.dimension_semantics<parallel>], iteration_bounds = array<i64: 1>, scalar_prefetch = 0 : i64, scratch_operands = 0 : i64, tpu.core_type = #tpu.core_type<tc>, window_params = [{transform_indices = @transform_0, window_bounds = array<i64: 8, 1152>}, {pipeline_mode = #tpu.pipeline_mode<synchronous>, transform_indices = @transform_1, window_bounds = array<i64: 1152, 128>}, {pipeline_mode = #tpu.pipeline_mode<synchronous>, transform_indices = @transform_2, window_bounds = array<i64: 1, 128>}, {pipeline_mode = #tpu.pipeline_mode<synchronous>, transform_indices = @transform_3, window_bounds = array<i64: 128, 128>}, {pipeline_mode = #tpu.pipeline_mode<synchronous>, transform_indices = @transform_4, window_bounds = array<i64: 1, 128>}, {transform_indices = @transform_5, window_bounds = array<i64: 8, 128>}]} {
    %c0 = arith.constant 0 : index
    %c0_0 = arith.constant 0 : index
    %0 = vector.load %arg1[%c0, %c0_0] : memref<8x1152xbf16, #tpu.memory_space<vmem>>, vector<8x1152xbf16>
    %c0_1 = arith.constant 0 : index
    %c0_2 = arith.constant 0 : index
    %1 = vector.load %arg2[%c0_1, %c0_2] : memref<1152x128xbf16, #tpu.memory_space<vmem>>, vector<1152x128xbf16>
    %cst = arith.constant dense<0.000000e+00> : vector<8x128xf32>
    %2 = tpu.matmul %0, %1, %cst {dimension_numbers = #tpu.dot_dimension_numbers<[1], [0], [0], [1], [0, 0, 1, 1], [], []>} : vector<8x1152xbf16>, vector<1152x128xbf16>, vector<8x128xf32> -> vector<8x128xf32>
    %c0_3 = arith.constant 0 : index
    %c0_4 = arith.constant 0 : index
    %3 = vector.load %arg3[%c0_3, %c0_4] : memref<1x128xf32, #tpu.memory_space<vmem>>, vector<1x128xf32>
    %4 = vector.broadcast %3 : vector<1x128xf32> to vector<8x128xf32>
    %5 = arith.addf %2, %4 : vector<8x128xf32>
    %cst_5 = arith.constant 0.000000e+00 : f32
    %6 = vector.broadcast %cst_5 : f32 to vector<8x128xf32>
    %7 = arith.maximumf %5, %6 : vector<8x128xf32>
    %8 = arith.truncf %7 : vector<8x128xf32> to vector<8x128xbf16>
    %c0_6 = arith.constant 0 : index
    %c0_7 = arith.constant 0 : index
    %9 = vector.load %arg4[%c0_6, %c0_7] : memref<128x128xbf16, #tpu.memory_space<vmem>>, vector<128x128xbf16>
    %cst_8 = arith.constant dense<0.000000e+00> : vector<8x128xf32>
    %10 = tpu.matmul %8, %9, %cst_8 {dimension_numbers = #tpu.dot_dimension_numbers<[1], [0], [0], [1], [0, 0, 1, 1], [], []>} : vector<8x128xbf16>, vector<128x128xbf16>, vector<8x128xf32> -> vector<8x128xf32>
    %c0_9 = arith.constant 0 : index
    %c0_10 = arith.constant 0 : index
    %11 = vector.load %arg5[%c0_9, %c0_10] : memref<1x128xf32, #tpu.memory_space<vmem>>, vector<1x128xf32>
    %12 = vector.broadcast %11 : vector<1x128xf32> to vector<8x128xf32>
    %13 = arith.addf %10, %12 : vector<8x128xf32>
    %c0_11 = arith.constant 0 : index
    %c0_12 = arith.constant 0 : index
    %14 = vector.load %arg6[%c0_11, %c0_12] : memref<8x128xf32, #tpu.memory_space<vmem>>, vector<8x128xf32>
    tpu.vector_store %arg6[%c0_11, %c0_12], %13 {strides = array<i32>} : memref<8x128xf32, #tpu.memory_space<vmem>>, vector<8x128xf32>,
    return
  }
  func.func @transform_0(%arg0: i32) -> (i32, i32) {
    %c0_i32 = arith.constant 0 : i32
    %c0_i32_0 = arith.constant 0 : i32
    return %arg0, %c0_i32 : i32, i32
  }
  func.func @transform_1(%arg0: i32) -> (i32, i32) {
    %c0_i32 = arith.constant 0 : i32
    %c0_i32_0 = arith.constant 0 : i32
    %c0_i32_1 = arith.constant 0 : i32
    return %c0_i32, %c0_i32_0 : i32, i32
  }
  func.func @transform_2(%arg0: i32) -> (i32, i32) {
    %c0_i32 = arith.constant 0 : i32
    %c0_i32_0 = arith.constant 0 : i32
    %c0_i32_1 = arith.constant 0 : i32
    return %c0_i32, %c0_i32_0 : i32, i32
  }
  func.func @transform_3(%arg0: i32) -> (i32, i32) {
    %c0_i32 = arith.constant 0 : i32
    %c0_i32_0 = arith.constant 0 : i32
    %c0_i32_1 = arith.constant 0 : i32
    return %c0_i32, %c0_i32_0 : i32, i32
  }
  func.func @transform_4(%arg0: i32) -> (i32, i32) {
    %c0_i32 = arith.constant 0 : i32
    %c0_i32_0 = arith.constant 0 : i32
    %c0_i32_1 = arith.constant 0 : i32
    return %c0_i32, %c0_i32_0 : i32, i32
  }
  func.func @transform_5(%arg0: i32) -> (i32, i32) {
    %c0_i32 = arith.constant 0 : i32
    %c0_i32_0 = arith.constant 0 : i32
    return %arg0, %c0_i32 : i32, i32
  }
}

</mosaic_0001>

<llo_original>
// kernel: convnet_forward.5
$region0: #{convnet_forward.5}
  #allocation0 [shape = 'u32[]', space=smem, size = 0x4, offset = 0x4, fixed_abs, tag = 'smem constant byte address 0x4 - core index']
  #allocation1 [shape = 'u32[144,128]{1,0:T(1,128)}', space=vmem, size = 0x12000, scoped, tag = 'internal scratch']
  %s0 = inlined_call_operand.vmem [shape: bf16[2,16,16,128], index: 0, kind: input, shape index: {}]
  %s1 = inlined_call_operand.vmem [shape: bf16[9,128,128], index: 1, kind: input, shape index: {}]
  %s2 = inlined_call_operand.vmem [shape: f32[1,128], index: 2, kind: input, shape index: {}]
  %s3 = inlined_call_operand.vmem [shape: bf16[2,9,9,128], index: 3, kind: output, shape index: {}]
  %s4 = sld [smem:[#allocation0]]
  $region52: #{convnet_forward.5} parent=0
    _
  %s6 = ssub.s32 1, %s4
  %s7 = scalar_select 0, %s6, %s4
  loop: start=0, step=1, limit=4
  $region2: #{convnet_forward.5} parent=0 // loop_pre_header
    _
  $region3: #{convnet_forward.5} parent=0 // loop_header
    %s9 = sphi 0, %s13
    %p10 = scmp.ge.s32.totalorder %s9, 4
    %s19 = sphi 0, %s21
    %s22 = sphi 0, %s19
    %s23 = sphi 0, %s22
    %s39 = sphi 0, %s23
    %s43 = sphi 0, %s43
    %s45 = sphi 0, %s43
    %s46 = sphi 0, %s45
    %s60 = sphi 0, %s46
    %s64 = sphi 0, %s64
    %s66 = sphi 0, %s64
    %s67 = sphi 0, %s66
    %s81 = sphi 0, %s67
    %s87 = sphi 0, %s89
    %s90 = sphi 0, %s87
    %s91 = sphi 0, %s90
    %s107 = sphi 0, %s91
  $region4: #{convnet_forward.5} parent=0 // loop_header_branch
    %12 = sbr.rel (%p10) target = $region8
  $region5: #{convnet_forward.5} parent=0 // loop_body
    %s14 = ssub.s32 %s9, 1
    %s15 = ssub.s32 %s9, 2
    %s16 = sadd.s32 %s9, 1
    %s17 = ssub.s32 %s9, %s16
    %p18 = scmp.eq.s32.totalorder %s17, 0
    %s20 = sadd.s32 %s19, 1
    %s21 = scalar_select %p18, %s19, %s20
    %p24 = pneg %p18
    %p25 = scmp.eq.s32.totalorder %s9, 1
    %p26 = por %p24, %p25
    %p27 = scmp.ne.s32.totalorder %s19, %s22
    %p28 = scmp.eq.s32.totalorder %s9, 0
    %p29 = por %p27, %p28
    %p30 = scmp.ne.s32.totalorder %s19, %s22
    %p31 = scmp.eq.s32.totalorder %s14, 1
    %p32 = por %p30, %p31
    %p33 = scmp.ne.s32.totalorder %s22, %s23
    %p34 = scmp.eq.s32.totalorder %s14, 0
    %p35 = por %p33, %p34
    %p36 = scmp.ne.s32.totalorder %s22, %s23
    %p37 = scmp.eq.s32.totalorder %s15, 1
    %p38 = por %p36, %p37
    %p40 = scmp.ne.s32.totalorder %s23, %s39
    %p41 = scmp.eq.s32.totalorder %s15, 0
    %p42 = por %p40, %p41
    %s44 = sadd.s32 %s43, 1
    %p47 = scmp.eq.s32.totalorder %s9, 1
    %p48 = scmp.ne.s32.totalorder %s43, %s45
    %p49 = scmp.eq.s32.totalorder %s9, 0
    %p50 = por %p48, %p49
    %p51 = scmp.ne.s32.totalorder %s43, %s45
    %p52 = scmp.eq.s32.totalorder %s14, 1
    %p53 = por %p51, %p52
    %p54 = scmp.ne.s32.totalorder %s45, %s46
    %p55 = scmp.eq.s32.totalorder %s14, 0
    %p56 = por %p54, %p55
    %p57 = scmp.ne.s32.totalorder %s45, %s46
    %p58 = scmp.eq.s32.totalorder %s15, 1
    %p59 = por %p57, %p58
    %p61 = scmp.ne.s32.totalorder %s46, %s60
    %p62 = scmp.eq.s32.totalorder %s15, 0
    %p63 = por %p61, %p62
    %s65 = sadd.s32 %s64, 1
    %p68 = scmp.eq.s32.totalorder %s9, 1
    %p69 = scmp.ne.s32.totalorder %s64, %s66
    %p70 = scmp.eq.s32.totalorder %s9, 0
    %p71 = por %p69, %p70
    %p72 = scmp.ne.s32.totalorder %s64, %s66
    %p73 = scmp.eq.s32.totalorder %s14, 1
    %p74 = por %p72, %p73
    %p75 = scmp.ne.s32.totalorder %s66, %s67
    %p76 = scmp.eq.s32.totalorder %s14, 0
    %p77 = por %p75, %p76
    %p78 = scmp.ne.s32.totalorder %s66, %s67
    %p79 = scmp.eq.s32.totalorder %s15, 1
    %p80 = por %p78, %p79
    %p82 = scmp.ne.s32.totalorder %s67, %s81
    %p83 = scmp.eq.s32.totalorder %s15, 0
    %p84 = por %p82, %p83
    %s85 = ssub.s32 %s9, %s16
    %p86 = scmp.eq.s32.totalorder %s85, 0
    %s88 = sadd.s32 %s87, 1
    %s89 = scalar_select %p86, %s87, %s88
    %p92 = pneg %p86
    %p93 = scmp.eq.s32.totalorder %s9, 1
    %p94 = por %p92, %p93
    %p95 = scmp.ne.s32.totalorder %s87, %s90
    %p96 = scmp.eq.s32.totalorder %s9, 0
    %p97 = por %p95, %p96
    %p98 = scmp.ne.s32.totalorder %s87, %s90
    %p99 = scmp.eq.s32.totalorder %s14, 1
    %p100 = por %p98, %p99
    %p101 = scmp.ne.s32.totalorder %s90, %s91
    %p102 = scmp.eq.s32.totalorder %s14, 0
    %p103 = por %p101, %p102
    %p104 = scmp.ne.s32.totalorder %s90, %s91
    %p105 = scmp.eq.s32.totalorder %s15, 1
    %p106 = por %p104, %p105
    %p108 = scmp.ne.s32.totalorder %s91, %s107
    %p109 = scmp.eq.s32.totalorder %s15, 0
    %p110 = por %p108, %p109
    %p111 = scmp.le.s32.totalorder 1, %s9
    %p112 = scmp.lt.s32.totalorder %s9, 3
    %p113 = pnand %p111, %p112
    %p114 = pneg %p113
    // Predicated region
    $region9: #{convnet_forward.5} parent=5 // pred_check
      _
    $region10: #{convnet_forward.5} parent=5 // pred_check_branch
      %116 = sbr.rel (%p113) target = $region12
    $region11: #{convnet_forward.5} parent=5 // pred_region
      %s117 = ssub.s32 %s9, 1
      // Predicated region
      $region13: #{convnet_forward.5} parent=11 // pred_check
        %p118 = pneg %p56
      $region14: #{convnet_forward.5} parent=11 // pred_check_branch
        %120 = sbr.rel (%p118) target = $region16
      $region15: #{convnet_forward.5} parent=11 // pred_region
        _
      $region16: #{convnet_forward.5} parent=11 // pred_fallthru
        _
      // Predicated region
      $region17: #{convnet_forward.5} parent=11 // pred_check
        %p121 = pneg %p77
      $region18: #{convnet_forward.5} parent=11 // pred_check_branch
        %123 = sbr.rel (%p121) target = $region20
      $region19: #{convnet_forward.5} parent=11 // pred_region
        _
      $region20: #{convnet_forward.5} parent=11 // pred_fallthru
        _
    $region12: #{convnet_forward.5} parent=5 // pred_fallthru
      _
    %p124 = scmp.lt.s32.totalorder %s9, 2
    // Predicated region
    $region21: #{convnet_forward.5} parent=5 // pred_check
      %p125 = pneg %p124
    $region22: #{convnet_forward.5} parent=5 // pred_check_branch
      %127 = sbr.rel (%p125) target = $region24
    $region23: #{convnet_forward.5} parent=5 // pred_region
      // Predicated region
      $region25: #{convnet_forward.5} parent=23 // pred_check
        %p128 = pneg %p29
      $region26: #{convnet_forward.5} parent=23 // pred_check_branch
        %130 = sbr.rel (%p128) target = $region28
      $region27: #{convnet_forward.5} parent=23 // pred_region
        %p131 = scmp.lt.s32.totalorder %s9, 1
        %s132 = scalar_select %p131, %s9, 1
        %s133 = smul.addr %s132, 32
        %s134 = smul.addr %s133, 4
        %s135 = scalar_lea.vmem %s0, %s134
      $region28: #{convnet_forward.5} parent=23 // pred_fallthru
        _
    $region24: #{convnet_forward.5} parent=5 // pred_fallthru
      _
    %p136 = scmp.le.s32.totalorder 1, %s9
    %p137 = scmp.lt.s32.totalorder %s9, 3
    %p138 = pnand %p136, %p137
    %p139 = pneg %p138
    // Predicated region
    $region29: #{convnet_forward.5} parent=5 // pred_check
      _
    $region30: #{convnet_forward.5} parent=5 // pred_check_branch
      %141 = sbr.rel (%p138) target = $region32
    $region31: #{convnet_forward.5} parent=5 // pred_region
      %s142 = ssub.s32 %s9, 1
      %p143 = scmp.lt.s32.totalorder %s14, 1
      %s144 = scalar_select %p143, %s14, 1
      %s145 = smul.addr %s144, 32
      %s146 = smul.addr %s145, 4
      %s147 = scalar_lea.vmem %s0, %s146
      %p148 = pneg %p35
      %p149 = pneg %p32
      %p150 = pneg %p56
      %p151 = pneg %p53
      %p152 = pneg %p77
      %p153 = pneg %p74
      %p154 = pneg %p103
      %p155 = pneg %p100
      %p156 = scmp.lt.s32.totalorder %s14, 1
      %s157 = scalar_select %p156, %s14, 1
      %s158 = smul.addr %s157, 18
      %s159 = smul.addr %s158, 4
      %s160 = scalar_lea.vmem %s3, %s159
      %p161 = scmp.lt.s32.totalorder %s14, 1
      %s162 = scalar_select %p161, %s14, 1
      %s163 = smul.addr %s162, 32
      %s164 = smul.addr %s163, 4
      %s165 = scalar_lea.vmem %s0, %s164
      %p166 = scmp.lt.s32.totalorder %s14, 1
      %s167 = scalar_select %p166, %s14, 1
      %s168 = smul.addr %s167, 18
      %s169 = smul.addr %s168, 4
      %s170 = scalar_lea.vmem %s3, %s169
      %v172 = vlaneseq
      %v173 = vshrl.u32 %v172, 7
      %v174 = vlaneseq
      %v175 = vand.u32 %v174, 127
      %v176 = vmul.u32 %v173, 2
      %vm177 = vcmp.eq.s32.totalorder %v175, %v176
      %v178 = vsel %vm177, 1, 0
      %v179 = vcvt.s32.f32 %v178
      %v180 = vadd.s32 %v176, 1
      %vm181 = vcmp.eq.s32.totalorder %v175, %v180
      %v182 = vsel %vm181, 1, 0
      %v183 = vcvt.s32.f32 %v182
      %v184 = vld [vmem:[%s2] sm:$0x1]
      %185 = vst [vmem:[%s170] sm:$0xf] 0
      %vm186 = vcmask 1040384
      %vm187 = vsmask.f32 256
      %vm188 = vmand %vm186, %vm187
      %v189 = vld [vmem:[%s170 + $0x4] sm:$0x1]
      %v190 = vsel %vm188, 0, %v189
      %191 = vst [vmem:[%s170 + $0x4] sm:$0x1] %v190
      %192 = vst [vmem:[%s170 + $0x8] sm:$0xf] 0
      %v193 = vld [vmem:[%s170 + $0xc] sm:$0x1]
      %v194 = vsel %vm188, 0, %v193
      %195 = vst [vmem:[%s170 + $0xc] sm:$0x1] %v194
      %196 = vst [vmem:[%s170 + $0x10] sm:$0xf] 0
      %v197 = vld [vmem:[%s170 + $0x14] sm:$0x1]
      %v198 = vsel %vm188, 0, %v197
      %199 = vst [vmem:[%s170 + $0x14] sm:$0x1] %v198
      %200 = vst [vmem:[%s170 + $0x18] sm:$0xf] 0
      %v201 = vld [vmem:[%s170 + $0x1c] sm:$0x1]
      %v202 = vsel %vm188, 0, %v201
      %203 = vst [vmem:[%s170 + $0x1c] sm:$0x1] %v202
      %204 = vst [vmem:[%s170 + $0x20] sm:$0xf] 0
      %v205 = vld [vmem:[%s170 + $0x24] sm:$0x1]
      %v206 = vsel %vm188, 0, %v205
      %207 = vst [vmem:[%s170 + $0x24] sm:$0x1] %v206
      %208 = vst [vmem:[%s170 + $0x28] sm:$0xf] 0
      %v209 = vld [vmem:[%s170 + $0x2c] sm:$0x1]
      %v210 = vsel %vm188, 0, %v209
      %211 = vst [vmem:[%s170 + $0x2c] sm:$0x1] %v210
      %212 = vst [vmem:[%s170 + $0x30] sm:$0xf] 0
      %v213 = vld [vmem:[%s170 + $0x34] sm:$0x1]
      %v214 = vsel %vm188, 0, %v213
      %215 = vst [vmem:[%s170 + $0x34] sm:$0x1] %v214
      %216 = vst [vmem:[%s170 + $0x38] sm:$0xf] 0
      %v217 = vld [vmem:[%s170 + $0x3c] sm:$0x1]
      %v218 = vsel %vm188, 0, %v217
      %219 = vst [vmem:[%s170 + $0x3c] sm:$0x1] %v218
      %220 = vst [vmem:[%s170 + $0x40] sm:$0xf] 0
      %v221 = vld [vmem:[%s170 + $0x44] sm:$0x1]
      %v222 = vsel %vm188, 0, %v221
      %223 = vst [vmem:[%s170 + $0x44] sm:$0x1] %v222
      loop: start=0, step=1, limit=7
      $region33: #{convnet_forward.5} parent=31 // loop_pre_header
        _
      $region34: #{convnet_forward.5} parent=31 // loop_header
        %s225 = sphi 0, %s229
        %p226 = scmp.ge.s32.totalorder %s225, 7
      $region35: #{convnet_forward.5} parent=31 // loop_header_branch
        %228 = sbr.rel (%p226) target = $region39
      $region36: #{convnet_forward.5} parent=31 // loop_body
        %s230 = smul.u32 %s225, 2
        %s231 = smul.u32 %s230, 2
        %s232 = smul.addr %s231, 4
        %s233 = scalar_lea.vmem %s165, %s232
        %v234 = vld [vmem:[%s233] sm:$0xf]
        %v235 = vld [vmem:[%s233 + $0x4] sm:$0x7]
        %v236 = vld [vmem:[%s1] sm:$0xf]
        %v237 = vld [vmem:[%s1 + $0x4] sm:$0xf]
        %v238 = vld [vmem:[%s1 + $0x8] sm:$0xf]
        %v239 = vld [vmem:[%s1 + $0xc] sm:$0xf]
        %v240 = vld [vmem:[%s1 + $0x10] sm:$0xf]
        %v241 = vld [vmem:[%s1 + $0x14] sm:$0xf]
        %v242 = vld [vmem:[%s1 + $0x18] sm:$0xf]
        %v243 = vld [vmem:[%s1 + $0x1c] sm:$0xf]
        %v244 = vld [vmem:[%s1 + $0x20] sm:$0xf]
        %v245 = vld [vmem:[%s1 + $0x24] sm:$0xf]
        %v246 = vld [vmem:[%s1 + $0x28] sm:$0xf]
        %v247 = vld [vmem:[%s1 + $0x2c] sm:$0xf]
        %v248 = vld [vmem:[%s1 + $0x30] sm:$0xf]
        %v249 = vld [vmem:[%s1 + $0x34] sm:$0xf]
        %v250 = vld [vmem:[%s1 + $0x38] sm:$0xf]
        %v251 = vld [vmem:[%s1 + $0x3c] sm:$0xf]
        %v252 = vld [vmem:[%s233 + $0x4] sm:$0xf]
        %s253 = scalar_lea.vmem %s1, 64
        %v254 = vld [vmem:[%s253] sm:$0xf]
        %v255 = vld [vmem:[%s253 + $0x4] sm:$0xf]
        %v256 = vld [vmem:[%s253 + $0x8] sm:$0xf]
        %v257 = vld [vmem:[%s253 + $0xc] sm:$0xf]
        %v258 = vld [vmem:[%s253 + $0x10] sm:$0xf]
        %v259 = vld [vmem:[%s253 + $0x14] sm:$0xf]
        %v260 = vld [vmem:[%s253 + $0x18] sm:$0xf]
        %v261 = vld [vmem:[%s253 + $0x1c] sm:$0xf]
        %v262 = vld [vmem:[%s253 + $0x20] sm:$0xf]
        %v263 = vld [vmem:[%s253 + $0x24] sm:$0xf]
        %v264 = vld [vmem:[%s253 + $0x28] sm:$0xf]
        %v265 = vld [vmem:[%s253 + $0x2c] sm:$0xf]
        %v266 = vld [vmem:[%s253 + $0x30] sm:$0xf]
        %v267 = vld [vmem:[%s253 + $0x34] sm:$0xf]
        %v268 = vld [vmem:[%s253 + $0x38] sm:$0xf]
        %v269 = vld [vmem:[%s253 + $0x3c] sm:$0xf]
        %v272 = vunpack.c.l.b16 %v234
        %v273 = vunpack.c.l.b16 %v252
        %v274 = vpack.c.b16 %v273, %v272
        %v276 = vshrl.u32 %v274, 16
        %v278 = vshll.u32 %v274, 16
        %v280 = vrot.slane %v278, 1
        %v281 = vor.u32 %v276, %v280
        %v299 = vunpack.c.l.b16 %v254
        %v300 = vunpack.c.l.b16 %v255
        %v301 = vunpack.c.l.b16 %v256
        %v302 = vunpack.c.l.b16 %v257
        %v303 = vunpack.c.l.b16 %v258
        %v304 = vunpack.c.l.b16 %v259
        %v305 = vunpack.c.l.b16 %v260
        %v306 = vunpack.c.l.b16 %v261
        %v307 = vunpack.c.l.b16 %v262
        %v308 = vunpack.c.l.b16 %v263
        %v309 = vunpack.c.l.b16 %v264
        %v310 = vunpack.c.l.b16 %v265
        %v311 = vunpack.c.l.b16 %v266
        %v312 = vunpack.c.l.b16 %v267
        %v313 = vunpack.c.l.b16 %v268
        %v314 = vunpack.c.l.b16 %v269
        %v315 = vpack.c.b16 %v300, %v299
        %v316 = vpack.c.b16 %v302, %v301
        %v317 = vpack.c.b16 %v304, %v303
        %v318 = vpack.c.b16 %v306, %v305
        %v319 = vpack.c.b16 %v308, %v307
        %v320 = vpack.c.b16 %v310, %v309
        %v321 = vpack.c.b16 %v312, %v311
        %v322 = vpack.c.b16 %v314, %v313
        %331 = vmatprep.subr.bf16.mxu0 0
        %332 = vmatpush1.bf16.msra.mxu0 %v315
        %333 = vmatprep.subr.bf16.mxu0 0
        %334 = vmatpush1.bf16.msra.mxu0 %v316
        %335 = vmatprep.subr.bf16.mxu0 0
        %336 = vmatpush1.bf16.msra.mxu0 %v317
        %337 = vmatprep.subr.bf16.mxu0 0
        %338 = vmatpush1.bf16.msra.mxu0 %v318
        %339 = vmatprep.subr.bf16.mxu0 0
        %340 = vmatpush1.bf16.msra.mxu0 %v319
        %341 = vmatprep.subr.bf16.mxu0 0
        %342 = vmatpush1.bf16.msra.mxu0 %v320
        %343 = vmatprep.subr.bf16.mxu0 0
        %344 = vmatpush1.bf16.msra.mxu0 %v321
        %345 = vmatprep.subr.bf16.mxu0 0
        %346 = vmatpush1.bf16.msra.mxu0 %v322
        %347 = vmatprep.subr.bf16.mxu0 0
        %348 = vmatpush1.bf16.msra.mxu0 0
        %349 = vmatprep.subr.bf16.mxu0 0
        %350 = vmatpush1.bf16.msra.mxu0 0
        %351 = vmatprep.subr.bf16.mxu0 0
        %352 = vmatpush1.bf16.msra.mxu0 0
        %353 = vmatprep.subr.bf16.mxu0 0
        %354 = vmatpush1.bf16.msra.mxu0 0
        %355 = vmatprep.subr.bf16.mxu0 0
        %356 = vmatpush1.bf16.msra.mxu0 0
        %357 = vmatprep.subr.bf16.mxu0 0
        %358 = vmatpush1.bf16.msra.mxu0 0
        %359 = vmatprep.subr.bf16.mxu0 0
        %360 = vmatpush1.bf16.msra.mxu0 0
        %361 = vmatprep.subr.bf16.mxu0 0
        %362 = vmatpush1.bf16.msra.mxu0 0
        %363 = vmatprep.mubr.bf16.mxu0 0
        %364 = vmatmul.mubr.bf16.gmra.mrb[0].mxu0 %v281
        %v365 = vpop.f32.mrb[0].mxu0
        %v366 = vadd.f32 0.0, %v365
        %v367 = vpop.f32.mrb[0].mxu0
        %v368 = vpop.f32.mrb[0].mxu0
        %v369 = vadd.f32 0.0, %v368
        %v370 = vpop.f32.mrb[0].mxu0
        %371 = vdwg.mxu0
        %v373 = vunpack.c.l.b16 %v235
        %v374 = vpack.c.b16 %v373, %v272
        %v392 = vunpack.c.l.b16 %v236
        %v393 = vunpack.c.l.b16 %v237
        %v394 = vunpack.c.l.b16 %v238
        %v395 = vunpack.c.l.b16 %v239
        %v396 = vunpack.c.l.b16 %v240
        %v397 = vunpack.c.l.b16 %v241
        %v398 = vunpack.c.l.b16 %v242
        %v399 = vunpack.c.l.b16 %v243
        %v400 = vunpack.c.l.b16 %v244
        %v401 = vunpack.c.l.b16 %v245
        %v402 = vunpack.c.l.b16 %v246
        %v403 = vunpack.c.l.b16 %v247
        %v404 = vunpack.c.l.b16 %v248
        %v405 = vunpack.c.l.b16 %v249
        %v406 = vunpack.c.l.b16 %v250
        %v407 = vunpack.c.l.b16 %v251
        %v408 = vpack.c.b16 %v393, %v392
        %v409 = vpack.c.b16 %v395, %v394
        %v410 = vpack.c.b16 %v397, %v396
        %v411 = vpack.c.b16 %v399, %v398
        %v412 = vpack.c.b16 %v401, %v400
        %v413 = vpack.c.b16 %v403, %v402
        %v414 = vpack.c.b16 %v405, %v404
        %v415 = vpack.c.b16 %v407, %v406
        %424 = vmatprep.subr.bf16.mxu0 0
        %425 = vmatpush1.bf16.msra.mxu0 %v408
        %426 = vmatprep.subr.bf16.mxu0 0
        %427 = vmatpush1.bf16.msra.mxu0 %v409
        %428 = vmatprep.subr.bf16.mxu0 0
        %429 = vmatpush1.bf16.msra.mxu0 %v410
        %430 = vmatprep.subr.bf16.mxu0 0
        %431 = vmatpush1.bf16.msra.mxu0 %v411
        %432 = vmatprep.subr.bf16.mxu0 0
        %433 = vmatpush1.bf16.msra.mxu0 %v412
        %434 = vmatprep.subr.bf16.mxu0 0
        %435 = vmatpush1.bf16.msra.mxu0 %v413
        %436 = vmatprep.subr.bf16.mxu0 0
        %437 = vmatpush1.bf16.msra.mxu0 %v414
        %438 = vmatprep.subr.bf16.mxu0 0
        %439 = vmatpush1.bf16.msra.mxu0 %v415
        %440 = vmatprep.subr.bf16.mxu0 0
        %441 = vmatpush1.bf16.msra.mxu0 0
        %442 = vmatprep.subr.bf16.mxu0 0
        %443 = vmatpush1.bf16.msra.mxu0 0
        %444 = vmatprep.subr.bf16.mxu0 0
        %445 = vmatpush1.bf16.msra.mxu0 0
        %446 = vmatprep.subr.bf16.mxu0 0
        %447 = vmatpush1.bf16.msra.mxu0 0
        %448 = vmatprep.subr.bf16.mxu0 0
        %449 = vmatpush1.bf16.msra.mxu0 0
        %450 = vmatprep.subr.bf16.mxu0 0
        %451 = vmatpush1.bf16.msra.mxu0 0
        %452 = vmatprep.subr.bf16.mxu0 0
        %453 = vmatpush1.bf16.msra.mxu0 0
        %454 = vmatprep.subr.bf16.mxu0 0
        %455 = vmatpush1.bf16.msra.mxu0 0
        %456 = vmatprep.mubr.bf16.mxu0 0
        %457 = vmatmul.mubr.bf16.gmra.mrb[0].mxu0 %v374
        %v458 = vpop.f32.mrb[0].mxu0
        %v459 = vadd.f32 %v366, %v458
        %v460 = vpop.f32.mrb[0].mxu0
        %v461 = vpop.f32.mrb[0].mxu0
        %v462 = vadd.f32 %v369, %v461
        %v463 = vpop.f32.mrb[0].mxu0
        %464 = vdwg.mxu0
        %v465 = vld [vmem:[%s233] sm:$0xe]
        %s466 = scalar_lea.vmem %s1, 128
        %v467 = vld [vmem:[%s466] sm:$0xf]
        %v468 = vld [vmem:[%s466 + $0x4] sm:$0xf]
        %v469 = vld [vmem:[%s466 + $0x8] sm:$0xf]
        %v470 = vld [vmem:[%s466 + $0xc] sm:$0xf]
        %v471 = vld [vmem:[%s466 + $0x10] sm:$0xf]
        %v472 = vld [vmem:[%s466 + $0x14] sm:$0xf]
        %v473 = vld [vmem:[%s466 + $0x18] sm:$0xf]
        %v474 = vld [vmem:[%s466 + $0x1c] sm:$0xf]
        %v475 = vld [vmem:[%s466 + $0x20] sm:$0xf]
        %v476 = vld [vmem:[%s466 + $0x24] sm:$0xf]
        %v477 = vld [vmem:[%s466 + $0x28] sm:$0xf]
        %v478 = vld [vmem:[%s466 + $0x2c] sm:$0xf]
        %v479 = vld [vmem:[%s466 + $0x30] sm:$0xf]
        %v480 = vld [vmem:[%s466 + $0x34] sm:$0xf]
        %v481 = vld [vmem:[%s466 + $0x38] sm:$0xf]
        %v482 = vld [vmem:[%s466 + $0x3c] sm:$0xf]
        %v484 = vunpack.c.l.b16 %v465
        %v485 = vpack.c.b16 %v273, %v484
        %v486 = vrot.slane %v485, 1
        %v504 = vunpack.c.l.b16 %v467
        %v505 = vunpack.c.l.b16 %v468
        %v506 = vunpack.c.l.b16 %v469
        %v507 = vunpack.c.l.b16 %v470
        %v508 = vunpack.c.l.b16 %v471
        %v509 = vunpack.c.l.b16 %v472
        %v510 = vunpack.c.l.b16 %v473
        %v511 = vunpack.c.l.b16 %v474
        %v512 = vunpack.c.l.b16 %v475
        %v513 = vunpack.c.l.b16 %v476
        %v514 = vunpack.c.l.b16 %v477
        %v515 = vunpack.c.l.b16 %v478
        %v516 = vunpack.c.l.b16 %v479
        %v517 = vunpack.c.l.b16 %v480
        %v518 = vunpack.c.l.b16 %v481
        %v519 = vunpack.c.l.b16 %v482
        %v520 = vpack.c.b16 %v505, %v504
        %v521 = vpack.c.b16 %v507, %v506
        %v522 = vpack.c.b16 %v509, %v508
        %v523 = vpack.c.b16 %v511, %v510
        %v524 = vpack.c.b16 %v513, %v512
        %v525 = vpack.c.b16 %v515, %v514
        %v526 = vpack.c.b16 %v517, %v516
        %v527 = vpack.c.b16 %v519, %v518
        %536 = vmatprep.subr.bf16.mxu0 0
        %537 = vmatpush1.bf16.msra.mxu0 %v520
        %538 = vmatprep.subr.bf16.mxu0 0
        %539 = vmatpush1.bf16.msra.mxu0 %v521
        %540 = vmatprep.subr.bf16.mxu0 0
        %541 = vmatpush1.bf16.msra.mxu0 %v522
        %542 = vmatprep.subr.bf16.mxu0 0
        %543 = vmatpush1.bf16.msra.mxu0 %v523
        %544 = vmatprep.subr.bf16.mxu0 0
        %545 = vmatpush1.bf16.msra.mxu0 %v524
        %546 = vmatprep.subr.bf16.mxu0 0
        %547 = vmatpush1.bf16.msra.mxu0 %v525
        %548 = vmatprep.subr.bf16.mxu0 0
        %549 = vmatpush1.bf16.msra.mxu0 %v526
        %550 = vmatprep.subr.bf16.mxu0 0
        %551 = vmatpush1.bf16.msra.mxu0 %v527
        %552 = vmatprep.subr.bf16.mxu0 0
        %553 = vmatpush1.bf16.msra.mxu0 0
        %554 = vmatprep.subr.bf16.mxu0 0
        %555 = vmatpush1.bf16.msra.mxu0 0
        %556 = vmatprep.subr.bf16.mxu0 0
        %557 = vmatpush1.bf16.msra.mxu0 0
        %558 = vmatprep.subr.bf16.mxu0 0
        %559 = vmatpush1.bf16.msra.mxu0 0
        %560 = vmatprep.subr.bf16.mxu0 0
        %561 = vmatpush1.bf16.msra.mxu0 0
        %562 = vmatprep.subr.bf16.mxu0 0
        %563 = vmatpush1.bf16.msra.mxu0 0
        %564 = vmatprep.subr.bf16.mxu0 0
        %565 = vmatpush1.bf16.msra.mxu0 0
        %566 = vmatprep.subr.bf16.mxu0 0
        %567 = vmatpush1.bf16.msra.mxu0 0
        %568 = vmatprep.mubr.bf16.mxu0 0
        %569 = vmatmul.mubr.bf16.gmra.mrb[0].mxu0 %v486
        %v570 = vpop.f32.mrb[0].mxu0
        %v571 = vadd.f32 0.0, %v570
        %v572 = vpop.f32.mrb[0].mxu0
        %v573 = vpop.f32.mrb[0].mxu0
        %v574 = vadd.f32 0.0, %v573
        %v575 = vpop.f32.mrb[0].mxu0
        %576 = vdwg.mxu0
        %v577 = vadd.f32 %v459, %v571
        %v578 = vadd.f32 %v462, %v574
        %s579 = sadd.s32 %s230, 1
        %s580 = smul.u32 %s579, 2
        %s581 = smul.addr %s580, 4
        %s582 = scalar_lea.vmem %s165, %s581
        %v583 = vld [vmem:[%s582] sm:$0xf]
        %v584 = vld [vmem:[%s582 + $0x4] sm:$0x7]
        %s585 = scalar_lea.vmem %s1, 192
        %v586 = vld [vmem:[%s585] sm:$0xf]
        %v587 = vld [vmem:[%s585 + $0x4] sm:$0xf]
        %v588 = vld [vmem:[%s585 + $0x8] sm:$0xf]
        %v589 = vld [vmem:[%s585 + $0xc] sm:$0xf]
        %v590 = vld [vmem:[%s585 + $0x10] sm:$0xf]
        %v591 = vld [vmem:[%s585 + $0x14] sm:$0xf]
        %v592 = vld [vmem:[%s585 + $0x18] sm:$0xf]
        %v593 = vld [vmem:[%s585 + $0x1c] sm:$0xf]
        %v594 = vld [vmem:[%s585 + $0x20] sm:$0xf]
        %v595 = vld [vmem:[%s585 + $0x24] sm:$0xf]
        %v596 = vld [vmem:[%s585 + $0x28] sm:$0xf]
        %v597 = vld [vmem:[%s585 + $0x2c] sm:$0xf]
        %v598 = vld [vmem:[%s585 + $0x30] sm:$0xf]
        %v599 = vld [vmem:[%s585 + $0x34] sm:$0xf]
        %v600 = vld [vmem:[%s585 + $0x38] sm:$0xf]
        %v601 = vld [vmem:[%s585 + $0x3c] sm:$0xf]
        %v604 = vunpack.c.l.b16 %v583
        %v605 = vunpack.c.l.b16 %v584
        %v606 = vpack.c.b16 %v605, %v604
        %v624 = vunpack.c.l.b16 %v586
        %v625 = vunpack.c.l.b16 %v587
        %v626 = vunpack.c.l.b16 %v588
        %v627 = vunpack.c.l.b16 %v589
        %v628 = vunpack.c.l.b16 %v590
        %v629 = vunpack.c.l.b16 %v591
        %v630 = vunpack.c.l.b16 %v592
        %v631 = vunpack.c.l.b16 %v593
        %v632 = vunpack.c.l.b16 %v594
        %v633 = vunpack.c.l.b16 %v595
        %v634 = vunpack.c.l.b16 %v596
        %v635 = vunpack.c.l.b16 %v597
        %v636 = vunpack.c.l.b16 %v598
        %v637 = vunpack.c.l.b16 %v599
        %v638 = vunpack.c.l.b16 %v600
        %v639 = vunpack.c.l.b16 %v601
        %v640 = vpack.c.b16 %v625, %v624
        %v641 = vpack.c.b16 %v627, %v626
        %v642 = vpack.c.b16 %v629, %v628
        %v643 = vpack.c.b16 %v631, %v630
        %v644 = vpack.c.b16 %v633, %v632
        %v645 = vpack.c.b16 %v635, %v634
        %v646 = vpack.c.b16 %v637, %v636
        %v647 = vpack.c.b16 %v639, %v638
        %656 = vmatprep.subr.bf16.mxu0 0
        %657 = vmatpush1.bf16.msra.mxu0 %v640
        %658 = vmatprep.subr.bf16.mxu0 0
        %659 = vmatpush1.bf16.msra.mxu0 %v641
        %660 = vmatprep.subr.bf16.mxu0 0
        %661 = vmatpush1.bf16.msra.mxu0 %v642
        %662 = vmatprep.subr.bf16.mxu0 0
        %663 = vmatpush1.bf16.msra.mxu0 %v643
        %664 = vmatprep.subr.bf16.mxu0 0
        %665 = vmatpush1.bf16.msra.mxu0 %v644
        %666 = vmatprep.subr.bf16.mxu0 0
        %667 = vmatpush1.bf16.msra.mxu0 %v645
        %668 = vmatprep.subr.bf16.mxu0 0
        %669 = vmatpush1.bf16.msra.mxu0 %v646
        %670 = vmatprep.subr.bf16.mxu0 0
        %671 = vmatpush1.bf16.msra.mxu0 %v647
        %672 = vmatprep.subr.bf16.mxu0 0
        %673 = vmatpush1.bf16.msra.mxu0 0
        %674 = vmatprep.subr.bf16.mxu0 0
        %675 = vmatpush1.bf16.msra.mxu0 0
        %676 = vmatprep.subr.bf16.mxu0 0
        %677 = vmatpush1.bf16.msra.mxu0 0
        %678 = vmatprep.subr.bf16.mxu0 0
        %679 = vmatpush1.bf16.msra.mxu0 0
        %680 = vmatprep.subr.bf16.mxu0 0
        %681 = vmatpush1.bf16.msra.mxu0 0
        %682 = vmatprep.subr.bf16.mxu0 0
        %683 = vmatpush1.bf16.msra.mxu0 0
        %684 = vmatprep.subr.bf16.mxu0 0
        %685 = vmatpush1.bf16.msra.mxu0 0
        %686 = vmatprep.subr.bf16.mxu0 0
        %687 = vmatpush1.bf16.msra.mxu0 0
        %688 = vmatprep.mubr.bf16.mxu0 0
        %689 = vmatmul.mubr.bf16.gmra.mrb[0].mxu0 %v606
        %v690 = vpop.f32.mrb[0].mxu0
        %v691 = vadd.f32 0.0, %v690
        %v692 = vpop.f32.mrb[0].mxu0
        %v693 = vpop.f32.mrb[0].mxu0
        %v694 = vadd.f32 0.0, %v693
        %v695 = vpop.f32.mrb[0].mxu0
        %696 = vdwg.mxu0
        %v697 = vadd.f32 %v577, %v691
        %v698 = vadd.f32 %v578, %v694
        %v699 = vld [vmem:[%s582 + $0x4] sm:$0xf]
        %s700 = scalar_lea.vmem %s1, 256
        %v701 = vld [vmem:[%s700] sm:$0xf]
        %v702 = vld [vmem:[%s700 + $0x4] sm:$0xf]
        %v703 = vld [vmem:[%s700 + $0x8] sm:$0xf]
        %v704 = vld [vmem:[%s700 + $0xc] sm:$0xf]
        %v705 = vld [vmem:[%s700 + $0x10] sm:$0xf]
        %v706 = vld [vmem:[%s700 + $0x14] sm:$0xf]
        %v707 = vld [vmem:[%s700 + $0x18] sm:$0xf]
        %v708 = vld [vmem:[%s700 + $0x1c] sm:$0xf]
        %v709 = vld [vmem:[%s700 + $0x20] sm:$0xf]
        %v710 = vld [vmem:[%s700 + $0x24] sm:$0xf]
        %v711 = vld [vmem:[%s700 + $0x28] sm:$0xf]
        %v712 = vld [vmem:[%s700 + $0x2c] sm:$0xf]
        %v713 = vld [vmem:[%s700 + $0x30] sm:$0xf]
        %v714 = vld [vmem:[%s700 + $0x34] sm:$0xf]
        %v715 = vld [vmem:[%s700 + $0x38] sm:$0xf]
        %v716 = vld [vmem:[%s700 + $0x3c] sm:$0xf]
        %v718 = vunpack.c.l.b16 %v699
        %v719 = vpack.c.b16 %v718, %v604
        %v721 = vshrl.u32 %v719, 16
        %v723 = vshll.u32 %v719, 16
        %v725 = vrot.slane %v723, 1
        %v726 = vor.u32 %v721, %v725
        %v744 = vunpack.c.l.b16 %v701
        %v745 = vunpack.c.l.b16 %v702
        %v746 = vunpack.c.l.b16 %v703
        %v747 = vunpack.c.l.b16 %v704
        %v748 = vunpack.c.l.b16 %v705
        %v749 = vunpack.c.l.b16 %v706
        %v750 = vunpack.c.l.b16 %v707
        %v751 = vunpack.c.l.b16 %v708
        %v752 = vunpack.c.l.b16 %v709
        %v753 = vunpack.c.l.b16 %v710
        %v754 = vunpack.c.l.b16 %v711
        %v755 = vunpack.c.l.b16 %v712
        %v756 = vunpack.c.l.b16 %v713
        %v757 = vunpack.c.l.b16 %v714
        %v758 = vunpack.c.l.b16 %v715
        %v759 = vunpack.c.l.b16 %v716
        %v760 = vpack.c.b16 %v745, %v744
        %v761 = vpack.c.b16 %v747, %v746
        %v762 = vpack.c.b16 %v749, %v748
        %v763 = vpack.c.b16 %v751, %v750
        %v764 = vpack.c.b16 %v753, %v752
        %v765 = vpack.c.b16 %v755, %v754
        %v766 = vpack.c.b16 %v757, %v756
        %v767 = vpack.c.b16 %v759, %v758
        %776 = vmatprep.subr.bf16.mxu0 0
        %777 = vmatpush1.bf16.msra.mxu0 %v760
        %778 = vmatprep.subr.bf16.mxu0 0
        %779 = vmatpush1.bf16.msra.mxu0 %v761
        %780 = vmatprep.subr.bf16.mxu0 0
        %781 = vmatpush1.bf16.msra.mxu0 %v762
        %782 = vmatprep.subr.bf16.mxu0 0
        %783 = vmatpush1.bf16.msra.mxu0 %v763
        %784 = vmatprep.subr.bf16.mxu0 0
        %785 = vmatpush1.bf16.msra.mxu0 %v764
        %786 = vmatprep.subr.bf16.mxu0 0
        %787 = vmatpush1.bf16.msra.mxu0 %v765
        %788 = vmatprep.subr.bf16.mxu0 0
        %789 = vmatpush1.bf16.msra.mxu0 %v766
        %790 = vmatprep.subr.bf16.mxu0 0
        %791 = vmatpush1.bf16.msra.mxu0 %v767
        %792 = vmatprep.subr.bf16.mxu0 0
        %793 = vmatpush1.bf16.msra.mxu0 0
        %794 = vmatprep.subr.bf16.mxu0 0
        %795 = vmatpush1.bf16.msra.mxu0 0
        %796 = vmatprep.subr.bf16.mxu0 0
        %797 = vmatpush1.bf16.msra.mxu0 0
        %798 = vmatprep.subr.bf16.mxu0 0
        %799 = vmatpush1.bf16.msra.mxu0 0
        %800 = vmatprep.subr.bf16.mxu0 0
        %801 = vmatpush1.bf16.msra.mxu0 0
        %802 = vmatprep.subr.bf16.mxu0 0
        %803 = vmatpush1.bf16.msra.mxu0 0
        %804 = vmatprep.subr.bf16.mxu0 0
        %805 = vmatpush1.bf16.msra.mxu0 0
        %806 = vmatprep.subr.bf16.mxu0 0
        %807 = vmatpush1.bf16.msra.mxu0 0
        %808 = vmatprep.mubr.bf16.mxu0 0
        %809 = vmatmul.mubr.bf16.gmra.mrb[0].mxu0 %v726
        %v810 = vpop.f32.mrb[0].mxu0
        %v811 = vadd.f32 0.0, %v810
        %v812 = vpop.f32.mrb[0].mxu0
        %v813 = vpop.f32.mrb[0].mxu0
        %v814 = vadd.f32 0.0, %v813
        %v815 = vpop.f32.mrb[0].mxu0
        %816 = vdwg.mxu0
        %v817 = vadd.f32 %v697, %v811
        %v818 = vadd.f32 %v698, %v814
        %v819 = vld [vmem:[%s582] sm:$0xe]
        %s820 = scalar_lea.vmem %s1, 320
        %v821 = vld [vmem:[%s820] sm:$0xf]
        %v822 = vld [vmem:[%s820 + $0x4] sm:$0xf]
        %v823 = vld [vmem:[%s820 + $0x8] sm:$0xf]
        %v824 = vld [vmem:[%s820 + $0xc] sm:$0xf]
        %v825 = vld [vmem:[%s820 + $0x10] sm:$0xf]
        %v826 = vld [vmem:[%s820 + $0x14] sm:$0xf]
        %v827 = vld [vmem:[%s820 + $0x18] sm:$0xf]
        %v828 = vld [vmem:[%s820 + $0x1c] sm:$0xf]
        %v829 = vld [vmem:[%s820 + $0x20] sm:$0xf]
        %v830 = vld [vmem:[%s820 + $0x24] sm:$0xf]
        %v831 = vld [vmem:[%s820 + $0x28] sm:$0xf]
        %v832 = vld [vmem:[%s820 + $0x2c] sm:$0xf]
        %v833 = vld [vmem:[%s820 + $0x30] sm:$0xf]
        %v834 = vld [vmem:[%s820 + $0x34] sm:$0xf]
        %v835 = vld [vmem:[%s820 + $0x38] sm:$0xf]
        %v836 = vld [vmem:[%s820 + $0x3c] sm:$0xf]
        %v838 = vunpack.c.l.b16 %v819
        %v839 = vpack.c.b16 %v718, %v838
        %v840 = vrot.slane %v839, 1
        %v858 = vunpack.c.l.b16 %v821
        %v859 = vunpack.c.l.b16 %v822
        %v860 = vunpack.c.l.b16 %v823
        %v861 = vunpack.c.l.b16 %v824
        %v862 = vunpack.c.l.b16 %v825
        %v863 = vunpack.c.l.b16 %v826
        %v864 = vunpack.c.l.b16 %v827
        %v865 = vunpack.c.l.b16 %v828
        %v866 = vunpack.c.l.b16 %v829
        %v867 = vunpack.c.l.b16 %v830
        %v868 = vunpack.c.l.b16 %v831
        %v869 = vunpack.c.l.b16 %v832
        %v870 = vunpack.c.l.b16 %v833
        %v871 = vunpack.c.l.b16 %v834
        %v872 = vunpack.c.l.b16 %v835
        %v873 = vunpack.c.l.b16 %v836
        %v874 = vpack.c.b16 %v859, %v858
        %v875 = vpack.c.b16 %v861, %v860
        %v876 = vpack.c.b16 %v863, %v862
        %v877 = vpack.c.b16 %v865, %v864
        %v878 = vpack.c.b16 %v867, %v866
        %v879 = vpack.c.b16 %v869, %v868
        %v880 = vpack.c.b16 %v871, %v870
        %v881 = vpack.c.b16 %v873, %v872
        %890 = vmatprep.subr.bf16.mxu0 0
        %891 = vmatpush1.bf16.msra.mxu0 %v874
        %892 = vmatprep.subr.bf16.mxu0 0
        %893 = vmatpush1.bf16.msra.mxu0 %v875
        %894 = vmatprep.subr.bf16.mxu0 0
        %895 = vmatpush1.bf16.msra.mxu0 %v876
        %896 = vmatprep.subr.bf16.mxu0 0
        %897 = vmatpush1.bf16.msra.mxu0 %v877
        %898 = vmatprep.subr.bf16.mxu0 0
        %899 = vmatpush1.bf16.msra.mxu0 %v878
        %900 = vmatprep.subr.bf16.mxu0 0
        %901 = vmatpush1.bf16.msra.mxu0 %v879
        %902 = vmatprep.subr.bf16.mxu0 0
        %903 = vmatpush1.bf16.msra.mxu0 %v880
        %904 = vmatprep.subr.bf16.mxu0 0
        %905 = vmatpush1.bf16.msra.mxu0 %v881
        %906 = vmatprep.subr.bf16.mxu0 0
        %907 = vmatpush1.bf16.msra.mxu0 0
        %908 = vmatprep.subr.bf16.mxu0 0
        %909 = vmatpush1.bf16.msra.mxu0 0
        %910 = vmatprep.subr.bf16.mxu0 0
        %911 = vmatpush1.bf16.msra.mxu0 0
        %912 = vmatprep.subr.bf16.mxu0 0
        %913 = vmatpush1.bf16.msra.mxu0 0
        %914 = vmatprep.subr.bf16.mxu0 0
        %915 = vmatpush1.bf16.msra.mxu0 0
        %916 = vmatprep.subr.bf16.mxu0 0
        %917 = vmatpush1.bf16.msra.mxu0 0
        %918 = vmatprep.subr.bf16.mxu0 0
        %919 = vmatpush1.bf16.msra.mxu0 0
        %920 = vmatprep.subr.bf16.mxu0 0
        %921 = vmatpush1.bf16.msra.mxu0 0
        %922 = vmatprep.mubr.bf16.mxu0 0
        %923 = vmatmul.mubr.bf16.gmra.mrb[0].mxu0 %v840
        %v924 = vpop.f32.mrb[0].mxu0
        %v925 = vadd.f32 0.0, %v924
        %v926 = vpop.f32.mrb[0].mxu0
        %v927 = vpop.f32.mrb[0].mxu0
        %v928 = vadd.f32 0.0, %v927
        %v929 = vpop.f32.mrb[0].mxu0
        %930 = vdwg.mxu0
        %v931 = vadd.f32 %v817, %v925
        %v932 = vadd.f32 %v818, %v928
        %s933 = sadd.s32 %s230, 2
        %s934 = smul.u32 %s933, 2
        %s935 = smul.addr %s934, 4
        %s936 = scalar_lea.vmem %s165, %s935
        %v937 = vld [vmem:[%s936] sm:$0xf]
        %v938 = vld [vmem:[%s936 + $0x4] sm:$0x7]
        %s939 = scalar_lea.vmem %s1, 384
        %v940 = vld [vmem:[%s939] sm:$0xf]
        %v941 = vld [vmem:[%s939 + $0x4] sm:$0xf]
        %v942 = vld [vmem:[%s939 + $0x8] sm:$0xf]
        %v943 = vld [vmem:[%s939 + $0xc] sm:$0xf]
        %v944 = vld [vmem:[%s939 + $0x10] sm:$0xf]
        %v945 = vld [vmem:[%s939 + $0x14] sm:$0xf]
        %v946 = vld [vmem:[%s939 + $0x18] sm:$0xf]
        %v947 = vld [vmem:[%s939 + $0x1c] sm:$0xf]
        %v948 = vld [vmem:[%s939 + $0x20] sm:$0xf]
        %v949 = vld [vmem:[%s939 + $0x24] sm:$0xf]
        %v950 = vld [vmem:[%s939 + $0x28] sm:$0xf]
        %v951 = vld [vmem:[%s939 + $0x2c] sm:$0xf]
        %v952 = vld [vmem:[%s939 + $0x30] sm:$0xf]
        %v953 = vld [vmem:[%s939 + $0x34] sm:$0xf]
        %v954 = vld [vmem:[%s939 + $0x38] sm:$0xf]
        %v955 = vld [vmem:[%s939 + $0x3c] sm:$0xf]
        %v958 = vunpack.c.l.b16 %v937
        %v959 = vunpack.c.l.b16 %v938
        %v960 = vpack.c.b16 %v959, %v958
        %v978 = vunpack.c.l.b16 %v940
        %v979 = vunpack.c.l.b16 %v941
        %v980 = vunpack.c.l.b16 %v942
        %v981 = vunpack.c.l.b16 %v943
        %v982 = vunpack.c.l.b16 %v944
        %v983 = vunpack.c.l.b16 %v945
        %v984 = vunpack.c.l.b16 %v946
        %v985 = vunpack.c.l.b16 %v947
        %v986 = vunpack.c.l.b16 %v948
        %v987 = vunpack.c.l.b16 %v949
        %v988 = vunpack.c.l.b16 %v950
        %v989 = vunpack.c.l.b16 %v951
        %v990 = vunpack.c.l.b16 %v952
        %v991 = vunpack.c.l.b16 %v953
        %v992 = vunpack.c.l.b16 %v954
        %v993 = vunpack.c.l.b16 %v955
        %v994 = vpack.c.b16 %v979, %v978
        %v995 = vpack.c.b16 %v981, %v980
        %v996 = vpack.c.b16 %v983, %v982
        %v997 = vpack.c.b16 %v985, %v984
        %v998 = vpack.c.b16 %v987, %v986
        %v999 = vpack.c.b16 %v989, %v988
        %v1000 = vpack.c.b16 %v991, %v990
        %v1001 = vpack.c.b16 %v993, %v992
        %1010 = vmatprep.subr.bf16.mxu0 0
        %1011 = vmatpush1.bf16.msra.mxu0 %v994
        %1012 = vmatprep.subr.bf16.mxu0 0
        %1013 = vmatpush1.bf16.msra.mxu0 %v995
        %1014 = vmatprep.subr.bf16.mxu0 0
        %1015 = vmatpush1.bf16.msra.mxu0 %v996
        %1016 = vmatprep.subr.bf16.mxu0 0
        %1017 = vmatpush1.bf16.msra.mxu0 %v997
        %1018 = vmatprep.subr.bf16.mxu0 0
        %1019 = vmatpush1.bf16.msra.mxu0 %v998
        %1020 = vmatprep.subr.bf16.mxu0 0
        %1021 = vmatpush1.bf16.msra.mxu0 %v999
        %1022 = vmatprep.subr.bf16.mxu0 0
        %1023 = vmatpush1.bf16.msra.mxu0 %v1000
        %1024 = vmatprep.subr.bf16.mxu0 0
        %1025 = vmatpush1.bf16.msra.mxu0 %v1001
        %1026 = vmatprep.subr.bf16.mxu0 0
        %1027 = vmatpush1.bf16.msra.mxu0 0
        %1028 = vmatprep.subr.bf16.mxu0 0
        %1029 = vmatpush1.bf16.msra.mxu0 0
        %1030 = vmatprep.subr.bf16.mxu0 0
        %1031 = vmatpush1.bf16.msra.mxu0 0
        %1032 = vmatprep.subr.bf16.mxu0 0
        %1033 = vmatpush1.bf16.msra.mxu0 0
        %1034 = vmatprep.subr.bf16.mxu0 0
        %1035 = vmatpush1.bf16.msra.mxu0 0
        %1036 = vmatprep.subr.bf16.mxu0 0
        %1037 = vmatpush1.bf16.msra.mxu0 0
        %1038 = vmatprep.subr.bf16.mxu0 0
        %1039 = vmatpush1.bf16.msra.mxu0 0
        %1040 = vmatprep.subr.bf16.mxu0 0
        %1041 = vmatpush1.bf16.msra.mxu0 0
        %1042 = vmatprep.mubr.bf16.mxu0 0
        %1043 = vmatmul.mubr.bf16.gmra.mrb[0].mxu0 %v960
        %v1044 = vpop.f32.mrb[0].mxu0
        %v1045 = vadd.f32 0.0, %v1044
        %v1046 = vpop.f32.mrb[0].mxu0
        %v1047 = vpop.f32.mrb[0].mxu0
        %v1048 = vadd.f32 0.0, %v1047
        %v1049 = vpop.f32.mrb[0].mxu0
        %1050 = vdwg.mxu0
        %v1051 = vadd.f32 %v931, %v1045
        %v1052 = vadd.f32 %v932, %v1048
        %v1053 = vld [vmem:[%s936 + $0x4] sm:$0xf]
        %s1054 = scalar_lea.vmem %s1, 448
        %v1055 = vld [vmem:[%s1054] sm:$0xf]
        %v1056 = vld [vmem:[%s1054 + $0x4] sm:$0xf]
        %v1057 = vld [vmem:[%s1054 + $0x8] sm:$0xf]
        %v1058 = vld [vmem:[%s1054 + $0xc] sm:$0xf]
        %v1059 = vld [vmem:[%s1054 + $0x10] sm:$0xf]
        %v1060 = vld [vmem:[%s1054 + $0x14] sm:$0xf]
        %v1061 = vld [vmem:[%s1054 + $0x18] sm:$0xf]
        %v1062 = vld [vmem:[%s1054 + $0x1c] sm:$0xf]
        %v1063 = vld [vmem:[%s1054 + $0x20] sm:$0xf]
        %v1064 = vld [vmem:[%s1054 + $0x24] sm:$0xf]
        %v1065 = vld [vmem:[%s1054 + $0x28] sm:$0xf]
        %v1066 = vld [vmem:[%s1054 + $0x2c] sm:$0xf]
        %v1067 = vld [vmem:[%s1054 + $0x30] sm:$0xf]
        %v1068 = vld [vmem:[%s1054 + $0x34] sm:$0xf]
        %v1069 = vld [vmem:[%s1054 + $0x38] sm:$0xf]
        %v1070 = vld [vmem:[%s1054 + $0x3c] sm:$0xf]
        %v1072 = vunpack.c.l.b16 %v1053
        %v1073 = vpack.c.b16 %v1072, %v958
        %v1075 = vshrl.u32 %v1073, 16
        %v1077 = vshll.u32 %v1073, 16
        %v1079 = vrot.slane %v1077, 1
        %v1080 = vor.u32 %v1075, %v1079
        %v1098 = vunpack.c.l.b16 %v1055
        %v1099 = vunpack.c.l.b16 %v1056
        %v1100 = vunpack.c.l.b16 %v1057
        %v1101 = vunpack.c.l.b16 %v1058
        %v1102 = vunpack.c.l.b16 %v1059
        %v1103 = vunpack.c.l.b16 %v1060
        %v1104 = vunpack.c.l.b16 %v1061
        %v1105 = vunpack.c.l.b16 %v1062
        %v1106 = vunpack.c.l.b16 %v1063
        %v1107 = vunpack.c.l.b16 %v1064
        %v1108 = vunpack.c.l.b16 %v1065
        %v1109 = vunpack.c.l.b16 %v1066
        %v1110 = vunpack.c.l.b16 %v1067
        %v1111 = vunpack.c.l.b16 %v1068
        %v1112 = vunpack.c.l.b16 %v1069
        %v1113 = vunpack.c.l.b16 %v1070
        %v1114 = vpack.c.b16 %v1099, %v1098
        %v1115 = vpack.c.b16 %v1101, %v1100
        %v1116 = vpack.c.b16 %v1103, %v1102
        %v1117 = vpack.c.b16 %v1105, %v1104
        %v1118 = vpack.c.b16 %v1107, %v1106
        %v1119 = vpack.c.b16 %v1109, %v1108
        %v1120 = vpack.c.b16 %v1111, %v1110
        %v1121 = vpack.c.b16 %v1113, %v1112
        %1130 = vmatprep.subr.bf16.mxu0 0
        %1131 = vmatpush1.bf16.msra.mxu0 %v1114
        %1132 = vmatprep.subr.bf16.mxu0 0
        %1133 = vmatpush1.bf16.msra.mxu0 %v1115
        %1134 = vmatprep.subr.bf16.mxu0 0
        %1135 = vmatpush1.bf16.msra.mxu0 %v1116
        %1136 = vmatprep.subr.bf16.mxu0 0
        %1137 = vmatpush1.bf16.msra.mxu0 %v1117
        %1138 = vmatprep.subr.bf16.mxu0 0
        %1139 = vmatpush1.bf16.msra.mxu0 %v1118
        %1140 = vmatprep.subr.bf16.mxu0 0
        %1141 = vmatpush1.bf16.msra.mxu0 %v1119
        %1142 = vmatprep.subr.bf16.mxu0 0
        %1143 = vmatpush1.bf16.msra.mxu0 %v1120
        %1144 = vmatprep.subr.bf16.mxu0 0
        %1145 = vmatpush1.bf16.msra.mxu0 %v1121
        %1146 = vmatprep.subr.bf16.mxu0 0
        %1147 = vmatpush1.bf16.msra.mxu0 0
        %1148 = vmatprep.subr.bf16.mxu0 0
        %1149 = vmatpush1.bf16.msra.mxu0 0
        %1150 = vmatprep.subr.bf16.mxu0 0
        %1151 = vmatpush1.bf16.msra.mxu0 0
        %1152 = vmatprep.subr.bf16.mxu0 0
        %1153 = vmatpush1.bf16.msra.mxu0 0
        %1154 = vmatprep.subr.bf16.mxu0 0
        %1155 = vmatpush1.bf16.msra.mxu0 0
        %1156 = vmatprep.subr.bf16.mxu0 0
        %1157 = vmatpush1.bf16.msra.mxu0 0
        %1158 = vmatprep.subr.bf16.mxu0 0
        %1159 = vmatpush1.bf16.msra.mxu0 0
        %1160 = vmatprep.subr.bf16.mxu0 0
        %1161 = vmatpush1.bf16.msra.mxu0 0
        %1162 = vmatprep.mubr.bf16.mxu0 0
        %1163 = vmatmul.mubr.bf16.gmra.mrb[0].mxu0 %v1080
        %v1164 = vpop.f32.mrb[0].mxu0
        %v1165 = vadd.f32 0.0, %v1164
        %v1166 = vpop.f32.mrb[0].mxu0
        %v1167 = vpop.f32.mrb[0].mxu0
        %v1168 = vadd.f32 0.0, %v1167
        %v1169 = vpop.f32.mrb[0].mxu0
        %1170 = vdwg.mxu0
        %v1171 = vadd.f32 %v1051, %v1165
        %v1172 = vadd.f32 %v1052, %v1168
        %v1173 = vld [vmem:[%s936] sm:$0xe]
        %s1174 = scalar_lea.vmem %s1, 512
        %v1175 = vld [vmem:[%s1174] sm:$0xf]
        %v1176 = vld [vmem:[%s1174 + $0x4] sm:$0xf]
        %v1177 = vld [vmem:[%s1174 + $0x8] sm:$0xf]
        %v1178 = vld [vmem:[%s1174 + $0xc] sm:$0xf]
        %v1179 = vld [vmem:[%s1174 + $0x10] sm:$0xf]
        %v1180 = vld [vmem:[%s1174 + $0x14] sm:$0xf]
        %v1181 = vld [vmem:[%s1174 + $0x18] sm:$0xf]
        %v1182 = vld [vmem:[%s1174 + $0x1c] sm:$0xf]
        %v1183 = vld [vmem:[%s1174 + $0x20] sm:$0xf]
        %v1184 = vld [vmem:[%s1174 + $0x24] sm:$0xf]
        %v1185 = vld [vmem:[%s1174 + $0x28] sm:$0xf]
        %v1186 = vld [vmem:[%s1174 + $0x2c] sm:$0xf]
        %v1187 = vld [vmem:[%s1174 + $0x30] sm:$0xf]
        %v1188 = vld [vmem:[%s1174 + $0x34] sm:$0xf]
        %v1189 = vld [vmem:[%s1174 + $0x38] sm:$0xf]
        %v1190 = vld [vmem:[%s1174 + $0x3c] sm:$0xf]
        %v1192 = vunpack.c.l.b16 %v1173
        %v1193 = vpack.c.b16 %v1072, %v1192
        %v1194 = vrot.slane %v1193, 1
        %v1212 = vunpack.c.l.b16 %v1175
        %v1213 = vunpack.c.l.b16 %v1176
        %v1214 = vunpack.c.l.b16 %v1177
        %v1215 = vunpack.c.l.b16 %v1178
        %v1216 = vunpack.c.l.b16 %v1179
        %v1217 = vunpack.c.l.b16 %v1180
        %v1218 = vunpack.c.l.b16 %v1181
        %v1219 = vunpack.c.l.b16 %v1182
        %v1220 = vunpack.c.l.b16 %v1183
        %v1221 = vunpack.c.l.b16 %v1184
        %v1222 = vunpack.c.l.b16 %v1185
        %v1223 = vunpack.c.l.b16 %v1186
        %v1224 = vunpack.c.l.b16 %v1187
        %v1225 = vunpack.c.l.b16 %v1188
        %v1226 = vunpack.c.l.b16 %v1189
        %v1227 = vunpack.c.l.b16 %v1190
        %v1228 = vpack.c.b16 %v1213, %v1212
        %v1229 = vpack.c.b16 %v1215, %v1214
        %v1230 = vpack.c.b16 %v1217, %v1216
        %v1231 = vpack.c.b16 %v1219, %v1218
        %v1232 = vpack.c.b16 %v1221, %v1220
        %v1233 = vpack.c.b16 %v1223, %v1222
        %v1234 = vpack.c.b16 %v1225, %v1224
        %v1235 = vpack.c.b16 %v1227, %v1226
        %1244 = vmatprep.subr.bf16.mxu0 0
        %1245 = vmatpush1.bf16.msra.mxu0 %v1228
        %1246 = vmatprep.subr.bf16.mxu0 0
        %1247 = vmatpush1.bf16.msra.mxu0 %v1229
        %1248 = vmatprep.subr.bf16.mxu0 0
        %1249 = vmatpush1.bf16.msra.mxu0 %v1230
        %1250 = vmatprep.subr.bf16.mxu0 0
        %1251 = vmatpush1.bf16.msra.mxu0 %v1231
        %1252 = vmatprep.subr.bf16.mxu0 0
        %1253 = vmatpush1.bf16.msra.mxu0 %v1232
        %1254 = vmatprep.subr.bf16.mxu0 0
        %1255 = vmatpush1.bf16.msra.mxu0 %v1233
        %1256 = vmatprep.subr.bf16.mxu0 0
        %1257 = vmatpush1.bf16.msra.mxu0 %v1234
        %1258 = vmatprep.subr.bf16.mxu0 0
        %1259 = vmatpush1.bf16.msra.mxu0 %v1235
        %1260 = vmatprep.subr.bf16.mxu0 0
        %1261 = vmatpush1.bf16.msra.mxu0 0
        %1262 = vmatprep.subr.bf16.mxu0 0
        %1263 = vmatpush1.bf16.msra.mxu0 0
        %1264 = vmatprep.subr.bf16.mxu0 0
        %1265 = vmatpush1.bf16.msra.mxu0 0
        %1266 = vmatprep.subr.bf16.mxu0 0
        %1267 = vmatpush1.bf16.msra.mxu0 0
        %1268 = vmatprep.subr.bf16.mxu0 0
        %1269 = vmatpush1.bf16.msra.mxu0 0
        %1270 = vmatprep.subr.bf16.mxu0 0
        %1271 = vmatpush1.bf16.msra.mxu0 0
        %1272 = vmatprep.subr.bf16.mxu0 0
        %1273 = vmatpush1.bf16.msra.mxu0 0
        %1274 = vmatprep.subr.bf16.mxu0 0
        %1275 = vmatpush1.bf16.msra.mxu0 0
        %1276 = vmatprep.mubr.bf16.mxu0 0
        %1277 = vmatmul.mubr.bf16.gmra.mrb[0].mxu0 %v1194
        %v1278 = vpop.f32.mrb[0].mxu0
        %v1279 = vadd.f32 0.0, %v1278
        %v1280 = vpop.f32.mrb[0].mxu0
        %v1281 = vpop.f32.mrb[0].mxu0
        %v1282 = vadd.f32 0.0, %v1281
        %v1283 = vpop.f32.mrb[0].mxu0
        %1284 = vdwg.mxu0
        %v1285 = vadd.f32 %v1171, %v1279
        %v1286 = vadd.f32 %v1172, %v1282
        %1287 = vmatprep.subr.bf16.mxu0 0
        %1288 = vmatpush1.bf16.msra.mxu0 %v315
        %1289 = vmatprep.subr.bf16.mxu0 0
        %1290 = vmatpush1.bf16.msra.mxu0 %v316
        %1291 = vmatprep.subr.bf16.mxu0 0
        %1292 = vmatpush1.bf16.msra.mxu0 %v317
        %1293 = vmatprep.subr.bf16.mxu0 0
        %1294 = vmatpush1.bf16.msra.mxu0 %v318
        %1295 = vmatprep.subr.bf16.mxu0 0
        %1296 = vmatpush1.bf16.msra.mxu0 %v319
        %1297 = vmatprep.subr.bf16.mxu0 0
        %1298 = vmatpush1.bf16.msra.mxu0 %v320
        %1299 = vmatprep.subr.bf16.mxu0 0
        %1300 = vmatpush1.bf16.msra.mxu0 %v321
        %1301 = vmatprep.subr.bf16.mxu0 0
        %1302 = vmatpush1.bf16.msra.mxu0 %v322
        %1303 = vmatprep.subr.bf16.mxu0 0
        %1304 = vmatpush1.bf16.msra.mxu0 0
        %1305 = vmatprep.subr.bf16.mxu0 0
        %1306 = vmatpush1.bf16.msra.mxu0 0
        %1307 = vmatprep.subr.bf16.mxu0 0
        %1308 = vmatpush1.bf16.msra.mxu0 0
        %1309 = vmatprep.subr.bf16.mxu0 0
        %1310 = vmatpush1.bf16.msra.mxu0 0
        %1311 = vmatprep.subr.bf16.mxu0 0
        %1312 = vmatpush1.bf16.msra.mxu0 0
        %1313 = vmatprep.subr.bf16.mxu0 0
        %1314 = vmatpush1.bf16.msra.mxu0 0
        %1315 = vmatprep.subr.bf16.mxu0 0
        %1316 = vmatpush1.bf16.msra.mxu0 0
        %1317 = vmatprep.subr.bf16.mxu0 0
        %1318 = vmatpush1.bf16.msra.mxu0 0
        %1319 = vmatprep.mubr.bf16.mxu0 0
        %1320 = vmatmul.mubr.bf16.gmra.mrb[0].mxu0 %v726
        %v1321 = vpop.f32.mrb[0].mxu0
        %v1322 = vadd.f32 0.0, %v1321
        %v1323 = vpop.f32.mrb[0].mxu0
        %v1324 = vpop.f32.mrb[0].mxu0
        %v1325 = vadd.f32 0.0, %v1324
        %v1326 = vpop.f32.mrb[0].mxu0
        %1327 = vdwg.mxu0
        %1328 = vmatprep.subr.bf16.mxu0 0
        %1329 = vmatpush1.bf16.msra.mxu0 %v408
        %1330 = vmatprep.subr.bf16.mxu0 0
        %1331 = vmatpush1.bf16.msra.mxu0 %v409
        %1332 = vmatprep.subr.bf16.mxu0 0
        %1333 = vmatpush1.bf16.msra.mxu0 %v410
        %1334 = vmatprep.subr.bf16.mxu0 0
        %1335 = vmatpush1.bf16.msra.mxu0 %v411
        %1336 = vmatprep.subr.bf16.mxu0 0
        %1337 = vmatpush1.bf16.msra.mxu0 %v412
        %1338 = vmatprep.subr.bf16.mxu0 0
        %1339 = vmatpush1.bf16.msra.mxu0 %v413
        %1340 = vmatprep.subr.bf16.mxu0 0
        %1341 = vmatpush1.bf16.msra.mxu0 %v414
        %1342 = vmatprep.subr.bf16.mxu0 0
        %1343 = vmatpush1.bf16.msra.mxu0 %v415
        %1344 = vmatprep.subr.bf16.mxu0 0
        %1345 = vmatpush1.bf16.msra.mxu0 0
        %1346 = vmatprep.subr.bf16.mxu0 0
        %1347 = vmatpush1.bf16.msra.mxu0 0
        %1348 = vmatprep.subr.bf16.mxu0 0
        %1349 = vmatpush1.bf16.msra.mxu0 0
        %1350 = vmatprep.subr.bf16.mxu0 0
        %1351 = vmatpush1.bf16.msra.mxu0 0
        %1352 = vmatprep.subr.bf16.mxu0 0
        %1353 = vmatpush1.bf16.msra.mxu0 0
        %1354 = vmatprep.subr.bf16.mxu0 0
        %1355 = vmatpush1.bf16.msra.mxu0 0
        %1356 = vmatprep.subr.bf16.mxu0 0
        %1357 = vmatpush1.bf16.msra.mxu0 0
        %1358 = vmatprep.subr.bf16.mxu0 0
        %1359 = vmatpush1.bf16.msra.mxu0 0
        %1360 = vmatprep.mubr.bf16.mxu0 0
        %1361 = vmatmul.mubr.bf16.gmra.mrb[0].mxu0 %v606
        %v1362 = vpop.f32.mrb[0].mxu0
        %v1363 = vadd.f32 %v1322, %v1362
        %v1364 = vpop.f32.mrb[0].mxu0
        %v1365 = vpop.f32.mrb[0].mxu0
        %v1366 = vadd.f32 %v1325, %v1365
        %v1367 = vpop.f32.mrb[0].mxu0
        %1368 = vdwg.mxu0
        %1369 = vmatprep.subr.bf16.mxu0 0
        %1370 = vmatpush1.bf16.msra.mxu0 %v520
        %1371 = vmatprep.subr.bf16.mxu0 0
        %1372 = vmatpush1.bf16.msra.mxu0 %v521
        %1373 = vmatprep.subr.bf16.mxu0 0
        %1374 = vmatpush1.bf16.msra.mxu0 %v522
        %1375 = vmatprep.subr.bf16.mxu0 0
        %1376 = vmatpush1.bf16.msra.mxu0 %v523
        %1377 = vmatprep.subr.bf16.mxu0 0
        %1378 = vmatpush1.bf16.msra.mxu0 %v524
        %1379 = vmatprep.subr.bf16.mxu0 0
        %1380 = vmatpush1.bf16.msra.mxu0 %v525
        %1381 = vmatprep.subr.bf16.mxu0 0
        %1382 = vmatpush1.bf16.msra.mxu0 %v526
        %1383 = vmatprep.subr.bf16.mxu0 0
        %1384 = vmatpush1.bf16.msra.mxu0 %v527
        %1385 = vmatprep.subr.bf16.mxu0 0
        %1386 = vmatpush1.bf16.msra.mxu0 0
        %1387 = vmatprep.subr.bf16.mxu0 0
        %1388 = vmatpush1.bf16.msra.mxu0 0
        %1389 = vmatprep.subr.bf16.mxu0 0
        %1390 = vmatpush1.bf16.msra.mxu0 0
        %1391 = vmatprep.subr.bf16.mxu0 0
        %1392 = vmatpush1.bf16.msra.mxu0 0
        %1393 = vmatprep.subr.bf16.mxu0 0
        %1394 = vmatpush1.bf16.msra.mxu0 0
        %1395 = vmatprep.subr.bf16.mxu0 0
        %1396 = vmatpush1.bf16.msra.mxu0 0
        %1397 = vmatprep.subr.bf16.mxu0 0
        %1398 = vmatpush1.bf16.msra.mxu0 0
        %1399 = vmatprep.subr.bf16.mxu0 0
        %1400 = vmatpush1.bf16.msra.mxu0 0
        %1401 = vmatprep.mubr.bf16.mxu0 0
        %1402 = vmatmul.mubr.bf16.gmra.mrb[0].mxu0 %v840
        %v1403 = vpop.f32.mrb[0].mxu0
        %v1404 = vadd.f32 0.0, %v1403
        %v1405 = vpop.f32.mrb[0].mxu0
        %v1406 = vpop.f32.mrb[0].mxu0
        %v1407 = vadd.f32 0.0, %v1406
        %v1408 = vpop.f32.mrb[0].mxu0
        %1409 = vdwg.mxu0
        %v1410 = vadd.f32 %v1363, %v1404
        %v1411 = vadd.f32 %v1366, %v1407
        %1412 = vmatprep.subr.bf16.mxu0 0
        %1413 = vmatpush1.bf16.msra.mxu0 %v640
        %1414 = vmatprep.subr.bf16.mxu0 0
        %1415 = vmatpush1.bf16.msra.mxu0 %v641
        %1416 = vmatprep.subr.bf16.mxu0 0
        %1417 = vmatpush1.bf16.msra.mxu0 %v642
        %1418 = vmatprep.subr.bf16.mxu0 0
        %1419 = vmatpush1.bf16.msra.mxu0 %v643
        %1420 = vmatprep.subr.bf16.mxu0 0
        %1421 = vmatpush1.bf16.msra.mxu0 %v644
        %1422 = vmatprep.subr.bf16.mxu0 0
        %1423 = vmatpush1.bf16.msra.mxu0 %v645
        %1424 = vmatprep.subr.bf16.mxu0 0
        %1425 = vmatpush1.bf16.msra.mxu0 %v646
        %1426 = vmatprep.subr.bf16.mxu0 0
        %1427 = vmatpush1.bf16.msra.mxu0 %v647
        %1428 = vmatprep.subr.bf16.mxu0 0
        %1429 = vmatpush1.bf16.msra.mxu0 0
        %1430 = vmatprep.subr.bf16.mxu0 0
        %1431 = vmatpush1.bf16.msra.mxu0 0
        %1432 = vmatprep.subr.bf16.mxu0 0
        %1433 = vmatpush1.bf16.msra.mxu0 0
        %1434 = vmatprep.subr.bf16.mxu0 0
        %1435 = vmatpush1.bf16.msra.mxu0 0
        %1436 = vmatprep.subr.bf16.mxu0 0
        %1437 = vmatpush1.bf16.msra.mxu0 0
        %1438 = vmatprep.subr.bf16.mxu0 0
        %1439 = vmatpush1.bf16.msra.mxu0 0
        %1440 = vmatprep.subr.bf16.mxu0 0
        %1441 = vmatpush1.bf16.msra.mxu0 0
        %1442 = vmatprep.subr.bf16.mxu0 0
        %1443 = vmatpush1.bf16.msra.mxu0 0
        %1444 = vmatprep.mubr.bf16.mxu0 0
        %1445 = vmatmul.mubr.bf16.gmra.mrb[0].mxu0 %v960
        %v1446 = vpop.f32.mrb[0].mxu0
        %v1447 = vadd.f32 0.0, %v1446
        %v1448 = vpop.f32.mrb[0].mxu0
        %v1449 = vpop.f32.mrb[0].mxu0
        %v1450 = vadd.f32 0.0, %v1449
        %v1451 = vpop.f32.mrb[0].mxu0
        %1452 = vdwg.mxu0
        %v1453 = vadd.f32 %v1410, %v1447
        %v1454 = vadd.f32 %v1411, %v1450
        %1455 = vmatprep.subr.bf16.mxu0 0
        %1456 = vmatpush1.bf16.msra.mxu0 %v760
        %1457 = vmatprep.subr.bf16.mxu0 0
        %1458 = vmatpush1.bf16.msra.mxu0 %v761
        %1459 = vmatprep.subr.bf16.mxu0 0
        %1460 = vmatpush1.bf16.msra.mxu0 %v762
        %1461 = vmatprep.subr.bf16.mxu0 0
        %1462 = vmatpush1.bf16.msra.mxu0 %v763
        %1463 = vmatprep.subr.bf16.mxu0 0
        %1464 = vmatpush1.bf16.msra.mxu0 %v764
        %1465 = vmatprep.subr.bf16.mxu0 0
        %1466 = vmatpush1.bf16.msra.mxu0 %v765
        %1467 = vmatprep.subr.bf16.mxu0 0
        %1468 = vmatpush1.bf16.msra.mxu0 %v766
        %1469 = vmatprep.subr.bf16.mxu0 0
        %1470 = vmatpush1.bf16.msra.mxu0 %v767
        %1471 = vmatprep.subr.bf16.mxu0 0
        %1472 = vmatpush1.bf16.msra.mxu0 0
        %1473 = vmatprep.subr.bf16.mxu0 0
        %1474 = vmatpush1.bf16.msra.mxu0 0
        %1475 = vmatprep.subr.bf16.mxu0 0
        %1476 = vmatpush1.bf16.msra.mxu0 0
        %1477 = vmatprep.subr.bf16.mxu0 0
        %1478 = vmatpush1.bf16.msra.mxu0 0
        %1479 = vmatprep.subr.bf16.mxu0 0
        %1480 = vmatpush1.bf16.msra.mxu0 0
        %1481 = vmatprep.subr.bf16.mxu0 0
        %1482 = vmatpush1.bf16.msra.mxu0 0
        %1483 = vmatprep.subr.bf16.mxu0 0
        %1484 = vmatpush1.bf16.msra.mxu0 0
        %1485 = vmatprep.subr.bf16.mxu0 0
        %1486 = vmatpush1.bf16.msra.mxu0 0
        %1487 = vmatprep.mubr.bf16.mxu0 0
        %1488 = vmatmul.mubr.bf16.gmra.mrb[0].mxu0 %v1080
        %v1489 = vpop.f32.mrb[0].mxu0
        %v1490 = vadd.f32 0.0, %v1489
        %v1491 = vpop.f32.mrb[0].mxu0
        %v1492 = vpop.f32.mrb[0].mxu0
        %v1493 = vadd.f32 0.0, %v1492
        %v1494 = vpop.f32.mrb[0].mxu0
        %1495 = vdwg.mxu0
        %v1496 = vadd.f32 %v1453, %v1490
        %v1497 = vadd.f32 %v1454, %v1493
        %1498 = vmatprep.subr.bf16.mxu0 0
        %1499 = vmatpush1.bf16.msra.mxu0 %v874
        %1500 = vmatprep.subr.bf16.mxu0 0
        %1501 = vmatpush1.bf16.msra.mxu0 %v875
        %1502 = vmatprep.subr.bf16.mxu0 0
        %1503 = vmatpush1.bf16.msra.mxu0 %v876
        %1504 = vmatprep.subr.bf16.mxu0 0
        %1505 = vmatpush1.bf16.msra.mxu0 %v877
        %1506 = vmatprep.subr.bf16.mxu0 0
        %1507 = vmatpush1.bf16.msra.mxu0 %v878
        %1508 = vmatprep.subr.bf16.mxu0 0
        %1509 = vmatpush1.bf16.msra.mxu0 %v879
        %1510 = vmatprep.subr.bf16.mxu0 0
        %1511 = vmatpush1.bf16.msra.mxu0 %v880
        %1512 = vmatprep.subr.bf16.mxu0 0
        %1513 = vmatpush1.bf16.msra.mxu0 %v881
        %1514 = vmatprep.subr.bf16.mxu0 0
        %1515 = vmatpush1.bf16.msra.mxu0 0
        %1516 = vmatprep.subr.bf16.mxu0 0
        %1517 = vmatpush1.bf16.msra.mxu0 0
        %1518 = vmatprep.subr.bf16.mxu0 0
        %1519 = vmatpush1.bf16.msra.mxu0 0
        %1520 = vmatprep.subr.bf16.mxu0 0
        %1521 = vmatpush1.bf16.msra.mxu0 0
        %1522 = vmatprep.subr.bf16.mxu0 0
        %1523 = vmatpush1.bf16.msra.mxu0 0
        %1524 = vmatprep.subr.bf16.mxu0 0
        %1525 = vmatpush1.bf16.msra.mxu0 0
        %1526 = vmatprep.subr.bf16.mxu0 0
        %1527 = vmatpush1.bf16.msra.mxu0 0
        %1528 = vmatprep.subr.bf16.mxu0 0
        %1529 = vmatpush1.bf16.msra.mxu0 0
        %1530 = vmatprep.mubr.bf16.mxu0 0
        %1531 = vmatmul.mubr.bf16.gmra.mrb[0].mxu0 %v1194
        %v1532 = vpop.f32.mrb[0].mxu0
        %v1533 = vadd.f32 0.0, %v1532
        %v1534 = vpop.f32.mrb[0].mxu0
        %v1535 = vpop.f32.mrb[0].mxu0
        %v1536 = vadd.f32 0.0, %v1535
        %v1537 = vpop.f32.mrb[0].mxu0
        %1538 = vdwg.mxu0
        %v1539 = vadd.f32 %v1496, %v1533
        %v1540 = vadd.f32 %v1497, %v1536
        %s1541 = sadd.s32 %s230, 3
        %s1542 = smul.u32 %s1541, 2
        %s1543 = smul.addr %s1542, 4
        %s1544 = scalar_lea.vmem %s165, %s1543
        %v1545 = vld [vmem:[%s1544] sm:$0xf]
        %v1546 = vld [vmem:[%s1544 + $0x4] sm:$0x7]
        %v1549 = vunpack.c.l.b16 %v1545
        %v1550 = vunpack.c.l.b16 %v1546
        %v1551 = vpack.c.b16 %v1550, %v1549
        %1553 = vmatprep.subr.bf16.mxu0 0
        %1554 = vmatpush1.bf16.msra.mxu0 %v994
        %1555 = vmatprep.subr.bf16.mxu0 0
        %1556 = vmatpush1.bf16.msra.mxu0 %v995
        %1557 = vmatprep.subr.bf16.mxu0 0
        %1558 = vmatpush1.bf16.msra.mxu0 %v996
        %1559 = vmatprep.subr.bf16.mxu0 0
        %1560 = vmatpush1.bf16.msra.mxu0 %v997
        %1561 = vmatprep.subr.bf16.mxu0 0
        %1562 = vmatpush1.bf16.msra.mxu0 %v998
        %1563 = vmatprep.subr.bf16.mxu0 0
        %1564 = vmatpush1.bf16.msra.mxu0 %v999
        %1565 = vmatprep.subr.bf16.mxu0 0
        %1566 = vmatpush1.bf16.msra.mxu0 %v1000
        %1567 = vmatprep.subr.bf16.mxu0 0
        %1568 = vmatpush1.bf16.msra.mxu0 %v1001
        %1569 = vmatprep.subr.bf16.mxu0 0
        %1570 = vmatpush1.bf16.msra.mxu0 0
        %1571 = vmatprep.subr.bf16.mxu0 0
        %1572 = vmatpush1.bf16.msra.mxu0 0
        %1573 = vmatprep.subr.bf16.mxu0 0
        %1574 = vmatpush1.bf16.msra.mxu0 0
        %1575 = vmatprep.subr.bf16.mxu0 0
        %1576 = vmatpush1.bf16.msra.mxu0 0
        %1577 = vmatprep.subr.bf16.mxu0 0
        %1578 = vmatpush1.bf16.msra.mxu0 0
        %1579 = vmatprep.subr.bf16.mxu0 0
        %1580 = vmatpush1.bf16.msra.mxu0 0
        %1581 = vmatprep.subr.bf16.mxu0 0
        %1582 = vmatpush1.bf16.msra.mxu0 0
        %1583 = vmatprep.subr.bf16.mxu0 0
        %1584 = vmatpush1.bf16.msra.mxu0 0
        %1585 = vmatprep.mubr.bf16.mxu0 0
        %1586 = vmatmul.mubr.bf16.gmra.mrb[0].mxu0 %v1551
        %v1587 = vpop.f32.mrb[0].mxu0
        %v1588 = vadd.f32 0.0, %v1587
        %v1589 = vpop.f32.mrb[0].mxu0
        %v1590 = vpop.f32.mrb[0].mxu0
        %v1591 = vadd.f32 0.0, %v1590
        %v1592 = vpop.f32.mrb[0].mxu0
        %1593 = vdwg.mxu0
        %v1594 = vadd.f32 %v1539, %v1588
        %v1595 = vadd.f32 %v1540, %v1591
        %v1596 = vld [vmem:[%s1544 + $0x4] sm:$0xf]
        %v1598 = vunpack.c.l.b16 %v1596
        %v1599 = vpack.c.b16 %v1598, %v1549
        %v1601 = vshrl.u32 %v1599, 16
        %v1603 = vshll.u32 %v1599, 16
        %v1605 = vrot.slane %v1603, 1
        %v1606 = vor.u32 %v1601, %v1605
        %1608 = vmatprep.subr.bf16.mxu0 0
        %1609 = vmatpush1.bf16.msra.mxu0 %v1114
        %1610 = vmatprep.subr.bf16.mxu0 0
        %1611 = vmatpush1.bf16.msra.mxu0 %v1115
        %1612 = vmatprep.subr.bf16.mxu0 0
        %1613 = vmatpush1.bf16.msra.mxu0 %v1116
        %1614 = vmatprep.subr.bf16.mxu0 0
        %1615 = vmatpush1.bf16.msra.mxu0 %v1117
        %1616 = vmatprep.subr.bf16.mxu0 0
        %1617 = vmatpush1.bf16.msra.mxu0 %v1118
        %1618 = vmatprep.subr.bf16.mxu0 0
        %1619 = vmatpush1.bf16.msra.mxu0 %v1119
        %1620 = vmatprep.subr.bf16.mxu0 0
        %1621 = vmatpush1.bf16.msra.mxu0 %v1120
        %1622 = vmatprep.subr.bf16.mxu0 0
        %1623 = vmatpush1.bf16.msra.mxu0 %v1121
        %1624 = vmatprep.subr.bf16.mxu0 0
        %1625 = vmatpush1.bf16.msra.mxu0 0
        %1626 = vmatprep.subr.bf16.mxu0 0
        %1627 = vmatpush1.bf16.msra.mxu0 0
        %1628 = vmatprep.subr.bf16.mxu0 0
        %1629 = vmatpush1.bf16.msra.mxu0 0
        %1630 = vmatprep.subr.bf16.mxu0 0
        %1631 = vmatpush1.bf16.msra.mxu0 0
        %1632 = vmatprep.subr.bf16.mxu0 0
        %1633 = vmatpush1.bf16.msra.mxu0 0
        %1634 = vmatprep.subr.bf16.mxu0 0
        %1635 = vmatpush1.bf16.msra.mxu0 0
        %1636 = vmatprep.subr.bf16.mxu0 0
        %1637 = vmatpush1.bf16.msra.mxu0 0
        %1638 = vmatprep.subr.bf16.mxu0 0
        %1639 = vmatpush1.bf16.msra.mxu0 0
        %1640 = vmatprep.mubr.bf16.mxu0 0
        %1641 = vmatmul.mubr.bf16.gmra.mrb[0].mxu0 %v1606
        %v1642 = vpop.f32.mrb[0].mxu0
        %v1643 = vadd.f32 0.0, %v1642
        %v1644 = vpop.f32.mrb[0].mxu0
        %v1645 = vpop.f32.mrb[0].mxu0
        %v1646 = vadd.f32 0.0, %v1645
        %v1647 = vpop.f32.mrb[0].mxu0
        %1648 = vdwg.mxu0
        %v1649 = vadd.f32 %v1594, %v1643
        %v1650 = vadd.f32 %v1595, %v1646
        %v1651 = vld [vmem:[%s1544] sm:$0xe]
        %v1653 = vunpack.c.l.b16 %v1651
        %v1654 = vpack.c.b16 %v1598, %v1653
        %v1655 = vrot.slane %v1654, 1
        %1657 = vmatprep.subr.bf16.mxu0 0
        %1658 = vmatpush1.bf16.msra.mxu0 %v1228
        %1659 = vmatprep.subr.bf16.mxu0 0
        %1660 = vmatpush1.bf16.msra.mxu0 %v1229
        %1661 = vmatprep.subr.bf16.mxu0 0
        %1662 = vmatpush1.bf16.msra.mxu0 %v1230
        %1663 = vmatprep.subr.bf16.mxu0 0
        %1664 = vmatpush1.bf16.msra.mxu0 %v1231
        %1665 = vmatprep.subr.bf16.mxu0 0
        %1666 = vmatpush1.bf16.msra.mxu0 %v1232
        %1667 = vmatprep.subr.bf16.mxu0 0
        %1668 = vmatpush1.bf16.msra.mxu0 %v1233
        %1669 = vmatprep.subr.bf16.mxu0 0
        %1670 = vmatpush1.bf16.msra.mxu0 %v1234
        %1671 = vmatprep.subr.bf16.mxu0 0
        %1672 = vmatpush1.bf16.msra.mxu0 %v1235
        %1673 = vmatprep.subr.bf16.mxu0 0
        %1674 = vmatpush1.bf16.msra.mxu0 0
        %1675 = vmatprep.subr.bf16.mxu0 0
        %1676 = vmatpush1.bf16.msra.mxu0 0
        %1677 = vmatprep.subr.bf16.mxu0 0
        %1678 = vmatpush1.bf16.msra.mxu0 0
        %1679 = vmatprep.subr.bf16.mxu0 0
        %1680 = vmatpush1.bf16.msra.mxu0 0
        %1681 = vmatprep.subr.bf16.mxu0 0
        %1682 = vmatpush1.bf16.msra.mxu0 0
        %1683 = vmatprep.subr.bf16.mxu0 0
        %1684 = vmatpush1.bf16.msra.mxu0 0
        %1685 = vmatprep.subr.bf16.mxu0 0
        %1686 = vmatpush1.bf16.msra.mxu0 0
        %1687 = vmatprep.subr.bf16.mxu0 0
        %1688 = vmatpush1.bf16.msra.mxu0 0
        %1689 = vmatprep.mubr.bf16.mxu0 0
        %1690 = vmatmul.mubr.bf16.gmra.mrb[0].mxu0 %v1655
        %v1691 = vpop.f32.mrb[0].mxu0
        %v1692 = vadd.f32 0.0, %v1691
        %v1693 = vpop.f32.mrb[0].mxu0
        %v1694 = vpop.f32.mrb[0].mxu0
        %v1695 = vadd.f32 0.0, %v1694
        %v1696 = vpop.f32.mrb[0].mxu0
        %1697 = vdwg.mxu0
        %v1698 = vadd.f32 %v1649, %v1692
        %v1699 = vadd.f32 %v1650, %v1695
        %v1700 = vmax.f32 %v1285, %v1698
        %v1701 = vmax.f32 %v1286, %v1699
        %vm1702 = vcmask 113664
        %v1704 = vsel %vm1702, %v179, 0
        %vm1706 = vcmask 1045504
        %v1708 = vsel %vm1706, %v1701, 0
        %1710 = vmatprep.subr.mxu0 0.0
        %1711 = vmatpush1.msra.mxu0 %v1700
        %1712 = vmatprep.subr.mxu0 0.0
        %1713 = vmatpush1.msra.mxu0 %v1708
        %1714 = vmatprep.subr.mxu0 0.0
        %1715 = vmatpush1.msra.mxu0 0.0
        %1716 = vmatprep.subr.mxu0 0.0
        %1717 = vmatpush1.msra.mxu0 0.0
        %1718 = vmatprep.subr.mxu0 0.0
        %1719 = vmatpush1.msra.mxu0 0.0
        %1720 = vmatprep.subr.mxu0 0.0
        %1721 = vmatpush1.msra.mxu0 0.0
        %1722 = vmatprep.subr.mxu0 0.0
        %1723 = vmatpush1.msra.mxu0 0.0
        %1724 = vmatprep.subr.mxu0 0.0
        %1725 = vmatpush1.msra.mxu0 0.0
        %1726 = vmatprep.subr.mxu0 0.0
        %1727 = vmatpush1.msra.mxu0 0.0
        %1728 = vmatprep.subr.mxu0 0.0
        %1729 = vmatpush1.msra.mxu0 0.0
        %1730 = vmatprep.subr.mxu0 0.0
        %1731 = vmatpush1.msra.mxu0 0.0
        %1732 = vmatprep.subr.mxu0 0.0
        %1733 = vmatpush1.msra.mxu0 0.0
        %1734 = vmatprep.subr.mxu0 0.0
        %1735 = vmatpush1.msra.mxu0 0.0
        %1736 = vmatprep.subr.mxu0 0.0
        %1737 = vmatpush1.msra.mxu0 0.0
        %1738 = vmatprep.subr.mxu0 0.0
        %1739 = vmatpush1.msra.mxu0 0.0
        %1740 = vmatprep.subr.mxu0 0.0
        %1741 = vmatpush1.msra.mxu0 0.0
        %1742 = vmatprep.subr.mxu0 0.0
        %1743 = vmatpush1.msra.mxu0 0.0
        %1744 = vmatprep.subr.mxu0 0.0
        %1745 = vmatpush1.msra.mxu0 0.0
        %1746 = vmatprep.subr.mxu0 0.0
        %1747 = vmatpush1.msra.mxu0 0.0
        %1748 = vmatprep.subr.mxu0 0.0
        %1749 = vmatpush1.msra.mxu0 0.0
        %1750 = vmatprep.subr.mxu0 0.0
        %1751 = vmatpush1.msra.mxu0 0.0
        %1752 = vmatprep.subr.mxu0 0.0
        %1753 = vmatpush1.msra.mxu0 0.0
        %1754 = vmatprep.subr.mxu0 0.0
        %1755 = vmatpush1.msra.mxu0 0.0
        %1756 = vmatprep.subr.mxu0 0.0
        %1757 = vmatpush1.msra.mxu0 0.0
        %1758 = vmatprep.subr.mxu0 0.0
        %1759 = vmatpush1.msra.mxu0 0.0
        %1760 = vmatprep.subr.mxu0 0.0
        %1761 = vmatpush1.msra.mxu0 0.0
        %1762 = vmatprep.subr.mxu0 0.0
        %1763 = vmatpush1.msra.mxu0 0.0
        %1764 = vmatprep.subr.mxu0 0.0
        %1765 = vmatpush1.msra.mxu0 0.0
        %1766 = vmatprep.subr.mxu0 0.0
        %1767 = vmatpush1.msra.mxu0 0.0
        %1768 = vmatprep.subr.mxu0 0.0
        %1769 = vmatpush1.msra.mxu0 0.0
        %1770 = vmatprep.subr.mxu0 0.0
        %1771 = vmatpush1.msra.mxu0 0.0
        %1772 = vmatprep.subr.mxu0 0.0
        %1773 = vmatpush1.msra.mxu0 0.0
        %1774 = vmatprep.mubr.f32.mxu0 0.0
        %1775 = vmatmul.mubr.f32.gmra.mrb[0].mxu0 %v1704
        %v1776 = vpop.f32.mrb[0].mxu0
        %v1777 = vadd.f32 0.0, %v1776
        %v1778 = vpop.f32.mrb[0].mxu0
        %1779 = vdwg.mxu0
        %v1781 = vsel %vm1702, %v183, 0
        %1783 = vmatprep.subr.mxu0 0.0
        %1784 = vmatpush1.msra.mxu0 %v1700
        %1785 = vmatprep.subr.mxu0 0.0
        %1786 = vmatpush1.msra.mxu0 %v1708
        %1787 = vmatprep.subr.mxu0 0.0
        %1788 = vmatpush1.msra.mxu0 0.0
        %1789 = vmatprep.subr.mxu0 0.0
        %1790 = vmatpush1.msra.mxu0 0.0
        %1791 = vmatprep.subr.mxu0 0.0
        %1792 = vmatpush1.msra.mxu0 0.0
        %1793 = vmatprep.subr.mxu0 0.0
        %1794 = vmatpush1.msra.mxu0 0.0
        %1795 = vmatprep.subr.mxu0 0.0
        %1796 = vmatpush1.msra.mxu0 0.0
        %1797 = vmatprep.subr.mxu0 0.0
        %1798 = vmatpush1.msra.mxu0 0.0
        %1799 = vmatprep.subr.mxu0 0.0
        %1800 = vmatpush1.msra.mxu0 0.0
        %1801 = vmatprep.subr.mxu0 0.0
        %1802 = vmatpush1.msra.mxu0 0.0
        %1803 = vmatprep.subr.mxu0 0.0
        %1804 = vmatpush1.msra.mxu0 0.0
        %1805 = vmatprep.subr.mxu0 0.0
        %1806 = vmatpush1.msra.mxu0 0.0
        %1807 = vmatprep.subr.mxu0 0.0
        %1808 = vmatpush1.msra.mxu0 0.0
        %1809 = vmatprep.subr.mxu0 0.0
        %1810 = vmatpush1.msra.mxu0 0.0
        %1811 = vmatprep.subr.mxu0 0.0
        %1812 = vmatpush1.msra.mxu0 0.0
        %1813 = vmatprep.subr.mxu0 0.0
        %1814 = vmatpush1.msra.mxu0 0.0
        %1815 = vmatprep.subr.mxu0 0.0
        %1816 = vmatpush1.msra.mxu0 0.0
        %1817 = vmatprep.subr.mxu0 0.0
        %1818 = vmatpush1.msra.mxu0 0.0
        %1819 = vmatprep.subr.mxu0 0.0
        %1820 = vmatpush1.msra.mxu0 0.0
        %1821 = vmatprep.subr.mxu0 0.0
        %1822 = vmatpush1.msra.mxu0 0.0
        %1823 = vmatprep.subr.mxu0 0.0
        %1824 = vmatpush1.msra.mxu0 0.0
        %1825 = vmatprep.subr.mxu0 0.0
        %1826 = vmatpush1.msra.mxu0 0.0
        %1827 = vmatprep.subr.mxu0 0.0
        %1828 = vmatpush1.msra.mxu0 0.0
        %1829 = vmatprep.subr.mxu0 0.0
        %1830 = vmatpush1.msra.mxu0 0.0
        %1831 = vmatprep.subr.mxu0 0.0
        %1832 = vmatpush1.msra.mxu0 0.0
        %1833 = vmatprep.subr.mxu0 0.0
        %1834 = vmatpush1.msra.mxu0 0.0
        %1835 = vmatprep.subr.mxu0 0.0
        %1836 = vmatpush1.msra.mxu0 0.0
        %1837 = vmatprep.subr.mxu0 0.0
        %1838 = vmatpush1.msra.mxu0 0.0
        %1839 = vmatprep.subr.mxu0 0.0
        %1840 = vmatpush1.msra.mxu0 0.0
        %1841 = vmatprep.subr.mxu0 0.0
        %1842 = vmatpush1.msra.mxu0 0.0
        %1843 = vmatprep.subr.mxu0 0.0
        %1844 = vmatpush1.msra.mxu0 0.0
        %1845 = vmatprep.subr.mxu0 0.0
        %1846 = vmatpush1.msra.mxu0 0.0
        %1847 = vmatprep.mubr.f32.mxu0 0.0
        %1848 = vmatmul.mubr.f32.gmra.mrb[0].mxu0 %v1781
        %v1849 = vpop.f32.mrb[0].mxu0
        %v1850 = vadd.f32 0.0, %v1849
        %v1851 = vpop.f32.mrb[0].mxu0
        %1852 = vdwg.mxu0
        %v1853 = vmax.f32 %v1777, %v1850
        %v1855 = vlaneseq
        %v1856 = vshrl.u32 %v1855, 7
        %v1857 = vsub.s32 0, %v1856
        %v1858 = vrot.slane %v184, %v1857
        %v1860 = vadd.f32 %v1853, %v1858
        %v1861 = vmax.f32 %v1860, 0.0
        %v1862 = vpack.c.bf16 %v1861, %v1861
        %s1863 = sadd.s32 %s225, 1
        %v1865 = vunpack.c.l.b16 %v1862
        %v1866 = vpack.c.b16 %v1865, %v1865
        %v1868 = vshrl.u32 %v1866, 16
        %v1870 = vrot.slane %v1868, 7
        %v1871 = vshll.u32 %v1866, 16
        %v1873 = vor.u32 %v1870, %v1871
        %s1875 = smul.u32 %s1863, 2
        %s1876 = smul.addr %s1875, 4
        %s1877 = scalar_lea.vmem %s170, %s1876
        %vm1878 = vcmask 1043456
        %vm1879 = vsmask.f32 7938
        %vm1880 = vmand %vm1878, %vm1879
        %v1881 = vld [vmem:[%s1877] sm:$0xf]
        %v1882 = vsel %vm1880, %v1873, %v1881
        %1883 = vst [vmem:[%s1877] sm:$0xf] %v1882
      $region37: #{convnet_forward.5} parent=31 // loop_footer
        %s229 = sadd.s32 1, %s225
      $region38: #{convnet_forward.5} parent=31 // loop_footer_branch
        %224 = sbr.rel target = $region34
      $region39: #{convnet_forward.5} parent=31 // loop_exit
        _
      %p1884 = scmp.lt.s32.totalorder %s14, 1
      %s1885 = scalar_select %p1884, %s14, 1
      %s1886 = smul.addr %s1885, 18
      %s1887 = smul.addr %s1886, 4
      %s1888 = scalar_lea.vmem %s3, %s1887
      // Predicated region
      $region40: #{convnet_forward.5} parent=31 // pred_check
        %p1889 = pneg %p100
      $region41: #{convnet_forward.5} parent=31 // pred_check_branch
        %1891 = sbr.rel (%p1889) target = $region43
      $region42: #{convnet_forward.5} parent=31 // pred_region
        _
      $region43: #{convnet_forward.5} parent=31 // pred_fallthru
        _
    $region32: #{convnet_forward.5} parent=5 // pred_fallthru
      _
    %p1892 = scmp.le.s32.totalorder 2, %s9
    // Predicated region
    $region44: #{convnet_forward.5} parent=5 // pred_check
      %p1893 = pneg %p1892
    $region45: #{convnet_forward.5} parent=5 // pred_check_branch
      %1895 = sbr.rel (%p1893) target = $region47
    $region46: #{convnet_forward.5} parent=5 // pred_region
      %s1896 = ssub.s32 %s9, 2
      // Predicated region
      $region48: #{convnet_forward.5} parent=46 // pred_check
        %p1897 = pneg %p106
      $region49: #{convnet_forward.5} parent=46 // pred_check_branch
        %1899 = sbr.rel (%p1897) target = $region51
      $region50: #{convnet_forward.5} parent=46 // pred_region
        %p1900 = scmp.lt.s32.totalorder %s15, 1
        %s1901 = scalar_select %p1900, %s15, 1
        %s1902 = smul.addr %s1901, 18
        %s1903 = smul.addr %s1902, 4
        %s1904 = scalar_lea.vmem %s3, %s1903
      $region51: #{convnet_forward.5} parent=46 // pred_fallthru
        _
    $region47: #{convnet_forward.5} parent=5 // pred_fallthru
      _
  $region6: #{convnet_forward.5} parent=0 // loop_footer
    %s13 = sadd.s32 1, %s9
  $region7: #{convnet_forward.5} parent=0 // loop_footer_branch
    %8 = sbr.rel target = $region3
  $region8: #{convnet_forward.5} parent=0 // loop_exit
    _

// kernel: convnet_forward.6
$region0: #{convnet_forward.6}
  #allocation0 [shape = 'u32[]', space=smem, size = 0x4, offset = 0x4, fixed_abs, tag = 'smem constant byte address 0x4 - core index']
  #allocation1 [shape = 'u32[144,128]{1,0:T(1,128)}', space=vmem, size = 0x12000, scoped, tag = 'internal scratch']
  %s0 = inlined_call_operand.vmem [shape: bf16[2,9,9,128], index: 0, kind: input, shape index: {}]
  %s1 = inlined_call_operand.vmem [shape: bf16[9,128,128], index: 1, kind: input, shape index: {}]
  %s2 = inlined_call_operand.vmem [shape: f32[1,128], index: 2, kind: input, shape index: {}]
  %s3 = inlined_call_operand.vmem [shape: bf16[2,3,3,128], index: 3, kind: output, shape index: {}]
  %s4 = sld [smem:[#allocation0]]
  $region52: #{convnet_forward.6} parent=0
    _
  %s6 = ssub.s32 1, %s4
  %s7 = scalar_select 0, %s6, %s4
  loop: start=0, step=1, limit=4
  $region2: #{convnet_forward.6} parent=0 // loop_pre_header
    _
  $region3: #{convnet_forward.6} parent=0 // loop_header
    %s9 = sphi 0, %s13
    %p10 = scmp.ge.s32.totalorder %s9, 4
    %s19 = sphi 0, %s21
    %s22 = sphi 0, %s19
    %s23 = sphi 0, %s22
    %s39 = sphi 0, %s23
    %s43 = sphi 0, %s43
    %s45 = sphi 0, %s43
    %s46 = sphi 0, %s45
    %s60 = sphi 0, %s46
    %s64 = sphi 0, %s64
    %s66 = sphi 0, %s64
    %s67 = sphi 0, %s66
    %s81 = sphi 0, %s67
    %s87 = sphi 0, %s89
    %s90 = sphi 0, %s87
    %s91 = sphi 0, %s90
    %s107 = sphi 0, %s91
  $region4: #{convnet_forward.6} parent=0 // loop_header_branch
    %12 = sbr.rel (%p10) target = $region8
  $region5: #{convnet_forward.6} parent=0 // loop_body
    %s14 = ssub.s32 %s9, 1
    %s15 = ssub.s32 %s9, 2
    %s16 = sadd.s32 %s9, 1
    %s17 = ssub.s32 %s9, %s16
    %p18 = scmp.eq.s32.totalorder %s17, 0
    %s20 = sadd.s32 %s19, 1
    %s21 = scalar_select %p18, %s19, %s20
    %p24 = pneg %p18
    %p25 = scmp.eq.s32.totalorder %s9, 1
    %p26 = por %p24, %p25
    %p27 = scmp.ne.s32.totalorder %s19, %s22
    %p28 = scmp.eq.s32.totalorder %s9, 0
    %p29 = por %p27, %p28
    %p30 = scmp.ne.s32.totalorder %s19, %s22
    %p31 = scmp.eq.s32.totalorder %s14, 1
    %p32 = por %p30, %p31
    %p33 = scmp.ne.s32.totalorder %s22, %s23
    %p34 = scmp.eq.s32.totalorder %s14, 0
    %p35 = por %p33, %p34
    %p36 = scmp.ne.s32.totalorder %s22, %s23
    %p37 = scmp.eq.s32.totalorder %s15, 1
    %p38 = por %p36, %p37
    %p40 = scmp.ne.s32.totalorder %s23, %s39
    %p41 = scmp.eq.s32.totalorder %s15, 0
    %p42 = por %p40, %p41
    %s44 = sadd.s32 %s43, 1
    %p47 = scmp.eq.s32.totalorder %s9, 1
    %p48 = scmp.ne.s32.totalorder %s43, %s45
    %p49 = scmp.eq.s32.totalorder %s9, 0
    %p50 = por %p48, %p49
    %p51 = scmp.ne.s32.totalorder %s43, %s45
    %p52 = scmp.eq.s32.totalorder %s14, 1
    %p53 = por %p51, %p52
    %p54 = scmp.ne.s32.totalorder %s45, %s46
    %p55 = scmp.eq.s32.totalorder %s14, 0
    %p56 = por %p54, %p55
    %p57 = scmp.ne.s32.totalorder %s45, %s46
    %p58 = scmp.eq.s32.totalorder %s15, 1
    %p59 = por %p57, %p58
    %p61 = scmp.ne.s32.totalorder %s46, %s60
    %p62 = scmp.eq.s32.totalorder %s15, 0
    %p63 = por %p61, %p62
    %s65 = sadd.s32 %s64, 1
    %p68 = scmp.eq.s32.totalorder %s9, 1
    %p69 = scmp.ne.s32.totalorder %s64, %s66
    %p70 = scmp.eq.s32.totalorder %s9, 0
    %p71 = por %p69, %p70
    %p72 = scmp.ne.s32.totalorder %s64, %s66
    %p73 = scmp.eq.s32.totalorder %s14, 1
    %p74 = por %p72, %p73
    %p75 = scmp.ne.s32.totalorder %s66, %s67
    %p76 = scmp.eq.s32.totalorder %s14, 0
    %p77 = por %p75, %p76
    %p78 = scmp.ne.s32.totalorder %s66, %s67
    %p79 = scmp.eq.s32.totalorder %s15, 1
    %p80 = por %p78, %p79
    %p82 = scmp.ne.s32.totalorder %s67, %s81
    %p83 = scmp.eq.s32.totalorder %s15, 0
    %p84 = por %p82, %p83
    %s85 = ssub.s32 %s9, %s16
    %p86 = scmp.eq.s32.totalorder %s85, 0
    %s88 = sadd.s32 %s87, 1
    %s89 = scalar_select %p86, %s87, %s88
    %p92 = pneg %p86
    %p93 = scmp.eq.s32.totalorder %s9, 1
    %p94 = por %p92, %p93
    %p95 = scmp.ne.s32.totalorder %s87, %s90
    %p96 = scmp.eq.s32.totalorder %s9, 0
    %p97 = por %p95, %p96
    %p98 = scmp.ne.s32.totalorder %s87, %s90
    %p99 = scmp.eq.s32.totalorder %s14, 1
    %p100 = por %p98, %p99
    %p101 = scmp.ne.s32.totalorder %s90, %s91
    %p102 = scmp.eq.s32.totalorder %s14, 0
    %p103 = por %p101, %p102
    %p104 = scmp.ne.s32.totalorder %s90, %s91
    %p105 = scmp.eq.s32.totalorder %s15, 1
    %p106 = por %p104, %p105
    %p108 = scmp.ne.s32.totalorder %s91, %s107
    %p109 = scmp.eq.s32.totalorder %s15, 0
    %p110 = por %p108, %p109
    %p111 = scmp.le.s32.totalorder 1, %s9
    %p112 = scmp.lt.s32.totalorder %s9, 3
    %p113 = pnand %p111, %p112
    %p114 = pneg %p113
    // Predicated region
    $region9: #{convnet_forward.6} parent=5 // pred_check
      _
    $region10: #{convnet_forward.6} parent=5 // pred_check_branch
      %116 = sbr.rel (%p113) target = $region12
    $region11: #{convnet_forward.6} parent=5 // pred_region
      %s117 = ssub.s32 %s9, 1
      // Predicated region
      $region13: #{convnet_forward.6} parent=11 // pred_check
        %p118 = pneg %p56
      $region14: #{convnet_forward.6} parent=11 // pred_check_branch
        %120 = sbr.rel (%p118) target = $region16
      $region15: #{convnet_forward.6} parent=11 // pred_region
        _
      $region16: #{convnet_forward.6} parent=11 // pred_fallthru
        _
      // Predicated region
      $region17: #{convnet_forward.6} parent=11 // pred_check
        %p121 = pneg %p77
      $region18: #{convnet_forward.6} parent=11 // pred_check_branch
        %123 = sbr.rel (%p121) target = $region20
      $region19: #{convnet_forward.6} parent=11 // pred_region
        _
      $region20: #{convnet_forward.6} parent=11 // pred_fallthru
        _
    $region12: #{convnet_forward.6} parent=5 // pred_fallthru
      _
    %p124 = scmp.lt.s32.totalorder %s9, 2
    // Predicated region
    $region21: #{convnet_forward.6} parent=5 // pred_check
      %p125 = pneg %p124
    $region22: #{convnet_forward.6} parent=5 // pred_check_branch
      %127 = sbr.rel (%p125) target = $region24
    $region23: #{convnet_forward.6} parent=5 // pred_region
      // Predicated region
      $region25: #{convnet_forward.6} parent=23 // pred_check
        %p128 = pneg %p29
      $region26: #{convnet_forward.6} parent=23 // pred_check_branch
        %130 = sbr.rel (%p128) target = $region28
      $region27: #{convnet_forward.6} parent=23 // pred_region
        %p131 = scmp.lt.s32.totalorder %s9, 1
        %s132 = scalar_select %p131, %s9, 1
        %s133 = smul.addr %s132, 18
        %s134 = smul.addr %s133, 4
        %s135 = scalar_lea.vmem %s0, %s134
      $region28: #{convnet_forward.6} parent=23 // pred_fallthru
        _
    $region24: #{convnet_forward.6} parent=5 // pred_fallthru
      _
    %p136 = scmp.le.s32.totalorder 1, %s9
    %p137 = scmp.lt.s32.totalorder %s9, 3
    %p138 = pnand %p136, %p137
    %p139 = pneg %p138
    // Predicated region
    $region29: #{convnet_forward.6} parent=5 // pred_check
      _
    $region30: #{convnet_forward.6} parent=5 // pred_check_branch
      %141 = sbr.rel (%p138) target = $region32
    $region31: #{convnet_forward.6} parent=5 // pred_region
      %s142 = ssub.s32 %s9, 1
      %p143 = scmp.lt.s32.totalorder %s14, 1
      %s144 = scalar_select %p143, %s14, 1
      %s145 = smul.addr %s144, 18
      %s146 = smul.addr %s145, 4
      %s147 = scalar_lea.vmem %s0, %s146
      %p148 = pneg %p35
      %p149 = pneg %p32
      %p150 = pneg %p56
      %p151 = pneg %p53
      %p152 = pneg %p77
      %p153 = pneg %p74
      %p154 = pneg %p103
      %p155 = pneg %p100
      %p156 = scmp.lt.s32.totalorder %s14, 1
      %s157 = scalar_select %p156, %s14, 1
      %s158 = smul.addr %s157, 3
      %s159 = smul.addr %s158, 2
      %s160 = scalar_lea.vmem %s3, %s159
      %p161 = scmp.lt.s32.totalorder %s14, 1
      %s162 = scalar_select %p161, %s14, 1
      %s163 = smul.addr %s162, 18
      %s164 = smul.addr %s163, 4
      %s165 = scalar_lea.vmem %s0, %s164
      %p166 = scmp.lt.s32.totalorder %s14, 1
      %s167 = scalar_select %p166, %s14, 1
      %s168 = smul.addr %s167, 3
      %s169 = smul.addr %s168, 2
      %s170 = scalar_lea.vmem %s3, %s169
      %v172 = vlaneseq
      %v173 = vshrl.u32 %v172, 7
      %v174 = vlaneseq
      %v175 = vand.u32 %v174, 127
      %v176 = vmul.u32 %v173, 2
      %vm177 = vcmp.eq.s32.totalorder %v175, %v176
      %v178 = vsel %vm177, 1, 0
      %v179 = vcvt.s32.f32 %v178
      %v180 = vadd.s32 %v176, 1
      %vm181 = vcmp.eq.s32.totalorder %v175, %v180
      %v182 = vsel %vm181, 1, 0
      %v183 = vcvt.s32.f32 %v182
      %v184 = vld [vmem:[%s2] sm:$0x1]
      loop: start=0, step=1, limit=3
      $region33: #{convnet_forward.6} parent=31 // loop_pre_header
        _
      $region34: #{convnet_forward.6} parent=31 // loop_header
        %s186 = sphi 0, %s190
        %p187 = scmp.ge.s32.totalorder %s186, 3
      $region35: #{convnet_forward.6} parent=31 // loop_header_branch
        %189 = sbr.rel (%p187) target = $region39
      $region36: #{convnet_forward.6} parent=31 // loop_body
        %s191 = smul.u32 %s186, 2
        %s192 = smul.u32 %s191, 2
        %s193 = smul.addr %s192, 4
        %s194 = scalar_lea.vmem %s165, %s193
        %v195 = vld [vmem:[%s194] sm:$0xf]
        %v196 = vld [vmem:[%s1] sm:$0xf]
        %v197 = vld [vmem:[%s1 + $0x4] sm:$0xf]
        %v198 = vld [vmem:[%s1 + $0x8] sm:$0xf]
        %v199 = vld [vmem:[%s1 + $0xc] sm:$0xf]
        %v200 = vld [vmem:[%s1 + $0x10] sm:$0xf]
        %v201 = vld [vmem:[%s1 + $0x14] sm:$0xf]
        %v202 = vld [vmem:[%s1 + $0x18] sm:$0xf]
        %v203 = vld [vmem:[%s1 + $0x1c] sm:$0xf]
        %v204 = vld [vmem:[%s1 + $0x20] sm:$0xf]
        %v205 = vld [vmem:[%s1 + $0x24] sm:$0xf]
        %v206 = vld [vmem:[%s1 + $0x28] sm:$0xf]
        %v207 = vld [vmem:[%s1 + $0x2c] sm:$0xf]
        %v208 = vld [vmem:[%s1 + $0x30] sm:$0xf]
        %v209 = vld [vmem:[%s1 + $0x34] sm:$0xf]
        %v210 = vld [vmem:[%s1 + $0x38] sm:$0xf]
        %v211 = vld [vmem:[%s1 + $0x3c] sm:$0xf]
        %s212 = scalar_lea.vmem %s1, 64
        %v213 = vld [vmem:[%s212] sm:$0xf]
        %v214 = vld [vmem:[%s212 + $0x4] sm:$0xf]
        %v215 = vld [vmem:[%s212 + $0x8] sm:$0xf]
        %v216 = vld [vmem:[%s212 + $0xc] sm:$0xf]
        %v217 = vld [vmem:[%s212 + $0x10] sm:$0xf]
        %v218 = vld [vmem:[%s212 + $0x14] sm:$0xf]
        %v219 = vld [vmem:[%s212 + $0x18] sm:$0xf]
        %v220 = vld [vmem:[%s212 + $0x1c] sm:$0xf]
        %v221 = vld [vmem:[%s212 + $0x20] sm:$0xf]
        %v222 = vld [vmem:[%s212 + $0x24] sm:$0xf]
        %v223 = vld [vmem:[%s212 + $0x28] sm:$0xf]
        %v224 = vld [vmem:[%s212 + $0x2c] sm:$0xf]
        %v225 = vld [vmem:[%s212 + $0x30] sm:$0xf]
        %v226 = vld [vmem:[%s212 + $0x34] sm:$0xf]
        %v227 = vld [vmem:[%s212 + $0x38] sm:$0xf]
        %v228 = vld [vmem:[%s212 + $0x3c] sm:$0xf]
        %v230 = vunpack.c.l.b16 %v195
        %v231 = vpack.c.b16 %v230, %v230
        %v233 = vshrl.u32 %v231, 16
        %v235 = vshll.u32 %v231, 16
        %v237 = vrot.slane %v235, 1
        %v238 = vor.u32 %v233, %v237
        %v256 = vunpack.c.l.b16 %v213
        %v257 = vunpack.c.l.b16 %v214
        %v258 = vunpack.c.l.b16 %v215
        %v259 = vunpack.c.l.b16 %v216
        %v260 = vunpack.c.l.b16 %v217
        %v261 = vunpack.c.l.b16 %v218
        %v262 = vunpack.c.l.b16 %v219
        %v263 = vunpack.c.l.b16 %v220
        %v264 = vunpack.c.l.b16 %v221
        %v265 = vunpack.c.l.b16 %v222
        %v266 = vunpack.c.l.b16 %v223
        %v267 = vunpack.c.l.b16 %v224
        %v268 = vunpack.c.l.b16 %v225
        %v269 = vunpack.c.l.b16 %v226
        %v270 = vunpack.c.l.b16 %v227
        %v271 = vunpack.c.l.b16 %v228
        %v272 = vpack.c.b16 %v257, %v256
        %v273 = vpack.c.b16 %v259, %v258
        %v274 = vpack.c.b16 %v261, %v260
        %v275 = vpack.c.b16 %v263, %v262
        %v276 = vpack.c.b16 %v265, %v264
        %v277 = vpack.c.b16 %v267, %v266
        %v278 = vpack.c.b16 %v269, %v268
        %v279 = vpack.c.b16 %v271, %v270
        %288 = vmatprep.subr.bf16.mxu0 0
        %289 = vmatpush1.bf16.msra.mxu0 %v272
        %290 = vmatprep.subr.bf16.mxu0 0
        %291 = vmatpush1.bf16.msra.mxu0 %v273
        %292 = vmatprep.subr.bf16.mxu0 0
        %293 = vmatpush1.bf16.msra.mxu0 %v274
        %294 = vmatprep.subr.bf16.mxu0 0
        %295 = vmatpush1.bf16.msra.mxu0 %v275
        %296 = vmatprep.subr.bf16.mxu0 0
        %297 = vmatpush1.bf16.msra.mxu0 %v276
        %298 = vmatprep.subr.bf16.mxu0 0
        %299 = vmatpush1.bf16.msra.mxu0 %v277
        %300 = vmatprep.subr.bf16.mxu0 0
        %301 = vmatpush1.bf16.msra.mxu0 %v278
        %302 = vmatprep.subr.bf16.mxu0 0
        %303 = vmatpush1.bf16.msra.mxu0 %v279
        %304 = vmatprep.subr.bf16.mxu0 0
        %305 = vmatpush1.bf16.msra.mxu0 0
        %306 = vmatprep.subr.bf16.mxu0 0
        %307 = vmatpush1.bf16.msra.mxu0 0
        %308 = vmatprep.subr.bf16.mxu0 0
        %309 = vmatpush1.bf16.msra.mxu0 0
        %310 = vmatprep.subr.bf16.mxu0 0
        %311 = vmatpush1.bf16.msra.mxu0 0
        %312 = vmatprep.subr.bf16.mxu0 0
        %313 = vmatpush1.bf16.msra.mxu0 0
        %314 = vmatprep.subr.bf16.mxu0 0
        %315 = vmatpush1.bf16.msra.mxu0 0
        %316 = vmatprep.subr.bf16.mxu0 0
        %317 = vmatpush1.bf16.msra.mxu0 0
        %318 = vmatprep.subr.bf16.mxu0 0
        %319 = vmatpush1.bf16.msra.mxu0 0
        %320 = vmatprep.mubr.bf16.mxu0 0
        %321 = vmatmul.mubr.bf16.gmra.mrb[0].mxu0 %v238
        %v322 = vpop.f32.mrb[0].mxu0
        %v323 = vadd.f32 0.0, %v322
        %v324 = vpop.f32.mrb[0].mxu0
        %v325 = vpop.f32.mrb[0].mxu0
        %v326 = vpop.f32.mrb[0].mxu0
        %327 = vdwg.mxu0
        %v344 = vunpack.c.l.b16 %v196
        %v345 = vunpack.c.l.b16 %v197
        %v346 = vunpack.c.l.b16 %v198
        %v347 = vunpack.c.l.b16 %v199
        %v348 = vunpack.c.l.b16 %v200
        %v349 = vunpack.c.l.b16 %v201
        %v350 = vunpack.c.l.b16 %v202
        %v351 = vunpack.c.l.b16 %v203
        %v352 = vunpack.c.l.b16 %v204
        %v353 = vunpack.c.l.b16 %v205
        %v354 = vunpack.c.l.b16 %v206
        %v355 = vunpack.c.l.b16 %v207
        %v356 = vunpack.c.l.b16 %v208
        %v357 = vunpack.c.l.b16 %v209
        %v358 = vunpack.c.l.b16 %v210
        %v359 = vunpack.c.l.b16 %v211
        %v360 = vpack.c.b16 %v345, %v344
        %v361 = vpack.c.b16 %v347, %v346
        %v362 = vpack.c.b16 %v349, %v348
        %v363 = vpack.c.b16 %v351, %v350
        %v364 = vpack.c.b16 %v353, %v352
        %v365 = vpack.c.b16 %v355, %v354
        %v366 = vpack.c.b16 %v357, %v356
        %v367 = vpack.c.b16 %v359, %v358
        %376 = vmatprep.subr.bf16.mxu0 0
        %377 = vmatpush1.bf16.msra.mxu0 %v360
        %378 = vmatprep.subr.bf16.mxu0 0
        %379 = vmatpush1.bf16.msra.mxu0 %v361
        %380 = vmatprep.subr.bf16.mxu0 0
        %381 = vmatpush1.bf16.msra.mxu0 %v362
        %382 = vmatprep.subr.bf16.mxu0 0
        %383 = vmatpush1.bf16.msra.mxu0 %v363
        %384 = vmatprep.subr.bf16.mxu0 0
        %385 = vmatpush1.bf16.msra.mxu0 %v364
        %386 = vmatprep.subr.bf16.mxu0 0
        %387 = vmatpush1.bf16.msra.mxu0 %v365
        %388 = vmatprep.subr.bf16.mxu0 0
        %389 = vmatpush1.bf16.msra.mxu0 %v366
        %390 = vmatprep.subr.bf16.mxu0 0
        %391 = vmatpush1.bf16.msra.mxu0 %v367
        %392 = vmatprep.subr.bf16.mxu0 0
        %393 = vmatpush1.bf16.msra.mxu0 0
        %394 = vmatprep.subr.bf16.mxu0 0
        %395 = vmatpush1.bf16.msra.mxu0 0
        %396 = vmatprep.subr.bf16.mxu0 0
        %397 = vmatpush1.bf16.msra.mxu0 0
        %398 = vmatprep.subr.bf16.mxu0 0
        %399 = vmatpush1.bf16.msra.mxu0 0
        %400 = vmatprep.subr.bf16.mxu0 0
        %401 = vmatpush1.bf16.msra.mxu0 0
        %402 = vmatprep.subr.bf16.mxu0 0
        %403 = vmatpush1.bf16.msra.mxu0 0
        %404 = vmatprep.subr.bf16.mxu0 0
        %405 = vmatpush1.bf16.msra.mxu0 0
        %406 = vmatprep.subr.bf16.mxu0 0
        %407 = vmatpush1.bf16.msra.mxu0 0
        %408 = vmatprep.mubr.bf16.mxu0 0
        %409 = vmatmul.mubr.bf16.gmra.mrb[0].mxu0 %v195
        %v410 = vpop.f32.mrb[0].mxu0
        %v411 = vadd.f32 %v323, %v410
        %v412 = vpop.f32.mrb[0].mxu0
        %v413 = vpop.f32.mrb[0].mxu0
        %v414 = vpop.f32.mrb[0].mxu0
        %415 = vdwg.mxu0
        %v416 = vld [vmem:[%s194] sm:$0xe]
        %v417 = vld [vmem:[%s194 + $0x4] sm:$0x1]
        %s418 = scalar_lea.vmem %s1, 128
        %v419 = vld [vmem:[%s418] sm:$0xf]
        %v420 = vld [vmem:[%s418 + $0x4] sm:$0xf]
        %v421 = vld [vmem:[%s418 + $0x8] sm:$0xf]
        %v422 = vld [vmem:[%s418 + $0xc] sm:$0xf]
        %v423 = vld [vmem:[%s418 + $0x10] sm:$0xf]
        %v424 = vld [vmem:[%s418 + $0x14] sm:$0xf]
        %v425 = vld [vmem:[%s418 + $0x18] sm:$0xf]
        %v426 = vld [vmem:[%s418 + $0x1c] sm:$0xf]
        %v427 = vld [vmem:[%s418 + $0x20] sm:$0xf]
        %v428 = vld [vmem:[%s418 + $0x24] sm:$0xf]
        %v429 = vld [vmem:[%s418 + $0x28] sm:$0xf]
        %v430 = vld [vmem:[%s418 + $0x2c] sm:$0xf]
        %v431 = vld [vmem:[%s418 + $0x30] sm:$0xf]
        %v432 = vld [vmem:[%s418 + $0x34] sm:$0xf]
        %v433 = vld [vmem:[%s418 + $0x38] sm:$0xf]
        %v434 = vld [vmem:[%s418 + $0x3c] sm:$0xf]
        %v437 = vunpack.c.l.b16 %v416
        %v438 = vunpack.c.l.b16 %v417
        %v439 = vpack.c.b16 %v438, %v437
        %v440 = vrot.slane %v439, 1
        %v458 = vunpack.c.l.b16 %v419
        %v459 = vunpack.c.l.b16 %v420
        %v460 = vunpack.c.l.b16 %v421
        %v461 = vunpack.c.l.b16 %v422
        %v462 = vunpack.c.l.b16 %v423
        %v463 = vunpack.c.l.b16 %v424
        %v464 = vunpack.c.l.b16 %v425
        %v465 = vunpack.c.l.b16 %v426
        %v466 = vunpack.c.l.b16 %v427
        %v467 = vunpack.c.l.b16 %v428
        %v468 = vunpack.c.l.b16 %v429
        %v469 = vunpack.c.l.b16 %v430
        %v470 = vunpack.c.l.b16 %v431
        %v471 = vunpack.c.l.b16 %v432
        %v472 = vunpack.c.l.b16 %v433
        %v473 = vunpack.c.l.b16 %v434
        %v474 = vpack.c.b16 %v459, %v458
        %v475 = vpack.c.b16 %v461, %v460
        %v476 = vpack.c.b16 %v463, %v462
        %v477 = vpack.c.b16 %v465, %v464
        %v478 = vpack.c.b16 %v467, %v466
        %v479 = vpack.c.b16 %v469, %v468
        %v480 = vpack.c.b16 %v471, %v470
        %v481 = vpack.c.b16 %v473, %v472
        %490 = vmatprep.subr.bf16.mxu0 0
        %491 = vmatpush1.bf16.msra.mxu0 %v474
        %492 = vmatprep.subr.bf16.mxu0 0
        %493 = vmatpush1.bf16.msra.mxu0 %v475
        %494 = vmatprep.subr.bf16.mxu0 0
        %495 = vmatpush1.bf16.msra.mxu0 %v476
        %496 = vmatprep.subr.bf16.mxu0 0
        %497 = vmatpush1.bf16.msra.mxu0 %v477
        %498 = vmatprep.subr.bf16.mxu0 0
        %499 = vmatpush1.bf16.msra.mxu0 %v478
        %500 = vmatprep.subr.bf16.mxu0 0
        %501 = vmatpush1.bf16.msra.mxu0 %v479
        %502 = vmatprep.subr.bf16.mxu0 0
        %503 = vmatpush1.bf16.msra.mxu0 %v480
        %504 = vmatprep.subr.bf16.mxu0 0
        %505 = vmatpush1.bf16.msra.mxu0 %v481
        %506 = vmatprep.subr.bf16.mxu0 0
        %507 = vmatpush1.bf16.msra.mxu0 0
        %508 = vmatprep.subr.bf16.mxu0 0
        %509 = vmatpush1.bf16.msra.mxu0 0
        %510 = vmatprep.subr.bf16.mxu0 0
        %511 = vmatpush1.bf16.msra.mxu0 0
        %512 = vmatprep.subr.bf16.mxu0 0
        %513 = vmatpush1.bf16.msra.mxu0 0
        %514 = vmatprep.subr.bf16.mxu0 0
        %515 = vmatpush1.bf16.msra.mxu0 0
        %516 = vmatprep.subr.bf16.mxu0 0
        %517 = vmatpush1.bf16.msra.mxu0 0
        %518 = vmatprep.subr.bf16.mxu0 0
        %519 = vmatpush1.bf16.msra.mxu0 0
        %520 = vmatprep.subr.bf16.mxu0 0
        %521 = vmatpush1.bf16.msra.mxu0 0
        %522 = vmatprep.mubr.bf16.mxu0 0
        %523 = vmatmul.mubr.bf16.gmra.mrb[0].mxu0 %v440
        %v524 = vpop.f32.mrb[0].mxu0
        %v525 = vadd.f32 0.0, %v524
        %v526 = vpop.f32.mrb[0].mxu0
        %v527 = vpop.f32.mrb[0].mxu0
        %v528 = vpop.f32.mrb[0].mxu0
        %529 = vdwg.mxu0
        %v530 = vadd.f32 %v411, %v525
        %s531 = sadd.s32 %s191, 1
        %s532 = smul.u32 %s531, 2
        %s533 = smul.addr %s532, 4
        %s534 = scalar_lea.vmem %s165, %s533
        %v535 = vld [vmem:[%s534] sm:$0xf]
        %s536 = scalar_lea.vmem %s1, 192
        %v537 = vld [vmem:[%s536] sm:$0xf]
        %v538 = vld [vmem:[%s536 + $0x4] sm:$0xf]
        %v539 = vld [vmem:[%s536 + $0x8] sm:$0xf]
        %v540 = vld [vmem:[%s536 + $0xc] sm:$0xf]
        %v541 = vld [vmem:[%s536 + $0x10] sm:$0xf]
        %v542 = vld [vmem:[%s536 + $0x14] sm:$0xf]
        %v543 = vld [vmem:[%s536 + $0x18] sm:$0xf]
        %v544 = vld [vmem:[%s536 + $0x1c] sm:$0xf]
        %v545 = vld [vmem:[%s536 + $0x20] sm:$0xf]
        %v546 = vld [vmem:[%s536 + $0x24] sm:$0xf]
        %v547 = vld [vmem:[%s536 + $0x28] sm:$0xf]
        %v548 = vld [vmem:[%s536 + $0x2c] sm:$0xf]
        %v549 = vld [vmem:[%s536 + $0x30] sm:$0xf]
        %v550 = vld [vmem:[%s536 + $0x34] sm:$0xf]
        %v551 = vld [vmem:[%s536 + $0x38] sm:$0xf]
        %v552 = vld [vmem:[%s536 + $0x3c] sm:$0xf]
        %v569 = vunpack.c.l.b16 %v537
        %v570 = vunpack.c.l.b16 %v538
        %v571 = vunpack.c.l.b16 %v539
        %v572 = vunpack.c.l.b16 %v540
        %v573 = vunpack.c.l.b16 %v541
        %v574 = vunpack.c.l.b16 %v542
        %v575 = vunpack.c.l.b16 %v543
        %v576 = vunpack.c.l.b16 %v544
        %v577 = vunpack.c.l.b16 %v545
        %v578 = vunpack.c.l.b16 %v546
        %v579 = vunpack.c.l.b16 %v547
        %v580 = vunpack.c.l.b16 %v548
        %v581 = vunpack.c.l.b16 %v549
        %v582 = vunpack.c.l.b16 %v550
        %v583 = vunpack.c.l.b16 %v551
        %v584 = vunpack.c.l.b16 %v552
        %v585 = vpack.c.b16 %v570, %v569
        %v586 = vpack.c.b16 %v572, %v571
        %v587 = vpack.c.b16 %v574, %v573
        %v588 = vpack.c.b16 %v576, %v575
        %v589 = vpack.c.b16 %v578, %v577
        %v590 = vpack.c.b16 %v580, %v579
        %v591 = vpack.c.b16 %v582, %v581
        %v592 = vpack.c.b16 %v584, %v583
        %601 = vmatprep.subr.bf16.mxu0 0
        %602 = vmatpush1.bf16.msra.mxu0 %v585
        %603 = vmatprep.subr.bf16.mxu0 0
        %604 = vmatpush1.bf16.msra.mxu0 %v586
        %605 = vmatprep.subr.bf16.mxu0 0
        %606 = vmatpush1.bf16.msra.mxu0 %v587
        %607 = vmatprep.subr.bf16.mxu0 0
        %608 = vmatpush1.bf16.msra.mxu0 %v588
        %609 = vmatprep.subr.bf16.mxu0 0
        %610 = vmatpush1.bf16.msra.mxu0 %v589
        %611 = vmatprep.subr.bf16.mxu0 0
        %612 = vmatpush1.bf16.msra.mxu0 %v590
        %613 = vmatprep.subr.bf16.mxu0 0
        %614 = vmatpush1.bf16.msra.mxu0 %v591
        %615 = vmatprep.subr.bf16.mxu0 0
        %616 = vmatpush1.bf16.msra.mxu0 %v592
        %617 = vmatprep.subr.bf16.mxu0 0
        %618 = vmatpush1.bf16.msra.mxu0 0
        %619 = vmatprep.subr.bf16.mxu0 0
        %620 = vmatpush1.bf16.msra.mxu0 0
        %621 = vmatprep.subr.bf16.mxu0 0
        %622 = vmatpush1.bf16.msra.mxu0 0
        %623 = vmatprep.subr.bf16.mxu0 0
        %624 = vmatpush1.bf16.msra.mxu0 0
        %625 = vmatprep.subr.bf16.mxu0 0
        %626 = vmatpush1.bf16.msra.mxu0 0
        %627 = vmatprep.subr.bf16.mxu0 0
        %628 = vmatpush1.bf16.msra.mxu0 0
        %629 = vmatprep.subr.bf16.mxu0 0
        %630 = vmatpush1.bf16.msra.mxu0 0
        %631 = vmatprep.subr.bf16.mxu0 0
        %632 = vmatpush1.bf16.msra.mxu0 0
        %633 = vmatprep.mubr.bf16.mxu0 0
        %634 = vmatmul.mubr.bf16.gmra.mrb[0].mxu0 %v535
        %v635 = vpop.f32.mrb[0].mxu0
        %v636 = vadd.f32 0.0, %v635
        %v637 = vpop.f32.mrb[0].mxu0
        %v638 = vpop.f32.mrb[0].mxu0
        %v639 = vpop.f32.mrb[0].mxu0
        %640 = vdwg.mxu0
        %v641 = vadd.f32 %v530, %v636
        %s642 = scalar_lea.vmem %s1, 256
        %v643 = vld [vmem:[%s642] sm:$0xf]
        %v644 = vld [vmem:[%s642 + $0x4] sm:$0xf]
        %v645 = vld [vmem:[%s642 + $0x8] sm:$0xf]
        %v646 = vld [vmem:[%s642 + $0xc] sm:$0xf]
        %v647 = vld [vmem:[%s642 + $0x10] sm:$0xf]
        %v648 = vld [vmem:[%s642 + $0x14] sm:$0xf]
        %v649 = vld [vmem:[%s642 + $0x18] sm:$0xf]
        %v650 = vld [vmem:[%s642 + $0x1c] sm:$0xf]
        %v651 = vld [vmem:[%s642 + $0x20] sm:$0xf]
        %v652 = vld [vmem:[%s642 + $0x24] sm:$0xf]
        %v653 = vld [vmem:[%s642 + $0x28] sm:$0xf]
        %v654 = vld [vmem:[%s642 + $0x2c] sm:$0xf]
        %v655 = vld [vmem:[%s642 + $0x30] sm:$0xf]
        %v656 = vld [vmem:[%s642 + $0x34] sm:$0xf]
        %v657 = vld [vmem:[%s642 + $0x38] sm:$0xf]
        %v658 = vld [vmem:[%s642 + $0x3c] sm:$0xf]
        %v660 = vunpack.c.l.b16 %v535
        %v661 = vpack.c.b16 %v660, %v660
        %v663 = vshrl.u32 %v661, 16
        %v665 = vshll.u32 %v661, 16
        %v667 = vrot.slane %v665, 1
        %v668 = vor.u32 %v663, %v667
        %v686 = vunpack.c.l.b16 %v643
        %v687 = vunpack.c.l.b16 %v644
        %v688 = vunpack.c.l.b16 %v645
        %v689 = vunpack.c.l.b16 %v646
        %v690 = vunpack.c.l.b16 %v647
        %v691 = vunpack.c.l.b16 %v648
        %v692 = vunpack.c.l.b16 %v649
        %v693 = vunpack.c.l.b16 %v650
        %v694 = vunpack.c.l.b16 %v651
        %v695 = vunpack.c.l.b16 %v652
        %v696 = vunpack.c.l.b16 %v653
        %v697 = vunpack.c.l.b16 %v654
        %v698 = vunpack.c.l.b16 %v655
        %v699 = vunpack.c.l.b16 %v656
        %v700 = vunpack.c.l.b16 %v657
        %v701 = vunpack.c.l.b16 %v658
        %v702 = vpack.c.b16 %v687, %v686
        %v703 = vpack.c.b16 %v689, %v688
        %v704 = vpack.c.b16 %v691, %v690
        %v705 = vpack.c.b16 %v693, %v692
        %v706 = vpack.c.b16 %v695, %v694
        %v707 = vpack.c.b16 %v697, %v696
        %v708 = vpack.c.b16 %v699, %v698
        %v709 = vpack.c.b16 %v701, %v700
        %718 = vmatprep.subr.bf16.mxu0 0
        %719 = vmatpush1.bf16.msra.mxu0 %v702
        %720 = vmatprep.subr.bf16.mxu0 0
        %721 = vmatpush1.bf16.msra.mxu0 %v703
        %722 = vmatprep.subr.bf16.mxu0 0
        %723 = vmatpush1.bf16.msra.mxu0 %v704
        %724 = vmatprep.subr.bf16.mxu0 0
        %725 = vmatpush1.bf16.msra.mxu0 %v705
        %726 = vmatprep.subr.bf16.mxu0 0
        %727 = vmatpush1.bf16.msra.mxu0 %v706
        %728 = vmatprep.subr.bf16.mxu0 0
        %729 = vmatpush1.bf16.msra.mxu0 %v707
        %730 = vmatprep.subr.bf16.mxu0 0
        %731 = vmatpush1.bf16.msra.mxu0 %v708
        %732 = vmatprep.subr.bf16.mxu0 0
        %733 = vmatpush1.bf16.msra.mxu0 %v709
        %734 = vmatprep.subr.bf16.mxu0 0
        %735 = vmatpush1.bf16.msra.mxu0 0
        %736 = vmatprep.subr.bf16.mxu0 0
        %737 = vmatpush1.bf16.msra.mxu0 0
        %738 = vmatprep.subr.bf16.mxu0 0
        %739 = vmatpush1.bf16.msra.mxu0 0
        %740 = vmatprep.subr.bf16.mxu0 0
        %741 = vmatpush1.bf16.msra.mxu0 0
        %742 = vmatprep.subr.bf16.mxu0 0
        %743 = vmatpush1.bf16.msra.mxu0 0
        %744 = vmatprep.subr.bf16.mxu0 0
        %745 = vmatpush1.bf16.msra.mxu0 0
        %746 = vmatprep.subr.bf16.mxu0 0
        %747 = vmatpush1.bf16.msra.mxu0 0
        %748 = vmatprep.subr.bf16.mxu0 0
        %749 = vmatpush1.bf16.msra.mxu0 0
        %750 = vmatprep.mubr.bf16.mxu0 0
        %751 = vmatmul.mubr.bf16.gmra.mrb[0].mxu0 %v668
        %v752 = vpop.f32.mrb[0].mxu0
        %v753 = vadd.f32 0.0, %v752
        %v754 = vpop.f32.mrb[0].mxu0
        %v755 = vpop.f32.mrb[0].mxu0
        %v756 = vpop.f32.mrb[0].mxu0
        %757 = vdwg.mxu0
        %v758 = vadd.f32 %v641, %v753
        %v759 = vld [vmem:[%s534] sm:$0xe]
        %v760 = vld [vmem:[%s534 + $0x4] sm:$0x1]
        %s761 = scalar_lea.vmem %s1, 320
        %v762 = vld [vmem:[%s761] sm:$0xf]
        %v763 = vld [vmem:[%s761 + $0x4] sm:$0xf]
        %v764 = vld [vmem:[%s761 + $0x8] sm:$0xf]
        %v765 = vld [vmem:[%s761 + $0xc] sm:$0xf]
        %v766 = vld [vmem:[%s761 + $0x10] sm:$0xf]
        %v767 = vld [vmem:[%s761 + $0x14] sm:$0xf]
        %v768 = vld [vmem:[%s761 + $0x18] sm:$0xf]
        %v769 = vld [vmem:[%s761 + $0x1c] sm:$0xf]
        %v770 = vld [vmem:[%s761 + $0x20] sm:$0xf]
        %v771 = vld [vmem:[%s761 + $0x24] sm:$0xf]
        %v772 = vld [vmem:[%s761 + $0x28] sm:$0xf]
        %v773 = vld [vmem:[%s761 + $0x2c] sm:$0xf]
        %v774 = vld [vmem:[%s761 + $0x30] sm:$0xf]
        %v775 = vld [vmem:[%s761 + $0x34] sm:$0xf]
        %v776 = vld [vmem:[%s761 + $0x38] sm:$0xf]
        %v777 = vld [vmem:[%s761 + $0x3c] sm:$0xf]
        %v780 = vunpack.c.l.b16 %v759
        %v781 = vunpack.c.l.b16 %v760
        %v782 = vpack.c.b16 %v781, %v780
        %v783 = vrot.slane %v782, 1
        %v801 = vunpack.c.l.b16 %v762
        %v802 = vunpack.c.l.b16 %v763
        %v803 = vunpack.c.l.b16 %v764
        %v804 = vunpack.c.l.b16 %v765
        %v805 = vunpack.c.l.b16 %v766
        %v806 = vunpack.c.l.b16 %v767
        %v807 = vunpack.c.l.b16 %v768
        %v808 = vunpack.c.l.b16 %v769
        %v809 = vunpack.c.l.b16 %v770
        %v810 = vunpack.c.l.b16 %v771
        %v811 = vunpack.c.l.b16 %v772
        %v812 = vunpack.c.l.b16 %v773
        %v813 = vunpack.c.l.b16 %v774
        %v814 = vunpack.c.l.b16 %v775
        %v815 = vunpack.c.l.b16 %v776
        %v816 = vunpack.c.l.b16 %v777
        %v817 = vpack.c.b16 %v802, %v801
        %v818 = vpack.c.b16 %v804, %v803
        %v819 = vpack.c.b16 %v806, %v805
        %v820 = vpack.c.b16 %v808, %v807
        %v821 = vpack.c.b16 %v810, %v809
        %v822 = vpack.c.b16 %v812, %v811
        %v823 = vpack.c.b16 %v814, %v813
        %v824 = vpack.c.b16 %v816, %v815
        %833 = vmatprep.subr.bf16.mxu0 0
        %834 = vmatpush1.bf16.msra.mxu0 %v817
        %835 = vmatprep.subr.bf16.mxu0 0
        %836 = vmatpush1.bf16.msra.mxu0 %v818
        %837 = vmatprep.subr.bf16.mxu0 0
        %838 = vmatpush1.bf16.msra.mxu0 %v819
        %839 = vmatprep.subr.bf16.mxu0 0
        %840 = vmatpush1.bf16.msra.mxu0 %v820
        %841 = vmatprep.subr.bf16.mxu0 0
        %842 = vmatpush1.bf16.msra.mxu0 %v821
        %843 = vmatprep.subr.bf16.mxu0 0
        %844 = vmatpush1.bf16.msra.mxu0 %v822
        %845 = vmatprep.subr.bf16.mxu0 0
        %846 = vmatpush1.bf16.msra.mxu0 %v823
        %847 = vmatprep.subr.bf16.mxu0 0
        %848 = vmatpush1.bf16.msra.mxu0 %v824
        %849 = vmatprep.subr.bf16.mxu0 0
        %850 = vmatpush1.bf16.msra.mxu0 0
        %851 = vmatprep.subr.bf16.mxu0 0
        %852 = vmatpush1.bf16.msra.mxu0 0
        %853 = vmatprep.subr.bf16.mxu0 0
        %854 = vmatpush1.bf16.msra.mxu0 0
        %855 = vmatprep.subr.bf16.mxu0 0
        %856 = vmatpush1.bf16.msra.mxu0 0
        %857 = vmatprep.subr.bf16.mxu0 0
        %858 = vmatpush1.bf16.msra.mxu0 0
        %859 = vmatprep.subr.bf16.mxu0 0
        %860 = vmatpush1.bf16.msra.mxu0 0
        %861 = vmatprep.subr.bf16.mxu0 0
        %862 = vmatpush1.bf16.msra.mxu0 0
        %863 = vmatprep.subr.bf16.mxu0 0
        %864 = vmatpush1.bf16.msra.mxu0 0
        %865 = vmatprep.mubr.bf16.mxu0 0
        %866 = vmatmul.mubr.bf16.gmra.mrb[0].mxu0 %v783
        %v867 = vpop.f32.mrb[0].mxu0
        %v868 = vadd.f32 0.0, %v867
        %v869 = vpop.f32.mrb[0].mxu0
        %v870 = vpop.f32.mrb[0].mxu0
        %v871 = vpop.f32.mrb[0].mxu0
        %872 = vdwg.mxu0
        %v873 = vadd.f32 %v758, %v868
        %s874 = sadd.s32 %s191, 2
        %s875 = smul.u32 %s874, 2
        %s876 = smul.addr %s875, 4
        %s877 = scalar_lea.vmem %s165, %s876
        %v878 = vld [vmem:[%s877] sm:$0xf]
        %s879 = scalar_lea.vmem %s1, 384
        %v880 = vld [vmem:[%s879] sm:$0xf]
        %v881 = vld [vmem:[%s879 + $0x4] sm:$0xf]
        %v882 = vld [vmem:[%s879 + $0x8] sm:$0xf]
        %v883 = vld [vmem:[%s879 + $0xc] sm:$0xf]
        %v884 = vld [vmem:[%s879 + $0x10] sm:$0xf]
        %v885 = vld [vmem:[%s879 + $0x14] sm:$0xf]
        %v886 = vld [vmem:[%s879 + $0x18] sm:$0xf]
        %v887 = vld [vmem:[%s879 + $0x1c] sm:$0xf]
        %v888 = vld [vmem:[%s879 + $0x20] sm:$0xf]
        %v889 = vld [vmem:[%s879 + $0x24] sm:$0xf]
        %v890 = vld [vmem:[%s879 + $0x28] sm:$0xf]
        %v891 = vld [vmem:[%s879 + $0x2c] sm:$0xf]
        %v892 = vld [vmem:[%s879 + $0x30] sm:$0xf]
        %v893 = vld [vmem:[%s879 + $0x34] sm:$0xf]
        %v894 = vld [vmem:[%s879 + $0x38] sm:$0xf]
        %v895 = vld [vmem:[%s879 + $0x3c] sm:$0xf]
        %v912 = vunpack.c.l.b16 %v880
        %v913 = vunpack.c.l.b16 %v881
        %v914 = vunpack.c.l.b16 %v882
        %v915 = vunpack.c.l.b16 %v883
        %v916 = vunpack.c.l.b16 %v884
        %v917 = vunpack.c.l.b16 %v885
        %v918 = vunpack.c.l.b16 %v886
        %v919 = vunpack.c.l.b16 %v887
        %v920 = vunpack.c.l.b16 %v888
        %v921 = vunpack.c.l.b16 %v889
        %v922 = vunpack.c.l.b16 %v890
        %v923 = vunpack.c.l.b16 %v891
        %v924 = vunpack.c.l.b16 %v892
        %v925 = vunpack.c.l.b16 %v893
        %v926 = vunpack.c.l.b16 %v894
        %v927 = vunpack.c.l.b16 %v895
        %v928 = vpack.c.b16 %v913, %v912
        %v929 = vpack.c.b16 %v915, %v914
        %v930 = vpack.c.b16 %v917, %v916
        %v931 = vpack.c.b16 %v919, %v918
        %v932 = vpack.c.b16 %v921, %v920
        %v933 = vpack.c.b16 %v923, %v922
        %v934 = vpack.c.b16 %v925, %v924
        %v935 = vpack.c.b16 %v927, %v926
        %944 = vmatprep.subr.bf16.mxu0 0
        %945 = vmatpush1.bf16.msra.mxu0 %v928
        %946 = vmatprep.subr.bf16.mxu0 0
        %947 = vmatpush1.bf16.msra.mxu0 %v929
        %948 = vmatprep.subr.bf16.mxu0 0
        %949 = vmatpush1.bf16.msra.mxu0 %v930
        %950 = vmatprep.subr.bf16.mxu0 0
        %951 = vmatpush1.bf16.msra.mxu0 %v931
        %952 = vmatprep.subr.bf16.mxu0 0
        %953 = vmatpush1.bf16.msra.mxu0 %v932
        %954 = vmatprep.subr.bf16.mxu0 0
        %955 = vmatpush1.bf16.msra.mxu0 %v933
        %956 = vmatprep.subr.bf16.mxu0 0
        %957 = vmatpush1.bf16.msra.mxu0 %v934
        %958 = vmatprep.subr.bf16.mxu0 0
        %959 = vmatpush1.bf16.msra.mxu0 %v935
        %960 = vmatprep.subr.bf16.mxu0 0
        %961 = vmatpush1.bf16.msra.mxu0 0
        %962 = vmatprep.subr.bf16.mxu0 0
        %963 = vmatpush1.bf16.msra.mxu0 0
        %964 = vmatprep.subr.bf16.mxu0 0
        %965 = vmatpush1.bf16.msra.mxu0 0
        %966 = vmatprep.subr.bf16.mxu0 0
        %967 = vmatpush1.bf16.msra.mxu0 0
        %968 = vmatprep.subr.bf16.mxu0 0
        %969 = vmatpush1.bf16.msra.mxu0 0
        %970 = vmatprep.subr.bf16.mxu0 0
        %971 = vmatpush1.bf16.msra.mxu0 0
        %972 = vmatprep.subr.bf16.mxu0 0
        %973 = vmatpush1.bf16.msra.mxu0 0
        %974 = vmatprep.subr.bf16.mxu0 0
        %975 = vmatpush1.bf16.msra.mxu0 0
        %976 = vmatprep.mubr.bf16.mxu0 0
        %977 = vmatmul.mubr.bf16.gmra.mrb[0].mxu0 %v878
        %v978 = vpop.f32.mrb[0].mxu0
        %v979 = vadd.f32 0.0, %v978
        %v980 = vpop.f32.mrb[0].mxu0
        %v981 = vpop.f32.mrb[0].mxu0
        %v982 = vpop.f32.mrb[0].mxu0
        %983 = vdwg.mxu0
        %v984 = vadd.f32 %v873, %v979
        %s985 = scalar_lea.vmem %s1, 448
        %v986 = vld [vmem:[%s985] sm:$0xf]
        %v987 = vld [vmem:[%s985 + $0x4] sm:$0xf]
        %v988 = vld [vmem:[%s985 + $0x8] sm:$0xf]
        %v989 = vld [vmem:[%s985 + $0xc] sm:$0xf]
        %v990 = vld [vmem:[%s985 + $0x10] sm:$0xf]
        %v991 = vld [vmem:[%s985 + $0x14] sm:$0xf]
        %v992 = vld [vmem:[%s985 + $0x18] sm:$0xf]
        %v993 = vld [vmem:[%s985 + $0x1c] sm:$0xf]
        %v994 = vld [vmem:[%s985 + $0x20] sm:$0xf]
        %v995 = vld [vmem:[%s985 + $0x24] sm:$0xf]
        %v996 = vld [vmem:[%s985 + $0x28] sm:$0xf]
        %v997 = vld [vmem:[%s985 + $0x2c] sm:$0xf]
        %v998 = vld [vmem:[%s985 + $0x30] sm:$0xf]
        %v999 = vld [vmem:[%s985 + $0x34] sm:$0xf]
        %v1000 = vld [vmem:[%s985 + $0x38] sm:$0xf]
        %v1001 = vld [vmem:[%s985 + $0x3c] sm:$0xf]
        %v1003 = vunpack.c.l.b16 %v878
        %v1004 = vpack.c.b16 %v1003, %v1003
        %v1006 = vshrl.u32 %v1004, 16
        %v1008 = vshll.u32 %v1004, 16
        %v1010 = vrot.slane %v1008, 1
        %v1011 = vor.u32 %v1006, %v1010
        %v1029 = vunpack.c.l.b16 %v986
        %v1030 = vunpack.c.l.b16 %v987
        %v1031 = vunpack.c.l.b16 %v988
        %v1032 = vunpack.c.l.b16 %v989
        %v1033 = vunpack.c.l.b16 %v990
        %v1034 = vunpack.c.l.b16 %v991
        %v1035 = vunpack.c.l.b16 %v992
        %v1036 = vunpack.c.l.b16 %v993
        %v1037 = vunpack.c.l.b16 %v994
        %v1038 = vunpack.c.l.b16 %v995
        %v1039 = vunpack.c.l.b16 %v996
        %v1040 = vunpack.c.l.b16 %v997
        %v1041 = vunpack.c.l.b16 %v998
        %v1042 = vunpack.c.l.b16 %v999
        %v1043 = vunpack.c.l.b16 %v1000
        %v1044 = vunpack.c.l.b16 %v1001
        %v1045 = vpack.c.b16 %v1030, %v1029
        %v1046 = vpack.c.b16 %v1032, %v1031
        %v1047 = vpack.c.b16 %v1034, %v1033
        %v1048 = vpack.c.b16 %v1036, %v1035
        %v1049 = vpack.c.b16 %v1038, %v1037
        %v1050 = vpack.c.b16 %v1040, %v1039
        %v1051 = vpack.c.b16 %v1042, %v1041
        %v1052 = vpack.c.b16 %v1044, %v1043
        %1061 = vmatprep.subr.bf16.mxu0 0
        %1062 = vmatpush1.bf16.msra.mxu0 %v1045
        %1063 = vmatprep.subr.bf16.mxu0 0
        %1064 = vmatpush1.bf16.msra.mxu0 %v1046
        %1065 = vmatprep.subr.bf16.mxu0 0
        %1066 = vmatpush1.bf16.msra.mxu0 %v1047
        %1067 = vmatprep.subr.bf16.mxu0 0
        %1068 = vmatpush1.bf16.msra.mxu0 %v1048
        %1069 = vmatprep.subr.bf16.mxu0 0
        %1070 = vmatpush1.bf16.msra.mxu0 %v1049
        %1071 = vmatprep.subr.bf16.mxu0 0
        %1072 = vmatpush1.bf16.msra.mxu0 %v1050
        %1073 = vmatprep.subr.bf16.mxu0 0
        %1074 = vmatpush1.bf16.msra.mxu0 %v1051
        %1075 = vmatprep.subr.bf16.mxu0 0
        %1076 = vmatpush1.bf16.msra.mxu0 %v1052
        %1077 = vmatprep.subr.bf16.mxu0 0
        %1078 = vmatpush1.bf16.msra.mxu0 0
        %1079 = vmatprep.subr.bf16.mxu0 0
        %1080 = vmatpush1.bf16.msra.mxu0 0
        %1081 = vmatprep.subr.bf16.mxu0 0
        %1082 = vmatpush1.bf16.msra.mxu0 0
        %1083 = vmatprep.subr.bf16.mxu0 0
        %1084 = vmatpush1.bf16.msra.mxu0 0
        %1085 = vmatprep.subr.bf16.mxu0 0
        %1086 = vmatpush1.bf16.msra.mxu0 0
        %1087 = vmatprep.subr.bf16.mxu0 0
        %1088 = vmatpush1.bf16.msra.mxu0 0
        %1089 = vmatprep.subr.bf16.mxu0 0
        %1090 = vmatpush1.bf16.msra.mxu0 0
        %1091 = vmatprep.subr.bf16.mxu0 0
        %1092 = vmatpush1.bf16.msra.mxu0 0
        %1093 = vmatprep.mubr.bf16.mxu0 0
        %1094 = vmatmul.mubr.bf16.gmra.mrb[0].mxu0 %v1011
        %v1095 = vpop.f32.mrb[0].mxu0
        %v1096 = vadd.f32 0.0, %v1095
        %v1097 = vpop.f32.mrb[0].mxu0
        %v1098 = vpop.f32.mrb[0].mxu0
        %v1099 = vpop.f32.mrb[0].mxu0
        %1100 = vdwg.mxu0
        %v1101 = vadd.f32 %v984, %v1096
        %v1102 = vld [vmem:[%s877] sm:$0xe]
        %v1103 = vld [vmem:[%s877 + $0x4] sm:$0x1]
        %s1104 = scalar_lea.vmem %s1, 512
        %v1105 = vld [vmem:[%s1104] sm:$0xf]
        %v1106 = vld [vmem:[%s1104 + $0x4] sm:$0xf]
        %v1107 = vld [vmem:[%s1104 + $0x8] sm:$0xf]
        %v1108 = vld [vmem:[%s1104 + $0xc] sm:$0xf]
        %v1109 = vld [vmem:[%s1104 + $0x10] sm:$0xf]
        %v1110 = vld [vmem:[%s1104 + $0x14] sm:$0xf]
        %v1111 = vld [vmem:[%s1104 + $0x18] sm:$0xf]
        %v1112 = vld [vmem:[%s1104 + $0x1c] sm:$0xf]
        %v1113 = vld [vmem:[%s1104 + $0x20] sm:$0xf]
        %v1114 = vld [vmem:[%s1104 + $0x24] sm:$0xf]
        %v1115 = vld [vmem:[%s1104 + $0x28] sm:$0xf]
        %v1116 = vld [vmem:[%s1104 + $0x2c] sm:$0xf]
        %v1117 = vld [vmem:[%s1104 + $0x30] sm:$0xf]
        %v1118 = vld [vmem:[%s1104 + $0x34] sm:$0xf]
        %v1119 = vld [vmem:[%s1104 + $0x38] sm:$0xf]
        %v1120 = vld [vmem:[%s1104 + $0x3c] sm:$0xf]
        %v1123 = vunpack.c.l.b16 %v1102
        %v1124 = vunpack.c.l.b16 %v1103
        %v1125 = vpack.c.b16 %v1124, %v1123
        %v1126 = vrot.slane %v1125, 1
        %v1144 = vunpack.c.l.b16 %v1105
        %v1145 = vunpack.c.l.b16 %v1106
        %v1146 = vunpack.c.l.b16 %v1107
        %v1147 = vunpack.c.l.b16 %v1108
        %v1148 = vunpack.c.l.b16 %v1109
        %v1149 = vunpack.c.l.b16 %v1110
        %v1150 = vunpack.c.l.b16 %v1111
        %v1151 = vunpack.c.l.b16 %v1112
        %v1152 = vunpack.c.l.b16 %v1113
        %v1153 = vunpack.c.l.b16 %v1114
        %v1154 = vunpack.c.l.b16 %v1115
        %v1155 = vunpack.c.l.b16 %v1116
        %v1156 = vunpack.c.l.b16 %v1117
        %v1157 = vunpack.c.l.b16 %v1118
        %v1158 = vunpack.c.l.b16 %v1119
        %v1159 = vunpack.c.l.b16 %v1120
        %v1160 = vpack.c.b16 %v1145, %v1144
        %v1161 = vpack.c.b16 %v1147, %v1146
        %v1162 = vpack.c.b16 %v1149, %v1148
        %v1163 = vpack.c.b16 %v1151, %v1150
        %v1164 = vpack.c.b16 %v1153, %v1152
        %v1165 = vpack.c.b16 %v1155, %v1154
        %v1166 = vpack.c.b16 %v1157, %v1156
        %v1167 = vpack.c.b16 %v1159, %v1158
        %1176 = vmatprep.subr.bf16.mxu0 0
        %1177 = vmatpush1.bf16.msra.mxu0 %v1160
        %1178 = vmatprep.subr.bf16.mxu0 0
        %1179 = vmatpush1.bf16.msra.mxu0 %v1161
        %1180 = vmatprep.subr.bf16.mxu0 0
        %1181 = vmatpush1.bf16.msra.mxu0 %v1162
        %1182 = vmatprep.subr.bf16.mxu0 0
        %1183 = vmatpush1.bf16.msra.mxu0 %v1163
        %1184 = vmatprep.subr.bf16.mxu0 0
        %1185 = vmatpush1.bf16.msra.mxu0 %v1164
        %1186 = vmatprep.subr.bf16.mxu0 0
        %1187 = vmatpush1.bf16.msra.mxu0 %v1165
        %1188 = vmatprep.subr.bf16.mxu0 0
        %1189 = vmatpush1.bf16.msra.mxu0 %v1166
        %1190 = vmatprep.subr.bf16.mxu0 0
        %1191 = vmatpush1.bf16.msra.mxu0 %v1167
        %1192 = vmatprep.subr.bf16.mxu0 0
        %1193 = vmatpush1.bf16.msra.mxu0 0
        %1194 = vmatprep.subr.bf16.mxu0 0
        %1195 = vmatpush1.bf16.msra.mxu0 0
        %1196 = vmatprep.subr.bf16.mxu0 0
        %1197 = vmatpush1.bf16.msra.mxu0 0
        %1198 = vmatprep.subr.bf16.mxu0 0
        %1199 = vmatpush1.bf16.msra.mxu0 0
        %1200 = vmatprep.subr.bf16.mxu0 0
        %1201 = vmatpush1.bf16.msra.mxu0 0
        %1202 = vmatprep.subr.bf16.mxu0 0
        %1203 = vmatpush1.bf16.msra.mxu0 0
        %1204 = vmatprep.subr.bf16.mxu0 0
        %1205 = vmatpush1.bf16.msra.mxu0 0
        %1206 = vmatprep.subr.bf16.mxu0 0
        %1207 = vmatpush1.bf16.msra.mxu0 0
        %1208 = vmatprep.mubr.bf16.mxu0 0
        %1209 = vmatmul.mubr.bf16.gmra.mrb[0].mxu0 %v1126
        %v1210 = vpop.f32.mrb[0].mxu0
        %v1211 = vadd.f32 0.0, %v1210
        %v1212 = vpop.f32.mrb[0].mxu0
        %v1213 = vpop.f32.mrb[0].mxu0
        %v1214 = vpop.f32.mrb[0].mxu0
        %1215 = vdwg.mxu0
        %v1216 = vadd.f32 %v1101, %v1211
        %1217 = vmatprep.subr.bf16.mxu0 0
        %1218 = vmatpush1.bf16.msra.mxu0 %v272
        %1219 = vmatprep.subr.bf16.mxu0 0
        %1220 = vmatpush1.bf16.msra.mxu0 %v273
        %1221 = vmatprep.subr.bf16.mxu0 0
        %1222 = vmatpush1.bf16.msra.mxu0 %v274
        %1223 = vmatprep.subr.bf16.mxu0 0
        %1224 = vmatpush1.bf16.msra.mxu0 %v275
        %1225 = vmatprep.subr.bf16.mxu0 0
        %1226 = vmatpush1.bf16.msra.mxu0 %v276
        %1227 = vmatprep.subr.bf16.mxu0 0
        %1228 = vmatpush1.bf16.msra.mxu0 %v277
        %1229 = vmatprep.subr.bf16.mxu0 0
        %1230 = vmatpush1.bf16.msra.mxu0 %v278
        %1231 = vmatprep.subr.bf16.mxu0 0
        %1232 = vmatpush1.bf16.msra.mxu0 %v279
        %1233 = vmatprep.subr.bf16.mxu0 0
        %1234 = vmatpush1.bf16.msra.mxu0 0
        %1235 = vmatprep.subr.bf16.mxu0 0
        %1236 = vmatpush1.bf16.msra.mxu0 0
        %1237 = vmatprep.subr.bf16.mxu0 0
        %1238 = vmatpush1.bf16.msra.mxu0 0
        %1239 = vmatprep.subr.bf16.mxu0 0
        %1240 = vmatpush1.bf16.msra.mxu0 0
        %1241 = vmatprep.subr.bf16.mxu0 0
        %1242 = vmatpush1.bf16.msra.mxu0 0
        %1243 = vmatprep.subr.bf16.mxu0 0
        %1244 = vmatpush1.bf16.msra.mxu0 0
        %1245 = vmatprep.subr.bf16.mxu0 0
        %1246 = vmatpush1.bf16.msra.mxu0 0
        %1247 = vmatprep.subr.bf16.mxu0 0
        %1248 = vmatpush1.bf16.msra.mxu0 0
        %1249 = vmatprep.mubr.bf16.mxu0 0
        %1250 = vmatmul.mubr.bf16.gmra.mrb[0].mxu0 %v668
        %v1251 = vpop.f32.mrb[0].mxu0
        %v1252 = vadd.f32 0.0, %v1251
        %v1253 = vpop.f32.mrb[0].mxu0
        %v1254 = vpop.f32.mrb[0].mxu0
        %v1255 = vpop.f32.mrb[0].mxu0
        %1256 = vdwg.mxu0
        %1257 = vmatprep.subr.bf16.mxu0 0
        %1258 = vmatpush1.bf16.msra.mxu0 %v360
        %1259 = vmatprep.subr.bf16.mxu0 0
        %1260 = vmatpush1.bf16.msra.mxu0 %v361
        %1261 = vmatprep.subr.bf16.mxu0 0
        %1262 = vmatpush1.bf16.msra.mxu0 %v362
        %1263 = vmatprep.subr.bf16.mxu0 0
        %1264 = vmatpush1.bf16.msra.mxu0 %v363
        %1265 = vmatprep.subr.bf16.mxu0 0
        %1266 = vmatpush1.bf16.msra.mxu0 %v364
        %1267 = vmatprep.subr.bf16.mxu0 0
        %1268 = vmatpush1.bf16.msra.mxu0 %v365
        %1269 = vmatprep.subr.bf16.mxu0 0
        %1270 = vmatpush1.bf16.msra.mxu0 %v366
        %1271 = vmatprep.subr.bf16.mxu0 0
        %1272 = vmatpush1.bf16.msra.mxu0 %v367
        %1273 = vmatprep.subr.bf16.mxu0 0
        %1274 = vmatpush1.bf16.msra.mxu0 0
        %1275 = vmatprep.subr.bf16.mxu0 0
        %1276 = vmatpush1.bf16.msra.mxu0 0
        %1277 = vmatprep.subr.bf16.mxu0 0
        %1278 = vmatpush1.bf16.msra.mxu0 0
        %1279 = vmatprep.subr.bf16.mxu0 0
        %1280 = vmatpush1.bf16.msra.mxu0 0
        %1281 = vmatprep.subr.bf16.mxu0 0
        %1282 = vmatpush1.bf16.msra.mxu0 0
        %1283 = vmatprep.subr.bf16.mxu0 0
        %1284 = vmatpush1.bf16.msra.mxu0 0
        %1285 = vmatprep.subr.bf16.mxu0 0
        %1286 = vmatpush1.bf16.msra.mxu0 0
        %1287 = vmatprep.subr.bf16.mxu0 0
        %1288 = vmatpush1.bf16.msra.mxu0 0
        %1289 = vmatprep.mubr.bf16.mxu0 0
        %1290 = vmatmul.mubr.bf16.gmra.mrb[0].mxu0 %v535
        %v1291 = vpop.f32.mrb[0].mxu0
        %v1292 = vadd.f32 %v1252, %v1291
        %v1293 = vpop.f32.mrb[0].mxu0
        %v1294 = vpop.f32.mrb[0].mxu0
        %v1295 = vpop.f32.mrb[0].mxu0
        %1296 = vdwg.mxu0
        %1297 = vmatprep.subr.bf16.mxu0 0
        %1298 = vmatpush1.bf16.msra.mxu0 %v474
        %1299 = vmatprep.subr.bf16.mxu0 0
        %1300 = vmatpush1.bf16.msra.mxu0 %v475
        %1301 = vmatprep.subr.bf16.mxu0 0
        %1302 = vmatpush1.bf16.msra.mxu0 %v476
        %1303 = vmatprep.subr.bf16.mxu0 0
        %1304 = vmatpush1.bf16.msra.mxu0 %v477
        %1305 = vmatprep.subr.bf16.mxu0 0
        %1306 = vmatpush1.bf16.msra.mxu0 %v478
        %1307 = vmatprep.subr.bf16.mxu0 0
        %1308 = vmatpush1.bf16.msra.mxu0 %v479
        %1309 = vmatprep.subr.bf16.mxu0 0
        %1310 = vmatpush1.bf16.msra.mxu0 %v480
        %1311 = vmatprep.subr.bf16.mxu0 0
        %1312 = vmatpush1.bf16.msra.mxu0 %v481
        %1313 = vmatprep.subr.bf16.mxu0 0
        %1314 = vmatpush1.bf16.msra.mxu0 0
        %1315 = vmatprep.subr.bf16.mxu0 0
        %1316 = vmatpush1.bf16.msra.mxu0 0
        %1317 = vmatprep.subr.bf16.mxu0 0
        %1318 = vmatpush1.bf16.msra.mxu0 0
        %1319 = vmatprep.subr.bf16.mxu0 0
        %1320 = vmatpush1.bf16.msra.mxu0 0
        %1321 = vmatprep.subr.bf16.mxu0 0
        %1322 = vmatpush1.bf16.msra.mxu0 0
        %1323 = vmatprep.subr.bf16.mxu0 0
        %1324 = vmatpush1.bf16.msra.mxu0 0
        %1325 = vmatprep.subr.bf16.mxu0 0
        %1326 = vmatpush1.bf16.msra.mxu0 0
        %1327 = vmatprep.subr.bf16.mxu0 0
        %1328 = vmatpush1.bf16.msra.mxu0 0
        %1329 = vmatprep.mubr.bf16.mxu0 0
        %1330 = vmatmul.mubr.bf16.gmra.mrb[0].mxu0 %v783
        %v1331 = vpop.f32.mrb[0].mxu0
        %v1332 = vadd.f32 0.0, %v1331
        %v1333 = vpop.f32.mrb[0].mxu0
        %v1334 = vpop.f32.mrb[0].mxu0
        %v1335 = vpop.f32.mrb[0].mxu0
        %1336 = vdwg.mxu0
        %v1337 = vadd.f32 %v1292, %v1332
        %1338 = vmatprep.subr.bf16.mxu0 0
        %1339 = vmatpush1.bf16.msra.mxu0 %v585
        %1340 = vmatprep.subr.bf16.mxu0 0
        %1341 = vmatpush1.bf16.msra.mxu0 %v586
        %1342 = vmatprep.subr.bf16.mxu0 0
        %1343 = vmatpush1.bf16.msra.mxu0 %v587
        %1344 = vmatprep.subr.bf16.mxu0 0
        %1345 = vmatpush1.bf16.msra.mxu0 %v588
        %1346 = vmatprep.subr.bf16.mxu0 0
        %1347 = vmatpush1.bf16.msra.mxu0 %v589
        %1348 = vmatprep.subr.bf16.mxu0 0
        %1349 = vmatpush1.bf16.msra.mxu0 %v590
        %1350 = vmatprep.subr.bf16.mxu0 0
        %1351 = vmatpush1.bf16.msra.mxu0 %v591
        %1352 = vmatprep.subr.bf16.mxu0 0
        %1353 = vmatpush1.bf16.msra.mxu0 %v592
        %1354 = vmatprep.subr.bf16.mxu0 0
        %1355 = vmatpush1.bf16.msra.mxu0 0
        %1356 = vmatprep.subr.bf16.mxu0 0
        %1357 = vmatpush1.bf16.msra.mxu0 0
        %1358 = vmatprep.subr.bf16.mxu0 0
        %1359 = vmatpush1.bf16.msra.mxu0 0
        %1360 = vmatprep.subr.bf16.mxu0 0
        %1361 = vmatpush1.bf16.msra.mxu0 0
        %1362 = vmatprep.subr.bf16.mxu0 0
        %1363 = vmatpush1.bf16.msra.mxu0 0
        %1364 = vmatprep.subr.bf16.mxu0 0
        %1365 = vmatpush1.bf16.msra.mxu0 0
        %1366 = vmatprep.subr.bf16.mxu0 0
        %1367 = vmatpush1.bf16.msra.mxu0 0
        %1368 = vmatprep.subr.bf16.mxu0 0
        %1369 = vmatpush1.bf16.msra.mxu0 0
        %1370 = vmatprep.mubr.bf16.mxu0 0
        %1371 = vmatmul.mubr.bf16.gmra.mrb[0].mxu0 %v878
        %v1372 = vpop.f32.mrb[0].mxu0
        %v1373 = vadd.f32 0.0, %v1372
        %v1374 = vpop.f32.mrb[0].mxu0
        %v1375 = vpop.f32.mrb[0].mxu0
        %v1376 = vpop.f32.mrb[0].mxu0
        %1377 = vdwg.mxu0
        %v1378 = vadd.f32 %v1337, %v1373
        %1379 = vmatprep.subr.bf16.mxu0 0
        %1380 = vmatpush1.bf16.msra.mxu0 %v702
        %1381 = vmatprep.subr.bf16.mxu0 0
        %1382 = vmatpush1.bf16.msra.mxu0 %v703
        %1383 = vmatprep.subr.bf16.mxu0 0
        %1384 = vmatpush1.bf16.msra.mxu0 %v704
        %1385 = vmatprep.subr.bf16.mxu0 0
        %1386 = vmatpush1.bf16.msra.mxu0 %v705
        %1387 = vmatprep.subr.bf16.mxu0 0
        %1388 = vmatpush1.bf16.msra.mxu0 %v706
        %1389 = vmatprep.subr.bf16.mxu0 0
        %1390 = vmatpush1.bf16.msra.mxu0 %v707
        %1391 = vmatprep.subr.bf16.mxu0 0
        %1392 = vmatpush1.bf16.msra.mxu0 %v708
        %1393 = vmatprep.subr.bf16.mxu0 0
        %1394 = vmatpush1.bf16.msra.mxu0 %v709
        %1395 = vmatprep.subr.bf16.mxu0 0
        %1396 = vmatpush1.bf16.msra.mxu0 0
        %1397 = vmatprep.subr.bf16.mxu0 0
        %1398 = vmatpush1.bf16.msra.mxu0 0
        %1399 = vmatprep.subr.bf16.mxu0 0
        %1400 = vmatpush1.bf16.msra.mxu0 0
        %1401 = vmatprep.subr.bf16.mxu0 0
        %1402 = vmatpush1.bf16.msra.mxu0 0
        %1403 = vmatprep.subr.bf16.mxu0 0
        %1404 = vmatpush1.bf16.msra.mxu0 0
        %1405 = vmatprep.subr.bf16.mxu0 0
        %1406 = vmatpush1.bf16.msra.mxu0 0
        %1407 = vmatprep.subr.bf16.mxu0 0
        %1408 = vmatpush1.bf16.msra.mxu0 0
        %1409 = vmatprep.subr.bf16.mxu0 0
        %1410 = vmatpush1.bf16.msra.mxu0 0
        %1411 = vmatprep.mubr.bf16.mxu0 0
        %1412 = vmatmul.mubr.bf16.gmra.mrb[0].mxu0 %v1011
        %v1413 = vpop.f32.mrb[0].mxu0
        %v1414 = vadd.f32 0.0, %v1413
        %v1415 = vpop.f32.mrb[0].mxu0
        %v1416 = vpop.f32.mrb[0].mxu0
        %v1417 = vpop.f32.mrb[0].mxu0
        %1418 = vdwg.mxu0
        %v1419 = vadd.f32 %v1378, %v1414
        %1420 = vmatprep.subr.bf16.mxu0 0
        %1421 = vmatpush1.bf16.msra.mxu0 %v817
        %1422 = vmatprep.subr.bf16.mxu0 0
        %1423 = vmatpush1.bf16.msra.mxu0 %v818
        %1424 = vmatprep.subr.bf16.mxu0 0
        %1425 = vmatpush1.bf16.msra.mxu0 %v819
        %1426 = vmatprep.subr.bf16.mxu0 0
        %1427 = vmatpush1.bf16.msra.mxu0 %v820
        %1428 = vmatprep.subr.bf16.mxu0 0
        %1429 = vmatpush1.bf16.msra.mxu0 %v821
        %1430 = vmatprep.subr.bf16.mxu0 0
        %1431 = vmatpush1.bf16.msra.mxu0 %v822
        %1432 = vmatprep.subr.bf16.mxu0 0
        %1433 = vmatpush1.bf16.msra.mxu0 %v823
        %1434 = vmatprep.subr.bf16.mxu0 0
        %1435 = vmatpush1.bf16.msra.mxu0 %v824
        %1436 = vmatprep.subr.bf16.mxu0 0
        %1437 = vmatpush1.bf16.msra.mxu0 0
        %1438 = vmatprep.subr.bf16.mxu0 0
        %1439 = vmatpush1.bf16.msra.mxu0 0
        %1440 = vmatprep.subr.bf16.mxu0 0
        %1441 = vmatpush1.bf16.msra.mxu0 0
        %1442 = vmatprep.subr.bf16.mxu0 0
        %1443 = vmatpush1.bf16.msra.mxu0 0
        %1444 = vmatprep.subr.bf16.mxu0 0
        %1445 = vmatpush1.bf16.msra.mxu0 0
        %1446 = vmatprep.subr.bf16.mxu0 0
        %1447 = vmatpush1.bf16.msra.mxu0 0
        %1448 = vmatprep.subr.bf16.mxu0 0
        %1449 = vmatpush1.bf16.msra.mxu0 0
        %1450 = vmatprep.subr.bf16.mxu0 0
        %1451 = vmatpush1.bf16.msra.mxu0 0
        %1452 = vmatprep.mubr.bf16.mxu0 0
        %1453 = vmatmul.mubr.bf16.gmra.mrb[0].mxu0 %v1126
        %v1454 = vpop.f32.mrb[0].mxu0
        %v1455 = vadd.f32 0.0, %v1454
        %v1456 = vpop.f32.mrb[0].mxu0
        %v1457 = vpop.f32.mrb[0].mxu0
        %v1458 = vpop.f32.mrb[0].mxu0
        %1459 = vdwg.mxu0
        %v1460 = vadd.f32 %v1419, %v1455
        %s1461 = sadd.s32 %s191, 3
        %s1462 = smul.u32 %s1461, 2
        %s1463 = smul.addr %s1462, 4
        %s1464 = scalar_lea.vmem %s165, %s1463
        %v1465 = vld [vmem:[%s1464] sm:$0xf]
        %1466 = vmatprep.subr.bf16.mxu0 0
        %1467 = vmatpush1.bf16.msra.mxu0 %v928
        %1468 = vmatprep.subr.bf16.mxu0 0
        %1469 = vmatpush1.bf16.msra.mxu0 %v929
        %1470 = vmatprep.subr.bf16.mxu0 0
        %1471 = vmatpush1.bf16.msra.mxu0 %v930
        %1472 = vmatprep.subr.bf16.mxu0 0
        %1473 = vmatpush1.bf16.msra.mxu0 %v931
        %1474 = vmatprep.subr.bf16.mxu0 0
        %1475 = vmatpush1.bf16.msra.mxu0 %v932
        %1476 = vmatprep.subr.bf16.mxu0 0
        %1477 = vmatpush1.bf16.msra.mxu0 %v933
        %1478 = vmatprep.subr.bf16.mxu0 0
        %1479 = vmatpush1.bf16.msra.mxu0 %v934
        %1480 = vmatprep.subr.bf16.mxu0 0
        %1481 = vmatpush1.bf16.msra.mxu0 %v935
        %1482 = vmatprep.subr.bf16.mxu0 0
        %1483 = vmatpush1.bf16.msra.mxu0 0
        %1484 = vmatprep.subr.bf16.mxu0 0
        %1485 = vmatpush1.bf16.msra.mxu0 0
        %1486 = vmatprep.subr.bf16.mxu0 0
        %1487 = vmatpush1.bf16.msra.mxu0 0
        %1488 = vmatprep.subr.bf16.mxu0 0
        %1489 = vmatpush1.bf16.msra.mxu0 0
        %1490 = vmatprep.subr.bf16.mxu0 0
        %1491 = vmatpush1.bf16.msra.mxu0 0
        %1492 = vmatprep.subr.bf16.mxu0 0
        %1493 = vmatpush1.bf16.msra.mxu0 0
        %1494 = vmatprep.subr.bf16.mxu0 0
        %1495 = vmatpush1.bf16.msra.mxu0 0
        %1496 = vmatprep.subr.bf16.mxu0 0
        %1497 = vmatpush1.bf16.msra.mxu0 0
        %1498 = vmatprep.mubr.bf16.mxu0 0
        %1499 = vmatmul.mubr.bf16.gmra.mrb[0].mxu0 %v1465
        %v1500 = vpop.f32.mrb[0].mxu0
        %v1501 = vadd.f32 0.0, %v1500
        %v1502 = vpop.f32.mrb[0].mxu0
        %v1503 = vpop.f32.mrb[0].mxu0
        %v1504 = vpop.f32.mrb[0].mxu0
        %1505 = vdwg.mxu0
        %v1506 = vadd.f32 %v1460, %v1501
        %v1508 = vunpack.c.l.b16 %v1465
        %v1509 = vpack.c.b16 %v1508, %v1508
        %v1511 = vshrl.u32 %v1509, 16
        %v1513 = vshll.u32 %v1509, 16
        %v1515 = vrot.slane %v1513, 1
        %v1516 = vor.u32 %v1511, %v1515
        %1518 = vmatprep.subr.bf16.mxu0 0
        %1519 = vmatpush1.bf16.msra.mxu0 %v1045
        %1520 = vmatprep.subr.bf16.mxu0 0
        %1521 = vmatpush1.bf16.msra.mxu0 %v1046
        %1522 = vmatprep.subr.bf16.mxu0 0
        %1523 = vmatpush1.bf16.msra.mxu0 %v1047
        %1524 = vmatprep.subr.bf16.mxu0 0
        %1525 = vmatpush1.bf16.msra.mxu0 %v1048
        %1526 = vmatprep.subr.bf16.mxu0 0
        %1527 = vmatpush1.bf16.msra.mxu0 %v1049
        %1528 = vmatprep.subr.bf16.mxu0 0
        %1529 = vmatpush1.bf16.msra.mxu0 %v1050
        %1530 = vmatprep.subr.bf16.mxu0 0
        %1531 = vmatpush1.bf16.msra.mxu0 %v1051
        %1532 = vmatprep.subr.bf16.mxu0 0
        %1533 = vmatpush1.bf16.msra.mxu0 %v1052
        %1534 = vmatprep.subr.bf16.mxu0 0
        %1535 = vmatpush1.bf16.msra.mxu0 0
        %1536 = vmatprep.subr.bf16.mxu0 0
        %1537 = vmatpush1.bf16.msra.mxu0 0
        %1538 = vmatprep.subr.bf16.mxu0 0
        %1539 = vmatpush1.bf16.msra.mxu0 0
        %1540 = vmatprep.subr.bf16.mxu0 0
        %1541 = vmatpush1.bf16.msra.mxu0 0
        %1542 = vmatprep.subr.bf16.mxu0 0
        %1543 = vmatpush1.bf16.msra.mxu0 0
        %1544 = vmatprep.subr.bf16.mxu0 0
        %1545 = vmatpush1.bf16.msra.mxu0 0
        %1546 = vmatprep.subr.bf16.mxu0 0
        %1547 = vmatpush1.bf16.msra.mxu0 0
        %1548 = vmatprep.subr.bf16.mxu0 0
        %1549 = vmatpush1.bf16.msra.mxu0 0
        %1550 = vmatprep.mubr.bf16.mxu0 0
        %1551 = vmatmul.mubr.bf16.gmra.mrb[0].mxu0 %v1516
        %v1552 = vpop.f32.mrb[0].mxu0
        %v1553 = vadd.f32 0.0, %v1552
        %v1554 = vpop.f32.mrb[0].mxu0
        %v1555 = vpop.f32.mrb[0].mxu0
        %v1556 = vpop.f32.mrb[0].mxu0
        %1557 = vdwg.mxu0
        %v1558 = vadd.f32 %v1506, %v1553
        %v1559 = vld [vmem:[%s1464] sm:$0xe]
        %v1560 = vld [vmem:[%s1464 + $0x4] sm:$0x1]
        %v1563 = vunpack.c.l.b16 %v1559
        %v1564 = vunpack.c.l.b16 %v1560
        %v1565 = vpack.c.b16 %v1564, %v1563
        %v1566 = vrot.slane %v1565, 1
        %1568 = vmatprep.subr.bf16.mxu0 0
        %1569 = vmatpush1.bf16.msra.mxu0 %v1160
        %1570 = vmatprep.subr.bf16.mxu0 0
        %1571 = vmatpush1.bf16.msra.mxu0 %v1161
        %1572 = vmatprep.subr.bf16.mxu0 0
        %1573 = vmatpush1.bf16.msra.mxu0 %v1162
        %1574 = vmatprep.subr.bf16.mxu0 0
        %1575 = vmatpush1.bf16.msra.mxu0 %v1163
        %1576 = vmatprep.subr.bf16.mxu0 0
        %1577 = vmatpush1.bf16.msra.mxu0 %v1164
        %1578 = vmatprep.subr.bf16.mxu0 0
        %1579 = vmatpush1.bf16.msra.mxu0 %v1165
        %1580 = vmatprep.subr.bf16.mxu0 0
        %1581 = vmatpush1.bf16.msra.mxu0 %v1166
        %1582 = vmatprep.subr.bf16.mxu0 0
        %1583 = vmatpush1.bf16.msra.mxu0 %v1167
        %1584 = vmatprep.subr.bf16.mxu0 0
        %1585 = vmatpush1.bf16.msra.mxu0 0
        %1586 = vmatprep.subr.bf16.mxu0 0
        %1587 = vmatpush1.bf16.msra.mxu0 0
        %1588 = vmatprep.subr.bf16.mxu0 0
        %1589 = vmatpush1.bf16.msra.mxu0 0
        %1590 = vmatprep.subr.bf16.mxu0 0
        %1591 = vmatpush1.bf16.msra.mxu0 0
        %1592 = vmatprep.subr.bf16.mxu0 0
        %1593 = vmatpush1.bf16.msra.mxu0 0
        %1594 = vmatprep.subr.bf16.mxu0 0
        %1595 = vmatpush1.bf16.msra.mxu0 0
        %1596 = vmatprep.subr.bf16.mxu0 0
        %1597 = vmatpush1.bf16.msra.mxu0 0
        %1598 = vmatprep.subr.bf16.mxu0 0
        %1599 = vmatpush1.bf16.msra.mxu0 0
        %1600 = vmatprep.mubr.bf16.mxu0 0
        %1601 = vmatmul.mubr.bf16.gmra.mrb[0].mxu0 %v1566
        %v1602 = vpop.f32.mrb[0].mxu0
        %v1603 = vadd.f32 0.0, %v1602
        %v1604 = vpop.f32.mrb[0].mxu0
        %v1605 = vpop.f32.mrb[0].mxu0
        %v1606 = vpop.f32.mrb[0].mxu0
        %1607 = vdwg.mxu0
        %v1608 = vadd.f32 %v1558, %v1603
        %v1609 = vmax.f32 %v1216, %v1608
        %vm1610 = vcmask 56320
        %v1612 = vsel %vm1610, %v179, 0
        %vm1614 = vcmask 1046528
        %v1616 = vsel %vm1614, %v1609, 0
        %1618 = vmatprep.subr.mxu0 0.0
        %1619 = vmatpush1.msra.mxu0 %v1616
        %1620 = vmatprep.subr.mxu0 0.0
        %1621 = vmatpush1.msra.mxu0 0.0
        %1622 = vmatprep.subr.mxu0 0.0
        %1623 = vmatpush1.msra.mxu0 0.0
        %1624 = vmatprep.subr.mxu0 0.0
        %1625 = vmatpush1.msra.mxu0 0.0
        %1626 = vmatprep.subr.mxu0 0.0
        %1627 = vmatpush1.msra.mxu0 0.0
        %1628 = vmatprep.subr.mxu0 0.0
        %1629 = vmatpush1.msra.mxu0 0.0
        %1630 = vmatprep.subr.mxu0 0.0
        %1631 = vmatpush1.msra.mxu0 0.0
        %1632 = vmatprep.subr.mxu0 0.0
        %1633 = vmatpush1.msra.mxu0 0.0
        %1634 = vmatprep.subr.mxu0 0.0
        %1635 = vmatpush1.msra.mxu0 0.0
        %1636 = vmatprep.subr.mxu0 0.0
        %1637 = vmatpush1.msra.mxu0 0.0
        %1638 = vmatprep.subr.mxu0 0.0
        %1639 = vmatpush1.msra.mxu0 0.0
        %1640 = vmatprep.subr.mxu0 0.0
        %1641 = vmatpush1.msra.mxu0 0.0
        %1642 = vmatprep.subr.mxu0 0.0
        %1643 = vmatpush1.msra.mxu0 0.0
        %1644 = vmatprep.subr.mxu0 0.0
        %1645 = vmatpush1.msra.mxu0 0.0
        %1646 = vmatprep.subr.mxu0 0.0
        %1647 = vmatpush1.msra.mxu0 0.0
        %1648 = vmatprep.subr.mxu0 0.0
        %1649 = vmatpush1.msra.mxu0 0.0
        %1650 = vmatprep.subr.mxu0 0.0
        %1651 = vmatpush1.msra.mxu0 0.0
        %1652 = vmatprep.subr.mxu0 0.0
        %1653 = vmatpush1.msra.mxu0 0.0
        %1654 = vmatprep.subr.mxu0 0.0
        %1655 = vmatpush1.msra.mxu0 0.0
        %1656 = vmatprep.subr.mxu0 0.0
        %1657 = vmatpush1.msra.mxu0 0.0
        %1658 = vmatprep.subr.mxu0 0.0
        %1659 = vmatpush1.msra.mxu0 0.0
        %1660 = vmatprep.subr.mxu0 0.0
        %1661 = vmatpush1.msra.mxu0 0.0
        %1662 = vmatprep.subr.mxu0 0.0
        %1663 = vmatpush1.msra.mxu0 0.0
        %1664 = vmatprep.subr.mxu0 0.0
        %1665 = vmatpush1.msra.mxu0 0.0
        %1666 = vmatprep.subr.mxu0 0.0
        %1667 = vmatpush1.msra.mxu0 0.0
        %1668 = vmatprep.subr.mxu0 0.0
        %1669 = vmatpush1.msra.mxu0 0.0
        %1670 = vmatprep.subr.mxu0 0.0
        %1671 = vmatpush1.msra.mxu0 0.0
        %1672 = vmatprep.subr.mxu0 0.0
        %1673 = vmatpush1.msra.mxu0 0.0
        %1674 = vmatprep.subr.mxu0 0.0
        %1675 = vmatpush1.msra.mxu0 0.0
        %1676 = vmatprep.subr.mxu0 0.0
        %1677 = vmatpush1.msra.mxu0 0.0
        %1678 = vmatprep.subr.mxu0 0.0
        %1679 = vmatpush1.msra.mxu0 0.0
        %1680 = vmatprep.subr.mxu0 0.0
        %1681 = vmatpush1.msra.mxu0 0.0
        %1682 = vmatprep.mubr.f32.mxu0 0.0
        %1683 = vmatmul.mubr.f32.gmra.mrb[0].mxu0 %v1612
        %v1684 = vpop.f32.mrb[0].mxu0
        %v1685 = vadd.f32 0.0, %v1684
        %v1686 = vpop.f32.mrb[0].mxu0
        %1687 = vdwg.mxu0
        %v1689 = vsel %vm1610, %v183, 0
        %1691 = vmatprep.subr.mxu0 0.0
        %1692 = vmatpush1.msra.mxu0 %v1616
        %1693 = vmatprep.subr.mxu0 0.0
        %1694 = vmatpush1.msra.mxu0 0.0
        %1695 = vmatprep.subr.mxu0 0.0
        %1696 = vmatpush1.msra.mxu0 0.0
        %1697 = vmatprep.subr.mxu0 0.0
        %1698 = vmatpush1.msra.mxu0 0.0
        %1699 = vmatprep.subr.mxu0 0.0
        %1700 = vmatpush1.msra.mxu0 0.0
        %1701 = vmatprep.subr.mxu0 0.0
        %1702 = vmatpush1.msra.mxu0 0.0
        %1703 = vmatprep.subr.mxu0 0.0
        %1704 = vmatpush1.msra.mxu0 0.0
        %1705 = vmatprep.subr.mxu0 0.0
        %1706 = vmatpush1.msra.mxu0 0.0
        %1707 = vmatprep.subr.mxu0 0.0
        %1708 = vmatpush1.msra.mxu0 0.0
        %1709 = vmatprep.subr.mxu0 0.0
        %1710 = vmatpush1.msra.mxu0 0.0
        %1711 = vmatprep.subr.mxu0 0.0
        %1712 = vmatpush1.msra.mxu0 0.0
        %1713 = vmatprep.subr.mxu0 0.0
        %1714 = vmatpush1.msra.mxu0 0.0
        %1715 = vmatprep.subr.mxu0 0.0
        %1716 = vmatpush1.msra.mxu0 0.0
        %1717 = vmatprep.subr.mxu0 0.0
        %1718 = vmatpush1.msra.mxu0 0.0
        %1719 = vmatprep.subr.mxu0 0.0
        %1720 = vmatpush1.msra.mxu0 0.0
        %1721 = vmatprep.subr.mxu0 0.0
        %1722 = vmatpush1.msra.mxu0 0.0
        %1723 = vmatprep.subr.mxu0 0.0
        %1724 = vmatpush1.msra.mxu0 0.0
        %1725 = vmatprep.subr.mxu0 0.0
        %1726 = vmatpush1.msra.mxu0 0.0
        %1727 = vmatprep.subr.mxu0 0.0
        %1728 = vmatpush1.msra.mxu0 0.0
        %1729 = vmatprep.subr.mxu0 0.0
        %1730 = vmatpush1.msra.mxu0 0.0
        %1731 = vmatprep.subr.mxu0 0.0
        %1732 = vmatpush1.msra.mxu0 0.0
        %1733 = vmatprep.subr.mxu0 0.0
        %1734 = vmatpush1.msra.mxu0 0.0
        %1735 = vmatprep.subr.mxu0 0.0
        %1736 = vmatpush1.msra.mxu0 0.0
        %1737 = vmatprep.subr.mxu0 0.0
        %1738 = vmatpush1.msra.mxu0 0.0
        %1739 = vmatprep.subr.mxu0 0.0
        %1740 = vmatpush1.msra.mxu0 0.0
        %1741 = vmatprep.subr.mxu0 0.0
        %1742 = vmatpush1.msra.mxu0 0.0
        %1743 = vmatprep.subr.mxu0 0.0
        %1744 = vmatpush1.msra.mxu0 0.0
        %1745 = vmatprep.subr.mxu0 0.0
        %1746 = vmatpush1.msra.mxu0 0.0
        %1747 = vmatprep.subr.mxu0 0.0
        %1748 = vmatpush1.msra.mxu0 0.0
        %1749 = vmatprep.subr.mxu0 0.0
        %1750 = vmatpush1.msra.mxu0 0.0
        %1751 = vmatprep.subr.mxu0 0.0
        %1752 = vmatpush1.msra.mxu0 0.0
        %1753 = vmatprep.subr.mxu0 0.0
        %1754 = vmatpush1.msra.mxu0 0.0
        %1755 = vmatprep.mubr.f32.mxu0 0.0
        %1756 = vmatmul.mubr.f32.gmra.mrb[0].mxu0 %v1689
        %v1757 = vpop.f32.mrb[0].mxu0
        %v1758 = vadd.f32 0.0, %v1757
        %v1759 = vpop.f32.mrb[0].mxu0
        %1760 = vdwg.mxu0
        %v1761 = vmax.f32 %v1685, %v1758
        %v1763 = vlaneseq
        %v1764 = vshrl.u32 %v1763, 7
        %v1765 = vsub.s32 0, %v1764
        %v1766 = vrot.slane %v184, %v1765
        %v1768 = vadd.f32 %v1761, %v1766
        %v1769 = vmax.f32 %v1768, 0.0
        %v1770 = vpack.c.bf16 %v1769, %v1769
        %s1771 = smul.addr %s186, 2
        %s1772 = scalar_lea.vmem %s170, %s1771
        %vm1773 = vcmask 1041408
        %vm1774 = vsmask.f32 1280
        %vm1775 = vmand %vm1773, %vm1774
        %v1776 = vld [vmem:[%s1772] sm:$0x3]
        %v1777 = vsel %vm1775, %v1770, %v1776
        %1778 = vst [vmem:[%s1772] sm:$0x3] %v1777
      $region37: #{convnet_forward.6} parent=31 // loop_footer
        %s190 = sadd.s32 1, %s186
      $region38: #{convnet_forward.6} parent=31 // loop_footer_branch
        %185 = sbr.rel target = $region34
      $region39: #{convnet_forward.6} parent=31 // loop_exit
        _
      %p1779 = scmp.lt.s32.totalorder %s14, 1
      %s1780 = scalar_select %p1779, %s14, 1
      %s1781 = smul.addr %s1780, 3
      %s1782 = smul.addr %s1781, 2
      %s1783 = scalar_lea.vmem %s3, %s1782
      // Predicated region
      $region40: #{convnet_forward.6} parent=31 // pred_check
        %p1784 = pneg %p100
      $region41: #{convnet_forward.6} parent=31 // pred_check_branch
        %1786 = sbr.rel (%p1784) target = $region43
      $region42: #{convnet_forward.6} parent=31 // pred_region
        _
      $region43: #{convnet_forward.6} parent=31 // pred_fallthru
        _
    $region32: #{convnet_forward.6} parent=5 // pred_fallthru
      _
    %p1787 = scmp.le.s32.totalorder 2, %s9
    // Predicated region
    $region44: #{convnet_forward.6} parent=5 // pred_check
      %p1788 = pneg %p1787
    $region45: #{convnet_forward.6} parent=5 // pred_check_branch
      %1790 = sbr.rel (%p1788) target = $region47
    $region46: #{convnet_forward.6} parent=5 // pred_region
      %s1791 = ssub.s32 %s9, 2
      // Predicated region
      $region48: #{convnet_forward.6} parent=46 // pred_check
        %p1792 = pneg %p106
      $region49: #{convnet_forward.6} parent=46 // pred_check_branch
        %1794 = sbr.rel (%p1792) target = $region51
      $region50: #{convnet_forward.6} parent=46 // pred_region
        %p1795 = scmp.lt.s32.totalorder %s15, 1
        %s1796 = scalar_select %p1795, %s15, 1
        %s1797 = smul.addr %s1796, 3
        %s1798 = smul.addr %s1797, 2
        %s1799 = scalar_lea.vmem %s3, %s1798
      $region51: #{convnet_forward.6} parent=46 // pred_fallthru
        _
    $region47: #{convnet_forward.6} parent=5 // pred_fallthru
      _
  $region6: #{convnet_forward.6} parent=0 // loop_footer
    %s13 = sadd.s32 1, %s9
  $region7: #{convnet_forward.6} parent=0 // loop_footer_branch
    %8 = sbr.rel target = $region3
  $region8: #{convnet_forward.6} parent=0 // loop_exit
    _

// kernel: convnet_forward.4
$region0: #{convnet_forward.4}
  #allocation0 [shape = 'u32[]', space=smem, size = 0x4, offset = 0x4, fixed_abs, tag = 'smem constant byte address 0x4 - core index']
  #allocation1 [shape = 'u32[144,128]{1,0:T(1,128)}', space=vmem, size = 0x12000, scoped, tag = 'internal scratch']
  %s0 = inlined_call_operand.vmem [shape: bf16[2,30,30,128], index: 0, kind: input, shape index: {}]
  %s1 = inlined_call_operand.vmem [shape: bf16[9,128,128], index: 1, kind: input, shape index: {}]
  %s2 = inlined_call_operand.vmem [shape: f32[1,128], index: 2, kind: input, shape index: {}]
  %s3 = inlined_call_operand.vmem [shape: bf16[2,16,16,128], index: 3, kind: output, shape index: {}]
  %s4 = sld [smem:[#allocation0]]
  $region52: #{convnet_forward.4} parent=0
    _
  %s6 = ssub.s32 1, %s4
  %s7 = scalar_select 0, %s6, %s4
  loop: start=0, step=1, limit=4
  $region2: #{convnet_forward.4} parent=0 // loop_pre_header
    _
  $region3: #{convnet_forward.4} parent=0 // loop_header
    %s9 = sphi 0, %s13
    %p10 = scmp.ge.s32.totalorder %s9, 4
    %s19 = sphi 0, %s21
    %s22 = sphi 0, %s19
    %s23 = sphi 0, %s22
    %s39 = sphi 0, %s23
    %s43 = sphi 0, %s43
    %s45 = sphi 0, %s43
    %s46 = sphi 0, %s45
    %s60 = sphi 0, %s46
    %s64 = sphi 0, %s64
    %s66 = sphi 0, %s64
    %s67 = sphi 0, %s66
    %s81 = sphi 0, %s67
    %s87 = sphi 0, %s89
    %s90 = sphi 0, %s87
    %s91 = sphi 0, %s90
    %s107 = sphi 0, %s91
  $region4: #{convnet_forward.4} parent=0 // loop_header_branch
    %12 = sbr.rel (%p10) target = $region8
  $region5: #{convnet_forward.4} parent=0 // loop_body
    %s14 = ssub.s32 %s9, 1
    %s15 = ssub.s32 %s9, 2
    %s16 = sadd.s32 %s9, 1
    %s17 = ssub.s32 %s9, %s16
    %p18 = scmp.eq.s32.totalorder %s17, 0
    %s20 = sadd.s32 %s19, 1
    %s21 = scalar_select %p18, %s19, %s20
    %p24 = pneg %p18
    %p25 = scmp.eq.s32.totalorder %s9, 1
    %p26 = por %p24, %p25
    %p27 = scmp.ne.s32.totalorder %s19, %s22
    %p28 = scmp.eq.s32.totalorder %s9, 0
    %p29 = por %p27, %p28
    %p30 = scmp.ne.s32.totalorder %s19, %s22
    %p31 = scmp.eq.s32.totalorder %s14, 1
    %p32 = por %p30, %p31
    %p33 = scmp.ne.s32.totalorder %s22, %s23
    %p34 = scmp.eq.s32.totalorder %s14, 0
    %p35 = por %p33, %p34
    %p36 = scmp.ne.s32.totalorder %s22, %s23
    %p37 = scmp.eq.s32.totalorder %s15, 1
    %p38 = por %p36, %p37
    %p40 = scmp.ne.s32.totalorder %s23, %s39
    %p41 = scmp.eq.s32.totalorder %s15, 0
    %p42 = por %p40, %p41
    %s44 = sadd.s32 %s43, 1
    %p47 = scmp.eq.s32.totalorder %s9, 1
    %p48 = scmp.ne.s32.totalorder %s43, %s45
    %p49 = scmp.eq.s32.totalorder %s9, 0
    %p50 = por %p48, %p49
    %p51 = scmp.ne.s32.totalorder %s43, %s45
    %p52 = scmp.eq.s32.totalorder %s14, 1
    %p53 = por %p51, %p52
    %p54 = scmp.ne.s32.totalorder %s45, %s46
    %p55 = scmp.eq.s32.totalorder %s14, 0
    %p56 = por %p54, %p55
    %p57 = scmp.ne.s32.totalorder %s45, %s46
    %p58 = scmp.eq.s32.totalorder %s15, 1
    %p59 = por %p57, %p58
    %p61 = scmp.ne.s32.totalorder %s46, %s60
    %p62 = scmp.eq.s32.totalorder %s15, 0
    %p63 = por %p61, %p62
    %s65 = sadd.s32 %s64, 1
    %p68 = scmp.eq.s32.totalorder %s9, 1
    %p69 = scmp.ne.s32.totalorder %s64, %s66
    %p70 = scmp.eq.s32.totalorder %s9, 0
    %p71 = por %p69, %p70
    %p72 = scmp.ne.s32.totalorder %s64, %s66
    %p73 = scmp.eq.s32.totalorder %s14, 1
    %p74 = por %p72, %p73
    %p75 = scmp.ne.s32.totalorder %s66, %s67
    %p76 = scmp.eq.s32.totalorder %s14, 0
    %p77 = por %p75, %p76
    %p78 = scmp.ne.s32.totalorder %s66, %s67
    %p79 = scmp.eq.s32.totalorder %s15, 1
    %p80 = por %p78, %p79
    %p82 = scmp.ne.s32.totalorder %s67, %s81
    %p83 = scmp.eq.s32.totalorder %s15, 0
    %p84 = por %p82, %p83
    %s85 = ssub.s32 %s9, %s16
    %p86 = scmp.eq.s32.totalorder %s85, 0
    %s88 = sadd.s32 %s87, 1
    %s89 = scalar_select %p86, %s87, %s88
    %p92 = pneg %p86
    %p93 = scmp.eq.s32.totalorder %s9, 1
    %p94 = por %p92, %p93
    %p95 = scmp.ne.s32.totalorder %s87, %s90
    %p96 = scmp.eq.s32.totalorder %s9, 0
    %p97 = por %p95, %p96
    %p98 = scmp.ne.s32.totalorder %s87, %s90
    %p99 = scmp.eq.s32.totalorder %s14, 1
    %p100 = por %p98, %p99
    %p101 = scmp.ne.s32.totalorder %s90, %s91
    %p102 = scmp.eq.s32.totalorder %s14, 0
    %p103 = por %p101, %p102
    %p104 = scmp.ne.s32.totalorder %s90, %s91
    %p105 = scmp.eq.s32.totalorder %s15, 1
    %p106 = por %p104, %p105
    %p108 = scmp.ne.s32.totalorder %s91, %s107
    %p109 = scmp.eq.s32.totalorder %s15, 0
    %p110 = por %p108, %p109
    %p111 = scmp.le.s32.totalorder 1, %s9
    %p112 = scmp.lt.s32.totalorder %s9, 3
    %p113 = pnand %p111, %p112
    %p114 = pneg %p113
    // Predicated region
    $region9: #{convnet_forward.4} parent=5 // pred_check
      _
    $region10: #{convnet_forward.4} parent=5 // pred_check_branch
      %116 = sbr.rel (%p113) target = $region12
    $region11: #{convnet_forward.4} parent=5 // pred_region
      %s117 = ssub.s32 %s9, 1
      // Predicated region
      $region13: #{convnet_forward.4} parent=11 // pred_check
        %p118 = pneg %p56
      $region14: #{convnet_forward.4} parent=11 // pred_check_branch
        %120 = sbr.rel (%p118) target = $region16
      $region15: #{convnet_forward.4} parent=11 // pred_region
        _
      $region16: #{convnet_forward.4} parent=11 // pred_fallthru
        _
      // Predicated region
      $region17: #{convnet_forward.4} parent=11 // pred_check
        %p121 = pneg %p77
      $region18: #{convnet_forward.4} parent=11 // pred_check_branch
        %123 = sbr.rel (%p121) target = $region20
      $region19: #{convnet_forward.4} parent=11 // pred_region
        _
      $region20: #{convnet_forward.4} parent=11 // pred_fallthru
        _
    $region12: #{convnet_forward.4} parent=5 // pred_fallthru
      _
    %p124 = scmp.lt.s32.totalorder %s9, 2
    // Predicated region
    $region21: #{convnet_forward.4} parent=5 // pred_check
      %p125 = pneg %p124
    $region22: #{convnet_forward.4} parent=5 // pred_check_branch
      %127 = sbr.rel (%p125) target = $region24
    $region23: #{convnet_forward.4} parent=5 // pred_region
      // Predicated region
      $region25: #{convnet_forward.4} parent=23 // pred_check
        %p128 = pneg %p29
      $region26: #{convnet_forward.4} parent=23 // pred_check_branch
        %130 = sbr.rel (%p128) target = $region28
      $region27: #{convnet_forward.4} parent=23 // pred_region
        %p131 = scmp.lt.s32.totalorder %s9, 1
        %s132 = scalar_select %p131, %s9, 1
        %s133 = smul.addr %s132, 120
        %s134 = smul.addr %s133, 4
        %s135 = scalar_lea.vmem %s0, %s134
      $region28: #{convnet_forward.4} parent=23 // pred_fallthru
        _
    $region24: #{convnet_forward.4} parent=5 // pred_fallthru
      _
    %p136 = scmp.le.s32.totalorder 1, %s9
    %p137 = scmp.lt.s32.totalorder %s9, 3
    %p138 = pnand %p136, %p137
    %p139 = pneg %p138
    // Predicated region
    $region29: #{convnet_forward.4} parent=5 // pred_check
      _
    $region30: #{convnet_forward.4} parent=5 // pred_check_branch
      %141 = sbr.rel (%p138) target = $region32
    $region31: #{convnet_forward.4} parent=5 // pred_region
      %s142 = ssub.s32 %s9, 1
      %p143 = scmp.lt.s32.totalorder %s14, 1
      %s144 = scalar_select %p143, %s14, 1
      %s145 = smul.addr %s144, 120
      %s146 = smul.addr %s145, 4
      %s147 = scalar_lea.vmem %s0, %s146
      %p148 = pneg %p35
      %p149 = pneg %p32
      %p150 = pneg %p56
      %p151 = pneg %p53
      %p152 = pneg %p77
      %p153 = pneg %p74
      %p154 = pneg %p103
      %p155 = pneg %p100
      %p156 = scmp.lt.s32.totalorder %s14, 1
      %s157 = scalar_select %p156, %s14, 1
      %s158 = smul.addr %s157, 32
      %s159 = smul.addr %s158, 4
      %s160 = scalar_lea.vmem %s3, %s159
      %p161 = scmp.lt.s32.totalorder %s14, 1
      %s162 = scalar_select %p161, %s14, 1
      %s163 = smul.addr %s162, 120
      %s164 = smul.addr %s163, 4
      %s165 = scalar_lea.vmem %s0, %s164
      %p166 = scmp.lt.s32.totalorder %s14, 1
      %s167 = scalar_select %p166, %s14, 1
      %s168 = smul.addr %s167, 32
      %s169 = smul.addr %s168, 4
      %s170 = scalar_lea.vmem %s3, %s169
      %v172 = vlaneseq
      %v173 = vshrl.u32 %v172, 7
      %v174 = vadd.s32 %v173, 8
      %v175 = vlaneseq
      %v176 = vand.u32 %v175, 127
      %v177 = vmul.u32 %v173, 2
      %v178 = vmul.u32 %v174, 2
      %vm179 = vcmp.eq.s32.totalorder %v176, %v177
      %vm180 = vcmp.eq.s32.totalorder %v176, %v178
      %v181 = vsel %vm179, 1, 0
      %v182 = vsel %vm180, 1, 0
      %v183 = vcvt.s32.f32 %v181
      %v184 = vcvt.s32.f32 %v182
      %v185 = vadd.s32 %v177, 1
      %v186 = vadd.s32 %v178, 1
      %vm187 = vcmp.eq.s32.totalorder %v176, %v185
      %vm188 = vcmp.eq.s32.totalorder %v176, %v186
      %v189 = vsel %vm187, 1, 0
      %v190 = vsel %vm188, 1, 0
      %v191 = vcvt.s32.f32 %v189
      %v192 = vcvt.s32.f32 %v190
      %v193 = vld [vmem:[%s2] sm:$0x1]
      %194 = vst [vmem:[%s170] sm:$0xf] 0
      %195 = vst [vmem:[%s170 + $0x4] sm:$0xf] 0
      %196 = vst [vmem:[%s170 + $0x8] sm:$0xf] 0
      %197 = vst [vmem:[%s170 + $0xc] sm:$0xf] 0
      %198 = vst [vmem:[%s170 + $0x10] sm:$0xf] 0
      %199 = vst [vmem:[%s170 + $0x14] sm:$0xf] 0
      %200 = vst [vmem:[%s170 + $0x18] sm:$0xf] 0
      %201 = vst [vmem:[%s170 + $0x1c] sm:$0xf] 0
      %202 = vst [vmem:[%s170 + $0x20] sm:$0xf] 0
      %203 = vst [vmem:[%s170 + $0x24] sm:$0xf] 0
      %204 = vst [vmem:[%s170 + $0x28] sm:$0xf] 0
      %205 = vst [vmem:[%s170 + $0x2c] sm:$0xf] 0
      %206 = vst [vmem:[%s170 + $0x30] sm:$0xf] 0
      %207 = vst [vmem:[%s170 + $0x34] sm:$0xf] 0
      %208 = vst [vmem:[%s170 + $0x38] sm:$0xf] 0
      %209 = vst [vmem:[%s170 + $0x3c] sm:$0xf] 0
      %210 = vst [vmem:[%s170 + $0x40] sm:$0xf] 0
      %211 = vst [vmem:[%s170 + $0x44] sm:$0xf] 0
      %212 = vst [vmem:[%s170 + $0x48] sm:$0xf] 0
      %213 = vst [vmem:[%s170 + $0x4c] sm:$0xf] 0
      %214 = vst [vmem:[%s170 + $0x50] sm:$0xf] 0
      %215 = vst [vmem:[%s170 + $0x54] sm:$0xf] 0
      %216 = vst [vmem:[%s170 + $0x58] sm:$0xf] 0
      %217 = vst [vmem:[%s170 + $0x5c] sm:$0xf] 0
      %218 = vst [vmem:[%s170 + $0x60] sm:$0xf] 0
      %219 = vst [vmem:[%s170 + $0x64] sm:$0xf] 0
      %220 = vst [vmem:[%s170 + $0x68] sm:$0xf] 0
      %221 = vst [vmem:[%s170 + $0x6c] sm:$0xf] 0
      %222 = vst [vmem:[%s170 + $0x70] sm:$0xf] 0
      %223 = vst [vmem:[%s170 + $0x74] sm:$0xf] 0
      %224 = vst [vmem:[%s170 + $0x78] sm:$0xf] 0
      %225 = vst [vmem:[%s170 + $0x7c] sm:$0xf] 0
      loop: start=0, step=1, limit=14
      $region33: #{convnet_forward.4} parent=31 // loop_pre_header
        _
      $region34: #{convnet_forward.4} parent=31 // loop_header
        %s227 = sphi 0, %s231
        %p228 = scmp.ge.s32.totalorder %s227, 14
      $region35: #{convnet_forward.4} parent=31 // loop_header_branch
        %230 = sbr.rel (%p228) target = $region39
      $region36: #{convnet_forward.4} parent=31 // loop_body
        %s232 = smul.u32 %s227, 2
        %s233 = smul.u32 %s232, 4
        %s234 = smul.addr %s233, 4
        %s235 = scalar_lea.vmem %s165, %s234
        %v236 = vld [vmem:[%s235] sm:$0xf]
        %v237 = vld [vmem:[%s235 + $0x4] sm:$0xf]
        %v238 = vld [vmem:[%s235 + $0x8] sm:$0xf]
        %v239 = vld [vmem:[%s235 + $0xc] sm:$0x3]
        %v240 = vld [vmem:[%s1] sm:$0xf]
        %v241 = vld [vmem:[%s1 + $0x4] sm:$0xf]
        %v242 = vld [vmem:[%s1 + $0x8] sm:$0xf]
        %v243 = vld [vmem:[%s1 + $0xc] sm:$0xf]
        %v244 = vld [vmem:[%s1 + $0x10] sm:$0xf]
        %v245 = vld [vmem:[%s1 + $0x14] sm:$0xf]
        %v246 = vld [vmem:[%s1 + $0x18] sm:$0xf]
        %v247 = vld [vmem:[%s1 + $0x1c] sm:$0xf]
        %v248 = vld [vmem:[%s1 + $0x20] sm:$0xf]
        %v249 = vld [vmem:[%s1 + $0x24] sm:$0xf]
        %v250 = vld [vmem:[%s1 + $0x28] sm:$0xf]
        %v251 = vld [vmem:[%s1 + $0x2c] sm:$0xf]
        %v252 = vld [vmem:[%s1 + $0x30] sm:$0xf]
        %v253 = vld [vmem:[%s1 + $0x34] sm:$0xf]
        %v254 = vld [vmem:[%s1 + $0x38] sm:$0xf]
        %v255 = vld [vmem:[%s1 + $0x3c] sm:$0xf]
        %v256 = vld [vmem:[%s235 + $0xc] sm:$0x7]
        %s257 = scalar_lea.vmem %s1, 64
        %v258 = vld [vmem:[%s257] sm:$0xf]
        %v259 = vld [vmem:[%s257 + $0x4] sm:$0xf]
        %v260 = vld [vmem:[%s257 + $0x8] sm:$0xf]
        %v261 = vld [vmem:[%s257 + $0xc] sm:$0xf]
        %v262 = vld [vmem:[%s257 + $0x10] sm:$0xf]
        %v263 = vld [vmem:[%s257 + $0x14] sm:$0xf]
        %v264 = vld [vmem:[%s257 + $0x18] sm:$0xf]
        %v265 = vld [vmem:[%s257 + $0x1c] sm:$0xf]
        %v266 = vld [vmem:[%s257 + $0x20] sm:$0xf]
        %v267 = vld [vmem:[%s257 + $0x24] sm:$0xf]
        %v268 = vld [vmem:[%s257 + $0x28] sm:$0xf]
        %v269 = vld [vmem:[%s257 + $0x2c] sm:$0xf]
        %v270 = vld [vmem:[%s257 + $0x30] sm:$0xf]
        %v271 = vld [vmem:[%s257 + $0x34] sm:$0xf]
        %v272 = vld [vmem:[%s257 + $0x38] sm:$0xf]
        %v273 = vld [vmem:[%s257 + $0x3c] sm:$0xf]
        %v278 = vunpack.c.l.b16 %v236
        %v279 = vunpack.c.l.b16 %v237
        %v280 = vunpack.c.l.b16 %v238
        %v281 = vunpack.c.l.b16 %v256
        %v282 = vpack.c.b16 %v279, %v278
        %v283 = vpack.c.b16 %v281, %v280
        %vm284 = vsmask.f32 7424
        %v286 = vshrl.u32 %v282, 16
        %v288 = vshll.u32 %v282, 16
        %v290 = vrot.slane %v288, 1
        %v291 = vor.u32 %v286, %v290
        %v293 = vshll.u32 %v283, 16
        %v295 = vrot.slane %v293, 1
        %v296 = vsel %vm284, %v291, %v295
        %v297 = vshrl.u32 %v283, 16
        %v299 = vor.u32 %v297, %v295
        %v318 = vunpack.c.l.b16 %v258
        %v319 = vunpack.c.l.b16 %v259
        %v320 = vunpack.c.l.b16 %v260
        %v321 = vunpack.c.l.b16 %v261
        %v322 = vunpack.c.l.b16 %v262
        %v323 = vunpack.c.l.b16 %v263
        %v324 = vunpack.c.l.b16 %v264
        %v325 = vunpack.c.l.b16 %v265
        %v326 = vunpack.c.l.b16 %v266
        %v327 = vunpack.c.l.b16 %v267
        %v328 = vunpack.c.l.b16 %v268
        %v329 = vunpack.c.l.b16 %v269
        %v330 = vunpack.c.l.b16 %v270
        %v331 = vunpack.c.l.b16 %v271
        %v332 = vunpack.c.l.b16 %v272
        %v333 = vunpack.c.l.b16 %v273
        %v334 = vpack.c.b16 %v319, %v318
        %v335 = vpack.c.b16 %v321, %v320
        %v336 = vpack.c.b16 %v323, %v322
        %v337 = vpack.c.b16 %v325, %v324
        %v338 = vpack.c.b16 %v327, %v326
        %v339 = vpack.c.b16 %v329, %v328
        %v340 = vpack.c.b16 %v331, %v330
        %v341 = vpack.c.b16 %v333, %v332
        %350 = vmatprep.subr.bf16.mxu0 0
        %351 = vmatpush1.bf16.msra.mxu0 %v334
        %352 = vmatprep.subr.bf16.mxu0 0
        %353 = vmatpush1.bf16.msra.mxu0 %v335
        %354 = vmatprep.subr.bf16.mxu0 0
        %355 = vmatpush1.bf16.msra.mxu0 %v336
        %356 = vmatprep.subr.bf16.mxu0 0
        %357 = vmatpush1.bf16.msra.mxu0 %v337
        %358 = vmatprep.subr.bf16.mxu0 0
        %359 = vmatpush1.bf16.msra.mxu0 %v338
        %360 = vmatprep.subr.bf16.mxu0 0
        %361 = vmatpush1.bf16.msra.mxu0 %v339
        %362 = vmatprep.subr.bf16.mxu0 0
        %363 = vmatpush1.bf16.msra.mxu0 %v340
        %364 = vmatprep.subr.bf16.mxu0 0
        %365 = vmatpush1.bf16.msra.mxu0 %v341
        %366 = vmatprep.subr.bf16.mxu0 0
        %367 = vmatpush1.bf16.msra.mxu0 0
        %368 = vmatprep.subr.bf16.mxu0 0
        %369 = vmatpush1.bf16.msra.mxu0 0
        %370 = vmatprep.subr.bf16.mxu0 0
        %371 = vmatpush1.bf16.msra.mxu0 0
        %372 = vmatprep.subr.bf16.mxu0 0
        %373 = vmatpush1.bf16.msra.mxu0 0
        %374 = vmatprep.subr.bf16.mxu0 0
        %375 = vmatpush1.bf16.msra.mxu0 0
        %376 = vmatprep.subr.bf16.mxu0 0
        %377 = vmatpush1.bf16.msra.mxu0 0
        %378 = vmatprep.subr.bf16.mxu0 0
        %379 = vmatpush1.bf16.msra.mxu0 0
        %380 = vmatprep.subr.bf16.mxu0 0
        %381 = vmatpush1.bf16.msra.mxu0 0
        %382 = vmatprep.mubr.bf16.mxu0 0
        %383 = vmatmul.mubr.bf16.gmra.mrb[0].mxu0 %v296
        %v384 = vpop.f32.mrb[0].mxu0
        %v385 = vadd.f32 0.0, %v384
        %v386 = vpop.f32.mrb[0].mxu0
        %v387 = vpop.f32.mrb[0].mxu0
        %v388 = vadd.f32 0.0, %v387
        %v389 = vpop.f32.mrb[0].mxu0
        %390 = vmatprep.mubr.bf16.mxu0 0
        %391 = vmatmul.mubr.bf16.gmra.mrb[0].mxu0 %v299
        %v392 = vpop.f32.mrb[0].mxu0
        %v393 = vadd.f32 0.0, %v392
        %v394 = vpop.f32.mrb[0].mxu0
        %v395 = vpop.f32.mrb[0].mxu0
        %v396 = vadd.f32 0.0, %v395
        %v397 = vpop.f32.mrb[0].mxu0
        %398 = vdwg.mxu0
        %v400 = vunpack.c.l.b16 %v239
        %v401 = vpack.c.b16 %v400, %v280
        %v420 = vunpack.c.l.b16 %v240
        %v421 = vunpack.c.l.b16 %v241
        %v422 = vunpack.c.l.b16 %v242
        %v423 = vunpack.c.l.b16 %v243
        %v424 = vunpack.c.l.b16 %v244
        %v425 = vunpack.c.l.b16 %v245
        %v426 = vunpack.c.l.b16 %v246
        %v427 = vunpack.c.l.b16 %v247
        %v428 = vunpack.c.l.b16 %v248
        %v429 = vunpack.c.l.b16 %v249
        %v430 = vunpack.c.l.b16 %v250
        %v431 = vunpack.c.l.b16 %v251
        %v432 = vunpack.c.l.b16 %v252
        %v433 = vunpack.c.l.b16 %v253
        %v434 = vunpack.c.l.b16 %v254
        %v435 = vunpack.c.l.b16 %v255
        %v436 = vpack.c.b16 %v421, %v420
        %v437 = vpack.c.b16 %v423, %v422
        %v438 = vpack.c.b16 %v425, %v424
        %v439 = vpack.c.b16 %v427, %v426
        %v440 = vpack.c.b16 %v429, %v428
        %v441 = vpack.c.b16 %v431, %v430
        %v442 = vpack.c.b16 %v433, %v432
        %v443 = vpack.c.b16 %v435, %v434
        %452 = vmatprep.subr.bf16.mxu0 0
        %453 = vmatpush1.bf16.msra.mxu0 %v436
        %454 = vmatprep.subr.bf16.mxu0 0
        %455 = vmatpush1.bf16.msra.mxu0 %v437
        %456 = vmatprep.subr.bf16.mxu0 0
        %457 = vmatpush1.bf16.msra.mxu0 %v438
        %458 = vmatprep.subr.bf16.mxu0 0
        %459 = vmatpush1.bf16.msra.mxu0 %v439
        %460 = vmatprep.subr.bf16.mxu0 0
        %461 = vmatpush1.bf16.msra.mxu0 %v440
        %462 = vmatprep.subr.bf16.mxu0 0
        %463 = vmatpush1.bf16.msra.mxu0 %v441
        %464 = vmatprep.subr.bf16.mxu0 0
        %465 = vmatpush1.bf16.msra.mxu0 %v442
        %466 = vmatprep.subr.bf16.mxu0 0
        %467 = vmatpush1.bf16.msra.mxu0 %v443
        %468 = vmatprep.subr.bf16.mxu0 0
        %469 = vmatpush1.bf16.msra.mxu0 0
        %470 = vmatprep.subr.bf16.mxu0 0
        %471 = vmatpush1.bf16.msra.mxu0 0
        %472 = vmatprep.subr.bf16.mxu0 0
        %473 = vmatpush1.bf16.msra.mxu0 0
        %474 = vmatprep.subr.bf16.mxu0 0
        %475 = vmatpush1.bf16.msra.mxu0 0
        %476 = vmatprep.subr.bf16.mxu0 0
        %477 = vmatpush1.bf16.msra.mxu0 0
        %478 = vmatprep.subr.bf16.mxu0 0
        %479 = vmatpush1.bf16.msra.mxu0 0
        %480 = vmatprep.subr.bf16.mxu0 0
        %481 = vmatpush1.bf16.msra.mxu0 0
        %482 = vmatprep.subr.bf16.mxu0 0
        %483 = vmatpush1.bf16.msra.mxu0 0
        %484 = vmatprep.mubr.bf16.mxu0 0
        %485 = vmatmul.mubr.bf16.gmra.mrb[0].mxu0 %v282
        %v486 = vpop.f32.mrb[0].mxu0
        %v487 = vadd.f32 %v385, %v486
        %v488 = vpop.f32.mrb[0].mxu0
        %v489 = vpop.f32.mrb[0].mxu0
        %v490 = vadd.f32 %v388, %v489
        %v491 = vpop.f32.mrb[0].mxu0
        %492 = vmatprep.mubr.bf16.mxu0 0
        %493 = vmatmul.mubr.bf16.gmra.mrb[0].mxu0 %v401
        %v494 = vpop.f32.mrb[0].mxu0
        %v495 = vadd.f32 %v393, %v494
        %v496 = vpop.f32.mrb[0].mxu0
        %v497 = vpop.f32.mrb[0].mxu0
        %v498 = vadd.f32 %v396, %v497
        %v499 = vpop.f32.mrb[0].mxu0
        %500 = vdwg.mxu0
        %v501 = vld [vmem:[%s235] sm:$0xe]
        %s502 = scalar_lea.vmem %s1, 128
        %v503 = vld [vmem:[%s502] sm:$0xf]
        %v504 = vld [vmem:[%s502 + $0x4] sm:$0xf]
        %v505 = vld [vmem:[%s502 + $0x8] sm:$0xf]
        %v506 = vld [vmem:[%s502 + $0xc] sm:$0xf]
        %v507 = vld [vmem:[%s502 + $0x10] sm:$0xf]
        %v508 = vld [vmem:[%s502 + $0x14] sm:$0xf]
        %v509 = vld [vmem:[%s502 + $0x18] sm:$0xf]
        %v510 = vld [vmem:[%s502 + $0x1c] sm:$0xf]
        %v511 = vld [vmem:[%s502 + $0x20] sm:$0xf]
        %v512 = vld [vmem:[%s502 + $0x24] sm:$0xf]
        %v513 = vld [vmem:[%s502 + $0x28] sm:$0xf]
        %v514 = vld [vmem:[%s502 + $0x2c] sm:$0xf]
        %v515 = vld [vmem:[%s502 + $0x30] sm:$0xf]
        %v516 = vld [vmem:[%s502 + $0x34] sm:$0xf]
        %v517 = vld [vmem:[%s502 + $0x38] sm:$0xf]
        %v518 = vld [vmem:[%s502 + $0x3c] sm:$0xf]
        %v520 = vunpack.c.l.b16 %v501
        %v521 = vpack.c.b16 %v279, %v520
        %vm522 = vcmask 1046528
        %v523 = vrot.slane %v521, 1
        %v524 = vrot.slane %v283, 1
        %v525 = vsel %vm522, %v523, %v524
        %v544 = vunpack.c.l.b16 %v503
        %v545 = vunpack.c.l.b16 %v504
        %v546 = vunpack.c.l.b16 %v505
        %v547 = vunpack.c.l.b16 %v506
        %v548 = vunpack.c.l.b16 %v507
        %v549 = vunpack.c.l.b16 %v508
        %v550 = vunpack.c.l.b16 %v509
        %v551 = vunpack.c.l.b16 %v510
        %v552 = vunpack.c.l.b16 %v511
        %v553 = vunpack.c.l.b16 %v512
        %v554 = vunpack.c.l.b16 %v513
        %v555 = vunpack.c.l.b16 %v514
        %v556 = vunpack.c.l.b16 %v515
        %v557 = vunpack.c.l.b16 %v516
        %v558 = vunpack.c.l.b16 %v517
        %v559 = vunpack.c.l.b16 %v518
        %v560 = vpack.c.b16 %v545, %v544
        %v561 = vpack.c.b16 %v547, %v546
        %v562 = vpack.c.b16 %v549, %v548
        %v563 = vpack.c.b16 %v551, %v550
        %v564 = vpack.c.b16 %v553, %v552
        %v565 = vpack.c.b16 %v555, %v554
        %v566 = vpack.c.b16 %v557, %v556
        %v567 = vpack.c.b16 %v559, %v558
        %576 = vmatprep.subr.bf16.mxu0 0
        %577 = vmatpush1.bf16.msra.mxu0 %v560
        %578 = vmatprep.subr.bf16.mxu0 0
        %579 = vmatpush1.bf16.msra.mxu0 %v561
        %580 = vmatprep.subr.bf16.mxu0 0
        %581 = vmatpush1.bf16.msra.mxu0 %v562
        %582 = vmatprep.subr.bf16.mxu0 0
        %583 = vmatpush1.bf16.msra.mxu0 %v563
        %584 = vmatprep.subr.bf16.mxu0 0
        %585 = vmatpush1.bf16.msra.mxu0 %v564
        %586 = vmatprep.subr.bf16.mxu0 0
        %587 = vmatpush1.bf16.msra.mxu0 %v565
        %588 = vmatprep.subr.bf16.mxu0 0
        %589 = vmatpush1.bf16.msra.mxu0 %v566
        %590 = vmatprep.subr.bf16.mxu0 0
        %591 = vmatpush1.bf16.msra.mxu0 %v567
        %592 = vmatprep.subr.bf16.mxu0 0
        %593 = vmatpush1.bf16.msra.mxu0 0
        %594 = vmatprep.subr.bf16.mxu0 0
        %595 = vmatpush1.bf16.msra.mxu0 0
        %596 = vmatprep.subr.bf16.mxu0 0
        %597 = vmatpush1.bf16.msra.mxu0 0
        %598 = vmatprep.subr.bf16.mxu0 0
        %599 = vmatpush1.bf16.msra.mxu0 0
        %600 = vmatprep.subr.bf16.mxu0 0
        %601 = vmatpush1.bf16.msra.mxu0 0
        %602 = vmatprep.subr.bf16.mxu0 0
        %603 = vmatpush1.bf16.msra.mxu0 0
        %604 = vmatprep.subr.bf16.mxu0 0
        %605 = vmatpush1.bf16.msra.mxu0 0
        %606 = vmatprep.subr.bf16.mxu0 0
        %607 = vmatpush1.bf16.msra.mxu0 0
        %608 = vmatprep.mubr.bf16.mxu0 0
        %609 = vmatmul.mubr.bf16.gmra.mrb[0].mxu0 %v525
        %v610 = vpop.f32.mrb[0].mxu0
        %v611 = vadd.f32 0.0, %v610
        %v612 = vpop.f32.mrb[0].mxu0
        %v613 = vpop.f32.mrb[0].mxu0
        %v614 = vadd.f32 0.0, %v613
        %v615 = vpop.f32.mrb[0].mxu0
        %616 = vmatprep.mubr.bf16.mxu0 0
        %617 = vmatmul.mubr.bf16.gmra.mrb[0].mxu0 %v524
        %v618 = vpop.f32.mrb[0].mxu0
        %v619 = vadd.f32 0.0, %v618
        %v620 = vpop.f32.mrb[0].mxu0
        %v621 = vpop.f32.mrb[0].mxu0
        %v622 = vadd.f32 0.0, %v621
        %v623 = vpop.f32.mrb[0].mxu0
        %624 = vdwg.mxu0
        %v625 = vadd.f32 %v487, %v611
        %v626 = vadd.f32 %v490, %v614
        %v627 = vadd.f32 %v495, %v619
        %v628 = vadd.f32 %v498, %v622
        %s629 = sadd.s32 %s232, 1
        %s630 = smul.u32 %s629, 4
        %s631 = smul.addr %s630, 4
        %s632 = scalar_lea.vmem %s165, %s631
        %v633 = vld [vmem:[%s632] sm:$0xf]
        %v634 = vld [vmem:[%s632 + $0x4] sm:$0xf]
        %v635 = vld [vmem:[%s632 + $0x8] sm:$0xf]
        %v636 = vld [vmem:[%s632 + $0xc] sm:$0x3]
        %s637 = scalar_lea.vmem %s1, 192
        %v638 = vld [vmem:[%s637] sm:$0xf]
        %v639 = vld [vmem:[%s637 + $0x4] sm:$0xf]
        %v640 = vld [vmem:[%s637 + $0x8] sm:$0xf]
        %v641 = vld [vmem:[%s637 + $0xc] sm:$0xf]
        %v642 = vld [vmem:[%s637 + $0x10] sm:$0xf]
        %v643 = vld [vmem:[%s637 + $0x14] sm:$0xf]
        %v644 = vld [vmem:[%s637 + $0x18] sm:$0xf]
        %v645 = vld [vmem:[%s637 + $0x1c] sm:$0xf]
        %v646 = vld [vmem:[%s637 + $0x20] sm:$0xf]
        %v647 = vld [vmem:[%s637 + $0x24] sm:$0xf]
        %v648 = vld [vmem:[%s637 + $0x28] sm:$0xf]
        %v649 = vld [vmem:[%s637 + $0x2c] sm:$0xf]
        %v650 = vld [vmem:[%s637 + $0x30] sm:$0xf]
        %v651 = vld [vmem:[%s637 + $0x34] sm:$0xf]
        %v652 = vld [vmem:[%s637 + $0x38] sm:$0xf]
        %v653 = vld [vmem:[%s637 + $0x3c] sm:$0xf]
        %v658 = vunpack.c.l.b16 %v633
        %v659 = vunpack.c.l.b16 %v634
        %v660 = vunpack.c.l.b16 %v635
        %v661 = vunpack.c.l.b16 %v636
        %v662 = vpack.c.b16 %v659, %v658
        %v663 = vpack.c.b16 %v661, %v660
        %v682 = vunpack.c.l.b16 %v638
        %v683 = vunpack.c.l.b16 %v639
        %v684 = vunpack.c.l.b16 %v640
        %v685 = vunpack.c.l.b16 %v641
        %v686 = vunpack.c.l.b16 %v642
        %v687 = vunpack.c.l.b16 %v643
        %v688 = vunpack.c.l.b16 %v644
        %v689 = vunpack.c.l.b16 %v645
        %v690 = vunpack.c.l.b16 %v646
        %v691 = vunpack.c.l.b16 %v647
        %v692 = vunpack.c.l.b16 %v648
        %v693 = vunpack.c.l.b16 %v649
        %v694 = vunpack.c.l.b16 %v650
        %v695 = vunpack.c.l.b16 %v651
        %v696 = vunpack.c.l.b16 %v652
        %v697 = vunpack.c.l.b16 %v653
        %v698 = vpack.c.b16 %v683, %v682
        %v699 = vpack.c.b16 %v685, %v684
        %v700 = vpack.c.b16 %v687, %v686
        %v701 = vpack.c.b16 %v689, %v688
        %v702 = vpack.c.b16 %v691, %v690
        %v703 = vpack.c.b16 %v693, %v692
        %v704 = vpack.c.b16 %v695, %v694
        %v705 = vpack.c.b16 %v697, %v696
        %714 = vmatprep.subr.bf16.mxu0 0
        %715 = vmatpush1.bf16.msra.mxu0 %v698
        %716 = vmatprep.subr.bf16.mxu0 0
        %717 = vmatpush1.bf16.msra.mxu0 %v699
        %718 = vmatprep.subr.bf16.mxu0 0
        %719 = vmatpush1.bf16.msra.mxu0 %v700
        %720 = vmatprep.subr.bf16.mxu0 0
        %721 = vmatpush1.bf16.msra.mxu0 %v701
        %722 = vmatprep.subr.bf16.mxu0 0
        %723 = vmatpush1.bf16.msra.mxu0 %v702
        %724 = vmatprep.subr.bf16.mxu0 0
        %725 = vmatpush1.bf16.msra.mxu0 %v703
        %726 = vmatprep.subr.bf16.mxu0 0
        %727 = vmatpush1.bf16.msra.mxu0 %v704
        %728 = vmatprep.subr.bf16.mxu0 0
        %729 = vmatpush1.bf16.msra.mxu0 %v705
        %730 = vmatprep.subr.bf16.mxu0 0
        %731 = vmatpush1.bf16.msra.mxu0 0
        %732 = vmatprep.subr.bf16.mxu0 0
        %733 = vmatpush1.bf16.msra.mxu0 0
        %734 = vmatprep.subr.bf16.mxu0 0
        %735 = vmatpush1.bf16.msra.mxu0 0
        %736 = vmatprep.subr.bf16.mxu0 0
        %737 = vmatpush1.bf16.msra.mxu0 0
        %738 = vmatprep.subr.bf16.mxu0 0
        %739 = vmatpush1.bf16.msra.mxu0 0
        %740 = vmatprep.subr.bf16.mxu0 0
        %741 = vmatpush1.bf16.msra.mxu0 0
        %742 = vmatprep.subr.bf16.mxu0 0
        %743 = vmatpush1.bf16.msra.mxu0 0
        %744 = vmatprep.subr.bf16.mxu0 0
        %745 = vmatpush1.bf16.msra.mxu0 0
        %746 = vmatprep.mubr.bf16.mxu0 0
        %747 = vmatmul.mubr.bf16.gmra.mrb[0].mxu0 %v662
        %v748 = vpop.f32.mrb[0].mxu0
        %v749 = vadd.f32 0.0, %v748
        %v750 = vpop.f32.mrb[0].mxu0
        %v751 = vpop.f32.mrb[0].mxu0
        %v752 = vadd.f32 0.0, %v751
        %v753 = vpop.f32.mrb[0].mxu0
        %754 = vmatprep.mubr.bf16.mxu0 0
        %755 = vmatmul.mubr.bf16.gmra.mrb[0].mxu0 %v663
        %v756 = vpop.f32.mrb[0].mxu0
        %v757 = vadd.f32 0.0, %v756
        %v758 = vpop.f32.mrb[0].mxu0
        %v759 = vpop.f32.mrb[0].mxu0
        %v760 = vadd.f32 0.0, %v759
        %v761 = vpop.f32.mrb[0].mxu0
        %762 = vdwg.mxu0
        %v763 = vadd.f32 %v625, %v749
        %v764 = vadd.f32 %v626, %v752
        %v765 = vadd.f32 %v627, %v757
        %v766 = vadd.f32 %v628, %v760
        %v767 = vld [vmem:[%s632 + $0xc] sm:$0x7]
        %s768 = scalar_lea.vmem %s1, 256
        %v769 = vld [vmem:[%s768] sm:$0xf]
        %v770 = vld [vmem:[%s768 + $0x4] sm:$0xf]
        %v771 = vld [vmem:[%s768 + $0x8] sm:$0xf]
        %v772 = vld [vmem:[%s768 + $0xc] sm:$0xf]
        %v773 = vld [vmem:[%s768 + $0x10] sm:$0xf]
        %v774 = vld [vmem:[%s768 + $0x14] sm:$0xf]
        %v775 = vld [vmem:[%s768 + $0x18] sm:$0xf]
        %v776 = vld [vmem:[%s768 + $0x1c] sm:$0xf]
        %v777 = vld [vmem:[%s768 + $0x20] sm:$0xf]
        %v778 = vld [vmem:[%s768 + $0x24] sm:$0xf]
        %v779 = vld [vmem:[%s768 + $0x28] sm:$0xf]
        %v780 = vld [vmem:[%s768 + $0x2c] sm:$0xf]
        %v781 = vld [vmem:[%s768 + $0x30] sm:$0xf]
        %v782 = vld [vmem:[%s768 + $0x34] sm:$0xf]
        %v783 = vld [vmem:[%s768 + $0x38] sm:$0xf]
        %v784 = vld [vmem:[%s768 + $0x3c] sm:$0xf]
        %v786 = vunpack.c.l.b16 %v767
        %v787 = vpack.c.b16 %v786, %v660
        %v789 = vshrl.u32 %v662, 16
        %v791 = vshll.u32 %v662, 16
        %v793 = vrot.slane %v791, 1
        %v794 = vor.u32 %v789, %v793
        %v796 = vshll.u32 %v787, 16
        %v798 = vrot.slane %v796, 1
        %v799 = vsel %vm284, %v794, %v798
        %v800 = vshrl.u32 %v787, 16
        %v802 = vor.u32 %v800, %v798
        %v821 = vunpack.c.l.b16 %v769
        %v822 = vunpack.c.l.b16 %v770
        %v823 = vunpack.c.l.b16 %v771
        %v824 = vunpack.c.l.b16 %v772
        %v825 = vunpack.c.l.b16 %v773
        %v826 = vunpack.c.l.b16 %v774
        %v827 = vunpack.c.l.b16 %v775
        %v828 = vunpack.c.l.b16 %v776
        %v829 = vunpack.c.l.b16 %v777
        %v830 = vunpack.c.l.b16 %v778
        %v831 = vunpack.c.l.b16 %v779
        %v832 = vunpack.c.l.b16 %v780
        %v833 = vunpack.c.l.b16 %v781
        %v834 = vunpack.c.l.b16 %v782
        %v835 = vunpack.c.l.b16 %v783
        %v836 = vunpack.c.l.b16 %v784
        %v837 = vpack.c.b16 %v822, %v821
        %v838 = vpack.c.b16 %v824, %v823
        %v839 = vpack.c.b16 %v826, %v825
        %v840 = vpack.c.b16 %v828, %v827
        %v841 = vpack.c.b16 %v830, %v829
        %v842 = vpack.c.b16 %v832, %v831
        %v843 = vpack.c.b16 %v834, %v833
        %v844 = vpack.c.b16 %v836, %v835
        %853 = vmatprep.subr.bf16.mxu0 0
        %854 = vmatpush1.bf16.msra.mxu0 %v837
        %855 = vmatprep.subr.bf16.mxu0 0
        %856 = vmatpush1.bf16.msra.mxu0 %v838
        %857 = vmatprep.subr.bf16.mxu0 0
        %858 = vmatpush1.bf16.msra.mxu0 %v839
        %859 = vmatprep.subr.bf16.mxu0 0
        %860 = vmatpush1.bf16.msra.mxu0 %v840
        %861 = vmatprep.subr.bf16.mxu0 0
        %862 = vmatpush1.bf16.msra.mxu0 %v841
        %863 = vmatprep.subr.bf16.mxu0 0
        %864 = vmatpush1.bf16.msra.mxu0 %v842
        %865 = vmatprep.subr.bf16.mxu0 0
        %866 = vmatpush1.bf16.msra.mxu0 %v843
        %867 = vmatprep.subr.bf16.mxu0 0
        %868 = vmatpush1.bf16.msra.mxu0 %v844
        %869 = vmatprep.subr.bf16.mxu0 0
        %870 = vmatpush1.bf16.msra.mxu0 0
        %871 = vmatprep.subr.bf16.mxu0 0
        %872 = vmatpush1.bf16.msra.mxu0 0
        %873 = vmatprep.subr.bf16.mxu0 0
        %874 = vmatpush1.bf16.msra.mxu0 0
        %875 = vmatprep.subr.bf16.mxu0 0
        %876 = vmatpush1.bf16.msra.mxu0 0
        %877 = vmatprep.subr.bf16.mxu0 0
        %878 = vmatpush1.bf16.msra.mxu0 0
        %879 = vmatprep.subr.bf16.mxu0 0
        %880 = vmatpush1.bf16.msra.mxu0 0
        %881 = vmatprep.subr.bf16.mxu0 0
        %882 = vmatpush1.bf16.msra.mxu0 0
        %883 = vmatprep.subr.bf16.mxu0 0
        %884 = vmatpush1.bf16.msra.mxu0 0
        %885 = vmatprep.mubr.bf16.mxu0 0
        %886 = vmatmul.mubr.bf16.gmra.mrb[0].mxu0 %v799
        %v887 = vpop.f32.mrb[0].mxu0
        %v888 = vadd.f32 0.0, %v887
        %v889 = vpop.f32.mrb[0].mxu0
        %v890 = vpop.f32.mrb[0].mxu0
        %v891 = vadd.f32 0.0, %v890
        %v892 = vpop.f32.mrb[0].mxu0
        %893 = vmatprep.mubr.bf16.mxu0 0
        %894 = vmatmul.mubr.bf16.gmra.mrb[0].mxu0 %v802
        %v895 = vpop.f32.mrb[0].mxu0
        %v896 = vadd.f32 0.0, %v895
        %v897 = vpop.f32.mrb[0].mxu0
        %v898 = vpop.f32.mrb[0].mxu0
        %v899 = vadd.f32 0.0, %v898
        %v900 = vpop.f32.mrb[0].mxu0
        %901 = vdwg.mxu0
        %v902 = vadd.f32 %v763, %v888
        %v903 = vadd.f32 %v764, %v891
        %v904 = vadd.f32 %v765, %v896
        %v905 = vadd.f32 %v766, %v899
        %v906 = vld [vmem:[%s632] sm:$0xe]
        %s907 = scalar_lea.vmem %s1, 320
        %v908 = vld [vmem:[%s907] sm:$0xf]
        %v909 = vld [vmem:[%s907 + $0x4] sm:$0xf]
        %v910 = vld [vmem:[%s907 + $0x8] sm:$0xf]
        %v911 = vld [vmem:[%s907 + $0xc] sm:$0xf]
        %v912 = vld [vmem:[%s907 + $0x10] sm:$0xf]
        %v913 = vld [vmem:[%s907 + $0x14] sm:$0xf]
        %v914 = vld [vmem:[%s907 + $0x18] sm:$0xf]
        %v915 = vld [vmem:[%s907 + $0x1c] sm:$0xf]
        %v916 = vld [vmem:[%s907 + $0x20] sm:$0xf]
        %v917 = vld [vmem:[%s907 + $0x24] sm:$0xf]
        %v918 = vld [vmem:[%s907 + $0x28] sm:$0xf]
        %v919 = vld [vmem:[%s907 + $0x2c] sm:$0xf]
        %v920 = vld [vmem:[%s907 + $0x30] sm:$0xf]
        %v921 = vld [vmem:[%s907 + $0x34] sm:$0xf]
        %v922 = vld [vmem:[%s907 + $0x38] sm:$0xf]
        %v923 = vld [vmem:[%s907 + $0x3c] sm:$0xf]
        %v925 = vunpack.c.l.b16 %v906
        %v926 = vpack.c.b16 %v659, %v925
        %v927 = vrot.slane %v926, 1
        %v928 = vrot.slane %v787, 1
        %v929 = vsel %vm522, %v927, %v928
        %v948 = vunpack.c.l.b16 %v908
        %v949 = vunpack.c.l.b16 %v909
        %v950 = vunpack.c.l.b16 %v910
        %v951 = vunpack.c.l.b16 %v911
        %v952 = vunpack.c.l.b16 %v912
        %v953 = vunpack.c.l.b16 %v913
        %v954 = vunpack.c.l.b16 %v914
        %v955 = vunpack.c.l.b16 %v915
        %v956 = vunpack.c.l.b16 %v916
        %v957 = vunpack.c.l.b16 %v917
        %v958 = vunpack.c.l.b16 %v918
        %v959 = vunpack.c.l.b16 %v919
        %v960 = vunpack.c.l.b16 %v920
        %v961 = vunpack.c.l.b16 %v921
        %v962 = vunpack.c.l.b16 %v922
        %v963 = vunpack.c.l.b16 %v923
        %v964 = vpack.c.b16 %v949, %v948
        %v965 = vpack.c.b16 %v951, %v950
        %v966 = vpack.c.b16 %v953, %v952
        %v967 = vpack.c.b16 %v955, %v954
        %v968 = vpack.c.b16 %v957, %v956
        %v969 = vpack.c.b16 %v959, %v958
        %v970 = vpack.c.b16 %v961, %v960
        %v971 = vpack.c.b16 %v963, %v962
        %980 = vmatprep.subr.bf16.mxu0 0
        %981 = vmatpush1.bf16.msra.mxu0 %v964
        %982 = vmatprep.subr.bf16.mxu0 0
        %983 = vmatpush1.bf16.msra.mxu0 %v965
        %984 = vmatprep.subr.bf16.mxu0 0
        %985 = vmatpush1.bf16.msra.mxu0 %v966
        %986 = vmatprep.subr.bf16.mxu0 0
        %987 = vmatpush1.bf16.msra.mxu0 %v967
        %988 = vmatprep.subr.bf16.mxu0 0
        %989 = vmatpush1.bf16.msra.mxu0 %v968
        %990 = vmatprep.subr.bf16.mxu0 0
        %991 = vmatpush1.bf16.msra.mxu0 %v969
        %992 = vmatprep.subr.bf16.mxu0 0
        %993 = vmatpush1.bf16.msra.mxu0 %v970
        %994 = vmatprep.subr.bf16.mxu0 0
        %995 = vmatpush1.bf16.msra.mxu0 %v971
        %996 = vmatprep.subr.bf16.mxu0 0
        %997 = vmatpush1.bf16.msra.mxu0 0
        %998 = vmatprep.subr.bf16.mxu0 0
        %999 = vmatpush1.bf16.msra.mxu0 0
        %1000 = vmatprep.subr.bf16.mxu0 0
        %1001 = vmatpush1.bf16.msra.mxu0 0
        %1002 = vmatprep.subr.bf16.mxu0 0
        %1003 = vmatpush1.bf16.msra.mxu0 0
        %1004 = vmatprep.subr.bf16.mxu0 0
        %1005 = vmatpush1.bf16.msra.mxu0 0
        %1006 = vmatprep.subr.bf16.mxu0 0
        %1007 = vmatpush1.bf16.msra.mxu0 0
        %1008 = vmatprep.subr.bf16.mxu0 0
        %1009 = vmatpush1.bf16.msra.mxu0 0
        %1010 = vmatprep.subr.bf16.mxu0 0
        %1011 = vmatpush1.bf16.msra.mxu0 0
        %1012 = vmatprep.mubr.bf16.mxu0 0
        %1013 = vmatmul.mubr.bf16.gmra.mrb[0].mxu0 %v929
        %v1014 = vpop.f32.mrb[0].mxu0
        %v1015 = vadd.f32 0.0, %v1014
        %v1016 = vpop.f32.mrb[0].mxu0
        %v1017 = vpop.f32.mrb[0].mxu0
        %v1018 = vadd.f32 0.0, %v1017
        %v1019 = vpop.f32.mrb[0].mxu0
        %1020 = vmatprep.mubr.bf16.mxu0 0
        %1021 = vmatmul.mubr.bf16.gmra.mrb[0].mxu0 %v928
        %v1022 = vpop.f32.mrb[0].mxu0
        %v1023 = vadd.f32 0.0, %v1022
        %v1024 = vpop.f32.mrb[0].mxu0
        %v1025 = vpop.f32.mrb[0].mxu0
        %v1026 = vadd.f32 0.0, %v1025
        %v1027 = vpop.f32.mrb[0].mxu0
        %1028 = vdwg.mxu0
        %v1029 = vadd.f32 %v902, %v1015
        %v1030 = vadd.f32 %v903, %v1018
        %v1031 = vadd.f32 %v904, %v1023
        %v1032 = vadd.f32 %v905, %v1026
        %s1033 = sadd.s32 %s232, 2
        %s1034 = smul.u32 %s1033, 4
        %s1035 = smul.addr %s1034, 4
        %s1036 = scalar_lea.vmem %s165, %s1035
        %v1037 = vld [vmem:[%s1036] sm:$0xf]
        %v1038 = vld [vmem:[%s1036 + $0x4] sm:$0xf]
        %v1039 = vld [vmem:[%s1036 + $0x8] sm:$0xf]
        %v1040 = vld [vmem:[%s1036 + $0xc] sm:$0x3]
        %s1041 = scalar_lea.vmem %s1, 384
        %v1042 = vld [vmem:[%s1041] sm:$0xf]
        %v1043 = vld [vmem:[%s1041 + $0x4] sm:$0xf]
        %v1044 = vld [vmem:[%s1041 + $0x8] sm:$0xf]
        %v1045 = vld [vmem:[%s1041 + $0xc] sm:$0xf]
        %v1046 = vld [vmem:[%s1041 + $0x10] sm:$0xf]
        %v1047 = vld [vmem:[%s1041 + $0x14] sm:$0xf]
        %v1048 = vld [vmem:[%s1041 + $0x18] sm:$0xf]
        %v1049 = vld [vmem:[%s1041 + $0x1c] sm:$0xf]
        %v1050 = vld [vmem:[%s1041 + $0x20] sm:$0xf]
        %v1051 = vld [vmem:[%s1041 + $0x24] sm:$0xf]
        %v1052 = vld [vmem:[%s1041 + $0x28] sm:$0xf]
        %v1053 = vld [vmem:[%s1041 + $0x2c] sm:$0xf]
        %v1054 = vld [vmem:[%s1041 + $0x30] sm:$0xf]
        %v1055 = vld [vmem:[%s1041 + $0x34] sm:$0xf]
        %v1056 = vld [vmem:[%s1041 + $0x38] sm:$0xf]
        %v1057 = vld [vmem:[%s1041 + $0x3c] sm:$0xf]
        %v1062 = vunpack.c.l.b16 %v1037
        %v1063 = vunpack.c.l.b16 %v1038
        %v1064 = vunpack.c.l.b16 %v1039
        %v1065 = vunpack.c.l.b16 %v1040
        %v1066 = vpack.c.b16 %v1063, %v1062
        %v1067 = vpack.c.b16 %v1065, %v1064
        %v1086 = vunpack.c.l.b16 %v1042
        %v1087 = vunpack.c.l.b16 %v1043
        %v1088 = vunpack.c.l.b16 %v1044
        %v1089 = vunpack.c.l.b16 %v1045
        %v1090 = vunpack.c.l.b16 %v1046
        %v1091 = vunpack.c.l.b16 %v1047
        %v1092 = vunpack.c.l.b16 %v1048
        %v1093 = vunpack.c.l.b16 %v1049
        %v1094 = vunpack.c.l.b16 %v1050
        %v1095 = vunpack.c.l.b16 %v1051
        %v1096 = vunpack.c.l.b16 %v1052
        %v1097 = vunpack.c.l.b16 %v1053
        %v1098 = vunpack.c.l.b16 %v1054
        %v1099 = vunpack.c.l.b16 %v1055
        %v1100 = vunpack.c.l.b16 %v1056
        %v1101 = vunpack.c.l.b16 %v1057
        %v1102 = vpack.c.b16 %v1087, %v1086
        %v1103 = vpack.c.b16 %v1089, %v1088
        %v1104 = vpack.c.b16 %v1091, %v1090
        %v1105 = vpack.c.b16 %v1093, %v1092
        %v1106 = vpack.c.b16 %v1095, %v1094
        %v1107 = vpack.c.b16 %v1097, %v1096
        %v1108 = vpack.c.b16 %v1099, %v1098
        %v1109 = vpack.c.b16 %v1101, %v1100
        %1118 = vmatprep.subr.bf16.mxu0 0
        %1119 = vmatpush1.bf16.msra.mxu0 %v1102
        %1120 = vmatprep.subr.bf16.mxu0 0
        %1121 = vmatpush1.bf16.msra.mxu0 %v1103
        %1122 = vmatprep.subr.bf16.mxu0 0
        %1123 = vmatpush1.bf16.msra.mxu0 %v1104
        %1124 = vmatprep.subr.bf16.mxu0 0
        %1125 = vmatpush1.bf16.msra.mxu0 %v1105
        %1126 = vmatprep.subr.bf16.mxu0 0
        %1127 = vmatpush1.bf16.msra.mxu0 %v1106
        %1128 = vmatprep.subr.bf16.mxu0 0
        %1129 = vmatpush1.bf16.msra.mxu0 %v1107
        %1130 = vmatprep.subr.bf16.mxu0 0
        %1131 = vmatpush1.bf16.msra.mxu0 %v1108
        %1132 = vmatprep.subr.bf16.mxu0 0
        %1133 = vmatpush1.bf16.msra.mxu0 %v1109
        %1134 = vmatprep.subr.bf16.mxu0 0
        %1135 = vmatpush1.bf16.msra.mxu0 0
        %1136 = vmatprep.subr.bf16.mxu0 0
        %1137 = vmatpush1.bf16.msra.mxu0 0
        %1138 = vmatprep.subr.bf16.mxu0 0
        %1139 = vmatpush1.bf16.msra.mxu0 0
        %1140 = vmatprep.subr.bf16.mxu0 0
        %1141 = vmatpush1.bf16.msra.mxu0 0
        %1142 = vmatprep.subr.bf16.mxu0 0
        %1143 = vmatpush1.bf16.msra.mxu0 0
        %1144 = vmatprep.subr.bf16.mxu0 0
        %1145 = vmatpush1.bf16.msra.mxu0 0
        %1146 = vmatprep.subr.bf16.mxu0 0
        %1147 = vmatpush1.bf16.msra.mxu0 0
        %1148 = vmatprep.subr.bf16.mxu0 0
        %1149 = vmatpush1.bf16.msra.mxu0 0
        %1150 = vmatprep.mubr.bf16.mxu0 0
        %1151 = vmatmul.mubr.bf16.gmra.mrb[0].mxu0 %v1066
        %v1152 = vpop.f32.mrb[0].mxu0
        %v1153 = vadd.f32 0.0, %v1152
        %v1154 = vpop.f32.mrb[0].mxu0
        %v1155 = vpop.f32.mrb[0].mxu0
        %v1156 = vadd.f32 0.0, %v1155
        %v1157 = vpop.f32.mrb[0].mxu0
        %1158 = vmatprep.mubr.bf16.mxu0 0
        %1159 = vmatmul.mubr.bf16.gmra.mrb[0].mxu0 %v1067
        %v1160 = vpop.f32.mrb[0].mxu0
        %v1161 = vadd.f32 0.0, %v1160
        %v1162 = vpop.f32.mrb[0].mxu0
        %v1163 = vpop.f32.mrb[0].mxu0
        %v1164 = vadd.f32 0.0, %v1163
        %v1165 = vpop.f32.mrb[0].mxu0
        %1166 = vdwg.mxu0
        %v1167 = vadd.f32 %v1029, %v1153
        %v1168 = vadd.f32 %v1030, %v1156
        %v1169 = vadd.f32 %v1031, %v1161
        %v1170 = vadd.f32 %v1032, %v1164
        %v1171 = vld [vmem:[%s1036 + $0xc] sm:$0x7]
        %s1172 = scalar_lea.vmem %s1, 448
        %v1173 = vld [vmem:[%s1172] sm:$0xf]
        %v1174 = vld [vmem:[%s1172 + $0x4] sm:$0xf]
        %v1175 = vld [vmem:[%s1172 + $0x8] sm:$0xf]
        %v1176 = vld [vmem:[%s1172 + $0xc] sm:$0xf]
        %v1177 = vld [vmem:[%s1172 + $0x10] sm:$0xf]
        %v1178 = vld [vmem:[%s1172 + $0x14] sm:$0xf]
        %v1179 = vld [vmem:[%s1172 + $0x18] sm:$0xf]
        %v1180 = vld [vmem:[%s1172 + $0x1c] sm:$0xf]
        %v1181 = vld [vmem:[%s1172 + $0x20] sm:$0xf]
        %v1182 = vld [vmem:[%s1172 + $0x24] sm:$0xf]
        %v1183 = vld [vmem:[%s1172 + $0x28] sm:$0xf]
        %v1184 = vld [vmem:[%s1172 + $0x2c] sm:$0xf]
        %v1185 = vld [vmem:[%s1172 + $0x30] sm:$0xf]
        %v1186 = vld [vmem:[%s1172 + $0x34] sm:$0xf]
        %v1187 = vld [vmem:[%s1172 + $0x38] sm:$0xf]
        %v1188 = vld [vmem:[%s1172 + $0x3c] sm:$0xf]
        %v1190 = vunpack.c.l.b16 %v1171
        %v1191 = vpack.c.b16 %v1190, %v1064
        %v1193 = vshrl.u32 %v1066, 16
        %v1195 = vshll.u32 %v1066, 16
        %v1197 = vrot.slane %v1195, 1
        %v1198 = vor.u32 %v1193, %v1197
        %v1200 = vshll.u32 %v1191, 16
        %v1202 = vrot.slane %v1200, 1
        %v1203 = vsel %vm284, %v1198, %v1202
        %v1204 = vshrl.u32 %v1191, 16
        %v1206 = vor.u32 %v1204, %v1202
        %v1225 = vunpack.c.l.b16 %v1173
        %v1226 = vunpack.c.l.b16 %v1174
        %v1227 = vunpack.c.l.b16 %v1175
        %v1228 = vunpack.c.l.b16 %v1176
        %v1229 = vunpack.c.l.b16 %v1177
        %v1230 = vunpack.c.l.b16 %v1178
        %v1231 = vunpack.c.l.b16 %v1179
        %v1232 = vunpack.c.l.b16 %v1180
        %v1233 = vunpack.c.l.b16 %v1181
        %v1234 = vunpack.c.l.b16 %v1182
        %v1235 = vunpack.c.l.b16 %v1183
        %v1236 = vunpack.c.l.b16 %v1184
        %v1237 = vunpack.c.l.b16 %v1185
        %v1238 = vunpack.c.l.b16 %v1186
        %v1239 = vunpack.c.l.b16 %v1187
        %v1240 = vunpack.c.l.b16 %v1188
        %v1241 = vpack.c.b16 %v1226, %v1225
        %v1242 = vpack.c.b16 %v1228, %v1227
        %v1243 = vpack.c.b16 %v1230, %v1229
        %v1244 = vpack.c.b16 %v1232, %v1231
        %v1245 = vpack.c.b16 %v1234, %v1233
        %v1246 = vpack.c.b16 %v1236, %v1235
        %v1247 = vpack.c.b16 %v1238, %v1237
        %v1248 = vpack.c.b16 %v1240, %v1239
        %1257 = vmatprep.subr.bf16.mxu0 0
        %1258 = vmatpush1.bf16.msra.mxu0 %v1241
        %1259 = vmatprep.subr.bf16.mxu0 0
        %1260 = vmatpush1.bf16.msra.mxu0 %v1242
        %1261 = vmatprep.subr.bf16.mxu0 0
        %1262 = vmatpush1.bf16.msra.mxu0 %v1243
        %1263 = vmatprep.subr.bf16.mxu0 0
        %1264 = vmatpush1.bf16.msra.mxu0 %v1244
        %1265 = vmatprep.subr.bf16.mxu0 0
        %1266 = vmatpush1.bf16.msra.mxu0 %v1245
        %1267 = vmatprep.subr.bf16.mxu0 0
        %1268 = vmatpush1.bf16.msra.mxu0 %v1246
        %1269 = vmatprep.subr.bf16.mxu0 0
        %1270 = vmatpush1.bf16.msra.mxu0 %v1247
        %1271 = vmatprep.subr.bf16.mxu0 0
        %1272 = vmatpush1.bf16.msra.mxu0 %v1248
        %1273 = vmatprep.subr.bf16.mxu0 0
        %1274 = vmatpush1.bf16.msra.mxu0 0
        %1275 = vmatprep.subr.bf16.mxu0 0
        %1276 = vmatpush1.bf16.msra.mxu0 0
        %1277 = vmatprep.subr.bf16.mxu0 0
        %1278 = vmatpush1.bf16.msra.mxu0 0
        %1279 = vmatprep.subr.bf16.mxu0 0
        %1280 = vmatpush1.bf16.msra.mxu0 0
        %1281 = vmatprep.subr.bf16.mxu0 0
        %1282 = vmatpush1.bf16.msra.mxu0 0
        %1283 = vmatprep.subr.bf16.mxu0 0
        %1284 = vmatpush1.bf16.msra.mxu0 0
        %1285 = vmatprep.subr.bf16.mxu0 0
        %1286 = vmatpush1.bf16.msra.mxu0 0
        %1287 = vmatprep.subr.bf16.mxu0 0
        %1288 = vmatpush1.bf16.msra.mxu0 0
        %1289 = vmatprep.mubr.bf16.mxu0 0
        %1290 = vmatmul.mubr.bf16.gmra.mrb[0].mxu0 %v1203
        %v1291 = vpop.f32.mrb[0].mxu0
        %v1292 = vadd.f32 0.0, %v1291
        %v1293 = vpop.f32.mrb[0].mxu0
        %v1294 = vpop.f32.mrb[0].mxu0
        %v1295 = vadd.f32 0.0, %v1294
        %v1296 = vpop.f32.mrb[0].mxu0
        %1297 = vmatprep.mubr.bf16.mxu0 0
        %1298 = vmatmul.mubr.bf16.gmra.mrb[0].mxu0 %v1206
        %v1299 = vpop.f32.mrb[0].mxu0
        %v1300 = vadd.f32 0.0, %v1299
        %v1301 = vpop.f32.mrb[0].mxu0
        %v1302 = vpop.f32.mrb[0].mxu0
        %v1303 = vadd.f32 0.0, %v1302
        %v1304 = vpop.f32.mrb[0].mxu0
        %1305 = vdwg.mxu0
        %v1306 = vadd.f32 %v1167, %v1292
        %v1307 = vadd.f32 %v1168, %v1295
        %v1308 = vadd.f32 %v1169, %v1300
        %v1309 = vadd.f32 %v1170, %v1303
        %v1310 = vld [vmem:[%s1036] sm:$0xe]
        %s1311 = scalar_lea.vmem %s1, 512
        %v1312 = vld [vmem:[%s1311] sm:$0xf]
        %v1313 = vld [vmem:[%s1311 + $0x4] sm:$0xf]
        %v1314 = vld [vmem:[%s1311 + $0x8] sm:$0xf]
        %v1315 = vld [vmem:[%s1311 + $0xc] sm:$0xf]
        %v1316 = vld [vmem:[%s1311 + $0x10] sm:$0xf]
        %v1317 = vld [vmem:[%s1311 + $0x14] sm:$0xf]
        %v1318 = vld [vmem:[%s1311 + $0x18] sm:$0xf]
        %v1319 = vld [vmem:[%s1311 + $0x1c] sm:$0xf]
        %v1320 = vld [vmem:[%s1311 + $0x20] sm:$0xf]
        %v1321 = vld [vmem:[%s1311 + $0x24] sm:$0xf]
        %v1322 = vld [vmem:[%s1311 + $0x28] sm:$0xf]
        %v1323 = vld [vmem:[%s1311 + $0x2c] sm:$0xf]
        %v1324 = vld [vmem:[%s1311 + $0x30] sm:$0xf]
        %v1325 = vld [vmem:[%s1311 + $0x34] sm:$0xf]
        %v1326 = vld [vmem:[%s1311 + $0x38] sm:$0xf]
        %v1327 = vld [vmem:[%s1311 + $0x3c] sm:$0xf]
        %v1329 = vunpack.c.l.b16 %v1310
        %v1330 = vpack.c.b16 %v1063, %v1329
        %v1331 = vrot.slane %v1330, 1
        %v1332 = vrot.slane %v1191, 1
        %v1333 = vsel %vm522, %v1331, %v1332
        %v1352 = vunpack.c.l.b16 %v1312
        %v1353 = vunpack.c.l.b16 %v1313
        %v1354 = vunpack.c.l.b16 %v1314
        %v1355 = vunpack.c.l.b16 %v1315
        %v1356 = vunpack.c.l.b16 %v1316
        %v1357 = vunpack.c.l.b16 %v1317
        %v1358 = vunpack.c.l.b16 %v1318
        %v1359 = vunpack.c.l.b16 %v1319
        %v1360 = vunpack.c.l.b16 %v1320
        %v1361 = vunpack.c.l.b16 %v1321
        %v1362 = vunpack.c.l.b16 %v1322
        %v1363 = vunpack.c.l.b16 %v1323
        %v1364 = vunpack.c.l.b16 %v1324
        %v1365 = vunpack.c.l.b16 %v1325
        %v1366 = vunpack.c.l.b16 %v1326
        %v1367 = vunpack.c.l.b16 %v1327
        %v1368 = vpack.c.b16 %v1353, %v1352
        %v1369 = vpack.c.b16 %v1355, %v1354
        %v1370 = vpack.c.b16 %v1357, %v1356
        %v1371 = vpack.c.b16 %v1359, %v1358
        %v1372 = vpack.c.b16 %v1361, %v1360
        %v1373 = vpack.c.b16 %v1363, %v1362
        %v1374 = vpack.c.b16 %v1365, %v1364
        %v1375 = vpack.c.b16 %v1367, %v1366
        %1384 = vmatprep.subr.bf16.mxu0 0
        %1385 = vmatpush1.bf16.msra.mxu0 %v1368
        %1386 = vmatprep.subr.bf16.mxu0 0
        %1387 = vmatpush1.bf16.msra.mxu0 %v1369
        %1388 = vmatprep.subr.bf16.mxu0 0
        %1389 = vmatpush1.bf16.msra.mxu0 %v1370
        %1390 = vmatprep.subr.bf16.mxu0 0
        %1391 = vmatpush1.bf16.msra.mxu0 %v1371
        %1392 = vmatprep.subr.bf16.mxu0 0
        %1393 = vmatpush1.bf16.msra.mxu0 %v1372
        %1394 = vmatprep.subr.bf16.mxu0 0
        %1395 = vmatpush1.bf16.msra.mxu0 %v1373
        %1396 = vmatprep.subr.bf16.mxu0 0
        %1397 = vmatpush1.bf16.msra.mxu0 %v1374
        %1398 = vmatprep.subr.bf16.mxu0 0
        %1399 = vmatpush1.bf16.msra.mxu0 %v1375
        %1400 = vmatprep.subr.bf16.mxu0 0
        %1401 = vmatpush1.bf16.msra.mxu0 0
        %1402 = vmatprep.subr.bf16.mxu0 0
        %1403 = vmatpush1.bf16.msra.mxu0 0
        %1404 = vmatprep.subr.bf16.mxu0 0
        %1405 = vmatpush1.bf16.msra.mxu0 0
        %1406 = vmatprep.subr.bf16.mxu0 0
        %1407 = vmatpush1.bf16.msra.mxu0 0
        %1408 = vmatprep.subr.bf16.mxu0 0
        %1409 = vmatpush1.bf16.msra.mxu0 0
        %1410 = vmatprep.subr.bf16.mxu0 0
        %1411 = vmatpush1.bf16.msra.mxu0 0
        %1412 = vmatprep.subr.bf16.mxu0 0
        %1413 = vmatpush1.bf16.msra.mxu0 0
        %1414 = vmatprep.subr.bf16.mxu0 0
        %1415 = vmatpush1.bf16.msra.mxu0 0
        %1416 = vmatprep.mubr.bf16.mxu0 0
        %1417 = vmatmul.mubr.bf16.gmra.mrb[0].mxu0 %v1333
        %v1418 = vpop.f32.mrb[0].mxu0
        %v1419 = vadd.f32 0.0, %v1418
        %v1420 = vpop.f32.mrb[0].mxu0
        %v1421 = vpop.f32.mrb[0].mxu0
        %v1422 = vadd.f32 0.0, %v1421
        %v1423 = vpop.f32.mrb[0].mxu0
        %1424 = vmatprep.mubr.bf16.mxu0 0
        %1425 = vmatmul.mubr.bf16.gmra.mrb[0].mxu0 %v1332
        %v1426 = vpop.f32.mrb[0].mxu0
        %v1427 = vadd.f32 0.0, %v1426
        %v1428 = vpop.f32.mrb[0].mxu0
        %v1429 = vpop.f32.mrb[0].mxu0
        %v1430 = vadd.f32 0.0, %v1429
        %v1431 = vpop.f32.mrb[0].mxu0
        %1432 = vdwg.mxu0
        %v1433 = vadd.f32 %v1306, %v1419
        %v1434 = vadd.f32 %v1307, %v1422
        %v1435 = vadd.f32 %v1308, %v1427
        %v1436 = vadd.f32 %v1309, %v1430
        %1437 = vmatprep.subr.bf16.mxu0 0
        %1438 = vmatpush1.bf16.msra.mxu0 %v334
        %1439 = vmatprep.subr.bf16.mxu0 0
        %1440 = vmatpush1.bf16.msra.mxu0 %v335
        %1441 = vmatprep.subr.bf16.mxu0 0
        %1442 = vmatpush1.bf16.msra.mxu0 %v336
        %1443 = vmatprep.subr.bf16.mxu0 0
        %1444 = vmatpush1.bf16.msra.mxu0 %v337
        %1445 = vmatprep.subr.bf16.mxu0 0
        %1446 = vmatpush1.bf16.msra.mxu0 %v338
        %1447 = vmatprep.subr.bf16.mxu0 0
        %1448 = vmatpush1.bf16.msra.mxu0 %v339
        %1449 = vmatprep.subr.bf16.mxu0 0
        %1450 = vmatpush1.bf16.msra.mxu0 %v340
        %1451 = vmatprep.subr.bf16.mxu0 0
        %1452 = vmatpush1.bf16.msra.mxu0 %v341
        %1453 = vmatprep.subr.bf16.mxu0 0
        %1454 = vmatpush1.bf16.msra.mxu0 0
        %1455 = vmatprep.subr.bf16.mxu0 0
        %1456 = vmatpush1.bf16.msra.mxu0 0
        %1457 = vmatprep.subr.bf16.mxu0 0
        %1458 = vmatpush1.bf16.msra.mxu0 0
        %1459 = vmatprep.subr.bf16.mxu0 0
        %1460 = vmatpush1.bf16.msra.mxu0 0
        %1461 = vmatprep.subr.bf16.mxu0 0
        %1462 = vmatpush1.bf16.msra.mxu0 0
        %1463 = vmatprep.subr.bf16.mxu0 0
        %1464 = vmatpush1.bf16.msra.mxu0 0
        %1465 = vmatprep.subr.bf16.mxu0 0
        %1466 = vmatpush1.bf16.msra.mxu0 0
        %1467 = vmatprep.subr.bf16.mxu0 0
        %1468 = vmatpush1.bf16.msra.mxu0 0
        %1469 = vmatprep.mubr.bf16.mxu0 0
        %1470 = vmatmul.mubr.bf16.gmra.mrb[0].mxu0 %v799
        %v1471 = vpop.f32.mrb[0].mxu0
        %v1472 = vadd.f32 0.0, %v1471
        %v1473 = vpop.f32.mrb[0].mxu0
        %v1474 = vpop.f32.mrb[0].mxu0
        %v1475 = vadd.f32 0.0, %v1474
        %v1476 = vpop.f32.mrb[0].mxu0
        %1477 = vmatprep.mubr.bf16.mxu0 0
        %1478 = vmatmul.mubr.bf16.gmra.mrb[0].mxu0 %v802
        %v1479 = vpop.f32.mrb[0].mxu0
        %v1480 = vadd.f32 0.0, %v1479
        %v1481 = vpop.f32.mrb[0].mxu0
        %v1482 = vpop.f32.mrb[0].mxu0
        %v1483 = vadd.f32 0.0, %v1482
        %v1484 = vpop.f32.mrb[0].mxu0
        %1485 = vdwg.mxu0
        %1486 = vmatprep.subr.bf16.mxu0 0
        %1487 = vmatpush1.bf16.msra.mxu0 %v436
        %1488 = vmatprep.subr.bf16.mxu0 0
        %1489 = vmatpush1.bf16.msra.mxu0 %v437
        %1490 = vmatprep.subr.bf16.mxu0 0
        %1491 = vmatpush1.bf16.msra.mxu0 %v438
        %1492 = vmatprep.subr.bf16.mxu0 0
        %1493 = vmatpush1.bf16.msra.mxu0 %v439
        %1494 = vmatprep.subr.bf16.mxu0 0
        %1495 = vmatpush1.bf16.msra.mxu0 %v440
        %1496 = vmatprep.subr.bf16.mxu0 0
        %1497 = vmatpush1.bf16.msra.mxu0 %v441
        %1498 = vmatprep.subr.bf16.mxu0 0
        %1499 = vmatpush1.bf16.msra.mxu0 %v442
        %1500 = vmatprep.subr.bf16.mxu0 0
        %1501 = vmatpush1.bf16.msra.mxu0 %v443
        %1502 = vmatprep.subr.bf16.mxu0 0
        %1503 = vmatpush1.bf16.msra.mxu0 0
        %1504 = vmatprep.subr.bf16.mxu0 0
        %1505 = vmatpush1.bf16.msra.mxu0 0
        %1506 = vmatprep.subr.bf16.mxu0 0
        %1507 = vmatpush1.bf16.msra.mxu0 0
        %1508 = vmatprep.subr.bf16.mxu0 0
        %1509 = vmatpush1.bf16.msra.mxu0 0
        %1510 = vmatprep.subr.bf16.mxu0 0
        %1511 = vmatpush1.bf16.msra.mxu0 0
        %1512 = vmatprep.subr.bf16.mxu0 0
        %1513 = vmatpush1.bf16.msra.mxu0 0
        %1514 = vmatprep.subr.bf16.mxu0 0
        %1515 = vmatpush1.bf16.msra.mxu0 0
        %1516 = vmatprep.subr.bf16.mxu0 0
        %1517 = vmatpush1.bf16.msra.mxu0 0
        %1518 = vmatprep.mubr.bf16.mxu0 0
        %1519 = vmatmul.mubr.bf16.gmra.mrb[0].mxu0 %v662
        %v1520 = vpop.f32.mrb[0].mxu0
        %v1521 = vadd.f32 %v1472, %v1520
        %v1522 = vpop.f32.mrb[0].mxu0
        %v1523 = vpop.f32.mrb[0].mxu0
        %v1524 = vadd.f32 %v1475, %v1523
        %v1525 = vpop.f32.mrb[0].mxu0
        %1526 = vmatprep.mubr.bf16.mxu0 0
        %1527 = vmatmul.mubr.bf16.gmra.mrb[0].mxu0 %v663
        %v1528 = vpop.f32.mrb[0].mxu0
        %v1529 = vadd.f32 %v1480, %v1528
        %v1530 = vpop.f32.mrb[0].mxu0
        %v1531 = vpop.f32.mrb[0].mxu0
        %v1532 = vadd.f32 %v1483, %v1531
        %v1533 = vpop.f32.mrb[0].mxu0
        %1534 = vdwg.mxu0
        %1535 = vmatprep.subr.bf16.mxu0 0
        %1536 = vmatpush1.bf16.msra.mxu0 %v560
        %1537 = vmatprep.subr.bf16.mxu0 0
        %1538 = vmatpush1.bf16.msra.mxu0 %v561
        %1539 = vmatprep.subr.bf16.mxu0 0
        %1540 = vmatpush1.bf16.msra.mxu0 %v562
        %1541 = vmatprep.subr.bf16.mxu0 0
        %1542 = vmatpush1.bf16.msra.mxu0 %v563
        %1543 = vmatprep.subr.bf16.mxu0 0
        %1544 = vmatpush1.bf16.msra.mxu0 %v564
        %1545 = vmatprep.subr.bf16.mxu0 0
        %1546 = vmatpush1.bf16.msra.mxu0 %v565
        %1547 = vmatprep.subr.bf16.mxu0 0
        %1548 = vmatpush1.bf16.msra.mxu0 %v566
        %1549 = vmatprep.subr.bf16.mxu0 0
        %1550 = vmatpush1.bf16.msra.mxu0 %v567
        %1551 = vmatprep.subr.bf16.mxu0 0
        %1552 = vmatpush1.bf16.msra.mxu0 0
        %1553 = vmatprep.subr.bf16.mxu0 0
        %1554 = vmatpush1.bf16.msra.mxu0 0
        %1555 = vmatprep.subr.bf16.mxu0 0
        %1556 = vmatpush1.bf16.msra.mxu0 0
        %1557 = vmatprep.subr.bf16.mxu0 0
        %1558 = vmatpush1.bf16.msra.mxu0 0
        %1559 = vmatprep.subr.bf16.mxu0 0
        %1560 = vmatpush1.bf16.msra.mxu0 0
        %1561 = vmatprep.subr.bf16.mxu0 0
        %1562 = vmatpush1.bf16.msra.mxu0 0
        %1563 = vmatprep.subr.bf16.mxu0 0
        %1564 = vmatpush1.bf16.msra.mxu0 0
        %1565 = vmatprep.subr.bf16.mxu0 0
        %1566 = vmatpush1.bf16.msra.mxu0 0
        %1567 = vmatprep.mubr.bf16.mxu0 0
        %1568 = vmatmul.mubr.bf16.gmra.mrb[0].mxu0 %v929
        %v1569 = vpop.f32.mrb[0].mxu0
        %v1570 = vadd.f32 0.0, %v1569
        %v1571 = vpop.f32.mrb[0].mxu0
        %v1572 = vpop.f32.mrb[0].mxu0
        %v1573 = vadd.f32 0.0, %v1572
        %v1574 = vpop.f32.mrb[0].mxu0
        %1575 = vmatprep.mubr.bf16.mxu0 0
        %1576 = vmatmul.mubr.bf16.gmra.mrb[0].mxu0 %v928
        %v1577 = vpop.f32.mrb[0].mxu0
        %v1578 = vadd.f32 0.0, %v1577
        %v1579 = vpop.f32.mrb[0].mxu0
        %v1580 = vpop.f32.mrb[0].mxu0
        %v1581 = vadd.f32 0.0, %v1580
        %v1582 = vpop.f32.mrb[0].mxu0
        %1583 = vdwg.mxu0
        %v1584 = vadd.f32 %v1521, %v1570
        %v1585 = vadd.f32 %v1524, %v1573
        %v1586 = vadd.f32 %v1529, %v1578
        %v1587 = vadd.f32 %v1532, %v1581
        %1588 = vmatprep.subr.bf16.mxu0 0
        %1589 = vmatpush1.bf16.msra.mxu0 %v698
        %1590 = vmatprep.subr.bf16.mxu0 0
        %1591 = vmatpush1.bf16.msra.mxu0 %v699
        %1592 = vmatprep.subr.bf16.mxu0 0
        %1593 = vmatpush1.bf16.msra.mxu0 %v700
        %1594 = vmatprep.subr.bf16.mxu0 0
        %1595 = vmatpush1.bf16.msra.mxu0 %v701
        %1596 = vmatprep.subr.bf16.mxu0 0
        %1597 = vmatpush1.bf16.msra.mxu0 %v702
        %1598 = vmatprep.subr.bf16.mxu0 0
        %1599 = vmatpush1.bf16.msra.mxu0 %v703
        %1600 = vmatprep.subr.bf16.mxu0 0
        %1601 = vmatpush1.bf16.msra.mxu0 %v704
        %1602 = vmatprep.subr.bf16.mxu0 0
        %1603 = vmatpush1.bf16.msra.mxu0 %v705
        %1604 = vmatprep.subr.bf16.mxu0 0
        %1605 = vmatpush1.bf16.msra.mxu0 0
        %1606 = vmatprep.subr.bf16.mxu0 0
        %1607 = vmatpush1.bf16.msra.mxu0 0
        %1608 = vmatprep.subr.bf16.mxu0 0
        %1609 = vmatpush1.bf16.msra.mxu0 0
        %1610 = vmatprep.subr.bf16.mxu0 0
        %1611 = vmatpush1.bf16.msra.mxu0 0
        %1612 = vmatprep.subr.bf16.mxu0 0
        %1613 = vmatpush1.bf16.msra.mxu0 0
        %1614 = vmatprep.subr.bf16.mxu0 0
        %1615 = vmatpush1.bf16.msra.mxu0 0
        %1616 = vmatprep.subr.bf16.mxu0 0
        %1617 = vmatpush1.bf16.msra.mxu0 0
        %1618 = vmatprep.subr.bf16.mxu0 0
        %1619 = vmatpush1.bf16.msra.mxu0 0
        %1620 = vmatprep.mubr.bf16.mxu0 0
        %1621 = vmatmul.mubr.bf16.gmra.mrb[0].mxu0 %v1066
        %v1622 = vpop.f32.mrb[0].mxu0
        %v1623 = vadd.f32 0.0, %v1622
        %v1624 = vpop.f32.mrb[0].mxu0
        %v1625 = vpop.f32.mrb[0].mxu0
        %v1626 = vadd.f32 0.0, %v1625
        %v1627 = vpop.f32.mrb[0].mxu0
        %1628 = vmatprep.mubr.bf16.mxu0 0
        %1629 = vmatmul.mubr.bf16.gmra.mrb[0].mxu0 %v1067
        %v1630 = vpop.f32.mrb[0].mxu0
        %v1631 = vadd.f32 0.0, %v1630
        %v1632 = vpop.f32.mrb[0].mxu0
        %v1633 = vpop.f32.mrb[0].mxu0
        %v1634 = vadd.f32 0.0, %v1633
        %v1635 = vpop.f32.mrb[0].mxu0
        %1636 = vdwg.mxu0
        %v1637 = vadd.f32 %v1584, %v1623
        %v1638 = vadd.f32 %v1585, %v1626
        %v1639 = vadd.f32 %v1586, %v1631
        %v1640 = vadd.f32 %v1587, %v1634
        %1641 = vmatprep.subr.bf16.mxu0 0
        %1642 = vmatpush1.bf16.msra.mxu0 %v837
        %1643 = vmatprep.subr.bf16.mxu0 0
        %1644 = vmatpush1.bf16.msra.mxu0 %v838
        %1645 = vmatprep.subr.bf16.mxu0 0
        %1646 = vmatpush1.bf16.msra.mxu0 %v839
        %1647 = vmatprep.subr.bf16.mxu0 0
        %1648 = vmatpush1.bf16.msra.mxu0 %v840
        %1649 = vmatprep.subr.bf16.mxu0 0
        %1650 = vmatpush1.bf16.msra.mxu0 %v841
        %1651 = vmatprep.subr.bf16.mxu0 0
        %1652 = vmatpush1.bf16.msra.mxu0 %v842
        %1653 = vmatprep.subr.bf16.mxu0 0
        %1654 = vmatpush1.bf16.msra.mxu0 %v843
        %1655 = vmatprep.subr.bf16.mxu0 0
        %1656 = vmatpush1.bf16.msra.mxu0 %v844
        %1657 = vmatprep.subr.bf16.mxu0 0
        %1658 = vmatpush1.bf16.msra.mxu0 0
        %1659 = vmatprep.subr.bf16.mxu0 0
        %1660 = vmatpush1.bf16.msra.mxu0 0
        %1661 = vmatprep.subr.bf16.mxu0 0
        %1662 = vmatpush1.bf16.msra.mxu0 0
        %1663 = vmatprep.subr.bf16.mxu0 0
        %1664 = vmatpush1.bf16.msra.mxu0 0
        %1665 = vmatprep.subr.bf16.mxu0 0
        %1666 = vmatpush1.bf16.msra.mxu0 0
        %1667 = vmatprep.subr.bf16.mxu0 0
        %1668 = vmatpush1.bf16.msra.mxu0 0
        %1669 = vmatprep.subr.bf16.mxu0 0
        %1670 = vmatpush1.bf16.msra.mxu0 0
        %1671 = vmatprep.subr.bf16.mxu0 0
        %1672 = vmatpush1.bf16.msra.mxu0 0
        %1673 = vmatprep.mubr.bf16.mxu0 0
        %1674 = vmatmul.mubr.bf16.gmra.mrb[0].mxu0 %v1203
        %v1675 = vpop.f32.mrb[0].mxu0
        %v1676 = vadd.f32 0.0, %v1675
        %v1677 = vpop.f32.mrb[0].mxu0
        %v1678 = vpop.f32.mrb[0].mxu0
        %v1679 = vadd.f32 0.0, %v1678
        %v1680 = vpop.f32.mrb[0].mxu0
        %1681 = vmatprep.mubr.bf16.mxu0 0
        %1682 = vmatmul.mubr.bf16.gmra.mrb[0].mxu0 %v1206
        %v1683 = vpop.f32.mrb[0].mxu0
        %v1684 = vadd.f32 0.0, %v1683
        %v1685 = vpop.f32.mrb[0].mxu0
        %v1686 = vpop.f32.mrb[0].mxu0
        %v1687 = vadd.f32 0.0, %v1686
        %v1688 = vpop.f32.mrb[0].mxu0
        %1689 = vdwg.mxu0
        %v1690 = vadd.f32 %v1637, %v1676
        %v1691 = vadd.f32 %v1638, %v1679
        %v1692 = vadd.f32 %v1639, %v1684
        %v1693 = vadd.f32 %v1640, %v1687
        %1694 = vmatprep.subr.bf16.mxu0 0
        %1695 = vmatpush1.bf16.msra.mxu0 %v964
        %1696 = vmatprep.subr.bf16.mxu0 0
        %1697 = vmatpush1.bf16.msra.mxu0 %v965
        %1698 = vmatprep.subr.bf16.mxu0 0
        %1699 = vmatpush1.bf16.msra.mxu0 %v966
        %1700 = vmatprep.subr.bf16.mxu0 0
        %1701 = vmatpush1.bf16.msra.mxu0 %v967
        %1702 = vmatprep.subr.bf16.mxu0 0
        %1703 = vmatpush1.bf16.msra.mxu0 %v968
        %1704 = vmatprep.subr.bf16.mxu0 0
        %1705 = vmatpush1.bf16.msra.mxu0 %v969
        %1706 = vmatprep.subr.bf16.mxu0 0
        %1707 = vmatpush1.bf16.msra.mxu0 %v970
        %1708 = vmatprep.subr.bf16.mxu0 0
        %1709 = vmatpush1.bf16.msra.mxu0 %v971
        %1710 = vmatprep.subr.bf16.mxu0 0
        %1711 = vmatpush1.bf16.msra.mxu0 0
        %1712 = vmatprep.subr.bf16.mxu0 0
        %1713 = vmatpush1.bf16.msra.mxu0 0
        %1714 = vmatprep.subr.bf16.mxu0 0
        %1715 = vmatpush1.bf16.msra.mxu0 0
        %1716 = vmatprep.subr.bf16.mxu0 0
        %1717 = vmatpush1.bf16.msra.mxu0 0
        %1718 = vmatprep.subr.bf16.mxu0 0
        %1719 = vmatpush1.bf16.msra.mxu0 0
        %1720 = vmatprep.subr.bf16.mxu0 0
        %1721 = vmatpush1.bf16.msra.mxu0 0
        %1722 = vmatprep.subr.bf16.mxu0 0
        %1723 = vmatpush1.bf16.msra.mxu0 0
        %1724 = vmatprep.subr.bf16.mxu0 0
        %1725 = vmatpush1.bf16.msra.mxu0 0
        %1726 = vmatprep.mubr.bf16.mxu0 0
        %1727 = vmatmul.mubr.bf16.gmra.mrb[0].mxu0 %v1333
        %v1728 = vpop.f32.mrb[0].mxu0
        %v1729 = vadd.f32 0.0, %v1728
        %v1730 = vpop.f32.mrb[0].mxu0
        %v1731 = vpop.f32.mrb[0].mxu0
        %v1732 = vadd.f32 0.0, %v1731
        %v1733 = vpop.f32.mrb[0].mxu0
        %1734 = vmatprep.mubr.bf16.mxu0 0
        %1735 = vmatmul.mubr.bf16.gmra.mrb[0].mxu0 %v1332
        %v1736 = vpop.f32.mrb[0].mxu0
        %v1737 = vadd.f32 0.0, %v1736
        %v1738 = vpop.f32.mrb[0].mxu0
        %v1739 = vpop.f32.mrb[0].mxu0
        %v1740 = vadd.f32 0.0, %v1739
        %v1741 = vpop.f32.mrb[0].mxu0
        %1742 = vdwg.mxu0
        %v1743 = vadd.f32 %v1690, %v1729
        %v1744 = vadd.f32 %v1691, %v1732
        %v1745 = vadd.f32 %v1692, %v1737
        %v1746 = vadd.f32 %v1693, %v1740
        %s1747 = sadd.s32 %s232, 3
        %s1748 = smul.u32 %s1747, 4
        %s1749 = smul.addr %s1748, 4
        %s1750 = scalar_lea.vmem %s165, %s1749
        %v1751 = vld [vmem:[%s1750] sm:$0xf]
        %v1752 = vld [vmem:[%s1750 + $0x4] sm:$0xf]
        %v1753 = vld [vmem:[%s1750 + $0x8] sm:$0xf]
        %v1754 = vld [vmem:[%s1750 + $0xc] sm:$0x3]
        %v1759 = vunpack.c.l.b16 %v1751
        %v1760 = vunpack.c.l.b16 %v1752
        %v1761 = vunpack.c.l.b16 %v1753
        %v1762 = vunpack.c.l.b16 %v1754
        %v1763 = vpack.c.b16 %v1760, %v1759
        %v1764 = vpack.c.b16 %v1762, %v1761
        %1767 = vmatprep.subr.bf16.mxu0 0
        %1768 = vmatpush1.bf16.msra.mxu0 %v1102
        %1769 = vmatprep.subr.bf16.mxu0 0
        %1770 = vmatpush1.bf16.msra.mxu0 %v1103
        %1771 = vmatprep.subr.bf16.mxu0 0
        %1772 = vmatpush1.bf16.msra.mxu0 %v1104
        %1773 = vmatprep.subr.bf16.mxu0 0
        %1774 = vmatpush1.bf16.msra.mxu0 %v1105
        %1775 = vmatprep.subr.bf16.mxu0 0
        %1776 = vmatpush1.bf16.msra.mxu0 %v1106
        %1777 = vmatprep.subr.bf16.mxu0 0
        %1778 = vmatpush1.bf16.msra.mxu0 %v1107
        %1779 = vmatprep.subr.bf16.mxu0 0
        %1780 = vmatpush1.bf16.msra.mxu0 %v1108
        %1781 = vmatprep.subr.bf16.mxu0 0
        %1782 = vmatpush1.bf16.msra.mxu0 %v1109
        %1783 = vmatprep.subr.bf16.mxu0 0
        %1784 = vmatpush1.bf16.msra.mxu0 0
        %1785 = vmatprep.subr.bf16.mxu0 0
        %1786 = vmatpush1.bf16.msra.mxu0 0
        %1787 = vmatprep.subr.bf16.mxu0 0
        %1788 = vmatpush1.bf16.msra.mxu0 0
        %1789 = vmatprep.subr.bf16.mxu0 0
        %1790 = vmatpush1.bf16.msra.mxu0 0
        %1791 = vmatprep.subr.bf16.mxu0 0
        %1792 = vmatpush1.bf16.msra.mxu0 0
        %1793 = vmatprep.subr.bf16.mxu0 0
        %1794 = vmatpush1.bf16.msra.mxu0 0
        %1795 = vmatprep.subr.bf16.mxu0 0
        %1796 = vmatpush1.bf16.msra.mxu0 0
        %1797 = vmatprep.subr.bf16.mxu0 0
        %1798 = vmatpush1.bf16.msra.mxu0 0
        %1799 = vmatprep.mubr.bf16.mxu0 0
        %1800 = vmatmul.mubr.bf16.gmra.mrb[0].mxu0 %v1763
        %v1801 = vpop.f32.mrb[0].mxu0
        %v1802 = vadd.f32 0.0, %v1801
        %v1803 = vpop.f32.mrb[0].mxu0
        %v1804 = vpop.f32.mrb[0].mxu0
        %v1805 = vadd.f32 0.0, %v1804
        %v1806 = vpop.f32.mrb[0].mxu0
        %1807 = vmatprep.mubr.bf16.mxu0 0
        %1808 = vmatmul.mubr.bf16.gmra.mrb[0].mxu0 %v1764
        %v1809 = vpop.f32.mrb[0].mxu0
        %v1810 = vadd.f32 0.0, %v1809
        %v1811 = vpop.f32.mrb[0].mxu0
        %v1812 = vpop.f32.mrb[0].mxu0
        %v1813 = vadd.f32 0.0, %v1812
        %v1814 = vpop.f32.mrb[0].mxu0
        %1815 = vdwg.mxu0
        %v1816 = vadd.f32 %v1743, %v1802
        %v1817 = vadd.f32 %v1744, %v1805
        %v1818 = vadd.f32 %v1745, %v1810
        %v1819 = vadd.f32 %v1746, %v1813
        %v1820 = vld [vmem:[%s1750 + $0xc] sm:$0x7]
        %v1822 = vunpack.c.l.b16 %v1820
        %v1823 = vpack.c.b16 %v1822, %v1761
        %v1825 = vshrl.u32 %v1763, 16
        %v1827 = vshll.u32 %v1763, 16
        %v1829 = vrot.slane %v1827, 1
        %v1830 = vor.u32 %v1825, %v1829
        %v1832 = vshll.u32 %v1823, 16
        %v1834 = vrot.slane %v1832, 1
        %v1835 = vsel %vm284, %v1830, %v1834
        %v1836 = vshrl.u32 %v1823, 16
        %v1838 = vor.u32 %v1836, %v1834
        %1841 = vmatprep.subr.bf16.mxu0 0
        %1842 = vmatpush1.bf16.msra.mxu0 %v1241
        %1843 = vmatprep.subr.bf16.mxu0 0
        %1844 = vmatpush1.bf16.msra.mxu0 %v1242
        %1845 = vmatprep.subr.bf16.mxu0 0
        %1846 = vmatpush1.bf16.msra.mxu0 %v1243
        %1847 = vmatprep.subr.bf16.mxu0 0
        %1848 = vmatpush1.bf16.msra.mxu0 %v1244
        %1849 = vmatprep.subr.bf16.mxu0 0
        %1850 = vmatpush1.bf16.msra.mxu0 %v1245
        %1851 = vmatprep.subr.bf16.mxu0 0
        %1852 = vmatpush1.bf16.msra.mxu0 %v1246
        %1853 = vmatprep.subr.bf16.mxu0 0
        %1854 = vmatpush1.bf16.msra.mxu0 %v1247
        %1855 = vmatprep.subr.bf16.mxu0 0
        %1856 = vmatpush1.bf16.msra.mxu0 %v1248
        %1857 = vmatprep.subr.bf16.mxu0 0
        %1858 = vmatpush1.bf16.msra.mxu0 0
        %1859 = vmatprep.subr.bf16.mxu0 0
        %1860 = vmatpush1.bf16.msra.mxu0 0
        %1861 = vmatprep.subr.bf16.mxu0 0
        %1862 = vmatpush1.bf16.msra.mxu0 0
        %1863 = vmatprep.subr.bf16.mxu0 0
        %1864 = vmatpush1.bf16.msra.mxu0 0
        %1865 = vmatprep.subr.bf16.mxu0 0
        %1866 = vmatpush1.bf16.msra.mxu0 0
        %1867 = vmatprep.subr.bf16.mxu0 0
        %1868 = vmatpush1.bf16.msra.mxu0 0
        %1869 = vmatprep.subr.bf16.mxu0 0
        %1870 = vmatpush1.bf16.msra.mxu0 0
        %1871 = vmatprep.subr.bf16.mxu0 0
        %1872 = vmatpush1.bf16.msra.mxu0 0
        %1873 = vmatprep.mubr.bf16.mxu0 0
        %1874 = vmatmul.mubr.bf16.gmra.mrb[0].mxu0 %v1835
        %v1875 = vpop.f32.mrb[0].mxu0
        %v1876 = vadd.f32 0.0, %v1875
        %v1877 = vpop.f32.mrb[0].mxu0
        %v1878 = vpop.f32.mrb[0].mxu0
        %v1879 = vadd.f32 0.0, %v1878
        %v1880 = vpop.f32.mrb[0].mxu0
        %1881 = vmatprep.mubr.bf16.mxu0 0
        %1882 = vmatmul.mubr.bf16.gmra.mrb[0].mxu0 %v1838
        %v1883 = vpop.f32.mrb[0].mxu0
        %v1884 = vadd.f32 0.0, %v1883
        %v1885 = vpop.f32.mrb[0].mxu0
        %v1886 = vpop.f32.mrb[0].mxu0
        %v1887 = vadd.f32 0.0, %v1886
        %v1888 = vpop.f32.mrb[0].mxu0
        %1889 = vdwg.mxu0
        %v1890 = vadd.f32 %v1816, %v1876
        %v1891 = vadd.f32 %v1817, %v1879
        %v1892 = vadd.f32 %v1818, %v1884
        %v1893 = vadd.f32 %v1819, %v1887
        %v1894 = vld [vmem:[%s1750] sm:$0xe]
        %v1896 = vunpack.c.l.b16 %v1894
        %v1897 = vpack.c.b16 %v1760, %v1896
        %v1898 = vrot.slane %v1897, 1
        %v1899 = vrot.slane %v1823, 1
        %v1900 = vsel %vm522, %v1898, %v1899
        %1903 = vmatprep.subr.bf16.mxu0 0
        %1904 = vmatpush1.bf16.msra.mxu0 %v1368
        %1905 = vmatprep.subr.bf16.mxu0 0
        %1906 = vmatpush1.bf16.msra.mxu0 %v1369
        %1907 = vmatprep.subr.bf16.mxu0 0
        %1908 = vmatpush1.bf16.msra.mxu0 %v1370
        %1909 = vmatprep.subr.bf16.mxu0 0
        %1910 = vmatpush1.bf16.msra.mxu0 %v1371
        %1911 = vmatprep.subr.bf16.mxu0 0
        %1912 = vmatpush1.bf16.msra.mxu0 %v1372
        %1913 = vmatprep.subr.bf16.mxu0 0
        %1914 = vmatpush1.bf16.msra.mxu0 %v1373
        %1915 = vmatprep.subr.bf16.mxu0 0
        %1916 = vmatpush1.bf16.msra.mxu0 %v1374
        %1917 = vmatprep.subr.bf16.mxu0 0
        %1918 = vmatpush1.bf16.msra.mxu0 %v1375
        %1919 = vmatprep.subr.bf16.mxu0 0
        %1920 = vmatpush1.bf16.msra.mxu0 0
        %1921 = vmatprep.subr.bf16.mxu0 0
        %1922 = vmatpush1.bf16.msra.mxu0 0
        %1923 = vmatprep.subr.bf16.mxu0 0
        %1924 = vmatpush1.bf16.msra.mxu0 0
        %1925 = vmatprep.subr.bf16.mxu0 0
        %1926 = vmatpush1.bf16.msra.mxu0 0
        %1927 = vmatprep.subr.bf16.mxu0 0
        %1928 = vmatpush1.bf16.msra.mxu0 0
        %1929 = vmatprep.subr.bf16.mxu0 0
        %1930 = vmatpush1.bf16.msra.mxu0 0
        %1931 = vmatprep.subr.bf16.mxu0 0
        %1932 = vmatpush1.bf16.msra.mxu0 0
        %1933 = vmatprep.subr.bf16.mxu0 0
        %1934 = vmatpush1.bf16.msra.mxu0 0
        %1935 = vmatprep.mubr.bf16.mxu0 0
        %1936 = vmatmul.mubr.bf16.gmra.mrb[0].mxu0 %v1900
        %v1937 = vpop.f32.mrb[0].mxu0
        %v1938 = vadd.f32 0.0, %v1937
        %v1939 = vpop.f32.mrb[0].mxu0
        %v1940 = vpop.f32.mrb[0].mxu0
        %v1941 = vadd.f32 0.0, %v1940
        %v1942 = vpop.f32.mrb[0].mxu0
        %1943 = vmatprep.mubr.bf16.mxu0 0
        %1944 = vmatmul.mubr.bf16.gmra.mrb[0].mxu0 %v1899
        %v1945 = vpop.f32.mrb[0].mxu0
        %v1946 = vadd.f32 0.0, %v1945
        %v1947 = vpop.f32.mrb[0].mxu0
        %v1948 = vpop.f32.mrb[0].mxu0
        %v1949 = vadd.f32 0.0, %v1948
        %v1950 = vpop.f32.mrb[0].mxu0
        %1951 = vdwg.mxu0
        %v1952 = vadd.f32 %v1890, %v1938
        %v1953 = vadd.f32 %v1891, %v1941
        %v1954 = vadd.f32 %v1892, %v1946
        %v1955 = vadd.f32 %v1893, %v1949
        %v1956 = vmax.f32 %v1433, %v1952
        %v1957 = vmax.f32 %v1434, %v1953
        %v1958 = vmax.f32 %v1435, %v1954
        %v1959 = vmax.f32 %v1436, %v1955
        %vm1960 = vcmask 228352
        %v1962 = vsel %vm1960, %v183, 0
        %v1965 = vsel %vm1960, %v184, 0
        %vm1967 = vcmask 1043456
        %v1969 = vsel %vm1967, %v1959, 0
        %1971 = vmatprep.subr.mxu0 0.0
        %1972 = vmatpush1.msra.mxu0 %v1956
        %1973 = vmatprep.subr.mxu0 0.0
        %1974 = vmatpush1.msra.mxu0 %v1957
        %1975 = vmatprep.subr.mxu0 0.0
        %1976 = vmatpush1.msra.mxu0 %v1958
        %1977 = vmatprep.subr.mxu0 0.0
        %1978 = vmatpush1.msra.mxu0 %v1969
        %1979 = vmatprep.subr.mxu0 0.0
        %1980 = vmatpush1.msra.mxu0 0.0
        %1981 = vmatprep.subr.mxu0 0.0
        %1982 = vmatpush1.msra.mxu0 0.0
        %1983 = vmatprep.subr.mxu0 0.0
        %1984 = vmatpush1.msra.mxu0 0.0
        %1985 = vmatprep.subr.mxu0 0.0
        %1986 = vmatpush1.msra.mxu0 0.0
        %1987 = vmatprep.subr.mxu0 0.0
        %1988 = vmatpush1.msra.mxu0 0.0
        %1989 = vmatprep.subr.mxu0 0.0
        %1990 = vmatpush1.msra.mxu0 0.0
        %1991 = vmatprep.subr.mxu0 0.0
        %1992 = vmatpush1.msra.mxu0 0.0
        %1993 = vmatprep.subr.mxu0 0.0
        %1994 = vmatpush1.msra.mxu0 0.0
        %1995 = vmatprep.subr.mxu0 0.0
        %1996 = vmatpush1.msra.mxu0 0.0
        %1997 = vmatprep.subr.mxu0 0.0
        %1998 = vmatpush1.msra.mxu0 0.0
        %1999 = vmatprep.subr.mxu0 0.0
        %2000 = vmatpush1.msra.mxu0 0.0
        %2001 = vmatprep.subr.mxu0 0.0
        %2002 = vmatpush1.msra.mxu0 0.0
        %2003 = vmatprep.subr.mxu0 0.0
        %2004 = vmatpush1.msra.mxu0 0.0
        %2005 = vmatprep.subr.mxu0 0.0
        %2006 = vmatpush1.msra.mxu0 0.0
        %2007 = vmatprep.subr.mxu0 0.0
        %2008 = vmatpush1.msra.mxu0 0.0
        %2009 = vmatprep.subr.mxu0 0.0
        %2010 = vmatpush1.msra.mxu0 0.0
        %2011 = vmatprep.subr.mxu0 0.0
        %2012 = vmatpush1.msra.mxu0 0.0
        %2013 = vmatprep.subr.mxu0 0.0
        %2014 = vmatpush1.msra.mxu0 0.0
        %2015 = vmatprep.subr.mxu0 0.0
        %2016 = vmatpush1.msra.mxu0 0.0
        %2017 = vmatprep.subr.mxu0 0.0
        %2018 = vmatpush1.msra.mxu0 0.0
        %2019 = vmatprep.subr.mxu0 0.0
        %2020 = vmatpush1.msra.mxu0 0.0
        %2021 = vmatprep.subr.mxu0 0.0
        %2022 = vmatpush1.msra.mxu0 0.0
        %2023 = vmatprep.subr.mxu0 0.0
        %2024 = vmatpush1.msra.mxu0 0.0
        %2025 = vmatprep.subr.mxu0 0.0
        %2026 = vmatpush1.msra.mxu0 0.0
        %2027 = vmatprep.subr.mxu0 0.0
        %2028 = vmatpush1.msra.mxu0 0.0
        %2029 = vmatprep.subr.mxu0 0.0
        %2030 = vmatpush1.msra.mxu0 0.0
        %2031 = vmatprep.subr.mxu0 0.0
        %2032 = vmatpush1.msra.mxu0 0.0
        %2033 = vmatprep.subr.mxu0 0.0
        %2034 = vmatpush1.msra.mxu0 0.0
        %2035 = vmatprep.mubr.f32.mxu0 0.0
        %2036 = vmatmul.mubr.f32.gmra.mrb[0].mxu0 %v1962
        %v2037 = vpop.f32.mrb[0].mxu0
        %v2038 = vadd.f32 0.0, %v2037
        %v2039 = vpop.f32.mrb[0].mxu0
        %2040 = vmatprep.mubr.f32.mxu0 0.0
        %2041 = vmatmul.mubr.f32.gmra.mrb[0].mxu0 %v1965
        %v2042 = vpop.f32.mrb[0].mxu0
        %v2043 = vadd.f32 0.0, %v2042
        %v2044 = vpop.f32.mrb[0].mxu0
        %2045 = vdwg.mxu0
        %v2047 = vsel %vm1960, %v191, 0
        %v2050 = vsel %vm1960, %v192, 0
        %2052 = vmatprep.subr.mxu0 0.0
        %2053 = vmatpush1.msra.mxu0 %v1956
        %2054 = vmatprep.subr.mxu0 0.0
        %2055 = vmatpush1.msra.mxu0 %v1957
        %2056 = vmatprep.subr.mxu0 0.0
        %2057 = vmatpush1.msra.mxu0 %v1958
        %2058 = vmatprep.subr.mxu0 0.0
        %2059 = vmatpush1.msra.mxu0 %v1969
        %2060 = vmatprep.subr.mxu0 0.0
        %2061 = vmatpush1.msra.mxu0 0.0
        %2062 = vmatprep.subr.mxu0 0.0
        %2063 = vmatpush1.msra.mxu0 0.0
        %2064 = vmatprep.subr.mxu0 0.0
        %2065 = vmatpush1.msra.mxu0 0.0
        %2066 = vmatprep.subr.mxu0 0.0
        %2067 = vmatpush1.msra.mxu0 0.0
        %2068 = vmatprep.subr.mxu0 0.0
        %2069 = vmatpush1.msra.mxu0 0.0
        %2070 = vmatprep.subr.mxu0 0.0
        %2071 = vmatpush1.msra.mxu0 0.0
        %2072 = vmatprep.subr.mxu0 0.0
        %2073 = vmatpush1.msra.mxu0 0.0
        %2074 = vmatprep.subr.mxu0 0.0
        %2075 = vmatpush1.msra.mxu0 0.0
        %2076 = vmatprep.subr.mxu0 0.0
        %2077 = vmatpush1.msra.mxu0 0.0
        %2078 = vmatprep.subr.mxu0 0.0
        %2079 = vmatpush1.msra.mxu0 0.0
        %2080 = vmatprep.subr.mxu0 0.0
        %2081 = vmatpush1.msra.mxu0 0.0
        %2082 = vmatprep.subr.mxu0 0.0
        %2083 = vmatpush1.msra.mxu0 0.0
        %2084 = vmatprep.subr.mxu0 0.0
        %2085 = vmatpush1.msra.mxu0 0.0
        %2086 = vmatprep.subr.mxu0 0.0
        %2087 = vmatpush1.msra.mxu0 0.0
        %2088 = vmatprep.subr.mxu0 0.0
        %2089 = vmatpush1.msra.mxu0 0.0
        %2090 = vmatprep.subr.mxu0 0.0
        %2091 = vmatpush1.msra.mxu0 0.0
        %2092 = vmatprep.subr.mxu0 0.0
        %2093 = vmatpush1.msra.mxu0 0.0
        %2094 = vmatprep.subr.mxu0 0.0
        %2095 = vmatpush1.msra.mxu0 0.0
        %2096 = vmatprep.subr.mxu0 0.0
        %2097 = vmatpush1.msra.mxu0 0.0
        %2098 = vmatprep.subr.mxu0 0.0
        %2099 = vmatpush1.msra.mxu0 0.0
        %2100 = vmatprep.subr.mxu0 0.0
        %2101 = vmatpush1.msra.mxu0 0.0
        %2102 = vmatprep.subr.mxu0 0.0
        %2103 = vmatpush1.msra.mxu0 0.0
        %2104 = vmatprep.subr.mxu0 0.0
        %2105 = vmatpush1.msra.mxu0 0.0
        %2106 = vmatprep.subr.mxu0 0.0
        %2107 = vmatpush1.msra.mxu0 0.0
        %2108 = vmatprep.subr.mxu0 0.0
        %2109 = vmatpush1.msra.mxu0 0.0
        %2110 = vmatprep.subr.mxu0 0.0
        %2111 = vmatpush1.msra.mxu0 0.0
        %2112 = vmatprep.subr.mxu0 0.0
        %2113 = vmatpush1.msra.mxu0 0.0
        %2114 = vmatprep.subr.mxu0 0.0
        %2115 = vmatpush1.msra.mxu0 0.0
        %2116 = vmatprep.mubr.f32.mxu0 0.0
        %2117 = vmatmul.mubr.f32.gmra.mrb[0].mxu0 %v2047
        %v2118 = vpop.f32.mrb[0].mxu0
        %v2119 = vadd.f32 0.0, %v2118
        %v2120 = vpop.f32.mrb[0].mxu0
        %2121 = vmatprep.mubr.f32.mxu0 0.0
        %2122 = vmatmul.mubr.f32.gmra.mrb[0].mxu0 %v2050
        %v2123 = vpop.f32.mrb[0].mxu0
        %v2124 = vadd.f32 0.0, %v2123
        %v2125 = vpop.f32.mrb[0].mxu0
        %2126 = vdwg.mxu0
        %v2127 = vmax.f32 %v2038, %v2119
        %v2128 = vmax.f32 %v2043, %v2124
        %v2130 = vlaneseq
        %v2131 = vshrl.u32 %v2130, 7
        %v2132 = vsub.s32 0, %v2131
        %v2133 = vrot.slane %v193, %v2132
        %v2135 = vadd.f32 %v2127, %v2133
        %v2136 = vadd.f32 %v2128, %v2133
        %v2137 = vmax.f32 %v2135, 0.0
        %v2138 = vmax.f32 %v2136, 0.0
        %v2139 = vpack.c.bf16 %v2138, %v2137
        %s2140 = sadd.s32 %s227, 1
        %v2142 = vunpack.c.l.b16 %v2139
        %v2143 = vunpack.c.h.b16 %v2139
        %v2144 = vpack.c.b16 %v2142, %v2142
        %v2145 = vpack.c.b16 %v2143, %v2143
        %vm2146 = vsmask.f32 256
        %vm2147 = vsmask.f32 4368
        %vm2148 = vmor %vm2146, %vm2147
        %v2150 = vshrl.u32 %v2144, 16
        %v2152 = vrot.slane %v2150, 7
        %v2153 = vshll.u32 %v2144, 16
        %v2155 = vor.u32 %v2152, %v2153
        %v2156 = vrot.slane %v2152, 4
        %v2158 = vshrl.u32 %v2145, 16
        %v2160 = vrot.slane %v2158, 7
        %v2161 = vshll.u32 %v2145, 16
        %v2163 = vor.u32 %v2160, %v2161
        %v2164 = vsel %vm2148, %v2156, %v2163
        %s2167 = smul.u32 %s2140, 2
        %s2168 = smul.addr %s2167, 4
        %s2169 = scalar_lea.vmem %s170, %s2168
        %vm2170 = vcmask 1043456
        %vm2171 = vsmask.f32 7938
        %vm2172 = vmand %vm2170, %vm2171
        %v2173 = vld [vmem:[%s2169] sm:$0xf]
        %v2174 = vsel %vm2172, %v2155, %v2173
        %2175 = vst [vmem:[%s2169] sm:$0xf] %v2174
        %vm2176 = vsmask.f32 3328
        %vm2177 = vmand %vm2170, %vm2176
        %v2178 = vld [vmem:[%s2169 + $0x4] sm:$0xf]
        %v2179 = vsel %vm2177, %v2164, %v2178
        %2180 = vst [vmem:[%s2169 + $0x4] sm:$0xf] %v2179
      $region37: #{convnet_forward.4} parent=31 // loop_footer
        %s231 = sadd.s32 1, %s227
      $region38: #{convnet_forward.4} parent=31 // loop_footer_branch
        %226 = sbr.rel target = $region34
      $region39: #{convnet_forward.4} parent=31 // loop_exit
        _
      %p2181 = scmp.lt.s32.totalorder %s14, 1
      %s2182 = scalar_select %p2181, %s14, 1
      %s2183 = smul.addr %s2182, 32
      %s2184 = smul.addr %s2183, 4
      %s2185 = scalar_lea.vmem %s3, %s2184
      // Predicated region
      $region40: #{convnet_forward.4} parent=31 // pred_check
        %p2186 = pneg %p100
      $region41: #{convnet_forward.4} parent=31 // pred_check_branch
        %2188 = sbr.rel (%p2186) target = $region43
      $region42: #{convnet_forward.4} parent=31 // pred_region
        _
      $region43: #{convnet_forward.4} parent=31 // pred_fallthru
        _
    $region32: #{convnet_forward.4} parent=5 // pred_fallthru
      _
    %p2189 = scmp.le.s32.totalorder 2, %s9
    // Predicated region
    $region44: #{convnet_forward.4} parent=5 // pred_check
      %p2190 = pneg %p2189
    $region45: #{convnet_forward.4} parent=5 // pred_check_branch
      %2192 = sbr.rel (%p2190) target = $region47
    $region46: #{convnet_forward.4} parent=5 // pred_region
      %s2193 = ssub.s32 %s9, 2
      // Predicated region
      $region48: #{convnet_forward.4} parent=46 // pred_check
        %p2194 = pneg %p106
      $region49: #{convnet_forward.4} parent=46 // pred_check_branch
        %2196 = sbr.rel (%p2194) target = $region51
      $region50: #{convnet_forward.4} parent=46 // pred_region
        %p2197 = scmp.lt.s32.totalorder %s15, 1
        %s2198 = scalar_select %p2197, %s15, 1
        %s2199 = smul.addr %s2198, 32
        %s2200 = smul.addr %s2199, 4
        %s2201 = scalar_lea.vmem %s3, %s2200
      $region51: #{convnet_forward.4} parent=46 // pred_fallthru
        _
    $region47: #{convnet_forward.4} parent=5 // pred_fallthru
      _
  $region6: #{convnet_forward.4} parent=0 // loop_footer
    %s13 = sadd.s32 1, %s9
  $region7: #{convnet_forward.4} parent=0 // loop_footer_branch
    %8 = sbr.rel target = $region3
  $region8: #{convnet_forward.4} parent=0 // loop_exit
    _

// kernel: convnet_forward.7
$region0: #{convnet_forward.7}
  #allocation0 [shape = 'u32[]', space=smem, size = 0x4, offset = 0x4, fixed_abs, tag = 'smem constant byte address 0x4 - core index']
  #allocation1 [shape = 'u32[144,128]{1,0:T(1,128)}', space=vmem, size = 0x12000, scoped, tag = 'internal scratch']
  %s0 = inlined_call_operand.vmem [shape: bf16[8,1152], index: 0, kind: input, shape index: {}]
  %s1 = inlined_call_operand.vmem [shape: bf16[1152,128], index: 1, kind: input, shape index: {}]
  %s2 = inlined_call_operand.vmem [shape: f32[1,128], index: 2, kind: input, shape index: {}]
  %s3 = inlined_call_operand.vmem [shape: bf16[128,128], index: 3, kind: input, shape index: {}]
  %s4 = inlined_call_operand.vmem [shape: f32[1,128], index: 4, kind: input, shape index: {}]
  %s5 = inlined_call_operand.vmem [shape: f32[8,128], index: 5, kind: output, shape index: {}]
  %s6 = sld [smem:[#allocation0]]
  $region30: #{convnet_forward.7} parent=0
    _
  %s8 = ssub.s32 1, %s6
  %s9 = scalar_select 0, %s8, %s6
  // Predicated region
  $region2: #{convnet_forward.7} parent=0 // pred_check
    _
  $region3: #{convnet_forward.7} parent=0 // pred_check_branch
    %11 = sbr.rel (0) target = $region5
  $region4: #{convnet_forward.7} parent=0 // pred_region
    _
  $region5: #{convnet_forward.7} parent=0 // pred_fallthru
    _
  // Predicated region
  $region6: #{convnet_forward.7} parent=0 // pred_check
    _
  $region7: #{convnet_forward.7} parent=0 // pred_check_branch
    %13 = sbr.rel (0) target = $region9
  $region8: #{convnet_forward.7} parent=0 // pred_region
    _
  $region9: #{convnet_forward.7} parent=0 // pred_fallthru
    _
  // Predicated region
  $region10: #{convnet_forward.7} parent=0 // pred_check
    _
  $region11: #{convnet_forward.7} parent=0 // pred_check_branch
    %15 = sbr.rel (0) target = $region13
  $region12: #{convnet_forward.7} parent=0 // pred_region
    _
  $region13: #{convnet_forward.7} parent=0 // pred_fallthru
    _
  // Predicated region
  $region14: #{convnet_forward.7} parent=0 // pred_check
    _
  $region15: #{convnet_forward.7} parent=0 // pred_check_branch
    %17 = sbr.rel (0) target = $region17
  $region16: #{convnet_forward.7} parent=0 // pred_region
    _
  $region17: #{convnet_forward.7} parent=0 // pred_fallthru
    _
  // Predicated region
  $region18: #{convnet_forward.7} parent=0 // pred_check
    _
  $region19: #{convnet_forward.7} parent=0 // pred_check_branch
    %19 = sbr.rel (0) target = $region21
  $region20: #{convnet_forward.7} parent=0 // pred_region
    _
  $region21: #{convnet_forward.7} parent=0 // pred_fallthru
    _
  %v21 = vld [vmem:[%s0] sm:$0xff]
  %v22 = vld [vmem:[%s0 + $0x8] sm:$0xff]
  %v23 = vld [vmem:[%s0 + $0x10] sm:$0xff]
  %v24 = vld [vmem:[%s0 + $0x18] sm:$0xff]
  %v25 = vld [vmem:[%s0 + $0x20] sm:$0xf]
  %v26 = vld [vmem:[%s1] sm:$0xf]
  %v27 = vld [vmem:[%s1 + $0x4] sm:$0xf]
  %v28 = vld [vmem:[%s1 + $0x8] sm:$0xf]
  %v29 = vld [vmem:[%s1 + $0xc] sm:$0xf]
  %v30 = vld [vmem:[%s1 + $0x10] sm:$0xf]
  %v31 = vld [vmem:[%s1 + $0x14] sm:$0xf]
  %v32 = vld [vmem:[%s1 + $0x18] sm:$0xf]
  %v33 = vld [vmem:[%s1 + $0x1c] sm:$0xf]
  %v34 = vld [vmem:[%s1 + $0x20] sm:$0xf]
  %v35 = vld [vmem:[%s1 + $0x24] sm:$0xf]
  %v36 = vld [vmem:[%s1 + $0x28] sm:$0xf]
  %v37 = vld [vmem:[%s1 + $0x2c] sm:$0xf]
  %v38 = vld [vmem:[%s1 + $0x30] sm:$0xf]
  %v39 = vld [vmem:[%s1 + $0x34] sm:$0xf]
  %v40 = vld [vmem:[%s1 + $0x38] sm:$0xf]
  %v41 = vld [vmem:[%s1 + $0x3c] sm:$0xf]
  %v42 = vld [vmem:[%s1 + $0x40] sm:$0xf]
  %v43 = vld [vmem:[%s1 + $0x44] sm:$0xf]
  %v44 = vld [vmem:[%s1 + $0x48] sm:$0xf]
  %v45 = vld [vmem:[%s1 + $0x4c] sm:$0xf]
  %v46 = vld [vmem:[%s1 + $0x50] sm:$0xf]
  %v47 = vld [vmem:[%s1 + $0x54] sm:$0xf]
  %v48 = vld [vmem:[%s1 + $0x58] sm:$0xf]
  %v49 = vld [vmem:[%s1 + $0x5c] sm:$0xf]
  %v50 = vld [vmem:[%s1 + $0x60] sm:$0xf]
  %v51 = vld [vmem:[%s1 + $0x64] sm:$0xf]
  %v52 = vld [vmem:[%s1 + $0x68] sm:$0xf]
  %v53 = vld [vmem:[%s1 + $0x6c] sm:$0xf]
  %v54 = vld [vmem:[%s1 + $0x70] sm:$0xf]
  %v55 = vld [vmem:[%s1 + $0x74] sm:$0xf]
  %v56 = vld [vmem:[%s1 + $0x78] sm:$0xf]
  %v57 = vld [vmem:[%s1 + $0x7c] sm:$0xf]
  %v58 = vld [vmem:[%s1 + $0x80] sm:$0xf]
  %v59 = vld [vmem:[%s1 + $0x84] sm:$0xf]
  %v60 = vld [vmem:[%s1 + $0x88] sm:$0xf]
  %v61 = vld [vmem:[%s1 + $0x8c] sm:$0xf]
  %v62 = vld [vmem:[%s1 + $0x90] sm:$0xf]
  %v63 = vld [vmem:[%s1 + $0x94] sm:$0xf]
  %v64 = vld [vmem:[%s1 + $0x98] sm:$0xf]
  %v65 = vld [vmem:[%s1 + $0x9c] sm:$0xf]
  %v66 = vld [vmem:[%s1 + $0xa0] sm:$0xf]
  %v67 = vld [vmem:[%s1 + $0xa4] sm:$0xf]
  %v68 = vld [vmem:[%s1 + $0xa8] sm:$0xf]
  %v69 = vld [vmem:[%s1 + $0xac] sm:$0xf]
  %v70 = vld [vmem:[%s1 + $0xb0] sm:$0xf]
  %v71 = vld [vmem:[%s1 + $0xb4] sm:$0xf]
  %v72 = vld [vmem:[%s1 + $0xb8] sm:$0xf]
  %v73 = vld [vmem:[%s1 + $0xbc] sm:$0xf]
  %v74 = vld [vmem:[%s1 + $0xc0] sm:$0xf]
  %v75 = vld [vmem:[%s1 + $0xc4] sm:$0xf]
  %v76 = vld [vmem:[%s1 + $0xc8] sm:$0xf]
  %v77 = vld [vmem:[%s1 + $0xcc] sm:$0xf]
  %v78 = vld [vmem:[%s1 + $0xd0] sm:$0xf]
  %v79 = vld [vmem:[%s1 + $0xd4] sm:$0xf]
  %v80 = vld [vmem:[%s1 + $0xd8] sm:$0xf]
  %v81 = vld [vmem:[%s1 + $0xdc] sm:$0xf]
  %v82 = vld [vmem:[%s1 + $0xe0] sm:$0xf]
  %v83 = vld [vmem:[%s1 + $0xe4] sm:$0xf]
  %v84 = vld [vmem:[%s1 + $0xe8] sm:$0xf]
  %v85 = vld [vmem:[%s1 + $0xec] sm:$0xf]
  %v86 = vld [vmem:[%s1 + $0xf0] sm:$0xf]
  %v87 = vld [vmem:[%s1 + $0xf4] sm:$0xf]
  %v88 = vld [vmem:[%s1 + $0xf8] sm:$0xf]
  %v89 = vld [vmem:[%s1 + $0xfc] sm:$0xf]
  %v90 = vld [vmem:[%s1 + $0x100] sm:$0xf]
  %v91 = vld [vmem:[%s1 + $0x104] sm:$0xf]
  %v92 = vld [vmem:[%s1 + $0x108] sm:$0xf]
  %v93 = vld [vmem:[%s1 + $0x10c] sm:$0xf]
  %v94 = vld [vmem:[%s1 + $0x110] sm:$0xf]
  %v95 = vld [vmem:[%s1 + $0x114] sm:$0xf]
  %v96 = vld [vmem:[%s1 + $0x118] sm:$0xf]
  %v97 = vld [vmem:[%s1 + $0x11c] sm:$0xf]
  %v98 = vld [vmem:[%s1 + $0x120] sm:$0xf]
  %v99 = vld [vmem:[%s1 + $0x124] sm:$0xf]
  %v100 = vld [vmem:[%s1 + $0x128] sm:$0xf]
  %v101 = vld [vmem:[%s1 + $0x12c] sm:$0xf]
  %v102 = vld [vmem:[%s1 + $0x130] sm:$0xf]
  %v103 = vld [vmem:[%s1 + $0x134] sm:$0xf]
  %v104 = vld [vmem:[%s1 + $0x138] sm:$0xf]
  %v105 = vld [vmem:[%s1 + $0x13c] sm:$0xf]
  %v106 = vld [vmem:[%s1 + $0x140] sm:$0xf]
  %v107 = vld [vmem:[%s1 + $0x144] sm:$0xf]
  %v108 = vld [vmem:[%s1 + $0x148] sm:$0xf]
  %v109 = vld [vmem:[%s1 + $0x14c] sm:$0xf]
  %v110 = vld [vmem:[%s1 + $0x150] sm:$0xf]
  %v111 = vld [vmem:[%s1 + $0x154] sm:$0xf]
  %v112 = vld [vmem:[%s1 + $0x158] sm:$0xf]
  %v113 = vld [vmem:[%s1 + $0x15c] sm:$0xf]
  %v114 = vld [vmem:[%s1 + $0x160] sm:$0xf]
  %v115 = vld [vmem:[%s1 + $0x164] sm:$0xf]
  %v116 = vld [vmem:[%s1 + $0x168] sm:$0xf]
  %v117 = vld [vmem:[%s1 + $0x16c] sm:$0xf]
  %v118 = vld [vmem:[%s1 + $0x170] sm:$0xf]
  %v119 = vld [vmem:[%s1 + $0x174] sm:$0xf]
  %v120 = vld [vmem:[%s1 + $0x178] sm:$0xf]
  %v121 = vld [vmem:[%s1 + $0x17c] sm:$0xf]
  %v122 = vld [vmem:[%s1 + $0x180] sm:$0xf]
  %v123 = vld [vmem:[%s1 + $0x184] sm:$0xf]
  %v124 = vld [vmem:[%s1 + $0x188] sm:$0xf]
  %v125 = vld [vmem:[%s1 + $0x18c] sm:$0xf]
  %v126 = vld [vmem:[%s1 + $0x190] sm:$0xf]
  %v127 = vld [vmem:[%s1 + $0x194] sm:$0xf]
  %v128 = vld [vmem:[%s1 + $0x198] sm:$0xf]
  %v129 = vld [vmem:[%s1 + $0x19c] sm:$0xf]
  %v130 = vld [vmem:[%s1 + $0x1a0] sm:$0xf]
  %v131 = vld [vmem:[%s1 + $0x1a4] sm:$0xf]
  %v132 = vld [vmem:[%s1 + $0x1a8] sm:$0xf]
  %v133 = vld [vmem:[%s1 + $0x1ac] sm:$0xf]
  %v134 = vld [vmem:[%s1 + $0x1b0] sm:$0xf]
  %v135 = vld [vmem:[%s1 + $0x1b4] sm:$0xf]
  %v136 = vld [vmem:[%s1 + $0x1b8] sm:$0xf]
  %v137 = vld [vmem:[%s1 + $0x1bc] sm:$0xf]
  %v138 = vld [vmem:[%s1 + $0x1c0] sm:$0xf]
  %v139 = vld [vmem:[%s1 + $0x1c4] sm:$0xf]
  %v140 = vld [vmem:[%s1 + $0x1c8] sm:$0xf]
  %v141 = vld [vmem:[%s1 + $0x1cc] sm:$0xf]
  %v142 = vld [vmem:[%s1 + $0x1d0] sm:$0xf]
  %v143 = vld [vmem:[%s1 + $0x1d4] sm:$0xf]
  %v144 = vld [vmem:[%s1 + $0x1d8] sm:$0xf]
  %v145 = vld [vmem:[%s1 + $0x1dc] sm:$0xf]
  %v146 = vld [vmem:[%s1 + $0x1e0] sm:$0xf]
  %v147 = vld [vmem:[%s1 + $0x1e4] sm:$0xf]
  %v148 = vld [vmem:[%s1 + $0x1e8] sm:$0xf]
  %v149 = vld [vmem:[%s1 + $0x1ec] sm:$0xf]
  %v150 = vld [vmem:[%s1 + $0x1f0] sm:$0xf]
  %v151 = vld [vmem:[%s1 + $0x1f4] sm:$0xf]
  %v152 = vld [vmem:[%s1 + $0x1f8] sm:$0xf]
  %v153 = vld [vmem:[%s1 + $0x1fc] sm:$0xf]
  %v154 = vld [vmem:[%s1 + $0x200] sm:$0xf]
  %v155 = vld [vmem:[%s1 + $0x204] sm:$0xf]
  %v156 = vld [vmem:[%s1 + $0x208] sm:$0xf]
  %v157 = vld [vmem:[%s1 + $0x20c] sm:$0xf]
  %v158 = vld [vmem:[%s1 + $0x210] sm:$0xf]
  %v159 = vld [vmem:[%s1 + $0x214] sm:$0xf]
  %v160 = vld [vmem:[%s1 + $0x218] sm:$0xf]
  %v161 = vld [vmem:[%s1 + $0x21c] sm:$0xf]
  %v162 = vld [vmem:[%s1 + $0x220] sm:$0xf]
  %v163 = vld [vmem:[%s1 + $0x224] sm:$0xf]
  %v164 = vld [vmem:[%s1 + $0x228] sm:$0xf]
  %v165 = vld [vmem:[%s1 + $0x22c] sm:$0xf]
  %v166 = vld [vmem:[%s1 + $0x230] sm:$0xf]
  %v167 = vld [vmem:[%s1 + $0x234] sm:$0xf]
  %v168 = vld [vmem:[%s1 + $0x238] sm:$0xf]
  %v169 = vld [vmem:[%s1 + $0x23c] sm:$0xf]
  %v170 = vld [vmem:[%s2] sm:$0x1]
  %v172 = vlaneseq
  %v173 = vshrl.u32 %v172, 7
  %v174 = vsub.s32 0, %v173
  %v175 = vrot.slane %v170, %v174
  %v182 = vunpack.c.l.b16 %v21
  %v183 = vunpack.c.h.b16 %v21
  %v184 = vunpack.c.l.b16 %v22
  %v185 = vunpack.c.h.b16 %v22
  %v186 = vunpack.c.l.b16 %v23
  %v187 = vunpack.c.h.b16 %v23
  %v188 = vunpack.c.l.b16 %v24
  %v189 = vunpack.c.h.b16 %v24
  %v190 = vunpack.c.l.b16 %v25
  %v191 = vpack.c.b16 %v182, %v182
  %v192 = vpack.c.b16 %v183, %v183
  %v193 = vpack.c.b16 %v184, %v184
  %v194 = vpack.c.b16 %v185, %v185
  %v195 = vpack.c.b16 %v186, %v186
  %v196 = vpack.c.b16 %v187, %v187
  %v197 = vpack.c.b16 %v188, %v188
  %v198 = vpack.c.b16 %v189, %v189
  %v199 = vpack.c.b16 %v190, %v190
  %v353 = vunpack.c.l.b16 %v26
  %v354 = vunpack.c.l.b16 %v27
  %v355 = vunpack.c.l.b16 %v28
  %v356 = vunpack.c.l.b16 %v29
  %v357 = vunpack.c.l.b16 %v30
  %v358 = vunpack.c.l.b16 %v31
  %v359 = vunpack.c.l.b16 %v32
  %v360 = vunpack.c.l.b16 %v33
  %v361 = vunpack.c.l.b16 %v34
  %v362 = vunpack.c.l.b16 %v35
  %v363 = vunpack.c.l.b16 %v36
  %v364 = vunpack.c.l.b16 %v37
  %v365 = vunpack.c.l.b16 %v38
  %v366 = vunpack.c.l.b16 %v39
  %v367 = vunpack.c.l.b16 %v40
  %v368 = vunpack.c.l.b16 %v41
  %v369 = vunpack.c.l.b16 %v42
  %v370 = vunpack.c.l.b16 %v43
  %v371 = vunpack.c.l.b16 %v44
  %v372 = vunpack.c.l.b16 %v45
  %v373 = vunpack.c.l.b16 %v46
  %v374 = vunpack.c.l.b16 %v47
  %v375 = vunpack.c.l.b16 %v48
  %v376 = vunpack.c.l.b16 %v49
  %v377 = vunpack.c.l.b16 %v50
  %v378 = vunpack.c.l.b16 %v51
  %v379 = vunpack.c.l.b16 %v52
  %v380 = vunpack.c.l.b16 %v53
  %v381 = vunpack.c.l.b16 %v54
  %v382 = vunpack.c.l.b16 %v55
  %v383 = vunpack.c.l.b16 %v56
  %v384 = vunpack.c.l.b16 %v57
  %v385 = vunpack.c.l.b16 %v58
  %v386 = vunpack.c.l.b16 %v59
  %v387 = vunpack.c.l.b16 %v60
  %v388 = vunpack.c.l.b16 %v61
  %v389 = vunpack.c.l.b16 %v62
  %v390 = vunpack.c.l.b16 %v63
  %v391 = vunpack.c.l.b16 %v64
  %v392 = vunpack.c.l.b16 %v65
  %v393 = vunpack.c.l.b16 %v66
  %v394 = vunpack.c.l.b16 %v67
  %v395 = vunpack.c.l.b16 %v68
  %v396 = vunpack.c.l.b16 %v69
  %v397 = vunpack.c.l.b16 %v70
  %v398 = vunpack.c.l.b16 %v71
  %v399 = vunpack.c.l.b16 %v72
  %v400 = vunpack.c.l.b16 %v73
  %v401 = vunpack.c.l.b16 %v74
  %v402 = vunpack.c.l.b16 %v75
  %v403 = vunpack.c.l.b16 %v76
  %v404 = vunpack.c.l.b16 %v77
  %v405 = vunpack.c.l.b16 %v78
  %v406 = vunpack.c.l.b16 %v79
  %v407 = vunpack.c.l.b16 %v80
  %v408 = vunpack.c.l.b16 %v81
  %v409 = vunpack.c.l.b16 %v82
  %v410 = vunpack.c.l.b16 %v83
  %v411 = vunpack.c.l.b16 %v84
  %v412 = vunpack.c.l.b16 %v85
  %v413 = vunpack.c.l.b16 %v86
  %v414 = vunpack.c.l.b16 %v87
  %v415 = vunpack.c.l.b16 %v88
  %v416 = vunpack.c.l.b16 %v89
  %v417 = vunpack.c.l.b16 %v90
  %v418 = vunpack.c.l.b16 %v91
  %v419 = vunpack.c.l.b16 %v92
  %v420 = vunpack.c.l.b16 %v93
  %v421 = vunpack.c.l.b16 %v94
  %v422 = vunpack.c.l.b16 %v95
  %v423 = vunpack.c.l.b16 %v96
  %v424 = vunpack.c.l.b16 %v97
  %v425 = vunpack.c.l.b16 %v98
  %v426 = vunpack.c.l.b16 %v99
  %v427 = vunpack.c.l.b16 %v100
  %v428 = vunpack.c.l.b16 %v101
  %v429 = vunpack.c.l.b16 %v102
  %v430 = vunpack.c.l.b16 %v103
  %v431 = vunpack.c.l.b16 %v104
  %v432 = vunpack.c.l.b16 %v105
  %v433 = vunpack.c.l.b16 %v106
  %v434 = vunpack.c.l.b16 %v107
  %v435 = vunpack.c.l.b16 %v108
  %v436 = vunpack.c.l.b16 %v109
  %v437 = vunpack.c.l.b16 %v110
  %v438 = vunpack.c.l.b16 %v111
  %v439 = vunpack.c.l.b16 %v112
  %v440 = vunpack.c.l.b16 %v113
  %v441 = vunpack.c.l.b16 %v114
  %v442 = vunpack.c.l.b16 %v115
  %v443 = vunpack.c.l.b16 %v116
  %v444 = vunpack.c.l.b16 %v117
  %v445 = vunpack.c.l.b16 %v118
  %v446 = vunpack.c.l.b16 %v119
  %v447 = vunpack.c.l.b16 %v120
  %v448 = vunpack.c.l.b16 %v121
  %v449 = vunpack.c.l.b16 %v122
  %v450 = vunpack.c.l.b16 %v123
  %v451 = vunpack.c.l.b16 %v124
  %v452 = vunpack.c.l.b16 %v125
  %v453 = vunpack.c.l.b16 %v126
  %v454 = vunpack.c.l.b16 %v127
  %v455 = vunpack.c.l.b16 %v128
  %v456 = vunpack.c.l.b16 %v129
  %v457 = vunpack.c.l.b16 %v130
  %v458 = vunpack.c.l.b16 %v131
  %v459 = vunpack.c.l.b16 %v132
  %v460 = vunpack.c.l.b16 %v133
  %v461 = vunpack.c.l.b16 %v134
  %v462 = vunpack.c.l.b16 %v135
  %v463 = vunpack.c.l.b16 %v136
  %v464 = vunpack.c.l.b16 %v137
  %v465 = vunpack.c.l.b16 %v138
  %v466 = vunpack.c.l.b16 %v139
  %v467 = vunpack.c.l.b16 %v140
  %v468 = vunpack.c.l.b16 %v141
  %v469 = vunpack.c.l.b16 %v142
  %v470 = vunpack.c.l.b16 %v143
  %v471 = vunpack.c.l.b16 %v144
  %v472 = vunpack.c.l.b16 %v145
  %v473 = vunpack.c.l.b16 %v146
  %v474 = vunpack.c.l.b16 %v147
  %v475 = vunpack.c.l.b16 %v148
  %v476 = vunpack.c.l.b16 %v149
  %v477 = vunpack.c.l.b16 %v150
  %v478 = vunpack.c.l.b16 %v151
  %v479 = vunpack.c.l.b16 %v152
  %v480 = vunpack.c.l.b16 %v153
  %v481 = vunpack.c.l.b16 %v154
  %v482 = vunpack.c.l.b16 %v155
  %v483 = vunpack.c.l.b16 %v156
  %v484 = vunpack.c.l.b16 %v157
  %v485 = vunpack.c.l.b16 %v158
  %v486 = vunpack.c.l.b16 %v159
  %v487 = vunpack.c.l.b16 %v160
  %v488 = vunpack.c.l.b16 %v161
  %v489 = vunpack.c.l.b16 %v162
  %v490 = vunpack.c.l.b16 %v163
  %v491 = vunpack.c.l.b16 %v164
  %v492 = vunpack.c.l.b16 %v165
  %v493 = vunpack.c.l.b16 %v166
  %v494 = vunpack.c.l.b16 %v167
  %v495 = vunpack.c.l.b16 %v168
  %v496 = vunpack.c.l.b16 %v169
  %v497 = vpack.c.b16 %v354, %v353
  %v498 = vpack.c.b16 %v356, %v355
  %v499 = vpack.c.b16 %v358, %v357
  %v500 = vpack.c.b16 %v360, %v359
  %v501 = vpack.c.b16 %v362, %v361
  %v502 = vpack.c.b16 %v364, %v363
  %v503 = vpack.c.b16 %v366, %v365
  %v504 = vpack.c.b16 %v368, %v367
  %v505 = vpack.c.b16 %v370, %v369
  %v506 = vpack.c.b16 %v372, %v371
  %v507 = vpack.c.b16 %v374, %v373
  %v508 = vpack.c.b16 %v376, %v375
  %v509 = vpack.c.b16 %v378, %v377
  %v510 = vpack.c.b16 %v380, %v379
  %v511 = vpack.c.b16 %v382, %v381
  %v512 = vpack.c.b16 %v384, %v383
  %v513 = vpack.c.b16 %v386, %v385
  %v514 = vpack.c.b16 %v388, %v387
  %v515 = vpack.c.b16 %v390, %v389
  %v516 = vpack.c.b16 %v392, %v391
  %v517 = vpack.c.b16 %v394, %v393
  %v518 = vpack.c.b16 %v396, %v395
  %v519 = vpack.c.b16 %v398, %v397
  %v520 = vpack.c.b16 %v400, %v399
  %v521 = vpack.c.b16 %v402, %v401
  %v522 = vpack.c.b16 %v404, %v403
  %v523 = vpack.c.b16 %v406, %v405
  %v524 = vpack.c.b16 %v408, %v407
  %v525 = vpack.c.b16 %v410, %v409
  %v526 = vpack.c.b16 %v412, %v411
  %v527 = vpack.c.b16 %v414, %v413
  %v528 = vpack.c.b16 %v416, %v415
  %v529 = vpack.c.b16 %v418, %v417
  %v530 = vpack.c.b16 %v420, %v419
  %v531 = vpack.c.b16 %v422, %v421
  %v532 = vpack.c.b16 %v424, %v423
  %v533 = vpack.c.b16 %v426, %v425
  %v534 = vpack.c.b16 %v428, %v427
  %v535 = vpack.c.b16 %v430, %v429
  %v536 = vpack.c.b16 %v432, %v431
  %v537 = vpack.c.b16 %v434, %v433
  %v538 = vpack.c.b16 %v436, %v435
  %v539 = vpack.c.b16 %v438, %v437
  %v540 = vpack.c.b16 %v440, %v439
  %v541 = vpack.c.b16 %v442, %v441
  %v542 = vpack.c.b16 %v444, %v443
  %v543 = vpack.c.b16 %v446, %v445
  %v544 = vpack.c.b16 %v448, %v447
  %v545 = vpack.c.b16 %v450, %v449
  %v546 = vpack.c.b16 %v452, %v451
  %v547 = vpack.c.b16 %v454, %v453
  %v548 = vpack.c.b16 %v456, %v455
  %v549 = vpack.c.b16 %v458, %v457
  %v550 = vpack.c.b16 %v460, %v459
  %v551 = vpack.c.b16 %v462, %v461
  %v552 = vpack.c.b16 %v464, %v463
  %v553 = vpack.c.b16 %v466, %v465
  %v554 = vpack.c.b16 %v468, %v467
  %v555 = vpack.c.b16 %v470, %v469
  %v556 = vpack.c.b16 %v472, %v471
  %v557 = vpack.c.b16 %v474, %v473
  %v558 = vpack.c.b16 %v476, %v475
  %v559 = vpack.c.b16 %v478, %v477
  %v560 = vpack.c.b16 %v480, %v479
  %v561 = vpack.c.b16 %v482, %v481
  %v562 = vpack.c.b16 %v484, %v483
  %v563 = vpack.c.b16 %v486, %v485
  %v564 = vpack.c.b16 %v488, %v487
  %v565 = vpack.c.b16 %v490, %v489
  %v566 = vpack.c.b16 %v492, %v491
  %v567 = vpack.c.b16 %v494, %v493
  %v568 = vpack.c.b16 %v496, %v495
  %641 = vmatprep.subr.bf16.mxu0 0
  %642 = vmatpush1.bf16.msra.mxu0 %v497
  %643 = vmatprep.subr.bf16.mxu0 0
  %644 = vmatpush1.bf16.msra.mxu0 %v498
  %645 = vmatprep.subr.bf16.mxu0 0
  %646 = vmatpush1.bf16.msra.mxu0 %v499
  %647 = vmatprep.subr.bf16.mxu0 0
  %648 = vmatpush1.bf16.msra.mxu0 %v500
  %649 = vmatprep.subr.bf16.mxu0 0
  %650 = vmatpush1.bf16.msra.mxu0 %v501
  %651 = vmatprep.subr.bf16.mxu0 0
  %652 = vmatpush1.bf16.msra.mxu0 %v502
  %653 = vmatprep.subr.bf16.mxu0 0
  %654 = vmatpush1.bf16.msra.mxu0 %v503
  %655 = vmatprep.subr.bf16.mxu0 0
  %656 = vmatpush1.bf16.msra.mxu0 %v504
  %657 = vmatprep.subr.bf16.mxu0 0
  %658 = vmatpush1.bf16.msra.mxu0 %v505
  %659 = vmatprep.subr.bf16.mxu0 0
  %660 = vmatpush1.bf16.msra.mxu0 %v506
  %661 = vmatprep.subr.bf16.mxu0 0
  %662 = vmatpush1.bf16.msra.mxu0 %v507
  %663 = vmatprep.subr.bf16.mxu0 0
  %664 = vmatpush1.bf16.msra.mxu0 %v508
  %665 = vmatprep.subr.bf16.mxu0 0
  %666 = vmatpush1.bf16.msra.mxu0 %v509
  %667 = vmatprep.subr.bf16.mxu0 0
  %668 = vmatpush1.bf16.msra.mxu0 %v510
  %669 = vmatprep.subr.bf16.mxu0 0
  %670 = vmatpush1.bf16.msra.mxu0 %v511
  %671 = vmatprep.subr.bf16.mxu0 0
  %672 = vmatpush1.bf16.msra.mxu0 %v512
  %673 = vmatprep.mubr.bf16.mxu0 %v192
  %674 = vmatmul.mubr.bf16.gmra.mrb[0].mxu0 %v191
  %v675 = vpop.f32.mrb[0].mxu0
  %v676 = vadd.f32 %v175, %v675
  %v677 = vpop.f32.mrb[0].mxu0
  %v678 = vpop.f32.mrb[0].mxu0
  %v679 = vpop.f32.mrb[0].mxu0
  %680 = vdwg.mxu0
  %681 = vmatprep.subr.bf16.mxu0 0
  %682 = vmatpush1.bf16.msra.mxu0 %v513
  %683 = vmatprep.subr.bf16.mxu0 0
  %684 = vmatpush1.bf16.msra.mxu0 %v514
  %685 = vmatprep.subr.bf16.mxu0 0
  %686 = vmatpush1.bf16.msra.mxu0 %v515
  %687 = vmatprep.subr.bf16.mxu0 0
  %688 = vmatpush1.bf16.msra.mxu0 %v516
  %689 = vmatprep.subr.bf16.mxu0 0
  %690 = vmatpush1.bf16.msra.mxu0 %v517
  %691 = vmatprep.subr.bf16.mxu0 0
  %692 = vmatpush1.bf16.msra.mxu0 %v518
  %693 = vmatprep.subr.bf16.mxu0 0
  %694 = vmatpush1.bf16.msra.mxu0 %v519
  %695 = vmatprep.subr.bf16.mxu0 0
  %696 = vmatpush1.bf16.msra.mxu0 %v520
  %697 = vmatprep.subr.bf16.mxu0 0
  %698 = vmatpush1.bf16.msra.mxu0 %v521
  %699 = vmatprep.subr.bf16.mxu0 0
  %700 = vmatpush1.bf16.msra.mxu0 %v522
  %701 = vmatprep.subr.bf16.mxu0 0
  %702 = vmatpush1.bf16.msra.mxu0 %v523
  %703 = vmatprep.subr.bf16.mxu0 0
  %704 = vmatpush1.bf16.msra.mxu0 %v524
  %705 = vmatprep.subr.bf16.mxu0 0
  %706 = vmatpush1.bf16.msra.mxu0 %v525
  %707 = vmatprep.subr.bf16.mxu0 0
  %708 = vmatpush1.bf16.msra.mxu0 %v526
  %709 = vmatprep.subr.bf16.mxu0 0
  %710 = vmatpush1.bf16.msra.mxu0 %v527
  %711 = vmatprep.subr.bf16.mxu0 0
  %712 = vmatpush1.bf16.msra.mxu0 %v528
  %713 = vmatprep.mubr.bf16.mxu0 %v194
  %714 = vmatmul.mubr.bf16.gmra.mrb[0].mxu0 %v193
  %v715 = vpop.f32.mrb[0].mxu0
  %v716 = vadd.f32 %v676, %v715
  %v717 = vpop.f32.mrb[0].mxu0
  %v718 = vpop.f32.mrb[0].mxu0
  %v719 = vpop.f32.mrb[0].mxu0
  %720 = vdwg.mxu0
  %721 = vmatprep.subr.bf16.mxu0 0
  %722 = vmatpush1.bf16.msra.mxu0 %v529
  %723 = vmatprep.subr.bf16.mxu0 0
  %724 = vmatpush1.bf16.msra.mxu0 %v530
  %725 = vmatprep.subr.bf16.mxu0 0
  %726 = vmatpush1.bf16.msra.mxu0 %v531
  %727 = vmatprep.subr.bf16.mxu0 0
  %728 = vmatpush1.bf16.msra.mxu0 %v532
  %729 = vmatprep.subr.bf16.mxu0 0
  %730 = vmatpush1.bf16.msra.mxu0 %v533
  %731 = vmatprep.subr.bf16.mxu0 0
  %732 = vmatpush1.bf16.msra.mxu0 %v534
  %733 = vmatprep.subr.bf16.mxu0 0
  %734 = vmatpush1.bf16.msra.mxu0 %v535
  %735 = vmatprep.subr.bf16.mxu0 0
  %736 = vmatpush1.bf16.msra.mxu0 %v536
  %737 = vmatprep.subr.bf16.mxu0 0
  %738 = vmatpush1.bf16.msra.mxu0 %v537
  %739 = vmatprep.subr.bf16.mxu0 0
  %740 = vmatpush1.bf16.msra.mxu0 %v538
  %741 = vmatprep.subr.bf16.mxu0 0
  %742 = vmatpush1.bf16.msra.mxu0 %v539
  %743 = vmatprep.subr.bf16.mxu0 0
  %744 = vmatpush1.bf16.msra.mxu0 %v540
  %745 = vmatprep.subr.bf16.mxu0 0
  %746 = vmatpush1.bf16.msra.mxu0 %v541
  %747 = vmatprep.subr.bf16.mxu0 0
  %748 = vmatpush1.bf16.msra.mxu0 %v542
  %749 = vmatprep.subr.bf16.mxu0 0
  %750 = vmatpush1.bf16.msra.mxu0 %v543
  %751 = vmatprep.subr.bf16.mxu0 0
  %752 = vmatpush1.bf16.msra.mxu0 %v544
  %753 = vmatprep.mubr.bf16.mxu0 %v196
  %754 = vmatmul.mubr.bf16.gmra.mrb[0].mxu0 %v195
  %v755 = vpop.f32.mrb[0].mxu0
  %v756 = vadd.f32 %v716, %v755
  %v757 = vpop.f32.mrb[0].mxu0
  %v758 = vpop.f32.mrb[0].mxu0
  %v759 = vpop.f32.mrb[0].mxu0
  %760 = vdwg.mxu0
  %761 = vmatprep.subr.bf16.mxu0 0
  %762 = vmatpush1.bf16.msra.mxu0 %v545
  %763 = vmatprep.subr.bf16.mxu0 0
  %764 = vmatpush1.bf16.msra.mxu0 %v546
  %765 = vmatprep.subr.bf16.mxu0 0
  %766 = vmatpush1.bf16.msra.mxu0 %v547
  %767 = vmatprep.subr.bf16.mxu0 0
  %768 = vmatpush1.bf16.msra.mxu0 %v548
  %769 = vmatprep.subr.bf16.mxu0 0
  %770 = vmatpush1.bf16.msra.mxu0 %v549
  %771 = vmatprep.subr.bf16.mxu0 0
  %772 = vmatpush1.bf16.msra.mxu0 %v550
  %773 = vmatprep.subr.bf16.mxu0 0
  %774 = vmatpush1.bf16.msra.mxu0 %v551
  %775 = vmatprep.subr.bf16.mxu0 0
  %776 = vmatpush1.bf16.msra.mxu0 %v552
  %777 = vmatprep.subr.bf16.mxu0 0
  %778 = vmatpush1.bf16.msra.mxu0 %v553
  %779 = vmatprep.subr.bf16.mxu0 0
  %780 = vmatpush1.bf16.msra.mxu0 %v554
  %781 = vmatprep.subr.bf16.mxu0 0
  %782 = vmatpush1.bf16.msra.mxu0 %v555
  %783 = vmatprep.subr.bf16.mxu0 0
  %784 = vmatpush1.bf16.msra.mxu0 %v556
  %785 = vmatprep.subr.bf16.mxu0 0
  %786 = vmatpush1.bf16.msra.mxu0 %v557
  %787 = vmatprep.subr.bf16.mxu0 0
  %788 = vmatpush1.bf16.msra.mxu0 %v558
  %789 = vmatprep.subr.bf16.mxu0 0
  %790 = vmatpush1.bf16.msra.mxu0 %v559
  %791 = vmatprep.subr.bf16.mxu0 0
  %792 = vmatpush1.bf16.msra.mxu0 %v560
  %793 = vmatprep.mubr.bf16.mxu0 %v198
  %794 = vmatmul.mubr.bf16.gmra.mrb[0].mxu0 %v197
  %v795 = vpop.f32.mrb[0].mxu0
  %v796 = vadd.f32 %v756, %v795
  %v797 = vpop.f32.mrb[0].mxu0
  %v798 = vpop.f32.mrb[0].mxu0
  %v799 = vpop.f32.mrb[0].mxu0
  %800 = vdwg.mxu0
  %801 = vmatprep.subr.bf16.mxu0 0
  %802 = vmatpush1.bf16.msra.mxu0 %v561
  %803 = vmatprep.subr.bf16.mxu0 0
  %804 = vmatpush1.bf16.msra.mxu0 %v562
  %805 = vmatprep.subr.bf16.mxu0 0
  %806 = vmatpush1.bf16.msra.mxu0 %v563
  %807 = vmatprep.subr.bf16.mxu0 0
  %808 = vmatpush1.bf16.msra.mxu0 %v564
  %809 = vmatprep.subr.bf16.mxu0 0
  %810 = vmatpush1.bf16.msra.mxu0 %v565
  %811 = vmatprep.subr.bf16.mxu0 0
  %812 = vmatpush1.bf16.msra.mxu0 %v566
  %813 = vmatprep.subr.bf16.mxu0 0
  %814 = vmatpush1.bf16.msra.mxu0 %v567
  %815 = vmatprep.subr.bf16.mxu0 0
  %816 = vmatpush1.bf16.msra.mxu0 %v568
  %817 = vmatprep.subr.bf16.mxu0 0
  %818 = vmatpush1.bf16.msra.mxu0 0
  %819 = vmatprep.subr.bf16.mxu0 0
  %820 = vmatpush1.bf16.msra.mxu0 0
  %821 = vmatprep.subr.bf16.mxu0 0
  %822 = vmatpush1.bf16.msra.mxu0 0
  %823 = vmatprep.subr.bf16.mxu0 0
  %824 = vmatpush1.bf16.msra.mxu0 0
  %825 = vmatprep.subr.bf16.mxu0 0
  %826 = vmatpush1.bf16.msra.mxu0 0
  %827 = vmatprep.subr.bf16.mxu0 0
  %828 = vmatpush1.bf16.msra.mxu0 0
  %829 = vmatprep.subr.bf16.mxu0 0
  %830 = vmatpush1.bf16.msra.mxu0 0
  %831 = vmatprep.subr.bf16.mxu0 0
  %832 = vmatpush1.bf16.msra.mxu0 0
  %833 = vmatprep.mubr.bf16.mxu0 0
  %834 = vmatmul.mubr.bf16.gmra.mrb[0].mxu0 %v199
  %v835 = vpop.f32.mrb[0].mxu0
  %v836 = vadd.f32 %v796, %v835
  %v837 = vpop.f32.mrb[0].mxu0
  %v838 = vpop.f32.mrb[0].mxu0
  %v839 = vpop.f32.mrb[0].mxu0
  %840 = vdwg.mxu0
  %v841 = vmax.f32 %v836, 0.0
  %v842 = vpack.c.bf16 %v841, %v841
  %v843 = vld [vmem:[%s3] sm:$0xf]
  %v844 = vld [vmem:[%s3 + $0x4] sm:$0xf]
  %v845 = vld [vmem:[%s3 + $0x8] sm:$0xf]
  %v846 = vld [vmem:[%s3 + $0xc] sm:$0xf]
  %v847 = vld [vmem:[%s3 + $0x10] sm:$0xf]
  %v848 = vld [vmem:[%s3 + $0x14] sm:$0xf]
  %v849 = vld [vmem:[%s3 + $0x18] sm:$0xf]
  %v850 = vld [vmem:[%s3 + $0x1c] sm:$0xf]
  %v851 = vld [vmem:[%s3 + $0x20] sm:$0xf]
  %v852 = vld [vmem:[%s3 + $0x24] sm:$0xf]
  %v853 = vld [vmem:[%s3 + $0x28] sm:$0xf]
  %v854 = vld [vmem:[%s3 + $0x2c] sm:$0xf]
  %v855 = vld [vmem:[%s3 + $0x30] sm:$0xf]
  %v856 = vld [vmem:[%s3 + $0x34] sm:$0xf]
  %v857 = vld [vmem:[%s3 + $0x38] sm:$0xf]
  %v858 = vld [vmem:[%s3 + $0x3c] sm:$0xf]
  %v859 = vld [vmem:[%s4] sm:$0x1]
  %v861 = vlaneseq
  %v862 = vshrl.u32 %v861, 7
  %v863 = vsub.s32 0, %v862
  %v864 = vrot.slane %v859, %v863
  %v882 = vunpack.c.l.b16 %v843
  %v883 = vunpack.c.l.b16 %v844
  %v884 = vunpack.c.l.b16 %v845
  %v885 = vunpack.c.l.b16 %v846
  %v886 = vunpack.c.l.b16 %v847
  %v887 = vunpack.c.l.b16 %v848
  %v888 = vunpack.c.l.b16 %v849
  %v889 = vunpack.c.l.b16 %v850
  %v890 = vunpack.c.l.b16 %v851
  %v891 = vunpack.c.l.b16 %v852
  %v892 = vunpack.c.l.b16 %v853
  %v893 = vunpack.c.l.b16 %v854
  %v894 = vunpack.c.l.b16 %v855
  %v895 = vunpack.c.l.b16 %v856
  %v896 = vunpack.c.l.b16 %v857
  %v897 = vunpack.c.l.b16 %v858
  %v898 = vpack.c.b16 %v883, %v882
  %v899 = vpack.c.b16 %v885, %v884
  %v900 = vpack.c.b16 %v887, %v886
  %v901 = vpack.c.b16 %v889, %v888
  %v902 = vpack.c.b16 %v891, %v890
  %v903 = vpack.c.b16 %v893, %v892
  %v904 = vpack.c.b16 %v895, %v894
  %v905 = vpack.c.b16 %v897, %v896
  %914 = vmatprep.subr.bf16.mxu0 0
  %915 = vmatpush1.bf16.msra.mxu0 %v898
  %916 = vmatprep.subr.bf16.mxu0 0
  %917 = vmatpush1.bf16.msra.mxu0 %v899
  %918 = vmatprep.subr.bf16.mxu0 0
  %919 = vmatpush1.bf16.msra.mxu0 %v900
  %920 = vmatprep.subr.bf16.mxu0 0
  %921 = vmatpush1.bf16.msra.mxu0 %v901
  %922 = vmatprep.subr.bf16.mxu0 0
  %923 = vmatpush1.bf16.msra.mxu0 %v902
  %924 = vmatprep.subr.bf16.mxu0 0
  %925 = vmatpush1.bf16.msra.mxu0 %v903
  %926 = vmatprep.subr.bf16.mxu0 0
  %927 = vmatpush1.bf16.msra.mxu0 %v904
  %928 = vmatprep.subr.bf16.mxu0 0
  %929 = vmatpush1.bf16.msra.mxu0 %v905
  %930 = vmatprep.subr.bf16.mxu0 0
  %931 = vmatpush1.bf16.msra.mxu0 0
  %932 = vmatprep.subr.bf16.mxu0 0
  %933 = vmatpush1.bf16.msra.mxu0 0
  %934 = vmatprep.subr.bf16.mxu0 0
  %935 = vmatpush1.bf16.msra.mxu0 0
  %936 = vmatprep.subr.bf16.mxu0 0
  %937 = vmatpush1.bf16.msra.mxu0 0
  %938 = vmatprep.subr.bf16.mxu0 0
  %939 = vmatpush1.bf16.msra.mxu0 0
  %940 = vmatprep.subr.bf16.mxu0 0
  %941 = vmatpush1.bf16.msra.mxu0 0
  %942 = vmatprep.subr.bf16.mxu0 0
  %943 = vmatpush1.bf16.msra.mxu0 0
  %944 = vmatprep.subr.bf16.mxu0 0
  %945 = vmatpush1.bf16.msra.mxu0 0
  %946 = vmatprep.mubr.bf16.mxu0 0
  %947 = vmatmul.mubr.bf16.gmra.mrb[0].mxu0 %v842
  %v948 = vpop.f32.mrb[0].mxu0
  %v949 = vadd.f32 %v864, %v948
  %v950 = vpop.f32.mrb[0].mxu0
  %v951 = vpop.f32.mrb[0].mxu0
  %v952 = vpop.f32.mrb[0].mxu0
  %953 = vdwg.mxu0
  %954 = vst [vmem:[%s5] sm:$0xff] %v949
  // Predicated region
  $region22: #{convnet_forward.7} parent=0 // pred_check
    _
  $region23: #{convnet_forward.7} parent=0 // pred_check_branch
    %956 = sbr.rel (0) target = $region25
  $region24: #{convnet_forward.7} parent=0 // pred_region
    _
  $region25: #{convnet_forward.7} parent=0 // pred_fallthru
    _
  // Predicated region
  $region26: #{convnet_forward.7} parent=0 // pred_check
    _
  $region27: #{convnet_forward.7} parent=0 // pred_check_branch
    %958 = sbr.rel (0) target = $region29
  $region28: #{convnet_forward.7} parent=0 // pred_region
    _
  $region29: #{convnet_forward.7} parent=0 // pred_fallthru
    _

</llo_original>
